<compile_context>
chip_gen: v7x
topology: tpu7x:2x2x1
jax: 0.10.0
libtpu: 0.0.40
codegen_flags: <defaults>
</compile_context>

<pallas_src>
import numpy as np
import jax
import jax.numpy as jnp
from jax.experimental import pallas as pl
from jax.experimental.pallas import tpu as pltpu


def make_convblock_call(N, H, W, Cin, Cout, row_tile=256):
    assert H % 2 == 0 and W % 2 == 0, "avg_pool2d(2) path assumes even H, W"
    Hp, Wp = H + 2, W + 2
    G = Wp + 1                    # guard rows on each side of the per-image flat layout
    R = Hp * Wp                   # per-image "real" flattened (padded-grid) rows
    RT = R + 2 * G
    Ho, Wo = H // 2, W // 2
    M = Ho * Wo

    tiles = [(t0, min(row_tile, R - t0)) for t0 in range(0, R, row_tile)]
    taps = [(dy, dx) for dy in range(3) for dx in range(3)]

    def kernel(x_ref, w1_ref, s1_ref, b1_ref, w2_ref, s2_ref, b2_ref, mask_ref,
               o_ref, y1_ref, y2_ref):
        # Zero only the guard strips of the conv1-output staging buffer (2*G rows).
        y1_ref[pl.ds(0, G), :] = jnp.zeros((G, Cout), jnp.float32)
        y1_ref[pl.ds(G + R, G), :] = jnp.zeros((G, Cout), jnp.float32)

        # ---- conv1 (3x3, stride 1, pad 1) + BN + ReLU, row-tiled ----
        for t0, tl in tiles:
            acc = jnp.zeros((tl, Cout), jnp.float32)
            for k, (dy, dx) in enumerate(taps):
                lhs = x_ref[0, pl.ds(t0 + dy * Wp + dx, tl), :].astype(jnp.bfloat16)
                acc += jnp.dot(lhs, w1_ref[k], preferred_element_type=jnp.float32)
            y1 = jnp.maximum(acc * s1_ref[...] + b1_ref[...], 0.0)
            y1 = y1 * mask_ref[pl.ds(t0, tl), :]     # zero pad ring (acts as conv2 padding)
            y1_ref[pl.ds(G + t0, tl), :] = y1

        # ---- conv2 (3x3, stride 1, pad 1) + BN + ReLU, row-tiled ----
        for t0, tl in tiles:
            acc = jnp.zeros((tl, Cout), jnp.float32)
            for k, (dy, dx) in enumerate(taps):
                lhs = y1_ref[pl.ds(t0 + dy * Wp + dx, tl), :].astype(jnp.bfloat16)
                acc += jnp.dot(lhs, w2_ref[k], preferred_element_type=jnp.float32)
            y2_ref[pl.ds(t0, tl), :] = jnp.maximum(acc * s2_ref[...] + b2_ref[...], 0.0)

        # ---- 2x2 average pool: 4 strided row reads + VPU adds (no selection matmul) ----
        rows = []
        for i in range(Ho):
            base = (2 * i + 1) * Wp + 1
            s = (y2_ref[pl.ds(base, Wo, stride=2), :]
                 + y2_ref[pl.ds(base + 1, Wo, stride=2), :]
                 + y2_ref[pl.ds(base + Wp, Wo, stride=2), :]
                 + y2_ref[pl.ds(base + Wp + 1, Wo, stride=2), :])
            rows.append(s)
        o_ref[0] = 0.25 * jnp.concatenate(rows, axis=0)

    return pl.pallas_call(
        kernel,
        out_shape=jax.ShapeDtypeStruct((N, M, Cout), jnp.float32),
        grid=(N,),
        in_specs=[
            pl.BlockSpec((1, RT, Cin), lambda n: (n, 0, 0)),     # x, guarded, one image/step
            pl.BlockSpec((9, Cin, Cout), lambda n: (0, 0, 0)),   # w1 (bf16)
            pl.BlockSpec((1, Cout), lambda n: (0, 0)),           # scale1
            pl.BlockSpec((1, Cout), lambda n: (0, 0)),           # shift1
            pl.BlockSpec((9, Cout, Cout), lambda n: (0, 0, 0)),  # w2 (bf16)
            pl.BlockSpec((1, Cout), lambda n: (0, 0)),           # scale2
            pl.BlockSpec((1, Cout), lambda n: (0, 0)),           # shift2
            pl.BlockSpec((R, 1), lambda n: (0, 0)),              # interior mask (shared)
        ],
        out_specs=pl.BlockSpec((1, M, Cout), lambda n: (n, 0, 0)),
        scratch_shapes=[pltpu.VMEM((RT, Cout), jnp.float32),     # guarded conv1 output
                        pltpu.VMEM((R, Cout), jnp.float32)],     # conv2 output
        compiler_params=pltpu.CompilerParams(dimension_semantics=("parallel",)),
    )


def convblock_forward(x_nchw, params, eps=1e-5):
    N, Cin, H, W = x_nchw.shape
    Cout = params["w1"].shape[0]
    assert H % 2 == 0 and W % 2 == 0, "avg_pool2d(2) path assumes even H, W"
    Hp, Wp = H + 2, W + 2
    G = Wp + 1
    R = Hp * Wp
    Ho, Wo = H // 2, W // 2

    # NCHW -> NHWC -> pad spatial by 1 -> per-image flatten -> add guard rows (glue)
    x = jnp.transpose(x_nchw, (0, 2, 3, 1)).astype(jnp.float32)
    x = jnp.pad(x, ((0, 0), (1, 1), (1, 1), (0, 0)))
    x = jnp.pad(x.reshape(N, R, Cin), ((0, 0), (G, G), (0, 0)))

    # fold conv bias + BatchNorm (eval mode) into per-channel scale / shift
    def fold(g, be, m, v, bc):
        scale = g / jnp.sqrt(v + eps)
        shift = (bc - m) * scale + be
        return (scale.reshape(1, -1).astype(jnp.float32),
                shift.reshape(1, -1).astype(jnp.float32))

    s1, b1 = fold(params["g1"], params["be1"], params["m1"], params["v1"], params["bc1"])
    s2, b2 = fold(params["g2"], params["be2"], params["m2"], params["v2"], params["bc2"])

    # conv weights (Cout, Cin, 3, 3) -> (9, Cin, Cout), bf16 for the MXU
    def wflat(w):
        return jnp.transpose(w, (2, 3, 1, 0)).reshape(
            9, w.shape[1], w.shape[0]).astype(jnp.bfloat16)

    w1, w2 = wflat(params["w1"]), wflat(params["w2"])

    # interior mask over the per-image flattened padded grid (1 = real pixel, 0 = pad ring)
    hh = np.arange(Hp)[:, None]
    ww = np.arange(Wp)[None, :]
    interior = ((hh >= 1) & (hh <= H) & (ww >= 1) & (ww <= W)).astype(np.float32)
    mask = jnp.asarray(interior.reshape(R, 1))

    call = make_convblock_call(N, H, W, Cin, Cout)
    out = call(x, w1, s1, b1, w2, s2, b2, mask)                   # (N, Ho*Wo, Cout)
    return out.reshape(N, Ho, Wo, Cout).transpose(0, 3, 1, 2)     # -> NCHW


def ref_forward(x, params, eps=1e-5):
    # pure-JAX reference of the PyTorch forward (BatchNorm in eval mode)
    def block(x, w, bc, g, be, m, v):
        y = jax.lax.conv_general_dilated(
            x, w, window_strides=(1, 1), padding=((1, 1), (1, 1)),
            dimension_numbers=("NCHW", "OIHW", "NCHW"),
            precision=jax.lax.Precision.HIGHEST)
        scale = g / jnp.sqrt(v + eps)
        shift = (bc - m) * scale + be
        y = y * scale[None, :, None, None] + shift[None, :, None, None]
        return jnp.maximum(y, 0.0)

    y = block(x, params["w1"], params["bc1"], params["g1"], params["be1"], params["m1"], params["v1"])
    y = block(y, params["w2"], params["bc2"], params["g2"], params["be2"], params["m2"], params["v2"])
    N, C, H, W = y.shape
    return y.reshape(N, C, H // 2, 2, W // 2, 2).mean(axis=(3, 5))


if __name__ == "__main__":
    N, Cin, Cout, H, W = 2, 4, 8, 16, 16
    key = jax.random.PRNGKey(0)
    kx, k1, k2 = jax.random.split(key, 3)

    x = jax.random.normal(kx, (N, Cin, H, W), jnp.float32)

    def kaiming(k, cout, cin):   # nn.init.kaiming_normal_, fan_in mode, relu gain
        fan_in = cin * 9
        return jax.random.normal(k, (cout, cin, 3, 3), jnp.float32) * np.sqrt(2.0 / fan_in)

    params = dict(
        w1=kaiming(k1, Cout, Cin), bc1=jnp.zeros((Cout,), jnp.float32),
        g1=jnp.ones((Cout,), jnp.float32), be1=jnp.zeros((Cout,), jnp.float32),
        m1=jnp.zeros((Cout,), jnp.float32), v1=jnp.ones((Cout,), jnp.float32),
        w2=kaiming(k2, Cout, Cout), bc2=jnp.zeros((Cout,), jnp.float32),
        g2=jnp.ones((Cout,), jnp.float32), be2=jnp.zeros((Cout,), jnp.float32),
        m2=jnp.zeros((Cout,), jnp.float32), v2=jnp.ones((Cout,), jnp.float32),
    )

    out = jax.block_until_ready(convblock_forward(x, params))
    ref = jax.block_until_ready(ref_forward(x, params))
    # bf16 MXU operands -> slightly looser tolerance than a pure-f32 comparison
    np.testing.assert_allclose(np.asarray(out), np.asarray(ref), rtol=3e-2, atol=3e-2)
    print("KERNEL_OK")
</pallas_src>

<mosaic_0001>
module attributes {stable_mosaic.version = 11 : i64} {
  func.func @kernel(%arg0: i32, %arg1: memref<1x362x4xf32, #tpu.memory_space<vmem>>, %arg2: memref<9x4x8xbf16, #tpu.memory_space<vmem>>, %arg3: memref<1x8xf32, #tpu.memory_space<vmem>>, %arg4: memref<1x8xf32, #tpu.memory_space<vmem>>, %arg5: memref<9x8x8xbf16, #tpu.memory_space<vmem>>, %arg6: memref<1x8xf32, #tpu.memory_space<vmem>>, %arg7: memref<1x8xf32, #tpu.memory_space<vmem>>, %arg8: memref<324x1xf32, #tpu.memory_space<vmem>>, %arg9: memref<1x64x8xf32, #tpu.memory_space<vmem>>, %arg10: memref<362x8xf32, #tpu.memory_space<vmem>>, %arg11: memref<324x8xf32, #tpu.memory_space<vmem>>) attributes {dimension_semantics = [#tpu.dimension_semantics<parallel>], iteration_bounds = array<i64: 2>, scalar_prefetch = 0 : i64, scratch_operands = 2 : i64, tpu.core_type = #tpu.core_type<tc>, window_params = [{transform_indices = @transform_0, window_bounds = array<i64: 1, 362, 4>}, {pipeline_mode = #tpu.pipeline_mode<synchronous>, transform_indices = @transform_1, window_bounds = array<i64: 9, 4, 8>}, {pipeline_mode = #tpu.pipeline_mode<synchronous>, transform_indices = @transform_2, window_bounds = array<i64: 1, 8>}, {pipeline_mode = #tpu.pipeline_mode<synchronous>, transform_indices = @transform_3, window_bounds = array<i64: 1, 8>}, {pipeline_mode = #tpu.pipeline_mode<synchronous>, transform_indices = @transform_4, window_bounds = array<i64: 9, 8, 8>}, {pipeline_mode = #tpu.pipeline_mode<synchronous>, transform_indices = @transform_5, window_bounds = array<i64: 1, 8>}, {pipeline_mode = #tpu.pipeline_mode<synchronous>, transform_indices = @transform_6, window_bounds = array<i64: 1, 8>}, {pipeline_mode = #tpu.pipeline_mode<synchronous>, transform_indices = @transform_7, window_bounds = array<i64: 324, 1>}, {transform_indices = @transform_8, window_bounds = array<i64: 1, 64, 8>}]} {
    %cst = arith.constant 0.000000e+00 : f32
    %0 = vector.broadcast %cst : f32 to vector<19x8xf32>
    %c0 = arith.constant 0 : index
    %c0_0 = arith.constant 0 : index
    %1 = vector.load %arg10[%c0, %c0_0] : memref<362x8xf32, #tpu.memory_space<vmem>>, vector<19x8xf32>
    tpu.vector_store %arg10[%c0, %c0_0], %0 {strides = array<i32>} : memref<362x8xf32, #tpu.memory_space<vmem>>, vector<19x8xf32>,
    %cst_1 = arith.constant 0.000000e+00 : f32
    %2 = vector.broadcast %cst_1 : f32 to vector<19x8xf32>
    %c343 = arith.constant 343 : index
    %c0_2 = arith.constant 0 : index
    %3 = vector.load %arg10[%c343, %c0_2] : memref<362x8xf32, #tpu.memory_space<vmem>>, vector<19x8xf32>
    tpu.vector_store %arg10[%c343, %c0_2], %2 {strides = array<i32>} : memref<362x8xf32, #tpu.memory_space<vmem>>, vector<19x8xf32>,
    %cst_3 = arith.constant 0.000000e+00 : f32
    %4 = vector.broadcast %cst_3 : f32 to vector<256x8xf32>
    %c0_4 = arith.constant 0 : index
    %c0_5 = arith.constant 0 : index
    %c0_6 = arith.constant 0 : index
    %5 = vector.load %arg1[%c0_4, %c0_5, %c0_6] : memref<1x362x4xf32, #tpu.memory_space<vmem>>, vector<1x256x4xf32>
    %6 = vector.shape_cast %5 : vector<1x256x4xf32> to vector<256x4xf32>
    %7 = arith.truncf %6 : vector<256x4xf32> to vector<256x4xbf16>
    %c0_7 = arith.constant 0 : index
    %c0_8 = arith.constant 0 : index
    %c0_9 = arith.constant 0 : index
    %8 = vector.load %arg2[%c0_7, %c0_8, %c0_9] : memref<9x4x8xbf16, #tpu.memory_space<vmem>>, vector<1x4x8xbf16>
    %9 = vector.shape_cast %8 : vector<1x4x8xbf16> to vector<4x8xbf16>
    %cst_10 = arith.constant dense<0.000000e+00> : vector<256x8xf32>
    %10 = tpu.matmul %7, %9, %cst_10 {dimension_numbers = #tpu.dot_dimension_numbers<[1], [0], [0], [1], [0, 0, 1, 1], [], []>} : vector<256x4xbf16>, vector<4x8xbf16>, vector<256x8xf32> -> vector<256x8xf32>
    %11 = arith.addf %4, %10 : vector<256x8xf32>
    %c0_11 = arith.constant 0 : index
    %c1 = arith.constant 1 : index
    %c0_12 = arith.constant 0 : index
    %12 = vector.load %arg1[%c0_11, %c1, %c0_12] : memref<1x362x4xf32, #tpu.memory_space<vmem>>, vector<1x256x4xf32>
    %13 = vector.shape_cast %12 : vector<1x256x4xf32> to vector<256x4xf32>
    %14 = arith.truncf %13 : vector<256x4xf32> to vector<256x4xbf16>
    %c1_13 = arith.constant 1 : index
    %c0_14 = arith.constant 0 : index
    %c0_15 = arith.constant 0 : index
    %15 = vector.load %arg2[%c1_13, %c0_14, %c0_15] : memref<9x4x8xbf16, #tpu.memory_space<vmem>>, vector<1x4x8xbf16>
    %16 = vector.shape_cast %15 : vector<1x4x8xbf16> to vector<4x8xbf16>
    %cst_16 = arith.constant dense<0.000000e+00> : vector<256x8xf32>
    %17 = tpu.matmul %14, %16, %cst_16 {dimension_numbers = #tpu.dot_dimension_numbers<[1], [0], [0], [1], [0, 0, 1, 1], [], []>} : vector<256x4xbf16>, vector<4x8xbf16>, vector<256x8xf32> -> vector<256x8xf32>
    %18 = arith.addf %11, %17 : vector<256x8xf32>
    %c0_17 = arith.constant 0 : index
    %c2 = arith.constant 2 : index
    %c0_18 = arith.constant 0 : index
    %19 = vector.load %arg1[%c0_17, %c2, %c0_18] : memref<1x362x4xf32, #tpu.memory_space<vmem>>, vector<1x256x4xf32>
    %20 = vector.shape_cast %19 : vector<1x256x4xf32> to vector<256x4xf32>
    %21 = arith.truncf %20 : vector<256x4xf32> to vector<256x4xbf16>
    %c2_19 = arith.constant 2 : index
    %c0_20 = arith.constant 0 : index
    %c0_21 = arith.constant 0 : index
    %22 = vector.load %arg2[%c2_19, %c0_20, %c0_21] : memref<9x4x8xbf16, #tpu.memory_space<vmem>>, vector<1x4x8xbf16>
    %23 = vector.shape_cast %22 : vector<1x4x8xbf16> to vector<4x8xbf16>
    %cst_22 = arith.constant dense<0.000000e+00> : vector<256x8xf32>
    %24 = tpu.matmul %21, %23, %cst_22 {dimension_numbers = #tpu.dot_dimension_numbers<[1], [0], [0], [1], [0, 0, 1, 1], [], []>} : vector<256x4xbf16>, vector<4x8xbf16>, vector<256x8xf32> -> vector<256x8xf32>
    %25 = arith.addf %18, %24 : vector<256x8xf32>
    %c0_23 = arith.constant 0 : index
    %c18 = arith.constant 18 : index
    %c0_24 = arith.constant 0 : index
    %26 = vector.load %arg1[%c0_23, %c18, %c0_24] : memref<1x362x4xf32, #tpu.memory_space<vmem>>, vector<1x256x4xf32>
    %27 = vector.shape_cast %26 : vector<1x256x4xf32> to vector<256x4xf32>
    %28 = arith.truncf %27 : vector<256x4xf32> to vector<256x4xbf16>
    %c3 = arith.constant 3 : index
    %c0_25 = arith.constant 0 : index
    %c0_26 = arith.constant 0 : index
    %29 = vector.load %arg2[%c3, %c0_25, %c0_26] : memref<9x4x8xbf16, #tpu.memory_space<vmem>>, vector<1x4x8xbf16>
    %30 = vector.shape_cast %29 : vector<1x4x8xbf16> to vector<4x8xbf16>
    %cst_27 = arith.constant dense<0.000000e+00> : vector<256x8xf32>
    %31 = tpu.matmul %28, %30, %cst_27 {dimension_numbers = #tpu.dot_dimension_numbers<[1], [0], [0], [1], [0, 0, 1, 1], [], []>} : vector<256x4xbf16>, vector<4x8xbf16>, vector<256x8xf32> -> vector<256x8xf32>
    %32 = arith.addf %25, %31 : vector<256x8xf32>
    %c0_28 = arith.constant 0 : index
    %c19 = arith.constant 19 : index
    %c0_29 = arith.constant 0 : index
    %33 = vector.load %arg1[%c0_28, %c19, %c0_29] : memref<1x362x4xf32, #tpu.memory_space<vmem>>, vector<1x256x4xf32>
    %34 = vector.shape_cast %33 : vector<1x256x4xf32> to vector<256x4xf32>
    %35 = arith.truncf %34 : vector<256x4xf32> to vector<256x4xbf16>
    %c4 = arith.constant 4 : index
    %c0_30 = arith.constant 0 : index
    %c0_31 = arith.constant 0 : index
    %36 = vector.load %arg2[%c4, %c0_30, %c0_31] : memref<9x4x8xbf16, #tpu.memory_space<vmem>>, vector<1x4x8xbf16>
    %37 = vector.shape_cast %36 : vector<1x4x8xbf16> to vector<4x8xbf16>
    %cst_32 = arith.constant dense<0.000000e+00> : vector<256x8xf32>
    %38 = tpu.matmul %35, %37, %cst_32 {dimension_numbers = #tpu.dot_dimension_numbers<[1], [0], [0], [1], [0, 0, 1, 1], [], []>} : vector<256x4xbf16>, vector<4x8xbf16>, vector<256x8xf32> -> vector<256x8xf32>
    %39 = arith.addf %32, %38 : vector<256x8xf32>
    %c0_33 = arith.constant 0 : index
    %c20 = arith.constant 20 : index
    %c0_34 = arith.constant 0 : index
    %40 = vector.load %arg1[%c0_33, %c20, %c0_34] : memref<1x362x4xf32, #tpu.memory_space<vmem>>, vector<1x256x4xf32>
    %41 = vector.shape_cast %40 : vector<1x256x4xf32> to vector<256x4xf32>
    %42 = arith.truncf %41 : vector<256x4xf32> to vector<256x4xbf16>
    %c5 = arith.constant 5 : index
    %c0_35 = arith.constant 0 : index
    %c0_36 = arith.constant 0 : index
    %43 = vector.load %arg2[%c5, %c0_35, %c0_36] : memref<9x4x8xbf16, #tpu.memory_space<vmem>>, vector<1x4x8xbf16>
    %44 = vector.shape_cast %43 : vector<1x4x8xbf16> to vector<4x8xbf16>
    %cst_37 = arith.constant dense<0.000000e+00> : vector<256x8xf32>
    %45 = tpu.matmul %42, %44, %cst_37 {dimension_numbers = #tpu.dot_dimension_numbers<[1], [0], [0], [1], [0, 0, 1, 1], [], []>} : vector<256x4xbf16>, vector<4x8xbf16>, vector<256x8xf32> -> vector<256x8xf32>
    %46 = arith.addf %39, %45 : vector<256x8xf32>
    %c0_38 = arith.constant 0 : index
    %c36 = arith.constant 36 : index
    %c0_39 = arith.constant 0 : index
    %47 = vector.load %arg1[%c0_38, %c36, %c0_39] : memref<1x362x4xf32, #tpu.memory_space<vmem>>, vector<1x256x4xf32>
    %48 = vector.shape_cast %47 : vector<1x256x4xf32> to vector<256x4xf32>
    %49 = arith.truncf %48 : vector<256x4xf32> to vector<256x4xbf16>
    %c6 = arith.constant 6 : index
    %c0_40 = arith.constant 0 : index
    %c0_41 = arith.constant 0 : index
    %50 = vector.load %arg2[%c6, %c0_40, %c0_41] : memref<9x4x8xbf16, #tpu.memory_space<vmem>>, vector<1x4x8xbf16>
    %51 = vector.shape_cast %50 : vector<1x4x8xbf16> to vector<4x8xbf16>
    %cst_42 = arith.constant dense<0.000000e+00> : vector<256x8xf32>
    %52 = tpu.matmul %49, %51, %cst_42 {dimension_numbers = #tpu.dot_dimension_numbers<[1], [0], [0], [1], [0, 0, 1, 1], [], []>} : vector<256x4xbf16>, vector<4x8xbf16>, vector<256x8xf32> -> vector<256x8xf32>
    %53 = arith.addf %46, %52 : vector<256x8xf32>
    %c0_43 = arith.constant 0 : index
    %c37 = arith.constant 37 : index
    %c0_44 = arith.constant 0 : index
    %54 = vector.load %arg1[%c0_43, %c37, %c0_44] : memref<1x362x4xf32, #tpu.memory_space<vmem>>, vector<1x256x4xf32>
    %55 = vector.shape_cast %54 : vector<1x256x4xf32> to vector<256x4xf32>
    %56 = arith.truncf %55 : vector<256x4xf32> to vector<256x4xbf16>
    %c7 = arith.constant 7 : index
    %c0_45 = arith.constant 0 : index
    %c0_46 = arith.constant 0 : index
    %57 = vector.load %arg2[%c7, %c0_45, %c0_46] : memref<9x4x8xbf16, #tpu.memory_space<vmem>>, vector<1x4x8xbf16>
    %58 = vector.shape_cast %57 : vector<1x4x8xbf16> to vector<4x8xbf16>
    %cst_47 = arith.constant dense<0.000000e+00> : vector<256x8xf32>
    %59 = tpu.matmul %56, %58, %cst_47 {dimension_numbers = #tpu.dot_dimension_numbers<[1], [0], [0], [1], [0, 0, 1, 1], [], []>} : vector<256x4xbf16>, vector<4x8xbf16>, vector<256x8xf32> -> vector<256x8xf32>
    %60 = arith.addf %53, %59 : vector<256x8xf32>
    %c0_48 = arith.constant 0 : index
    %c38 = arith.constant 38 : index
    %c0_49 = arith.constant 0 : index
    %61 = vector.load %arg1[%c0_48, %c38, %c0_49] : memref<1x362x4xf32, #tpu.memory_space<vmem>>, vector<1x256x4xf32>
    %62 = vector.shape_cast %61 : vector<1x256x4xf32> to vector<256x4xf32>
    %63 = arith.truncf %62 : vector<256x4xf32> to vector<256x4xbf16>
    %c8 = arith.constant 8 : index
    %c0_50 = arith.constant 0 : index
    %c0_51 = arith.constant 0 : index
    %64 = vector.load %arg2[%c8, %c0_50, %c0_51] : memref<9x4x8xbf16, #tpu.memory_space<vmem>>, vector<1x4x8xbf16>
    %65 = vector.shape_cast %64 : vector<1x4x8xbf16> to vector<4x8xbf16>
    %cst_52 = arith.constant dense<0.000000e+00> : vector<256x8xf32>
    %66 = tpu.matmul %63, %65, %cst_52 {dimension_numbers = #tpu.dot_dimension_numbers<[1], [0], [0], [1], [0, 0, 1, 1], [], []>} : vector<256x4xbf16>, vector<4x8xbf16>, vector<256x8xf32> -> vector<256x8xf32>
    %67 = arith.addf %60, %66 : vector<256x8xf32>
    %c0_53 = arith.constant 0 : index
    %c0_54 = arith.constant 0 : index
    %68 = vector.load %arg3[%c0_53, %c0_54] : memref<1x8xf32, #tpu.memory_space<vmem>>, vector<1x8xf32>
    %69 = vector.broadcast %68 : vector<1x8xf32> to vector<256x8xf32>
    %70 = arith.mulf %67, %69 : vector<256x8xf32>
    %c0_55 = arith.constant 0 : index
    %c0_56 = arith.constant 0 : index
    %71 = vector.load %arg4[%c0_55, %c0_56] : memref<1x8xf32, #tpu.memory_space<vmem>>, vector<1x8xf32>
    %72 = vector.broadcast %71 : vector<1x8xf32> to vector<256x8xf32>
    %73 = arith.addf %70, %72 : vector<256x8xf32>
    %cst_57 = arith.constant 0.000000e+00 : f32
    %74 = vector.broadcast %cst_57 : f32 to vector<256x8xf32>
    %75 = arith.maximumf %73, %74 : vector<256x8xf32>
    %c0_58 = arith.constant 0 : index
    %c0_59 = arith.constant 0 : index
    %76 = vector.load %arg8[%c0_58, %c0_59] : memref<324x1xf32, #tpu.memory_space<vmem>>, vector<256x1xf32>
    %77 = vector.broadcast %76 : vector<256x1xf32> to vector<256x8xf32>
    %78 = arith.mulf %75, %77 : vector<256x8xf32>
    %c19_60 = arith.constant 19 : index
    %c0_61 = arith.constant 0 : index
    %79 = vector.load %arg10[%c19_60, %c0_61] : memref<362x8xf32, #tpu.memory_space<vmem>>, vector<256x8xf32>
    tpu.vector_store %arg10[%c19_60, %c0_61], %78 {strides = array<i32>} : memref<362x8xf32, #tpu.memory_space<vmem>>, vector<256x8xf32>,
    %cst_62 = arith.constant 0.000000e+00 : f32
    %80 = vector.broadcast %cst_62 : f32 to vector<68x8xf32>
    %c0_63 = arith.constant 0 : index
    %c256 = arith.constant 256 : index
    %c0_64 = arith.constant 0 : index
    %81 = vector.load %arg1[%c0_63, %c256, %c0_64] : memref<1x362x4xf32, #tpu.memory_space<vmem>>, vector<1x68x4xf32>
    %82 = vector.shape_cast %81 : vector<1x68x4xf32> to vector<68x4xf32>
    %83 = arith.truncf %82 : vector<68x4xf32> to vector<68x4xbf16>
    %c0_65 = arith.constant 0 : index
    %c0_66 = arith.constant 0 : index
    %c0_67 = arith.constant 0 : index
    %84 = vector.load %arg2[%c0_65, %c0_66, %c0_67] : memref<9x4x8xbf16, #tpu.memory_space<vmem>>, vector<1x4x8xbf16>
    %85 = vector.shape_cast %84 : vector<1x4x8xbf16> to vector<4x8xbf16>
    %cst_68 = arith.constant dense<0.000000e+00> : vector<68x8xf32>
    %86 = tpu.matmul %83, %85, %cst_68 {dimension_numbers = #tpu.dot_dimension_numbers<[1], [0], [0], [1], [0, 0, 1, 1], [], []>} : vector<68x4xbf16>, vector<4x8xbf16>, vector<68x8xf32> -> vector<68x8xf32>
    %87 = arith.addf %80, %86 : vector<68x8xf32>
    %c0_69 = arith.constant 0 : index
    %c257 = arith.constant 257 : index
    %c0_70 = arith.constant 0 : index
    %88 = vector.load %arg1[%c0_69, %c257, %c0_70] : memref<1x362x4xf32, #tpu.memory_space<vmem>>, vector<1x68x4xf32>
    %89 = vector.shape_cast %88 : vector<1x68x4xf32> to vector<68x4xf32>
    %90 = arith.truncf %89 : vector<68x4xf32> to vector<68x4xbf16>
    %c1_71 = arith.constant 1 : index
    %c0_72 = arith.constant 0 : index
    %c0_73 = arith.constant 0 : index
    %91 = vector.load %arg2[%c1_71, %c0_72, %c0_73] : memref<9x4x8xbf16, #tpu.memory_space<vmem>>, vector<1x4x8xbf16>
    %92 = vector.shape_cast %91 : vector<1x4x8xbf16> to vector<4x8xbf16>
    %cst_74 = arith.constant dense<0.000000e+00> : vector<68x8xf32>
    %93 = tpu.matmul %90, %92, %cst_74 {dimension_numbers = #tpu.dot_dimension_numbers<[1], [0], [0], [1], [0, 0, 1, 1], [], []>} : vector<68x4xbf16>, vector<4x8xbf16>, vector<68x8xf32> -> vector<68x8xf32>
    %94 = arith.addf %87, %93 : vector<68x8xf32>
    %c0_75 = arith.constant 0 : index
    %c258 = arith.constant 258 : index
    %c0_76 = arith.constant 0 : index
    %95 = vector.load %arg1[%c0_75, %c258, %c0_76] : memref<1x362x4xf32, #tpu.memory_space<vmem>>, vector<1x68x4xf32>
    %96 = vector.shape_cast %95 : vector<1x68x4xf32> to vector<68x4xf32>
    %97 = arith.truncf %96 : vector<68x4xf32> to vector<68x4xbf16>
    %c2_77 = arith.constant 2 : index
    %c0_78 = arith.constant 0 : index
    %c0_79 = arith.constant 0 : index
    %98 = vector.load %arg2[%c2_77, %c0_78, %c0_79] : memref<9x4x8xbf16, #tpu.memory_space<vmem>>, vector<1x4x8xbf16>
    %99 = vector.shape_cast %98 : vector<1x4x8xbf16> to vector<4x8xbf16>
    %cst_80 = arith.constant dense<0.000000e+00> : vector<68x8xf32>
    %100 = tpu.matmul %97, %99, %cst_80 {dimension_numbers = #tpu.dot_dimension_numbers<[1], [0], [0], [1], [0, 0, 1, 1], [], []>} : vector<68x4xbf16>, vector<4x8xbf16>, vector<68x8xf32> -> vector<68x8xf32>
    %101 = arith.addf %94, %100 : vector<68x8xf32>
    %c0_81 = arith.constant 0 : index
    %c274 = arith.constant 274 : index
    %c0_82 = arith.constant 0 : index
    %102 = vector.load %arg1[%c0_81, %c274, %c0_82] : memref<1x362x4xf32, #tpu.memory_space<vmem>>, vector<1x68x4xf32>
    %103 = vector.shape_cast %102 : vector<1x68x4xf32> to vector<68x4xf32>
    %104 = arith.truncf %103 : vector<68x4xf32> to vector<68x4xbf16>
    %c3_83 = arith.constant 3 : index
    %c0_84 = arith.constant 0 : index
    %c0_85 = arith.constant 0 : index
    %105 = vector.load %arg2[%c3_83, %c0_84, %c0_85] : memref<9x4x8xbf16, #tpu.memory_space<vmem>>, vector<1x4x8xbf16>
    %106 = vector.shape_cast %105 : vector<1x4x8xbf16> to vector<4x8xbf16>
    %cst_86 = arith.constant dense<0.000000e+00> : vector<68x8xf32>
    %107 = tpu.matmul %104, %106, %cst_86 {dimension_numbers = #tpu.dot_dimension_numbers<[1], [0], [0], [1], [0, 0, 1, 1], [], []>} : vector<68x4xbf16>, vector<4x8xbf16>, vector<68x8xf32> -> vector<68x8xf32>
    %108 = arith.addf %101, %107 : vector<68x8xf32>
    %c0_87 = arith.constant 0 : index
    %c275 = arith.constant 275 : index
    %c0_88 = arith.constant 0 : index
    %109 = vector.load %arg1[%c0_87, %c275, %c0_88] : memref<1x362x4xf32, #tpu.memory_space<vmem>>, vector<1x68x4xf32>
    %110 = vector.shape_cast %109 : vector<1x68x4xf32> to vector<68x4xf32>
    %111 = arith.truncf %110 : vector<68x4xf32> to vector<68x4xbf16>
    %c4_89 = arith.constant 4 : index
    %c0_90 = arith.constant 0 : index
    %c0_91 = arith.constant 0 : index
    %112 = vector.load %arg2[%c4_89, %c0_90, %c0_91] : memref<9x4x8xbf16, #tpu.memory_space<vmem>>, vector<1x4x8xbf16>
    %113 = vector.shape_cast %112 : vector<1x4x8xbf16> to vector<4x8xbf16>
    %cst_92 = arith.constant dense<0.000000e+00> : vector<68x8xf32>
    %114 = tpu.matmul %111, %113, %cst_92 {dimension_numbers = #tpu.dot_dimension_numbers<[1], [0], [0], [1], [0, 0, 1, 1], [], []>} : vector<68x4xbf16>, vector<4x8xbf16>, vector<68x8xf32> -> vector<68x8xf32>
    %115 = arith.addf %108, %114 : vector<68x8xf32>
    %c0_93 = arith.constant 0 : index
    %c276 = arith.constant 276 : index
    %c0_94 = arith.constant 0 : index
    %116 = vector.load %arg1[%c0_93, %c276, %c0_94] : memref<1x362x4xf32, #tpu.memory_space<vmem>>, vector<1x68x4xf32>
    %117 = vector.shape_cast %116 : vector<1x68x4xf32> to vector<68x4xf32>
    %118 = arith.truncf %117 : vector<68x4xf32> to vector<68x4xbf16>
    %c5_95 = arith.constant 5 : index
    %c0_96 = arith.constant 0 : index
    %c0_97 = arith.constant 0 : index
    %119 = vector.load %arg2[%c5_95, %c0_96, %c0_97] : memref<9x4x8xbf16, #tpu.memory_space<vmem>>, vector<1x4x8xbf16>
    %120 = vector.shape_cast %119 : vector<1x4x8xbf16> to vector<4x8xbf16>
    %cst_98 = arith.constant dense<0.000000e+00> : vector<68x8xf32>
    %121 = tpu.matmul %118, %120, %cst_98 {dimension_numbers = #tpu.dot_dimension_numbers<[1], [0], [0], [1], [0, 0, 1, 1], [], []>} : vector<68x4xbf16>, vector<4x8xbf16>, vector<68x8xf32> -> vector<68x8xf32>
    %122 = arith.addf %115, %121 : vector<68x8xf32>
    %c0_99 = arith.constant 0 : index
    %c292 = arith.constant 292 : index
    %c0_100 = arith.constant 0 : index
    %123 = vector.load %arg1[%c0_99, %c292, %c0_100] : memref<1x362x4xf32, #tpu.memory_space<vmem>>, vector<1x68x4xf32>
    %124 = vector.shape_cast %123 : vector<1x68x4xf32> to vector<68x4xf32>
    %125 = arith.truncf %124 : vector<68x4xf32> to vector<68x4xbf16>
    %c6_101 = arith.constant 6 : index
    %c0_102 = arith.constant 0 : index
    %c0_103 = arith.constant 0 : index
    %126 = vector.load %arg2[%c6_101, %c0_102, %c0_103] : memref<9x4x8xbf16, #tpu.memory_space<vmem>>, vector<1x4x8xbf16>
    %127 = vector.shape_cast %126 : vector<1x4x8xbf16> to vector<4x8xbf16>
    %cst_104 = arith.constant dense<0.000000e+00> : vector<68x8xf32>
    %128 = tpu.matmul %125, %127, %cst_104 {dimension_numbers = #tpu.dot_dimension_numbers<[1], [0], [0], [1], [0, 0, 1, 1], [], []>} : vector<68x4xbf16>, vector<4x8xbf16>, vector<68x8xf32> -> vector<68x8xf32>
    %129 = arith.addf %122, %128 : vector<68x8xf32>
    %c0_105 = arith.constant 0 : index
    %c293 = arith.constant 293 : index
    %c0_106 = arith.constant 0 : index
    %130 = vector.load %arg1[%c0_105, %c293, %c0_106] : memref<1x362x4xf32, #tpu.memory_space<vmem>>, vector<1x68x4xf32>
    %131 = vector.shape_cast %130 : vector<1x68x4xf32> to vector<68x4xf32>
    %132 = arith.truncf %131 : vector<68x4xf32> to vector<68x4xbf16>
    %c7_107 = arith.constant 7 : index
    %c0_108 = arith.constant 0 : index
    %c0_109 = arith.constant 0 : index
    %133 = vector.load %arg2[%c7_107, %c0_108, %c0_109] : memref<9x4x8xbf16, #tpu.memory_space<vmem>>, vector<1x4x8xbf16>
    %134 = vector.shape_cast %133 : vector<1x4x8xbf16> to vector<4x8xbf16>
    %cst_110 = arith.constant dense<0.000000e+00> : vector<68x8xf32>
    %135 = tpu.matmul %132, %134, %cst_110 {dimension_numbers = #tpu.dot_dimension_numbers<[1], [0], [0], [1], [0, 0, 1, 1], [], []>} : vector<68x4xbf16>, vector<4x8xbf16>, vector<68x8xf32> -> vector<68x8xf32>
    %136 = arith.addf %129, %135 : vector<68x8xf32>
    %c0_111 = arith.constant 0 : index
    %c294 = arith.constant 294 : index
    %c0_112 = arith.constant 0 : index
    %137 = vector.load %arg1[%c0_111, %c294, %c0_112] : memref<1x362x4xf32, #tpu.memory_space<vmem>>, vector<1x68x4xf32>
    %138 = vector.shape_cast %137 : vector<1x68x4xf32> to vector<68x4xf32>
    %139 = arith.truncf %138 : vector<68x4xf32> to vector<68x4xbf16>
    %c8_113 = arith.constant 8 : index
    %c0_114 = arith.constant 0 : index
    %c0_115 = arith.constant 0 : index
    %140 = vector.load %arg2[%c8_113, %c0_114, %c0_115] : memref<9x4x8xbf16, #tpu.memory_space<vmem>>, vector<1x4x8xbf16>
    %141 = vector.shape_cast %140 : vector<1x4x8xbf16> to vector<4x8xbf16>
    %cst_116 = arith.constant dense<0.000000e+00> : vector<68x8xf32>
    %142 = tpu.matmul %139, %141, %cst_116 {dimension_numbers = #tpu.dot_dimension_numbers<[1], [0], [0], [1], [0, 0, 1, 1], [], []>} : vector<68x4xbf16>, vector<4x8xbf16>, vector<68x8xf32> -> vector<68x8xf32>
    %143 = arith.addf %136, %142 : vector<68x8xf32>
    %c0_117 = arith.constant 0 : index
    %c0_118 = arith.constant 0 : index
    %144 = vector.load %arg3[%c0_117, %c0_118] : memref<1x8xf32, #tpu.memory_space<vmem>>, vector<1x8xf32>
    %145 = vector.broadcast %144 : vector<1x8xf32> to vector<68x8xf32>
    %146 = arith.mulf %143, %145 : vector<68x8xf32>
    %c0_119 = arith.constant 0 : index
    %c0_120 = arith.constant 0 : index
    %147 = vector.load %arg4[%c0_119, %c0_120] : memref<1x8xf32, #tpu.memory_space<vmem>>, vector<1x8xf32>
    %148 = vector.broadcast %147 : vector<1x8xf32> to vector<68x8xf32>
    %149 = arith.addf %146, %148 : vector<68x8xf32>
    %cst_121 = arith.constant 0.000000e+00 : f32
    %150 = vector.broadcast %cst_121 : f32 to vector<68x8xf32>
    %151 = arith.maximumf %149, %150 : vector<68x8xf32>
    %c256_122 = arith.constant 256 : index
    %c0_123 = arith.constant 0 : index
    %152 = vector.load %arg8[%c256_122, %c0_123] : memref<324x1xf32, #tpu.memory_space<vmem>>, vector<68x1xf32>
    %153 = vector.broadcast %152 : vector<68x1xf32> to vector<68x8xf32>
    %154 = arith.mulf %151, %153 : vector<68x8xf32>
    %c275_124 = arith.constant 275 : index
    %c0_125 = arith.constant 0 : index
    %155 = vector.load %arg10[%c275_124, %c0_125] : memref<362x8xf32, #tpu.memory_space<vmem>>, vector<68x8xf32>
    tpu.vector_store %arg10[%c275_124, %c0_125], %154 {strides = array<i32>} : memref<362x8xf32, #tpu.memory_space<vmem>>, vector<68x8xf32>,
    %cst_126 = arith.constant 0.000000e+00 : f32
    %156 = vector.broadcast %cst_126 : f32 to vector<256x8xf32>
    %c0_127 = arith.constant 0 : index
    %c0_128 = arith.constant 0 : index
    %157 = vector.load %arg10[%c0_127, %c0_128] : memref<362x8xf32, #tpu.memory_space<vmem>>, vector<256x8xf32>
    %158 = arith.truncf %157 : vector<256x8xf32> to vector<256x8xbf16>
    %c0_129 = arith.constant 0 : index
    %c0_130 = arith.constant 0 : index
    %c0_131 = arith.constant 0 : index
    %159 = vector.load %arg5[%c0_129, %c0_130, %c0_131] : memref<9x8x8xbf16, #tpu.memory_space<vmem>>, vector<1x8x8xbf16>
    %160 = vector.shape_cast %159 : vector<1x8x8xbf16> to vector<8x8xbf16>
    %cst_132 = arith.constant dense<0.000000e+00> : vector<256x8xf32>
    %161 = tpu.matmul %158, %160, %cst_132 {dimension_numbers = #tpu.dot_dimension_numbers<[1], [0], [0], [1], [0, 0, 1, 1], [], []>} : vector<256x8xbf16>, vector<8x8xbf16>, vector<256x8xf32> -> vector<256x8xf32>
    %162 = arith.addf %156, %161 : vector<256x8xf32>
    %c1_133 = arith.constant 1 : index
    %c0_134 = arith.constant 0 : index
    %163 = vector.load %arg10[%c1_133, %c0_134] : memref<362x8xf32, #tpu.memory_space<vmem>>, vector<256x8xf32>
    %164 = arith.truncf %163 : vector<256x8xf32> to vector<256x8xbf16>
    %c1_135 = arith.constant 1 : index
    %c0_136 = arith.constant 0 : index
    %c0_137 = arith.constant 0 : index
    %165 = vector.load %arg5[%c1_135, %c0_136, %c0_137] : memref<9x8x8xbf16, #tpu.memory_space<vmem>>, vector<1x8x8xbf16>
    %166 = vector.shape_cast %165 : vector<1x8x8xbf16> to vector<8x8xbf16>
    %cst_138 = arith.constant dense<0.000000e+00> : vector<256x8xf32>
    %167 = tpu.matmul %164, %166, %cst_138 {dimension_numbers = #tpu.dot_dimension_numbers<[1], [0], [0], [1], [0, 0, 1, 1], [], []>} : vector<256x8xbf16>, vector<8x8xbf16>, vector<256x8xf32> -> vector<256x8xf32>
    %168 = arith.addf %162, %167 : vector<256x8xf32>
    %c2_139 = arith.constant 2 : index
    %c0_140 = arith.constant 0 : index
    %169 = vector.load %arg10[%c2_139, %c0_140] : memref<362x8xf32, #tpu.memory_space<vmem>>, vector<256x8xf32>
    %170 = arith.truncf %169 : vector<256x8xf32> to vector<256x8xbf16>
    %c2_141 = arith.constant 2 : index
    %c0_142 = arith.constant 0 : index
    %c0_143 = arith.constant 0 : index
    %171 = vector.load %arg5[%c2_141, %c0_142, %c0_143] : memref<9x8x8xbf16, #tpu.memory_space<vmem>>, vector<1x8x8xbf16>
    %172 = vector.shape_cast %171 : vector<1x8x8xbf16> to vector<8x8xbf16>
    %cst_144 = arith.constant dense<0.000000e+00> : vector<256x8xf32>
    %173 = tpu.matmul %170, %172, %cst_144 {dimension_numbers = #tpu.dot_dimension_numbers<[1], [0], [0], [1], [0, 0, 1, 1], [], []>} : vector<256x8xbf16>, vector<8x8xbf16>, vector<256x8xf32> -> vector<256x8xf32>
    %174 = arith.addf %168, %173 : vector<256x8xf32>
    %c18_145 = arith.constant 18 : index
    %c0_146 = arith.constant 0 : index
    %175 = vector.load %arg10[%c18_145, %c0_146] : memref<362x8xf32, #tpu.memory_space<vmem>>, vector<256x8xf32>
    %176 = arith.truncf %175 : vector<256x8xf32> to vector<256x8xbf16>
    %c3_147 = arith.constant 3 : index
    %c0_148 = arith.constant 0 : index
    %c0_149 = arith.constant 0 : index
    %177 = vector.load %arg5[%c3_147, %c0_148, %c0_149] : memref<9x8x8xbf16, #tpu.memory_space<vmem>>, vector<1x8x8xbf16>
    %178 = vector.shape_cast %177 : vector<1x8x8xbf16> to vector<8x8xbf16>
    %cst_150 = arith.constant dense<0.000000e+00> : vector<256x8xf32>
    %179 = tpu.matmul %176, %178, %cst_150 {dimension_numbers = #tpu.dot_dimension_numbers<[1], [0], [0], [1], [0, 0, 1, 1], [], []>} : vector<256x8xbf16>, vector<8x8xbf16>, vector<256x8xf32> -> vector<256x8xf32>
    %180 = arith.addf %174, %179 : vector<256x8xf32>
    %c19_151 = arith.constant 19 : index
    %c0_152 = arith.constant 0 : index
    %181 = vector.load %arg10[%c19_151, %c0_152] : memref<362x8xf32, #tpu.memory_space<vmem>>, vector<256x8xf32>
    %182 = arith.truncf %181 : vector<256x8xf32> to vector<256x8xbf16>
    %c4_153 = arith.constant 4 : index
    %c0_154 = arith.constant 0 : index
    %c0_155 = arith.constant 0 : index
    %183 = vector.load %arg5[%c4_153, %c0_154, %c0_155] : memref<9x8x8xbf16, #tpu.memory_space<vmem>>, vector<1x8x8xbf16>
    %184 = vector.shape_cast %183 : vector<1x8x8xbf16> to vector<8x8xbf16>
    %cst_156 = arith.constant dense<0.000000e+00> : vector<256x8xf32>
    %185 = tpu.matmul %182, %184, %cst_156 {dimension_numbers = #tpu.dot_dimension_numbers<[1], [0], [0], [1], [0, 0, 1, 1], [], []>} : vector<256x8xbf16>, vector<8x8xbf16>, vector<256x8xf32> -> vector<256x8xf32>
    %186 = arith.addf %180, %185 : vector<256x8xf32>
    %c20_157 = arith.constant 20 : index
    %c0_158 = arith.constant 0 : index
    %187 = vector.load %arg10[%c20_157, %c0_158] : memref<362x8xf32, #tpu.memory_space<vmem>>, vector<256x8xf32>
    %188 = arith.truncf %187 : vector<256x8xf32> to vector<256x8xbf16>
    %c5_159 = arith.constant 5 : index
    %c0_160 = arith.constant 0 : index
    %c0_161 = arith.constant 0 : index
    %189 = vector.load %arg5[%c5_159, %c0_160, %c0_161] : memref<9x8x8xbf16, #tpu.memory_space<vmem>>, vector<1x8x8xbf16>
    %190 = vector.shape_cast %189 : vector<1x8x8xbf16> to vector<8x8xbf16>
    %cst_162 = arith.constant dense<0.000000e+00> : vector<256x8xf32>
    %191 = tpu.matmul %188, %190, %cst_162 {dimension_numbers = #tpu.dot_dimension_numbers<[1], [0], [0], [1], [0, 0, 1, 1], [], []>} : vector<256x8xbf16>, vector<8x8xbf16>, vector<256x8xf32> -> vector<256x8xf32>
    %192 = arith.addf %186, %191 : vector<256x8xf32>
    %c36_163 = arith.constant 36 : index
    %c0_164 = arith.constant 0 : index
    %193 = vector.load %arg10[%c36_163, %c0_164] : memref<362x8xf32, #tpu.memory_space<vmem>>, vector<256x8xf32>
    %194 = arith.truncf %193 : vector<256x8xf32> to vector<256x8xbf16>
    %c6_165 = arith.constant 6 : index
    %c0_166 = arith.constant 0 : index
    %c0_167 = arith.constant 0 : index
    %195 = vector.load %arg5[%c6_165, %c0_166, %c0_167] : memref<9x8x8xbf16, #tpu.memory_space<vmem>>, vector<1x8x8xbf16>
    %196 = vector.shape_cast %195 : vector<1x8x8xbf16> to vector<8x8xbf16>
    %cst_168 = arith.constant dense<0.000000e+00> : vector<256x8xf32>
    %197 = tpu.matmul %194, %196, %cst_168 {dimension_numbers = #tpu.dot_dimension_numbers<[1], [0], [0], [1], [0, 0, 1, 1], [], []>} : vector<256x8xbf16>, vector<8x8xbf16>, vector<256x8xf32> -> vector<256x8xf32>
    %198 = arith.addf %192, %197 : vector<256x8xf32>
    %c37_169 = arith.constant 37 : index
    %c0_170 = arith.constant 0 : index
    %199 = vector.load %arg10[%c37_169, %c0_170] : memref<362x8xf32, #tpu.memory_space<vmem>>, vector<256x8xf32>
    %200 = arith.truncf %199 : vector<256x8xf32> to vector<256x8xbf16>
    %c7_171 = arith.constant 7 : index
    %c0_172 = arith.constant 0 : index
    %c0_173 = arith.constant 0 : index
    %201 = vector.load %arg5[%c7_171, %c0_172, %c0_173] : memref<9x8x8xbf16, #tpu.memory_space<vmem>>, vector<1x8x8xbf16>
    %202 = vector.shape_cast %201 : vector<1x8x8xbf16> to vector<8x8xbf16>
    %cst_174 = arith.constant dense<0.000000e+00> : vector<256x8xf32>
    %203 = tpu.matmul %200, %202, %cst_174 {dimension_numbers = #tpu.dot_dimension_numbers<[1], [0], [0], [1], [0, 0, 1, 1], [], []>} : vector<256x8xbf16>, vector<8x8xbf16>, vector<256x8xf32> -> vector<256x8xf32>
    %204 = arith.addf %198, %203 : vector<256x8xf32>
    %c38_175 = arith.constant 38 : index
    %c0_176 = arith.constant 0 : index
    %205 = vector.load %arg10[%c38_175, %c0_176] : memref<362x8xf32, #tpu.memory_space<vmem>>, vector<256x8xf32>
    %206 = arith.truncf %205 : vector<256x8xf32> to vector<256x8xbf16>
    %c8_177 = arith.constant 8 : index
    %c0_178 = arith.constant 0 : index
    %c0_179 = arith.constant 0 : index
    %207 = vector.load %arg5[%c8_177, %c0_178, %c0_179] : memref<9x8x8xbf16, #tpu.memory_space<vmem>>, vector<1x8x8xbf16>
    %208 = vector.shape_cast %207 : vector<1x8x8xbf16> to vector<8x8xbf16>
    %cst_180 = arith.constant dense<0.000000e+00> : vector<256x8xf32>
    %209 = tpu.matmul %206, %208, %cst_180 {dimension_numbers = #tpu.dot_dimension_numbers<[1], [0], [0], [1], [0, 0, 1, 1], [], []>} : vector<256x8xbf16>, vector<8x8xbf16>, vector<256x8xf32> -> vector<256x8xf32>
    %210 = arith.addf %204, %209 : vector<256x8xf32>
    %c0_181 = arith.constant 0 : index
    %c0_182 = arith.constant 0 : index
    %211 = vector.load %arg6[%c0_181, %c0_182] : memref<1x8xf32, #tpu.memory_space<vmem>>, vector<1x8xf32>
    %212 = vector.broadcast %211 : vector<1x8xf32> to vector<256x8xf32>
    %213 = arith.mulf %210, %212 : vector<256x8xf32>
    %c0_183 = arith.constant 0 : index
    %c0_184 = arith.constant 0 : index
    %214 = vector.load %arg7[%c0_183, %c0_184] : memref<1x8xf32, #tpu.memory_space<vmem>>, vector<1x8xf32>
    %215 = vector.broadcast %214 : vector<1x8xf32> to vector<256x8xf32>
    %216 = arith.addf %213, %215 : vector<256x8xf32>
    %cst_185 = arith.constant 0.000000e+00 : f32
    %217 = vector.broadcast %cst_185 : f32 to vector<256x8xf32>
    %218 = arith.maximumf %216, %217 : vector<256x8xf32>
    %c0_186 = arith.constant 0 : index
    %c0_187 = arith.constant 0 : index
    %219 = vector.load %arg11[%c0_186, %c0_187] : memref<324x8xf32, #tpu.memory_space<vmem>>, vector<256x8xf32>
    tpu.vector_store %arg11[%c0_186, %c0_187], %218 {strides = array<i32>} : memref<324x8xf32, #tpu.memory_space<vmem>>, vector<256x8xf32>,
    %cst_188 = arith.constant 0.000000e+00 : f32
    %220 = vector.broadcast %cst_188 : f32 to vector<68x8xf32>
    %c256_189 = arith.constant 256 : index
    %c0_190 = arith.constant 0 : index
    %221 = vector.load %arg10[%c256_189, %c0_190] : memref<362x8xf32, #tpu.memory_space<vmem>>, vector<68x8xf32>
    %222 = arith.truncf %221 : vector<68x8xf32> to vector<68x8xbf16>
    %c0_191 = arith.constant 0 : index
    %c0_192 = arith.constant 0 : index
    %c0_193 = arith.constant 0 : index
    %223 = vector.load %arg5[%c0_191, %c0_192, %c0_193] : memref<9x8x8xbf16, #tpu.memory_space<vmem>>, vector<1x8x8xbf16>
    %224 = vector.shape_cast %223 : vector<1x8x8xbf16> to vector<8x8xbf16>
    %cst_194 = arith.constant dense<0.000000e+00> : vector<68x8xf32>
    %225 = tpu.matmul %222, %224, %cst_194 {dimension_numbers = #tpu.dot_dimension_numbers<[1], [0], [0], [1], [0, 0, 1, 1], [], []>} : vector<68x8xbf16>, vector<8x8xbf16>, vector<68x8xf32> -> vector<68x8xf32>
    %226 = arith.addf %220, %225 : vector<68x8xf32>
    %c257_195 = arith.constant 257 : index
    %c0_196 = arith.constant 0 : index
    %227 = vector.load %arg10[%c257_195, %c0_196] : memref<362x8xf32, #tpu.memory_space<vmem>>, vector<68x8xf32>
    %228 = arith.truncf %227 : vector<68x8xf32> to vector<68x8xbf16>
    %c1_197 = arith.constant 1 : index
    %c0_198 = arith.constant 0 : index
    %c0_199 = arith.constant 0 : index
    %229 = vector.load %arg5[%c1_197, %c0_198, %c0_199] : memref<9x8x8xbf16, #tpu.memory_space<vmem>>, vector<1x8x8xbf16>
    %230 = vector.shape_cast %229 : vector<1x8x8xbf16> to vector<8x8xbf16>
    %cst_200 = arith.constant dense<0.000000e+00> : vector<68x8xf32>
    %231 = tpu.matmul %228, %230, %cst_200 {dimension_numbers = #tpu.dot_dimension_numbers<[1], [0], [0], [1], [0, 0, 1, 1], [], []>} : vector<68x8xbf16>, vector<8x8xbf16>, vector<68x8xf32> -> vector<68x8xf32>
    %232 = arith.addf %226, %231 : vector<68x8xf32>
    %c258_201 = arith.constant 258 : index
    %c0_202 = arith.constant 0 : index
    %233 = vector.load %arg10[%c258_201, %c0_202] : memref<362x8xf32, #tpu.memory_space<vmem>>, vector<68x8xf32>
    %234 = arith.truncf %233 : vector<68x8xf32> to vector<68x8xbf16>
    %c2_203 = arith.constant 2 : index
    %c0_204 = arith.constant 0 : index
    %c0_205 = arith.constant 0 : index
    %235 = vector.load %arg5[%c2_203, %c0_204, %c0_205] : memref<9x8x8xbf16, #tpu.memory_space<vmem>>, vector<1x8x8xbf16>
    %236 = vector.shape_cast %235 : vector<1x8x8xbf16> to vector<8x8xbf16>
    %cst_206 = arith.constant dense<0.000000e+00> : vector<68x8xf32>
    %237 = tpu.matmul %234, %236, %cst_206 {dimension_numbers = #tpu.dot_dimension_numbers<[1], [0], [0], [1], [0, 0, 1, 1], [], []>} : vector<68x8xbf16>, vector<8x8xbf16>, vector<68x8xf32> -> vector<68x8xf32>
    %238 = arith.addf %232, %237 : vector<68x8xf32>
    %c274_207 = arith.constant 274 : index
    %c0_208 = arith.constant 0 : index
    %239 = vector.load %arg10[%c274_207, %c0_208] : memref<362x8xf32, #tpu.memory_space<vmem>>, vector<68x8xf32>
    %240 = arith.truncf %239 : vector<68x8xf32> to vector<68x8xbf16>
    %c3_209 = arith.constant 3 : index
    %c0_210 = arith.constant 0 : index
    %c0_211 = arith.constant 0 : index
    %241 = vector.load %arg5[%c3_209, %c0_210, %c0_211] : memref<9x8x8xbf16, #tpu.memory_space<vmem>>, vector<1x8x8xbf16>
    %242 = vector.shape_cast %241 : vector<1x8x8xbf16> to vector<8x8xbf16>
    %cst_212 = arith.constant dense<0.000000e+00> : vector<68x8xf32>
    %243 = tpu.matmul %240, %242, %cst_212 {dimension_numbers = #tpu.dot_dimension_numbers<[1], [0], [0], [1], [0, 0, 1, 1], [], []>} : vector<68x8xbf16>, vector<8x8xbf16>, vector<68x8xf32> -> vector<68x8xf32>
    %244 = arith.addf %238, %243 : vector<68x8xf32>
    %c275_213 = arith.constant 275 : index
    %c0_214 = arith.constant 0 : index
    %245 = vector.load %arg10[%c275_213, %c0_214] : memref<362x8xf32, #tpu.memory_space<vmem>>, vector<68x8xf32>
    %246 = arith.truncf %245 : vector<68x8xf32> to vector<68x8xbf16>
    %c4_215 = arith.constant 4 : index
    %c0_216 = arith.constant 0 : index
    %c0_217 = arith.constant 0 : index
    %247 = vector.load %arg5[%c4_215, %c0_216, %c0_217] : memref<9x8x8xbf16, #tpu.memory_space<vmem>>, vector<1x8x8xbf16>
    %248 = vector.shape_cast %247 : vector<1x8x8xbf16> to vector<8x8xbf16>
    %cst_218 = arith.constant dense<0.000000e+00> : vector<68x8xf32>
    %249 = tpu.matmul %246, %248, %cst_218 {dimension_numbers = #tpu.dot_dimension_numbers<[1], [0], [0], [1], [0, 0, 1, 1], [], []>} : vector<68x8xbf16>, vector<8x8xbf16>, vector<68x8xf32> -> vector<68x8xf32>
    %250 = arith.addf %244, %249 : vector<68x8xf32>
    %c276_219 = arith.constant 276 : index
    %c0_220 = arith.constant 0 : index
    %251 = vector.load %arg10[%c276_219, %c0_220] : memref<362x8xf32, #tpu.memory_space<vmem>>, vector<68x8xf32>
    %252 = arith.truncf %251 : vector<68x8xf32> to vector<68x8xbf16>
    %c5_221 = arith.constant 5 : index
    %c0_222 = arith.constant 0 : index
    %c0_223 = arith.constant 0 : index
    %253 = vector.load %arg5[%c5_221, %c0_222, %c0_223] : memref<9x8x8xbf16, #tpu.memory_space<vmem>>, vector<1x8x8xbf16>
    %254 = vector.shape_cast %253 : vector<1x8x8xbf16> to vector<8x8xbf16>
    %cst_224 = arith.constant dense<0.000000e+00> : vector<68x8xf32>
    %255 = tpu.matmul %252, %254, %cst_224 {dimension_numbers = #tpu.dot_dimension_numbers<[1], [0], [0], [1], [0, 0, 1, 1], [], []>} : vector<68x8xbf16>, vector<8x8xbf16>, vector<68x8xf32> -> vector<68x8xf32>
    %256 = arith.addf %250, %255 : vector<68x8xf32>
    %c292_225 = arith.constant 292 : index
    %c0_226 = arith.constant 0 : index
    %257 = vector.load %arg10[%c292_225, %c0_226] : memref<362x8xf32, #tpu.memory_space<vmem>>, vector<68x8xf32>
    %258 = arith.truncf %257 : vector<68x8xf32> to vector<68x8xbf16>
    %c6_227 = arith.constant 6 : index
    %c0_228 = arith.constant 0 : index
    %c0_229 = arith.constant 0 : index
    %259 = vector.load %arg5[%c6_227, %c0_228, %c0_229] : memref<9x8x8xbf16, #tpu.memory_space<vmem>>, vector<1x8x8xbf16>
    %260 = vector.shape_cast %259 : vector<1x8x8xbf16> to vector<8x8xbf16>
    %cst_230 = arith.constant dense<0.000000e+00> : vector<68x8xf32>
    %261 = tpu.matmul %258, %260, %cst_230 {dimension_numbers = #tpu.dot_dimension_numbers<[1], [0], [0], [1], [0, 0, 1, 1], [], []>} : vector<68x8xbf16>, vector<8x8xbf16>, vector<68x8xf32> -> vector<68x8xf32>
    %262 = arith.addf %256, %261 : vector<68x8xf32>
    %c293_231 = arith.constant 293 : index
    %c0_232 = arith.constant 0 : index
    %263 = vector.load %arg10[%c293_231, %c0_232] : memref<362x8xf32, #tpu.memory_space<vmem>>, vector<68x8xf32>
    %264 = arith.truncf %263 : vector<68x8xf32> to vector<68x8xbf16>
    %c7_233 = arith.constant 7 : index
    %c0_234 = arith.constant 0 : index
    %c0_235 = arith.constant 0 : index
    %265 = vector.load %arg5[%c7_233, %c0_234, %c0_235] : memref<9x8x8xbf16, #tpu.memory_space<vmem>>, vector<1x8x8xbf16>
    %266 = vector.shape_cast %265 : vector<1x8x8xbf16> to vector<8x8xbf16>
    %cst_236 = arith.constant dense<0.000000e+00> : vector<68x8xf32>
    %267 = tpu.matmul %264, %266, %cst_236 {dimension_numbers = #tpu.dot_dimension_numbers<[1], [0], [0], [1], [0, 0, 1, 1], [], []>} : vector<68x8xbf16>, vector<8x8xbf16>, vector<68x8xf32> -> vector<68x8xf32>
    %268 = arith.addf %262, %267 : vector<68x8xf32>
    %c294_237 = arith.constant 294 : index
    %c0_238 = arith.constant 0 : index
    %269 = vector.load %arg10[%c294_237, %c0_238] : memref<362x8xf32, #tpu.memory_space<vmem>>, vector<68x8xf32>
    %270 = arith.truncf %269 : vector<68x8xf32> to vector<68x8xbf16>
    %c8_239 = arith.constant 8 : index
    %c0_240 = arith.constant 0 : index
    %c0_241 = arith.constant 0 : index
    %271 = vector.load %arg5[%c8_239, %c0_240, %c0_241] : memref<9x8x8xbf16, #tpu.memory_space<vmem>>, vector<1x8x8xbf16>
    %272 = vector.shape_cast %271 : vector<1x8x8xbf16> to vector<8x8xbf16>
    %cst_242 = arith.constant dense<0.000000e+00> : vector<68x8xf32>
    %273 = tpu.matmul %270, %272, %cst_242 {dimension_numbers = #tpu.dot_dimension_numbers<[1], [0], [0], [1], [0, 0, 1, 1], [], []>} : vector<68x8xbf16>, vector<8x8xbf16>, vector<68x8xf32> -> vector<68x8xf32>
    %274 = arith.addf %268, %273 : vector<68x8xf32>
    %c0_243 = arith.constant 0 : index
    %c0_244 = arith.constant 0 : index
    %275 = vector.load %arg6[%c0_243, %c0_244] : memref<1x8xf32, #tpu.memory_space<vmem>>, vector<1x8xf32>
    %276 = vector.broadcast %275 : vector<1x8xf32> to vector<68x8xf32>
    %277 = arith.mulf %274, %276 : vector<68x8xf32>
    %c0_245 = arith.constant 0 : index
    %c0_246 = arith.constant 0 : index
    %278 = vector.load %arg7[%c0_245, %c0_246] : memref<1x8xf32, #tpu.memory_space<vmem>>, vector<1x8xf32>
    %279 = vector.broadcast %278 : vector<1x8xf32> to vector<68x8xf32>
    %280 = arith.addf %277, %279 : vector<68x8xf32>
    %cst_247 = arith.constant 0.000000e+00 : f32
    %281 = vector.broadcast %cst_247 : f32 to vector<68x8xf32>
    %282 = arith.maximumf %280, %281 : vector<68x8xf32>
    %c256_248 = arith.constant 256 : index
    %c0_249 = arith.constant 0 : index
    %283 = vector.load %arg11[%c256_248, %c0_249] : memref<324x8xf32, #tpu.memory_space<vmem>>, vector<68x8xf32>
    tpu.vector_store %arg11[%c256_248, %c0_249], %282 {strides = array<i32>} : memref<324x8xf32, #tpu.memory_space<vmem>>, vector<68x8xf32>,
    %c19_250 = arith.constant 19 : index
    %c0_251 = arith.constant 0 : index
    %284 = tpu.strided_load %arg11[%c19_250, %c0_251] {strides = array<i32: 2, 1>} : memref<324x8xf32, #tpu.memory_space<vmem>>, vector<8x8xf32>
    %c20_252 = arith.constant 20 : index
    %c0_253 = arith.constant 0 : index
    %285 = tpu.strided_load %arg11[%c20_252, %c0_253] {strides = array<i32: 2, 1>} : memref<324x8xf32, #tpu.memory_space<vmem>>, vector<8x8xf32>
    %286 = arith.addf %284, %285 : vector<8x8xf32>
    %c37_254 = arith.constant 37 : index
    %c0_255 = arith.constant 0 : index
    %287 = tpu.strided_load %arg11[%c37_254, %c0_255] {strides = array<i32: 2, 1>} : memref<324x8xf32, #tpu.memory_space<vmem>>, vector<8x8xf32>
    %288 = arith.addf %286, %287 : vector<8x8xf32>
    %c38_256 = arith.constant 38 : index
    %c0_257 = arith.constant 0 : index
    %289 = tpu.strided_load %arg11[%c38_256, %c0_257] {strides = array<i32: 2, 1>} : memref<324x8xf32, #tpu.memory_space<vmem>>, vector<8x8xf32>
    %290 = arith.addf %288, %289 : vector<8x8xf32>
    %c55 = arith.constant 55 : index
    %c0_258 = arith.constant 0 : index
    %291 = tpu.strided_load %arg11[%c55, %c0_258] {strides = array<i32: 2, 1>} : memref<324x8xf32, #tpu.memory_space<vmem>>, vector<8x8xf32>
    %c56 = arith.constant 56 : index
    %c0_259 = arith.constant 0 : index
    %292 = tpu.strided_load %arg11[%c56, %c0_259] {strides = array<i32: 2, 1>} : memref<324x8xf32, #tpu.memory_space<vmem>>, vector<8x8xf32>
    %293 = arith.addf %291, %292 : vector<8x8xf32>
    %c73 = arith.constant 73 : index
    %c0_260 = arith.constant 0 : index
    %294 = tpu.strided_load %arg11[%c73, %c0_260] {strides = array<i32: 2, 1>} : memref<324x8xf32, #tpu.memory_space<vmem>>, vector<8x8xf32>
    %295 = arith.addf %293, %294 : vector<8x8xf32>
    %c74 = arith.constant 74 : index
    %c0_261 = arith.constant 0 : index
    %296 = tpu.strided_load %arg11[%c74, %c0_261] {strides = array<i32: 2, 1>} : memref<324x8xf32, #tpu.memory_space<vmem>>, vector<8x8xf32>
    %297 = arith.addf %295, %296 : vector<8x8xf32>
    %c91 = arith.constant 91 : index
    %c0_262 = arith.constant 0 : index
    %298 = tpu.strided_load %arg11[%c91, %c0_262] {strides = array<i32: 2, 1>} : memref<324x8xf32, #tpu.memory_space<vmem>>, vector<8x8xf32>
    %c92 = arith.constant 92 : index
    %c0_263 = arith.constant 0 : index
    %299 = tpu.strided_load %arg11[%c92, %c0_263] {strides = array<i32: 2, 1>} : memref<324x8xf32, #tpu.memory_space<vmem>>, vector<8x8xf32>
    %300 = arith.addf %298, %299 : vector<8x8xf32>
    %c109 = arith.constant 109 : index
    %c0_264 = arith.constant 0 : index
    %301 = tpu.strided_load %arg11[%c109, %c0_264] {strides = array<i32: 2, 1>} : memref<324x8xf32, #tpu.memory_space<vmem>>, vector<8x8xf32>
    %302 = arith.addf %300, %301 : vector<8x8xf32>
    %c110 = arith.constant 110 : index
    %c0_265 = arith.constant 0 : index
    %303 = tpu.strided_load %arg11[%c110, %c0_265] {strides = array<i32: 2, 1>} : memref<324x8xf32, #tpu.memory_space<vmem>>, vector<8x8xf32>
    %304 = arith.addf %302, %303 : vector<8x8xf32>
    %c127 = arith.constant 127 : index
    %c0_266 = arith.constant 0 : index
    %305 = tpu.strided_load %arg11[%c127, %c0_266] {strides = array<i32: 2, 1>} : memref<324x8xf32, #tpu.memory_space<vmem>>, vector<8x8xf32>
    %c128 = arith.constant 128 : index
    %c0_267 = arith.constant 0 : index
    %306 = tpu.strided_load %arg11[%c128, %c0_267] {strides = array<i32: 2, 1>} : memref<324x8xf32, #tpu.memory_space<vmem>>, vector<8x8xf32>
    %307 = arith.addf %305, %306 : vector<8x8xf32>
    %c145 = arith.constant 145 : index
    %c0_268 = arith.constant 0 : index
    %308 = tpu.strided_load %arg11[%c145, %c0_268] {strides = array<i32: 2, 1>} : memref<324x8xf32, #tpu.memory_space<vmem>>, vector<8x8xf32>
    %309 = arith.addf %307, %308 : vector<8x8xf32>
    %c146 = arith.constant 146 : index
    %c0_269 = arith.constant 0 : index
    %310 = tpu.strided_load %arg11[%c146, %c0_269] {strides = array<i32: 2, 1>} : memref<324x8xf32, #tpu.memory_space<vmem>>, vector<8x8xf32>
    %311 = arith.addf %309, %310 : vector<8x8xf32>
    %c163 = arith.constant 163 : index
    %c0_270 = arith.constant 0 : index
    %312 = tpu.strided_load %arg11[%c163, %c0_270] {strides = array<i32: 2, 1>} : memref<324x8xf32, #tpu.memory_space<vmem>>, vector<8x8xf32>
    %c164 = arith.constant 164 : index
    %c0_271 = arith.constant 0 : index
    %313 = tpu.strided_load %arg11[%c164, %c0_271] {strides = array<i32: 2, 1>} : memref<324x8xf32, #tpu.memory_space<vmem>>, vector<8x8xf32>
    %314 = arith.addf %312, %313 : vector<8x8xf32>
    %c181 = arith.constant 181 : index
    %c0_272 = arith.constant 0 : index
    %315 = tpu.strided_load %arg11[%c181, %c0_272] {strides = array<i32: 2, 1>} : memref<324x8xf32, #tpu.memory_space<vmem>>, vector<8x8xf32>
    %316 = arith.addf %314, %315 : vector<8x8xf32>
    %c182 = arith.constant 182 : index
    %c0_273 = arith.constant 0 : index
    %317 = tpu.strided_load %arg11[%c182, %c0_273] {strides = array<i32: 2, 1>} : memref<324x8xf32, #tpu.memory_space<vmem>>, vector<8x8xf32>
    %318 = arith.addf %316, %317 : vector<8x8xf32>
    %c199 = arith.constant 199 : index
    %c0_274 = arith.constant 0 : index
    %319 = tpu.strided_load %arg11[%c199, %c0_274] {strides = array<i32: 2, 1>} : memref<324x8xf32, #tpu.memory_space<vmem>>, vector<8x8xf32>
    %c200 = arith.constant 200 : index
    %c0_275 = arith.constant 0 : index
    %320 = tpu.strided_load %arg11[%c200, %c0_275] {strides = array<i32: 2, 1>} : memref<324x8xf32, #tpu.memory_space<vmem>>, vector<8x8xf32>
    %321 = arith.addf %319, %320 : vector<8x8xf32>
    %c217 = arith.constant 217 : index
    %c0_276 = arith.constant 0 : index
    %322 = tpu.strided_load %arg11[%c217, %c0_276] {strides = array<i32: 2, 1>} : memref<324x8xf32, #tpu.memory_space<vmem>>, vector<8x8xf32>
    %323 = arith.addf %321, %322 : vector<8x8xf32>
    %c218 = arith.constant 218 : index
    %c0_277 = arith.constant 0 : index
    %324 = tpu.strided_load %arg11[%c218, %c0_277] {strides = array<i32: 2, 1>} : memref<324x8xf32, #tpu.memory_space<vmem>>, vector<8x8xf32>
    %325 = arith.addf %323, %324 : vector<8x8xf32>
    %c235 = arith.constant 235 : index
    %c0_278 = arith.constant 0 : index
    %326 = tpu.strided_load %arg11[%c235, %c0_278] {strides = array<i32: 2, 1>} : memref<324x8xf32, #tpu.memory_space<vmem>>, vector<8x8xf32>
    %c236 = arith.constant 236 : index
    %c0_279 = arith.constant 0 : index
    %327 = tpu.strided_load %arg11[%c236, %c0_279] {strides = array<i32: 2, 1>} : memref<324x8xf32, #tpu.memory_space<vmem>>, vector<8x8xf32>
    %328 = arith.addf %326, %327 : vector<8x8xf32>
    %c253 = arith.constant 253 : index
    %c0_280 = arith.constant 0 : index
    %329 = tpu.strided_load %arg11[%c253, %c0_280] {strides = array<i32: 2, 1>} : memref<324x8xf32, #tpu.memory_space<vmem>>, vector<8x8xf32>
    %330 = arith.addf %328, %329 : vector<8x8xf32>
    %c254 = arith.constant 254 : index
    %c0_281 = arith.constant 0 : index
    %331 = tpu.strided_load %arg11[%c254, %c0_281] {strides = array<i32: 2, 1>} : memref<324x8xf32, #tpu.memory_space<vmem>>, vector<8x8xf32>
    %332 = arith.addf %330, %331 : vector<8x8xf32>
    %c271 = arith.constant 271 : index
    %c0_282 = arith.constant 0 : index
    %333 = tpu.strided_load %arg11[%c271, %c0_282] {strides = array<i32: 2, 1>} : memref<324x8xf32, #tpu.memory_space<vmem>>, vector<8x8xf32>
    %c272 = arith.constant 272 : index
    %c0_283 = arith.constant 0 : index
    %334 = tpu.strided_load %arg11[%c272, %c0_283] {strides = array<i32: 2, 1>} : memref<324x8xf32, #tpu.memory_space<vmem>>, vector<8x8xf32>
    %335 = arith.addf %333, %334 : vector<8x8xf32>
    %c289 = arith.constant 289 : index
    %c0_284 = arith.constant 0 : index
    %336 = tpu.strided_load %arg11[%c289, %c0_284] {strides = array<i32: 2, 1>} : memref<324x8xf32, #tpu.memory_space<vmem>>, vector<8x8xf32>
    %337 = arith.addf %335, %336 : vector<8x8xf32>
    %c290 = arith.constant 290 : index
    %c0_285 = arith.constant 0 : index
    %338 = tpu.strided_load %arg11[%c290, %c0_285] {strides = array<i32: 2, 1>} : memref<324x8xf32, #tpu.memory_space<vmem>>, vector<8x8xf32>
    %339 = arith.addf %337, %338 : vector<8x8xf32>
    %340 = tpu.concatenate %290, %297, %304, %311, %318, %325, %332, %339 in 0 : vector<8x8xf32>, vector<8x8xf32>, vector<8x8xf32>, vector<8x8xf32>, vector<8x8xf32>, vector<8x8xf32>, vector<8x8xf32>, vector<8x8xf32> -> vector<64x8xf32>
    %cst_286 = arith.constant 2.500000e-01 : f32
    %341 = vector.broadcast %cst_286 : f32 to vector<64x8xf32>
    %342 = arith.mulf %341, %340 : vector<64x8xf32>
    %c0_287 = arith.constant 0 : index
    %c0_288 = arith.constant 0 : index
    %c0_289 = arith.constant 0 : index
    %343 = vector.load %arg9[%c0_287, %c0_288, %c0_289] : memref<1x64x8xf32, #tpu.memory_space<vmem>>, vector<1x64x8xf32>
    %344 = vector.shape_cast %343 : vector<1x64x8xf32> to vector<64x8xf32>
    %345 = vector.shape_cast %342 : vector<64x8xf32> to vector<1x64x8xf32>
    tpu.vector_store %arg9[%c0_287, %c0_288, %c0_289], %345 {strides = array<i32>} : memref<1x64x8xf32, #tpu.memory_space<vmem>>, vector<1x64x8xf32>,
    return
  }
  func.func @transform_0(%arg0: i32) -> (i32, i32, i32) {
    %c0_i32 = arith.constant 0 : i32
    %c0_i32_0 = arith.constant 0 : i32
    %c0_i32_1 = arith.constant 0 : i32
    return %arg0, %c0_i32, %c0_i32_0 : i32, i32, i32
  }
  func.func @transform_1(%arg0: i32) -> (i32, i32, i32) {
    %c0_i32 = arith.constant 0 : i32
    %c0_i32_0 = arith.constant 0 : i32
    %c0_i32_1 = arith.constant 0 : i32
    %c0_i32_2 = arith.constant 0 : i32
    return %c0_i32, %c0_i32_0, %c0_i32_1 : i32, i32, i32
  }
  func.func @transform_2(%arg0: i32) -> (i32, i32) {
    %c0_i32 = arith.constant 0 : i32
    %c0_i32_0 = arith.constant 0 : i32
    %c0_i32_1 = arith.constant 0 : i32
    return %c0_i32, %c0_i32_0 : i32, i32
  }
  func.func @transform_3(%arg0: i32) -> (i32, i32) {
    %c0_i32 = arith.constant 0 : i32
    %c0_i32_0 = arith.constant 0 : i32
    %c0_i32_1 = arith.constant 0 : i32
    return %c0_i32, %c0_i32_0 : i32, i32
  }
  func.func @transform_4(%arg0: i32) -> (i32, i32, i32) {
    %c0_i32 = arith.constant 0 : i32
    %c0_i32_0 = arith.constant 0 : i32
    %c0_i32_1 = arith.constant 0 : i32
    %c0_i32_2 = arith.constant 0 : i32
    return %c0_i32, %c0_i32_0, %c0_i32_1 : i32, i32, i32
  }
  func.func @transform_5(%arg0: i32) -> (i32, i32) {
    %c0_i32 = arith.constant 0 : i32
    %c0_i32_0 = arith.constant 0 : i32
    %c0_i32_1 = arith.constant 0 : i32
    return %c0_i32, %c0_i32_0 : i32, i32
  }
  func.func @transform_6(%arg0: i32) -> (i32, i32) {
    %c0_i32 = arith.constant 0 : i32
    %c0_i32_0 = arith.constant 0 : i32
    %c0_i32_1 = arith.constant 0 : i32
    return %c0_i32, %c0_i32_0 : i32, i32
  }
  func.func @transform_7(%arg0: i32) -> (i32, i32) {
    %c0_i32 = arith.constant 0 : i32
    %c0_i32_0 = arith.constant 0 : i32
    %c0_i32_1 = arith.constant 0 : i32
    return %c0_i32, %c0_i32_0 : i32, i32
  }
  func.func @transform_8(%arg0: i32) -> (i32, i32, i32) {
    %c0_i32 = arith.constant 0 : i32
    %c0_i32_0 = arith.constant 0 : i32
    %c0_i32_1 = arith.constant 0 : i32
    return %arg0, %c0_i32, %c0_i32_0 : i32, i32, i32
  }
}

</mosaic_0001>

<llo_original>
// kernel: tpu_custom_call.1
$region0: #{tpu_custom_call.1}
  #allocation0 [shape = 'u32[]', space=smem, size = 0x4, offset = 0x4, fixed_abs, tag = 'smem constant byte address 0x4 - core index']
  #allocation1 [shape = 'u32[144,128]{1,0:T(1,128)}', space=vmem, size = 0x12000, scoped, tag = 'internal scratch']
  #allocation2 [shape = 'f32[362,8]{1,0:T(8,128)}', space=vmem, size = 0x2e000, scoped, tag = 'scratch operand']
  #allocation3 [shape = 'f32[324,8]{1,0:T(8,128)}', space=vmem, size = 0x29000, scoped, tag = 'scratch operand']
  %s0 = inlined_call_operand.vmem [shape: f32[2,362,4], index: 0, kind: input, shape index: {}]
  %s1 = inlined_call_operand.vmem [shape: bf16[9,4,8], index: 1, kind: input, shape index: {}]
  %s2 = inlined_call_operand.vmem [shape: f32[1,8], index: 2, kind: input, shape index: {}]
  %s3 = inlined_call_operand.vmem [shape: f32[1,8], index: 3, kind: input, shape index: {}]
  %s4 = inlined_call_operand.vmem [shape: bf16[9,8,8], index: 4, kind: input, shape index: {}]
  %s5 = inlined_call_operand.vmem [shape: f32[1,8], index: 5, kind: input, shape index: {}]
  %s6 = inlined_call_operand.vmem [shape: f32[1,8], index: 6, kind: input, shape index: {}]
  %s7 = inlined_call_operand.vmem [shape: f32[324,1], index: 7, kind: input, shape index: {}]
  %s8 = inlined_call_operand.vmem [shape: f32[2,64,8], index: 8, kind: output, shape index: {}]
  %s9 = sld [smem:[#allocation0]]
  $region65: #{tpu_custom_call.1} parent=0
    _
  %s11 = ssub.s32 1, %s9
  %s12 = scalar_select 0, %s11, %s9
  loop: start=0, step=1, limit=4
  $region2: #{tpu_custom_call.1} parent=0 // loop_pre_header
    _
  $region3: #{tpu_custom_call.1} parent=0 // loop_header
    %s14 = sphi 0, %s18
    %p15 = scmp.ge.s32.totalorder %s14, 4
    %s24 = sphi 0, %s26
    %s27 = sphi 0, %s24
    %s28 = sphi 0, %s27
    %s44 = sphi 0, %s28
    %s48 = sphi 0, %s48
    %s50 = sphi 0, %s48
    %s51 = sphi 0, %s50
    %s65 = sphi 0, %s51
    %s69 = sphi 0, %s69
    %s71 = sphi 0, %s69
    %s72 = sphi 0, %s71
    %s86 = sphi 0, %s72
    %s90 = sphi 0, %s90
    %s92 = sphi 0, %s90
    %s93 = sphi 0, %s92
    %s107 = sphi 0, %s93
    %s111 = sphi 0, %s111
    %s113 = sphi 0, %s111
    %s114 = sphi 0, %s113
    %s128 = sphi 0, %s114
    %s132 = sphi 0, %s132
    %s134 = sphi 0, %s132
    %s135 = sphi 0, %s134
    %s149 = sphi 0, %s135
    %s153 = sphi 0, %s153
    %s155 = sphi 0, %s153
    %s156 = sphi 0, %s155
    %s170 = sphi 0, %s156
    %s174 = sphi 0, %s174
    %s176 = sphi 0, %s174
    %s177 = sphi 0, %s176
    %s191 = sphi 0, %s177
    %s197 = sphi 0, %s199
    %s200 = sphi 0, %s197
    %s201 = sphi 0, %s200
    %s217 = sphi 0, %s201
  $region4: #{tpu_custom_call.1} parent=0 // loop_header_branch
    %17 = sbr.rel (%p15) target = $region8
  $region5: #{tpu_custom_call.1} parent=0 // loop_body
    %s19 = ssub.s32 %s14, 1
    %s20 = ssub.s32 %s14, 2
    %s21 = sadd.s32 %s14, 1
    %s22 = ssub.s32 %s14, %s21
    %p23 = scmp.eq.s32.totalorder %s22, 0
    %s25 = sadd.s32 %s24, 1
    %s26 = scalar_select %p23, %s24, %s25
    %p29 = pneg %p23
    %p30 = scmp.eq.s32.totalorder %s14, 1
    %p31 = por %p29, %p30
    %p32 = scmp.ne.s32.totalorder %s24, %s27
    %p33 = scmp.eq.s32.totalorder %s14, 0
    %p34 = por %p32, %p33
    %p35 = scmp.ne.s32.totalorder %s24, %s27
    %p36 = scmp.eq.s32.totalorder %s19, 1
    %p37 = por %p35, %p36
    %p38 = scmp.ne.s32.totalorder %s27, %s28
    %p39 = scmp.eq.s32.totalorder %s19, 0
    %p40 = por %p38, %p39
    %p41 = scmp.ne.s32.totalorder %s27, %s28
    %p42 = scmp.eq.s32.totalorder %s20, 1
    %p43 = por %p41, %p42
    %p45 = scmp.ne.s32.totalorder %s28, %s44
    %p46 = scmp.eq.s32.totalorder %s20, 0
    %p47 = por %p45, %p46
    %s49 = sadd.s32 %s48, 1
    %p52 = scmp.eq.s32.totalorder %s14, 1
    %p53 = scmp.ne.s32.totalorder %s48, %s50
    %p54 = scmp.eq.s32.totalorder %s14, 0
    %p55 = por %p53, %p54
    %p56 = scmp.ne.s32.totalorder %s48, %s50
    %p57 = scmp.eq.s32.totalorder %s19, 1
    %p58 = por %p56, %p57
    %p59 = scmp.ne.s32.totalorder %s50, %s51
    %p60 = scmp.eq.s32.totalorder %s19, 0
    %p61 = por %p59, %p60
    %p62 = scmp.ne.s32.totalorder %s50, %s51
    %p63 = scmp.eq.s32.totalorder %s20, 1
    %p64 = por %p62, %p63
    %p66 = scmp.ne.s32.totalorder %s51, %s65
    %p67 = scmp.eq.s32.totalorder %s20, 0
    %p68 = por %p66, %p67
    %s70 = sadd.s32 %s69, 1
    %p73 = scmp.eq.s32.totalorder %s14, 1
    %p74 = scmp.ne.s32.totalorder %s69, %s71
    %p75 = scmp.eq.s32.totalorder %s14, 0
    %p76 = por %p74, %p75
    %p77 = scmp.ne.s32.totalorder %s69, %s71
    %p78 = scmp.eq.s32.totalorder %s19, 1
    %p79 = por %p77, %p78
    %p80 = scmp.ne.s32.totalorder %s71, %s72
    %p81 = scmp.eq.s32.totalorder %s19, 0
    %p82 = por %p80, %p81
    %p83 = scmp.ne.s32.totalorder %s71, %s72
    %p84 = scmp.eq.s32.totalorder %s20, 1
    %p85 = por %p83, %p84
    %p87 = scmp.ne.s32.totalorder %s72, %s86
    %p88 = scmp.eq.s32.totalorder %s20, 0
    %p89 = por %p87, %p88
    %s91 = sadd.s32 %s90, 1
    %p94 = scmp.eq.s32.totalorder %s14, 1
    %p95 = scmp.ne.s32.totalorder %s90, %s92
    %p96 = scmp.eq.s32.totalorder %s14, 0
    %p97 = por %p95, %p96
    %p98 = scmp.ne.s32.totalorder %s90, %s92
    %p99 = scmp.eq.s32.totalorder %s19, 1
    %p100 = por %p98, %p99
    %p101 = scmp.ne.s32.totalorder %s92, %s93
    %p102 = scmp.eq.s32.totalorder %s19, 0
    %p103 = por %p101, %p102
    %p104 = scmp.ne.s32.totalorder %s92, %s93
    %p105 = scmp.eq.s32.totalorder %s20, 1
    %p106 = por %p104, %p105
    %p108 = scmp.ne.s32.totalorder %s93, %s107
    %p109 = scmp.eq.s32.totalorder %s20, 0
    %p110 = por %p108, %p109
    %s112 = sadd.s32 %s111, 1
    %p115 = scmp.eq.s32.totalorder %s14, 1
    %p116 = scmp.ne.s32.totalorder %s111, %s113
    %p117 = scmp.eq.s32.totalorder %s14, 0
    %p118 = por %p116, %p117
    %p119 = scmp.ne.s32.totalorder %s111, %s113
    %p120 = scmp.eq.s32.totalorder %s19, 1
    %p121 = por %p119, %p120
    %p122 = scmp.ne.s32.totalorder %s113, %s114
    %p123 = scmp.eq.s32.totalorder %s19, 0
    %p124 = por %p122, %p123
    %p125 = scmp.ne.s32.totalorder %s113, %s114
    %p126 = scmp.eq.s32.totalorder %s20, 1
    %p127 = por %p125, %p126
    %p129 = scmp.ne.s32.totalorder %s114, %s128
    %p130 = scmp.eq.s32.totalorder %s20, 0
    %p131 = por %p129, %p130
    %s133 = sadd.s32 %s132, 1
    %p136 = scmp.eq.s32.totalorder %s14, 1
    %p137 = scmp.ne.s32.totalorder %s132, %s134
    %p138 = scmp.eq.s32.totalorder %s14, 0
    %p139 = por %p137, %p138
    %p140 = scmp.ne.s32.totalorder %s132, %s134
    %p141 = scmp.eq.s32.totalorder %s19, 1
    %p142 = por %p140, %p141
    %p143 = scmp.ne.s32.totalorder %s134, %s135
    %p144 = scmp.eq.s32.totalorder %s19, 0
    %p145 = por %p143, %p144
    %p146 = scmp.ne.s32.totalorder %s134, %s135
    %p147 = scmp.eq.s32.totalorder %s20, 1
    %p148 = por %p146, %p147
    %p150 = scmp.ne.s32.totalorder %s135, %s149
    %p151 = scmp.eq.s32.totalorder %s20, 0
    %p152 = por %p150, %p151
    %s154 = sadd.s32 %s153, 1
    %p157 = scmp.eq.s32.totalorder %s14, 1
    %p158 = scmp.ne.s32.totalorder %s153, %s155
    %p159 = scmp.eq.s32.totalorder %s14, 0
    %p160 = por %p158, %p159
    %p161 = scmp.ne.s32.totalorder %s153, %s155
    %p162 = scmp.eq.s32.totalorder %s19, 1
    %p163 = por %p161, %p162
    %p164 = scmp.ne.s32.totalorder %s155, %s156
    %p165 = scmp.eq.s32.totalorder %s19, 0
    %p166 = por %p164, %p165
    %p167 = scmp.ne.s32.totalorder %s155, %s156
    %p168 = scmp.eq.s32.totalorder %s20, 1
    %p169 = por %p167, %p168
    %p171 = scmp.ne.s32.totalorder %s156, %s170
    %p172 = scmp.eq.s32.totalorder %s20, 0
    %p173 = por %p171, %p172
    %s175 = sadd.s32 %s174, 1
    %p178 = scmp.eq.s32.totalorder %s14, 1
    %p179 = scmp.ne.s32.totalorder %s174, %s176
    %p180 = scmp.eq.s32.totalorder %s14, 0
    %p181 = por %p179, %p180
    %p182 = scmp.ne.s32.totalorder %s174, %s176
    %p183 = scmp.eq.s32.totalorder %s19, 1
    %p184 = por %p182, %p183
    %p185 = scmp.ne.s32.totalorder %s176, %s177
    %p186 = scmp.eq.s32.totalorder %s19, 0
    %p187 = por %p185, %p186
    %p188 = scmp.ne.s32.totalorder %s176, %s177
    %p189 = scmp.eq.s32.totalorder %s20, 1
    %p190 = por %p188, %p189
    %p192 = scmp.ne.s32.totalorder %s177, %s191
    %p193 = scmp.eq.s32.totalorder %s20, 0
    %p194 = por %p192, %p193
    %s195 = ssub.s32 %s14, %s21
    %p196 = scmp.eq.s32.totalorder %s195, 0
    %s198 = sadd.s32 %s197, 1
    %s199 = scalar_select %p196, %s197, %s198
    %p202 = pneg %p196
    %p203 = scmp.eq.s32.totalorder %s14, 1
    %p204 = por %p202, %p203
    %p205 = scmp.ne.s32.totalorder %s197, %s200
    %p206 = scmp.eq.s32.totalorder %s14, 0
    %p207 = por %p205, %p206
    %p208 = scmp.ne.s32.totalorder %s197, %s200
    %p209 = scmp.eq.s32.totalorder %s19, 1
    %p210 = por %p208, %p209
    %p211 = scmp.ne.s32.totalorder %s200, %s201
    %p212 = scmp.eq.s32.totalorder %s19, 0
    %p213 = por %p211, %p212
    %p214 = scmp.ne.s32.totalorder %s200, %s201
    %p215 = scmp.eq.s32.totalorder %s20, 1
    %p216 = por %p214, %p215
    %p218 = scmp.ne.s32.totalorder %s201, %s217
    %p219 = scmp.eq.s32.totalorder %s20, 0
    %p220 = por %p218, %p219
    %p221 = scmp.le.s32.totalorder 1, %s14
    %p222 = scmp.lt.s32.totalorder %s14, 3
    %p223 = pnand %p221, %p222
    %p224 = pneg %p223
    // Predicated region
    $region9: #{tpu_custom_call.1} parent=5 // pred_check
      _
    $region10: #{tpu_custom_call.1} parent=5 // pred_check_branch
      %226 = sbr.rel (%p223) target = $region12
    $region11: #{tpu_custom_call.1} parent=5 // pred_region
      %s227 = ssub.s32 %s14, 1
      // Predicated region
      $region13: #{tpu_custom_call.1} parent=11 // pred_check
        %p228 = pneg %p61
      $region14: #{tpu_custom_call.1} parent=11 // pred_check_branch
        %230 = sbr.rel (%p228) target = $region16
      $region15: #{tpu_custom_call.1} parent=11 // pred_region
        _
      $region16: #{tpu_custom_call.1} parent=11 // pred_fallthru
        _
      // Predicated region
      $region17: #{tpu_custom_call.1} parent=11 // pred_check
        %p231 = pneg %p82
      $region18: #{tpu_custom_call.1} parent=11 // pred_check_branch
        %233 = sbr.rel (%p231) target = $region20
      $region19: #{tpu_custom_call.1} parent=11 // pred_region
        _
      $region20: #{tpu_custom_call.1} parent=11 // pred_fallthru
        _
      // Predicated region
      $region21: #{tpu_custom_call.1} parent=11 // pred_check
        %p234 = pneg %p103
      $region22: #{tpu_custom_call.1} parent=11 // pred_check_branch
        %236 = sbr.rel (%p234) target = $region24
      $region23: #{tpu_custom_call.1} parent=11 // pred_region
        _
      $region24: #{tpu_custom_call.1} parent=11 // pred_fallthru
        _
      // Predicated region
      $region25: #{tpu_custom_call.1} parent=11 // pred_check
        %p237 = pneg %p124
      $region26: #{tpu_custom_call.1} parent=11 // pred_check_branch
        %239 = sbr.rel (%p237) target = $region28
      $region27: #{tpu_custom_call.1} parent=11 // pred_region
        _
      $region28: #{tpu_custom_call.1} parent=11 // pred_fallthru
        _
      // Predicated region
      $region29: #{tpu_custom_call.1} parent=11 // pred_check
        %p240 = pneg %p145
      $region30: #{tpu_custom_call.1} parent=11 // pred_check_branch
        %242 = sbr.rel (%p240) target = $region32
      $region31: #{tpu_custom_call.1} parent=11 // pred_region
        _
      $region32: #{tpu_custom_call.1} parent=11 // pred_fallthru
        _
      // Predicated region
      $region33: #{tpu_custom_call.1} parent=11 // pred_check
        %p243 = pneg %p166
      $region34: #{tpu_custom_call.1} parent=11 // pred_check_branch
        %245 = sbr.rel (%p243) target = $region36
      $region35: #{tpu_custom_call.1} parent=11 // pred_region
        _
      $region36: #{tpu_custom_call.1} parent=11 // pred_fallthru
        _
      // Predicated region
      $region37: #{tpu_custom_call.1} parent=11 // pred_check
        %p246 = pneg %p187
      $region38: #{tpu_custom_call.1} parent=11 // pred_check_branch
        %248 = sbr.rel (%p246) target = $region40
      $region39: #{tpu_custom_call.1} parent=11 // pred_region
        _
      $region40: #{tpu_custom_call.1} parent=11 // pred_fallthru
        _
    $region12: #{tpu_custom_call.1} parent=5 // pred_fallthru
      _
    %p249 = scmp.lt.s32.totalorder %s14, 2
    // Predicated region
    $region41: #{tpu_custom_call.1} parent=5 // pred_check
      %p250 = pneg %p249
    $region42: #{tpu_custom_call.1} parent=5 // pred_check_branch
      %252 = sbr.rel (%p250) target = $region44
    $region43: #{tpu_custom_call.1} parent=5 // pred_region
      // Predicated region
      $region45: #{tpu_custom_call.1} parent=43 // pred_check
        %p253 = pneg %p34
      $region46: #{tpu_custom_call.1} parent=43 // pred_check_branch
        %255 = sbr.rel (%p253) target = $region48
      $region47: #{tpu_custom_call.1} parent=43 // pred_region
        %p256 = scmp.lt.s32.totalorder %s14, 1
        %s257 = scalar_select %p256, %s14, 1
        %s258 = smul.addr %s257, 46
        %s259 = smul.addr %s258, 8
        %s260 = scalar_lea.vmem %s0, %s259
      $region48: #{tpu_custom_call.1} parent=43 // pred_fallthru
        _
    $region44: #{tpu_custom_call.1} parent=5 // pred_fallthru
      _
    %p261 = scmp.le.s32.totalorder 1, %s14
    %p262 = scmp.lt.s32.totalorder %s14, 3
    %p263 = pnand %p261, %p262
    %p264 = pneg %p263
    // Predicated region
    $region49: #{tpu_custom_call.1} parent=5 // pred_check
      _
    $region50: #{tpu_custom_call.1} parent=5 // pred_check_branch
      %266 = sbr.rel (%p263) target = $region52
    $region51: #{tpu_custom_call.1} parent=5 // pred_region
      %s267 = ssub.s32 %s14, 1
      %p268 = scmp.lt.s32.totalorder %s19, 1
      %s269 = scalar_select %p268, %s19, 1
      %s270 = smul.addr %s269, 46
      %s271 = smul.addr %s270, 8
      %s272 = scalar_lea.vmem %s0, %s271
      %p273 = pneg %p40
      %p274 = pneg %p37
      %p275 = pneg %p61
      %p276 = pneg %p58
      %p277 = pneg %p82
      %p278 = pneg %p79
      %p279 = pneg %p103
      %p280 = pneg %p100
      %p281 = pneg %p124
      %p282 = pneg %p121
      %p283 = pneg %p145
      %p284 = pneg %p142
      %p285 = pneg %p166
      %p286 = pneg %p163
      %p287 = pneg %p187
      %p288 = pneg %p184
      %p289 = pneg %p213
      %p290 = pneg %p210
      %p291 = scmp.lt.s32.totalorder %s19, 1
      %s292 = scalar_select %p291, %s19, 1
      %s293 = smul.addr %s292, 8
      %s294 = smul.addr %s293, 8
      %s295 = scalar_lea.vmem %s8, %s294
      %p296 = scmp.lt.s32.totalorder %s19, 1
      %s297 = scalar_select %p296, %s19, 1
      %s298 = smul.addr %s297, 46
      %s299 = smul.addr %s298, 8
      %s300 = scalar_lea.vmem %s0, %s299
      %p301 = scmp.lt.s32.totalorder %s19, 1
      %s302 = scalar_select %p301, %s19, 1
      %s303 = smul.addr %s302, 8
      %s304 = smul.addr %s303, 8
      %s305 = scalar_lea.vmem %s8, %s304
      %vm307 = vcmask 64512
      %308 = vst.msk [vmem:[#allocation2] sm:$0xff] %vm307, 0.0
      %309 = vst.msk [vmem:[#allocation2 + $0x8] sm:$0xff] %vm307, 0.0
      %vm310 = vcmask 59392
      %311 = vst.msk [vmem:[#allocation2 + $0x10] sm:$0x7] %vm310, 0.0
      %312 = vst.msk [vmem:[#allocation2 + $0x157] sm:$0xff] %vm307, 0.0
      %313 = vst.msk [vmem:[#allocation2 + $0x15f] sm:$0xff] %vm307, 0.0
      %314 = vst.msk [vmem:[#allocation2 + $0x167] sm:$0x7] %vm310, 0.0
      %v315 = vld [vmem:[%s300] sm:$0xff]
      %v316 = vld [vmem:[%s300 + $0x8] sm:$0xff]
      %v317 = vld [vmem:[%s300 + $0x10] sm:$0xff]
      %v318 = vld [vmem:[%s300 + $0x18] sm:$0xff]
      %v319 = vld [vmem:[%s300 + $0x20] sm:$0xff]
      %v320 = vld [vmem:[%s300 + $0x28] sm:$0xff]
      %v321 = vld [vmem:[%s300 + $0x30] sm:$0xff]
      %v322 = vld [vmem:[%s300 + $0x38] sm:$0xff]
      %v323 = vld [vmem:[%s300 + $0x40] sm:$0xff]
      %v324 = vld [vmem:[%s300 + $0x48] sm:$0xff]
      %v325 = vld [vmem:[%s300 + $0x50] sm:$0xff]
      %v326 = vld [vmem:[%s300 + $0x58] sm:$0xff]
      %v327 = vld [vmem:[%s300 + $0x60] sm:$0xff]
      %v328 = vld [vmem:[%s300 + $0x68] sm:$0xff]
      %v329 = vld [vmem:[%s300 + $0x70] sm:$0xff]
      %v330 = vld [vmem:[%s300 + $0x78] sm:$0xff]
      %v331 = vld [vmem:[%s300 + $0x80] sm:$0xff]
      %v332 = vld [vmem:[%s300 + $0x88] sm:$0xff]
      %v333 = vld [vmem:[%s300 + $0x90] sm:$0xff]
      %v334 = vld [vmem:[%s300 + $0x98] sm:$0xff]
      %v335 = vld [vmem:[%s300 + $0xa0] sm:$0xff]
      %v336 = vld [vmem:[%s300 + $0xa8] sm:$0xff]
      %v337 = vld [vmem:[%s300 + $0xb0] sm:$0xff]
      %v338 = vld [vmem:[%s300 + $0xb8] sm:$0xff]
      %v339 = vld [vmem:[%s300 + $0xc0] sm:$0xff]
      %v340 = vld [vmem:[%s300 + $0xc8] sm:$0xff]
      %v341 = vld [vmem:[%s300 + $0xd0] sm:$0xff]
      %v342 = vld [vmem:[%s300 + $0xd8] sm:$0xff]
      %v343 = vld [vmem:[%s300 + $0xe0] sm:$0xff]
      %v344 = vld [vmem:[%s300 + $0xe8] sm:$0xff]
      %v345 = vld [vmem:[%s300 + $0xf0] sm:$0xff]
      %v346 = vld [vmem:[%s300 + $0xf8] sm:$0xff]
      %v347 = vpack.c.bf16 %v316, %v315
      %v348 = vpack.c.bf16 %v318, %v317
      %v349 = vpack.c.bf16 %v320, %v319
      %v350 = vpack.c.bf16 %v322, %v321
      %v351 = vpack.c.bf16 %v324, %v323
      %v352 = vpack.c.bf16 %v326, %v325
      %v353 = vpack.c.bf16 %v328, %v327
      %v354 = vpack.c.bf16 %v330, %v329
      %v355 = vpack.c.bf16 %v332, %v331
      %v356 = vpack.c.bf16 %v334, %v333
      %v357 = vpack.c.bf16 %v336, %v335
      %v358 = vpack.c.bf16 %v338, %v337
      %v359 = vpack.c.bf16 %v340, %v339
      %v360 = vpack.c.bf16 %v342, %v341
      %v361 = vpack.c.bf16 %v344, %v343
      %v362 = vpack.c.bf16 %v346, %v345
      %v363 = vld [vmem:[%s1] sm:$0x3]
      %v364 = vld [vmem:[%s300 + $0x1] sm:$0xff]
      %v365 = vld [vmem:[%s300 + $0x9] sm:$0xff]
      %v366 = vld [vmem:[%s300 + $0x11] sm:$0xff]
      %v367 = vld [vmem:[%s300 + $0x19] sm:$0xff]
      %v368 = vld [vmem:[%s300 + $0x21] sm:$0xff]
      %v369 = vld [vmem:[%s300 + $0x29] sm:$0xff]
      %v370 = vld [vmem:[%s300 + $0x31] sm:$0xff]
      %v371 = vld [vmem:[%s300 + $0x39] sm:$0xff]
      %v372 = vld [vmem:[%s300 + $0x41] sm:$0xff]
      %v373 = vld [vmem:[%s300 + $0x49] sm:$0xff]
      %v374 = vld [vmem:[%s300 + $0x51] sm:$0xff]
      %v375 = vld [vmem:[%s300 + $0x59] sm:$0xff]
      %v376 = vld [vmem:[%s300 + $0x61] sm:$0xff]
      %v377 = vld [vmem:[%s300 + $0x69] sm:$0xff]
      %v378 = vld [vmem:[%s300 + $0x71] sm:$0xff]
      %v379 = vld [vmem:[%s300 + $0x79] sm:$0xff]
      %v380 = vld [vmem:[%s300 + $0x81] sm:$0xff]
      %v381 = vld [vmem:[%s300 + $0x89] sm:$0xff]
      %v382 = vld [vmem:[%s300 + $0x91] sm:$0xff]
      %v383 = vld [vmem:[%s300 + $0x99] sm:$0xff]
      %v384 = vld [vmem:[%s300 + $0xa1] sm:$0xff]
      %v385 = vld [vmem:[%s300 + $0xa9] sm:$0xff]
      %v386 = vld [vmem:[%s300 + $0xb1] sm:$0xff]
      %v387 = vld [vmem:[%s300 + $0xb9] sm:$0xff]
      %v388 = vld [vmem:[%s300 + $0xc1] sm:$0xff]
      %v389 = vld [vmem:[%s300 + $0xc9] sm:$0xff]
      %v390 = vld [vmem:[%s300 + $0xd1] sm:$0xff]
      %v391 = vld [vmem:[%s300 + $0xd9] sm:$0xff]
      %v392 = vld [vmem:[%s300 + $0xe1] sm:$0xff]
      %v393 = vld [vmem:[%s300 + $0xe9] sm:$0xff]
      %v394 = vld [vmem:[%s300 + $0xf1] sm:$0xff]
      %v395 = vld [vmem:[%s300 + $0xf9] sm:$0xff]
      %v396 = vpack.c.bf16 %v365, %v364
      %v397 = vpack.c.bf16 %v367, %v366
      %v398 = vpack.c.bf16 %v369, %v368
      %v399 = vpack.c.bf16 %v371, %v370
      %v400 = vpack.c.bf16 %v373, %v372
      %v401 = vpack.c.bf16 %v375, %v374
      %v402 = vpack.c.bf16 %v377, %v376
      %v403 = vpack.c.bf16 %v379, %v378
      %v404 = vpack.c.bf16 %v381, %v380
      %v405 = vpack.c.bf16 %v383, %v382
      %v406 = vpack.c.bf16 %v385, %v384
      %v407 = vpack.c.bf16 %v387, %v386
      %v408 = vpack.c.bf16 %v389, %v388
      %v409 = vpack.c.bf16 %v391, %v390
      %v410 = vpack.c.bf16 %v393, %v392
      %v411 = vpack.c.bf16 %v395, %v394
      %s412 = scalar_lea.vmem %s1, 2
      %v413 = vld [vmem:[%s412] sm:$0x3]
      %vm414 = vcmask 31744
      %v416 = vsel %vm414, %v396, 0
      %v419 = vsel %vm414, %v397, 0
      %v422 = vsel %vm414, %v398, 0
      %v425 = vsel %vm414, %v399, 0
      %v428 = vsel %vm414, %v400, 0
      %v431 = vsel %vm414, %v401, 0
      %v434 = vsel %vm414, %v402, 0
      %v437 = vsel %vm414, %v403, 0
      %v440 = vsel %vm414, %v404, 0
      %v443 = vsel %vm414, %v405, 0
      %v446 = vsel %vm414, %v406, 0
      %v449 = vsel %vm414, %v407, 0
      %v452 = vsel %vm414, %v408, 0
      %v455 = vsel %vm414, %v409, 0
      %v458 = vsel %vm414, %v410, 0
      %v461 = vsel %vm414, %v411, 0
      %vm463 = vcmask 1041408
      %v465 = vsel %vm463, %v413, 0
      %467 = vmatprep.subr.bf16.mxu0 0
      %468 = vmatpush1.bf16.msra.mxu0 %v465
      %469 = vmatprep.subr.bf16.mxu0 0
      %470 = vmatpush1.bf16.msra.mxu0 0
      %471 = vmatprep.subr.bf16.mxu0 0
      %472 = vmatpush1.bf16.msra.mxu0 0
      %473 = vmatprep.subr.bf16.mxu0 0
      %474 = vmatpush1.bf16.msra.mxu0 0
      %475 = vmatprep.subr.bf16.mxu0 0
      %476 = vmatpush1.bf16.msra.mxu0 0
      %477 = vmatprep.subr.bf16.mxu0 0
      %478 = vmatpush1.bf16.msra.mxu0 0
      %479 = vmatprep.subr.bf16.mxu0 0
      %480 = vmatpush1.bf16.msra.mxu0 0
      %481 = vmatprep.subr.bf16.mxu0 0
      %482 = vmatpush1.bf16.msra.mxu0 0
      %483 = vmatprep.subr.bf16.mxu0 0
      %484 = vmatpush1.bf16.msra.mxu0 0
      %485 = vmatprep.subr.bf16.mxu0 0
      %486 = vmatpush1.bf16.msra.mxu0 0
      %487 = vmatprep.subr.bf16.mxu0 0
      %488 = vmatpush1.bf16.msra.mxu0 0
      %489 = vmatprep.subr.bf16.mxu0 0
      %490 = vmatpush1.bf16.msra.mxu0 0
      %491 = vmatprep.subr.bf16.mxu0 0
      %492 = vmatpush1.bf16.msra.mxu0 0
      %493 = vmatprep.subr.bf16.mxu0 0
      %494 = vmatpush1.bf16.msra.mxu0 0
      %495 = vmatprep.subr.bf16.mxu0 0
      %496 = vmatpush1.bf16.msra.mxu0 0
      %497 = vmatprep.subr.bf16.mxu0 0
      %498 = vmatpush1.bf16.msra.mxu0 0
      %499 = vmatprep.mubr.bf16.mxu0 0
      %500 = vmatmul.mubr.bf16.gmra.mrb[0].mxu0 %v416
      %v501 = vpop.f32.mrb[0].mxu0
      %v502 = vadd.f32 0.0, %v501
      %v503 = vpop.f32.mrb[0].mxu0
      %v504 = vpop.f32.mrb[0].mxu0
      %v505 = vadd.f32 0.0, %v504
      %v506 = vpop.f32.mrb[0].mxu0
      %507 = vmatprep.mubr.bf16.mxu0 0
      %508 = vmatmul.mubr.bf16.gmra.mrb[0].mxu0 %v419
      %v509 = vpop.f32.mrb[0].mxu0
      %v510 = vadd.f32 0.0, %v509
      %v511 = vpop.f32.mrb[0].mxu0
      %v512 = vpop.f32.mrb[0].mxu0
      %v513 = vadd.f32 0.0, %v512
      %v514 = vpop.f32.mrb[0].mxu0
      %515 = vmatprep.mubr.bf16.mxu0 0
      %516 = vmatmul.mubr.bf16.gmra.mrb[0].mxu0 %v422
      %v517 = vpop.f32.mrb[0].mxu0
      %v518 = vadd.f32 0.0, %v517
      %v519 = vpop.f32.mrb[0].mxu0
      %v520 = vpop.f32.mrb[0].mxu0
      %v521 = vadd.f32 0.0, %v520
      %v522 = vpop.f32.mrb[0].mxu0
      %523 = vmatprep.mubr.bf16.mxu0 0
      %524 = vmatmul.mubr.bf16.gmra.mrb[0].mxu0 %v425
      %v525 = vpop.f32.mrb[0].mxu0
      %v526 = vadd.f32 0.0, %v525
      %v527 = vpop.f32.mrb[0].mxu0
      %v528 = vpop.f32.mrb[0].mxu0
      %v529 = vadd.f32 0.0, %v528
      %v530 = vpop.f32.mrb[0].mxu0
      %531 = vmatprep.mubr.bf16.mxu0 0
      %532 = vmatmul.mubr.bf16.gmra.mrb[0].mxu0 %v428
      %v533 = vpop.f32.mrb[0].mxu0
      %v534 = vadd.f32 0.0, %v533
      %v535 = vpop.f32.mrb[0].mxu0
      %v536 = vpop.f32.mrb[0].mxu0
      %v537 = vadd.f32 0.0, %v536
      %v538 = vpop.f32.mrb[0].mxu0
      %539 = vmatprep.mubr.bf16.mxu0 0
      %540 = vmatmul.mubr.bf16.gmra.mrb[0].mxu0 %v431
      %v541 = vpop.f32.mrb[0].mxu0
      %v542 = vadd.f32 0.0, %v541
      %v543 = vpop.f32.mrb[0].mxu0
      %v544 = vpop.f32.mrb[0].mxu0
      %v545 = vadd.f32 0.0, %v544
      %v546 = vpop.f32.mrb[0].mxu0
      %547 = vmatprep.mubr.bf16.mxu0 0
      %548 = vmatmul.mubr.bf16.gmra.mrb[0].mxu0 %v434
      %v549 = vpop.f32.mrb[0].mxu0
      %v550 = vadd.f32 0.0, %v549
      %v551 = vpop.f32.mrb[0].mxu0
      %v552 = vpop.f32.mrb[0].mxu0
      %v553 = vadd.f32 0.0, %v552
      %v554 = vpop.f32.mrb[0].mxu0
      %555 = vmatprep.mubr.bf16.mxu0 0
      %556 = vmatmul.mubr.bf16.gmra.mrb[0].mxu0 %v437
      %v557 = vpop.f32.mrb[0].mxu0
      %v558 = vadd.f32 0.0, %v557
      %v559 = vpop.f32.mrb[0].mxu0
      %v560 = vpop.f32.mrb[0].mxu0
      %v561 = vadd.f32 0.0, %v560
      %v562 = vpop.f32.mrb[0].mxu0
      %563 = vmatprep.mubr.bf16.mxu0 0
      %564 = vmatmul.mubr.bf16.gmra.mrb[0].mxu0 %v440
      %v565 = vpop.f32.mrb[0].mxu0
      %v566 = vadd.f32 0.0, %v565
      %v567 = vpop.f32.mrb[0].mxu0
      %v568 = vpop.f32.mrb[0].mxu0
      %v569 = vadd.f32 0.0, %v568
      %v570 = vpop.f32.mrb[0].mxu0
      %571 = vmatprep.mubr.bf16.mxu0 0
      %572 = vmatmul.mubr.bf16.gmra.mrb[0].mxu0 %v443
      %v573 = vpop.f32.mrb[0].mxu0
      %v574 = vadd.f32 0.0, %v573
      %v575 = vpop.f32.mrb[0].mxu0
      %v576 = vpop.f32.mrb[0].mxu0
      %v577 = vadd.f32 0.0, %v576
      %v578 = vpop.f32.mrb[0].mxu0
      %579 = vmatprep.mubr.bf16.mxu0 0
      %580 = vmatmul.mubr.bf16.gmra.mrb[0].mxu0 %v446
      %v581 = vpop.f32.mrb[0].mxu0
      %v582 = vadd.f32 0.0, %v581
      %v583 = vpop.f32.mrb[0].mxu0
      %v584 = vpop.f32.mrb[0].mxu0
      %v585 = vadd.f32 0.0, %v584
      %v586 = vpop.f32.mrb[0].mxu0
      %587 = vmatprep.mubr.bf16.mxu0 0
      %588 = vmatmul.mubr.bf16.gmra.mrb[0].mxu0 %v449
      %v589 = vpop.f32.mrb[0].mxu0
      %v590 = vadd.f32 0.0, %v589
      %v591 = vpop.f32.mrb[0].mxu0
      %v592 = vpop.f32.mrb[0].mxu0
      %v593 = vadd.f32 0.0, %v592
      %v594 = vpop.f32.mrb[0].mxu0
      %595 = vmatprep.mubr.bf16.mxu0 0
      %596 = vmatmul.mubr.bf16.gmra.mrb[0].mxu0 %v452
      %v597 = vpop.f32.mrb[0].mxu0
      %v598 = vadd.f32 0.0, %v597
      %v599 = vpop.f32.mrb[0].mxu0
      %v600 = vpop.f32.mrb[0].mxu0
      %v601 = vadd.f32 0.0, %v600
      %v602 = vpop.f32.mrb[0].mxu0
      %603 = vmatprep.mubr.bf16.mxu0 0
      %604 = vmatmul.mubr.bf16.gmra.mrb[0].mxu0 %v455
      %v605 = vpop.f32.mrb[0].mxu0
      %v606 = vadd.f32 0.0, %v605
      %v607 = vpop.f32.mrb[0].mxu0
      %v608 = vpop.f32.mrb[0].mxu0
      %v609 = vadd.f32 0.0, %v608
      %v610 = vpop.f32.mrb[0].mxu0
      %611 = vmatprep.mubr.bf16.mxu0 0
      %612 = vmatmul.mubr.bf16.gmra.mrb[0].mxu0 %v458
      %v613 = vpop.f32.mrb[0].mxu0
      %v614 = vadd.f32 0.0, %v613
      %v615 = vpop.f32.mrb[0].mxu0
      %v616 = vpop.f32.mrb[0].mxu0
      %v617 = vadd.f32 0.0, %v616
      %v618 = vpop.f32.mrb[0].mxu0
      %619 = vmatprep.mubr.bf16.mxu0 0
      %620 = vmatmul.mubr.bf16.gmra.mrb[0].mxu0 %v461
      %v621 = vpop.f32.mrb[0].mxu0
      %v622 = vadd.f32 0.0, %v621
      %v623 = vpop.f32.mrb[0].mxu0
      %v624 = vpop.f32.mrb[0].mxu0
      %v625 = vadd.f32 0.0, %v624
      %v626 = vpop.f32.mrb[0].mxu0
      %627 = vdwg.mxu0
      %v629 = vsel %vm414, %v347, 0
      %v632 = vsel %vm414, %v348, 0
      %v635 = vsel %vm414, %v349, 0
      %v638 = vsel %vm414, %v350, 0
      %v641 = vsel %vm414, %v351, 0
      %v644 = vsel %vm414, %v352, 0
      %v647 = vsel %vm414, %v353, 0
      %v650 = vsel %vm414, %v354, 0
      %v653 = vsel %vm414, %v355, 0
      %v656 = vsel %vm414, %v356, 0
      %v659 = vsel %vm414, %v357, 0
      %v662 = vsel %vm414, %v358, 0
      %v665 = vsel %vm414, %v359, 0
      %v668 = vsel %vm414, %v360, 0
      %v671 = vsel %vm414, %v361, 0
      %v674 = vsel %vm414, %v362, 0
      %v677 = vsel %vm463, %v363, 0
      %679 = vmatprep.subr.bf16.mxu0 0
      %680 = vmatpush1.bf16.msra.mxu0 %v677
      %681 = vmatprep.subr.bf16.mxu0 0
      %682 = vmatpush1.bf16.msra.mxu0 0
      %683 = vmatprep.subr.bf16.mxu0 0
      %684 = vmatpush1.bf16.msra.mxu0 0
      %685 = vmatprep.subr.bf16.mxu0 0
      %686 = vmatpush1.bf16.msra.mxu0 0
      %687 = vmatprep.subr.bf16.mxu0 0
      %688 = vmatpush1.bf16.msra.mxu0 0
      %689 = vmatprep.subr.bf16.mxu0 0
      %690 = vmatpush1.bf16.msra.mxu0 0
      %691 = vmatprep.subr.bf16.mxu0 0
      %692 = vmatpush1.bf16.msra.mxu0 0
      %693 = vmatprep.subr.bf16.mxu0 0
      %694 = vmatpush1.bf16.msra.mxu0 0
      %695 = vmatprep.subr.bf16.mxu0 0
      %696 = vmatpush1.bf16.msra.mxu0 0
      %697 = vmatprep.subr.bf16.mxu0 0
      %698 = vmatpush1.bf16.msra.mxu0 0
      %699 = vmatprep.subr.bf16.mxu0 0
      %700 = vmatpush1.bf16.msra.mxu0 0
      %701 = vmatprep.subr.bf16.mxu0 0
      %702 = vmatpush1.bf16.msra.mxu0 0
      %703 = vmatprep.subr.bf16.mxu0 0
      %704 = vmatpush1.bf16.msra.mxu0 0
      %705 = vmatprep.subr.bf16.mxu0 0
      %706 = vmatpush1.bf16.msra.mxu0 0
      %707 = vmatprep.subr.bf16.mxu0 0
      %708 = vmatpush1.bf16.msra.mxu0 0
      %709 = vmatprep.subr.bf16.mxu0 0
      %710 = vmatpush1.bf16.msra.mxu0 0
      %711 = vmatprep.mubr.bf16.mxu0 0
      %712 = vmatmul.mubr.bf16.gmra.mrb[0].mxu0 %v629
      %v713 = vpop.f32.mrb[0].mxu0
      %v714 = vadd.f32 %v502, %v713
      %v715 = vpop.f32.mrb[0].mxu0
      %v716 = vpop.f32.mrb[0].mxu0
      %v717 = vadd.f32 %v505, %v716
      %v718 = vpop.f32.mrb[0].mxu0
      %719 = vmatprep.mubr.bf16.mxu0 0
      %720 = vmatmul.mubr.bf16.gmra.mrb[0].mxu0 %v632
      %v721 = vpop.f32.mrb[0].mxu0
      %v722 = vadd.f32 %v510, %v721
      %v723 = vpop.f32.mrb[0].mxu0
      %v724 = vpop.f32.mrb[0].mxu0
      %v725 = vadd.f32 %v513, %v724
      %v726 = vpop.f32.mrb[0].mxu0
      %727 = vmatprep.mubr.bf16.mxu0 0
      %728 = vmatmul.mubr.bf16.gmra.mrb[0].mxu0 %v635
      %v729 = vpop.f32.mrb[0].mxu0
      %v730 = vadd.f32 %v518, %v729
      %v731 = vpop.f32.mrb[0].mxu0
      %v732 = vpop.f32.mrb[0].mxu0
      %v733 = vadd.f32 %v521, %v732
      %v734 = vpop.f32.mrb[0].mxu0
      %735 = vmatprep.mubr.bf16.mxu0 0
      %736 = vmatmul.mubr.bf16.gmra.mrb[0].mxu0 %v638
      %v737 = vpop.f32.mrb[0].mxu0
      %v738 = vadd.f32 %v526, %v737
      %v739 = vpop.f32.mrb[0].mxu0
      %v740 = vpop.f32.mrb[0].mxu0
      %v741 = vadd.f32 %v529, %v740
      %v742 = vpop.f32.mrb[0].mxu0
      %743 = vmatprep.mubr.bf16.mxu0 0
      %744 = vmatmul.mubr.bf16.gmra.mrb[0].mxu0 %v641
      %v745 = vpop.f32.mrb[0].mxu0
      %v746 = vadd.f32 %v534, %v745
      %v747 = vpop.f32.mrb[0].mxu0
      %v748 = vpop.f32.mrb[0].mxu0
      %v749 = vadd.f32 %v537, %v748
      %v750 = vpop.f32.mrb[0].mxu0
      %751 = vmatprep.mubr.bf16.mxu0 0
      %752 = vmatmul.mubr.bf16.gmra.mrb[0].mxu0 %v644
      %v753 = vpop.f32.mrb[0].mxu0
      %v754 = vadd.f32 %v542, %v753
      %v755 = vpop.f32.mrb[0].mxu0
      %v756 = vpop.f32.mrb[0].mxu0
      %v757 = vadd.f32 %v545, %v756
      %v758 = vpop.f32.mrb[0].mxu0
      %759 = vmatprep.mubr.bf16.mxu0 0
      %760 = vmatmul.mubr.bf16.gmra.mrb[0].mxu0 %v647
      %v761 = vpop.f32.mrb[0].mxu0
      %v762 = vadd.f32 %v550, %v761
      %v763 = vpop.f32.mrb[0].mxu0
      %v764 = vpop.f32.mrb[0].mxu0
      %v765 = vadd.f32 %v553, %v764
      %v766 = vpop.f32.mrb[0].mxu0
      %767 = vmatprep.mubr.bf16.mxu0 0
      %768 = vmatmul.mubr.bf16.gmra.mrb[0].mxu0 %v650
      %v769 = vpop.f32.mrb[0].mxu0
      %v770 = vadd.f32 %v558, %v769
      %v771 = vpop.f32.mrb[0].mxu0
      %v772 = vpop.f32.mrb[0].mxu0
      %v773 = vadd.f32 %v561, %v772
      %v774 = vpop.f32.mrb[0].mxu0
      %775 = vmatprep.mubr.bf16.mxu0 0
      %776 = vmatmul.mubr.bf16.gmra.mrb[0].mxu0 %v653
      %v777 = vpop.f32.mrb[0].mxu0
      %v778 = vadd.f32 %v566, %v777
      %v779 = vpop.f32.mrb[0].mxu0
      %v780 = vpop.f32.mrb[0].mxu0
      %v781 = vadd.f32 %v569, %v780
      %v782 = vpop.f32.mrb[0].mxu0
      %783 = vmatprep.mubr.bf16.mxu0 0
      %784 = vmatmul.mubr.bf16.gmra.mrb[0].mxu0 %v656
      %v785 = vpop.f32.mrb[0].mxu0
      %v786 = vadd.f32 %v574, %v785
      %v787 = vpop.f32.mrb[0].mxu0
      %v788 = vpop.f32.mrb[0].mxu0
      %v789 = vadd.f32 %v577, %v788
      %v790 = vpop.f32.mrb[0].mxu0
      %791 = vmatprep.mubr.bf16.mxu0 0
      %792 = vmatmul.mubr.bf16.gmra.mrb[0].mxu0 %v659
      %v793 = vpop.f32.mrb[0].mxu0
      %v794 = vadd.f32 %v582, %v793
      %v795 = vpop.f32.mrb[0].mxu0
      %v796 = vpop.f32.mrb[0].mxu0
      %v797 = vadd.f32 %v585, %v796
      %v798 = vpop.f32.mrb[0].mxu0
      %799 = vmatprep.mubr.bf16.mxu0 0
      %800 = vmatmul.mubr.bf16.gmra.mrb[0].mxu0 %v662
      %v801 = vpop.f32.mrb[0].mxu0
      %v802 = vadd.f32 %v590, %v801
      %v803 = vpop.f32.mrb[0].mxu0
      %v804 = vpop.f32.mrb[0].mxu0
      %v805 = vadd.f32 %v593, %v804
      %v806 = vpop.f32.mrb[0].mxu0
      %807 = vmatprep.mubr.bf16.mxu0 0
      %808 = vmatmul.mubr.bf16.gmra.mrb[0].mxu0 %v665
      %v809 = vpop.f32.mrb[0].mxu0
      %v810 = vadd.f32 %v598, %v809
      %v811 = vpop.f32.mrb[0].mxu0
      %v812 = vpop.f32.mrb[0].mxu0
      %v813 = vadd.f32 %v601, %v812
      %v814 = vpop.f32.mrb[0].mxu0
      %815 = vmatprep.mubr.bf16.mxu0 0
      %816 = vmatmul.mubr.bf16.gmra.mrb[0].mxu0 %v668
      %v817 = vpop.f32.mrb[0].mxu0
      %v818 = vadd.f32 %v606, %v817
      %v819 = vpop.f32.mrb[0].mxu0
      %v820 = vpop.f32.mrb[0].mxu0
      %v821 = vadd.f32 %v609, %v820
      %v822 = vpop.f32.mrb[0].mxu0
      %823 = vmatprep.mubr.bf16.mxu0 0
      %824 = vmatmul.mubr.bf16.gmra.mrb[0].mxu0 %v671
      %v825 = vpop.f32.mrb[0].mxu0
      %v826 = vadd.f32 %v614, %v825
      %v827 = vpop.f32.mrb[0].mxu0
      %v828 = vpop.f32.mrb[0].mxu0
      %v829 = vadd.f32 %v617, %v828
      %v830 = vpop.f32.mrb[0].mxu0
      %831 = vmatprep.mubr.bf16.mxu0 0
      %832 = vmatmul.mubr.bf16.gmra.mrb[0].mxu0 %v674
      %v833 = vpop.f32.mrb[0].mxu0
      %v834 = vadd.f32 %v622, %v833
      %v835 = vpop.f32.mrb[0].mxu0
      %v836 = vpop.f32.mrb[0].mxu0
      %v837 = vadd.f32 %v625, %v836
      %v838 = vpop.f32.mrb[0].mxu0
      %839 = vdwg.mxu0
      %v840 = vld [vmem:[%s300 + $0x2] sm:$0xff]
      %v841 = vld [vmem:[%s300 + $0xa] sm:$0xff]
      %v842 = vld [vmem:[%s300 + $0x12] sm:$0xff]
      %v843 = vld [vmem:[%s300 + $0x1a] sm:$0xff]
      %v844 = vld [vmem:[%s300 + $0x22] sm:$0xff]
      %v845 = vld [vmem:[%s300 + $0x2a] sm:$0xff]
      %v846 = vld [vmem:[%s300 + $0x32] sm:$0xff]
      %v847 = vld [vmem:[%s300 + $0x3a] sm:$0xff]
      %v848 = vld [vmem:[%s300 + $0x42] sm:$0xff]
      %v849 = vld [vmem:[%s300 + $0x4a] sm:$0xff]
      %v850 = vld [vmem:[%s300 + $0x52] sm:$0xff]
      %v851 = vld [vmem:[%s300 + $0x5a] sm:$0xff]
      %v852 = vld [vmem:[%s300 + $0x62] sm:$0xff]
      %v853 = vld [vmem:[%s300 + $0x6a] sm:$0xff]
      %v854 = vld [vmem:[%s300 + $0x72] sm:$0xff]
      %v855 = vld [vmem:[%s300 + $0x7a] sm:$0xff]
      %v856 = vld [vmem:[%s300 + $0x82] sm:$0xff]
      %v857 = vld [vmem:[%s300 + $0x8a] sm:$0xff]
      %v858 = vld [vmem:[%s300 + $0x92] sm:$0xff]
      %v859 = vld [vmem:[%s300 + $0x9a] sm:$0xff]
      %v860 = vld [vmem:[%s300 + $0xa2] sm:$0xff]
      %v861 = vld [vmem:[%s300 + $0xaa] sm:$0xff]
      %v862 = vld [vmem:[%s300 + $0xb2] sm:$0xff]
      %v863 = vld [vmem:[%s300 + $0xba] sm:$0xff]
      %v864 = vld [vmem:[%s300 + $0xc2] sm:$0xff]
      %v865 = vld [vmem:[%s300 + $0xca] sm:$0xff]
      %v866 = vld [vmem:[%s300 + $0xd2] sm:$0xff]
      %v867 = vld [vmem:[%s300 + $0xda] sm:$0xff]
      %v868 = vld [vmem:[%s300 + $0xe2] sm:$0xff]
      %v869 = vld [vmem:[%s300 + $0xea] sm:$0xff]
      %v870 = vld [vmem:[%s300 + $0xf2] sm:$0xff]
      %v871 = vld [vmem:[%s300 + $0xfa] sm:$0xff]
      %v872 = vpack.c.bf16 %v841, %v840
      %v873 = vpack.c.bf16 %v843, %v842
      %v874 = vpack.c.bf16 %v845, %v844
      %v875 = vpack.c.bf16 %v847, %v846
      %v876 = vpack.c.bf16 %v849, %v848
      %v877 = vpack.c.bf16 %v851, %v850
      %v878 = vpack.c.bf16 %v853, %v852
      %v879 = vpack.c.bf16 %v855, %v854
      %v880 = vpack.c.bf16 %v857, %v856
      %v881 = vpack.c.bf16 %v859, %v858
      %v882 = vpack.c.bf16 %v861, %v860
      %v883 = vpack.c.bf16 %v863, %v862
      %v884 = vpack.c.bf16 %v865, %v864
      %v885 = vpack.c.bf16 %v867, %v866
      %v886 = vpack.c.bf16 %v869, %v868
      %v887 = vpack.c.bf16 %v871, %v870
      %s888 = scalar_lea.vmem %s1, 4
      %v889 = vld [vmem:[%s888] sm:$0x3]
      %v891 = vsel %vm414, %v872, 0
      %v894 = vsel %vm414, %v873, 0
      %v897 = vsel %vm414, %v874, 0
      %v900 = vsel %vm414, %v875, 0
      %v903 = vsel %vm414, %v876, 0
      %v906 = vsel %vm414, %v877, 0
      %v909 = vsel %vm414, %v878, 0
      %v912 = vsel %vm414, %v879, 0
      %v915 = vsel %vm414, %v880, 0
      %v918 = vsel %vm414, %v881, 0
      %v921 = vsel %vm414, %v882, 0
      %v924 = vsel %vm414, %v883, 0
      %v927 = vsel %vm414, %v884, 0
      %v930 = vsel %vm414, %v885, 0
      %v933 = vsel %vm414, %v886, 0
      %v936 = vsel %vm414, %v887, 0
      %v939 = vsel %vm463, %v889, 0
      %941 = vmatprep.subr.bf16.mxu0 0
      %942 = vmatpush1.bf16.msra.mxu0 %v939
      %943 = vmatprep.subr.bf16.mxu0 0
      %944 = vmatpush1.bf16.msra.mxu0 0
      %945 = vmatprep.subr.bf16.mxu0 0
      %946 = vmatpush1.bf16.msra.mxu0 0
      %947 = vmatprep.subr.bf16.mxu0 0
      %948 = vmatpush1.bf16.msra.mxu0 0
      %949 = vmatprep.subr.bf16.mxu0 0
      %950 = vmatpush1.bf16.msra.mxu0 0
      %951 = vmatprep.subr.bf16.mxu0 0
      %952 = vmatpush1.bf16.msra.mxu0 0
      %953 = vmatprep.subr.bf16.mxu0 0
      %954 = vmatpush1.bf16.msra.mxu0 0
      %955 = vmatprep.subr.bf16.mxu0 0
      %956 = vmatpush1.bf16.msra.mxu0 0
      %957 = vmatprep.subr.bf16.mxu0 0
      %958 = vmatpush1.bf16.msra.mxu0 0
      %959 = vmatprep.subr.bf16.mxu0 0
      %960 = vmatpush1.bf16.msra.mxu0 0
      %961 = vmatprep.subr.bf16.mxu0 0
      %962 = vmatpush1.bf16.msra.mxu0 0
      %963 = vmatprep.subr.bf16.mxu0 0
      %964 = vmatpush1.bf16.msra.mxu0 0
      %965 = vmatprep.subr.bf16.mxu0 0
      %966 = vmatpush1.bf16.msra.mxu0 0
      %967 = vmatprep.subr.bf16.mxu0 0
      %968 = vmatpush1.bf16.msra.mxu0 0
      %969 = vmatprep.subr.bf16.mxu0 0
      %970 = vmatpush1.bf16.msra.mxu0 0
      %971 = vmatprep.subr.bf16.mxu0 0
      %972 = vmatpush1.bf16.msra.mxu0 0
      %973 = vmatprep.mubr.bf16.mxu0 0
      %974 = vmatmul.mubr.bf16.gmra.mrb[0].mxu0 %v891
      %v975 = vpop.f32.mrb[0].mxu0
      %v976 = vadd.f32 0.0, %v975
      %v977 = vpop.f32.mrb[0].mxu0
      %v978 = vpop.f32.mrb[0].mxu0
      %v979 = vadd.f32 0.0, %v978
      %v980 = vpop.f32.mrb[0].mxu0
      %981 = vmatprep.mubr.bf16.mxu0 0
      %982 = vmatmul.mubr.bf16.gmra.mrb[0].mxu0 %v894
      %v983 = vpop.f32.mrb[0].mxu0
      %v984 = vadd.f32 0.0, %v983
      %v985 = vpop.f32.mrb[0].mxu0
      %v986 = vpop.f32.mrb[0].mxu0
      %v987 = vadd.f32 0.0, %v986
      %v988 = vpop.f32.mrb[0].mxu0
      %989 = vmatprep.mubr.bf16.mxu0 0
      %990 = vmatmul.mubr.bf16.gmra.mrb[0].mxu0 %v897
      %v991 = vpop.f32.mrb[0].mxu0
      %v992 = vadd.f32 0.0, %v991
      %v993 = vpop.f32.mrb[0].mxu0
      %v994 = vpop.f32.mrb[0].mxu0
      %v995 = vadd.f32 0.0, %v994
      %v996 = vpop.f32.mrb[0].mxu0
      %997 = vmatprep.mubr.bf16.mxu0 0
      %998 = vmatmul.mubr.bf16.gmra.mrb[0].mxu0 %v900
      %v999 = vpop.f32.mrb[0].mxu0
      %v1000 = vadd.f32 0.0, %v999
      %v1001 = vpop.f32.mrb[0].mxu0
      %v1002 = vpop.f32.mrb[0].mxu0
      %v1003 = vadd.f32 0.0, %v1002
      %v1004 = vpop.f32.mrb[0].mxu0
      %1005 = vmatprep.mubr.bf16.mxu0 0
      %1006 = vmatmul.mubr.bf16.gmra.mrb[0].mxu0 %v903
      %v1007 = vpop.f32.mrb[0].mxu0
      %v1008 = vadd.f32 0.0, %v1007
      %v1009 = vpop.f32.mrb[0].mxu0
      %v1010 = vpop.f32.mrb[0].mxu0
      %v1011 = vadd.f32 0.0, %v1010
      %v1012 = vpop.f32.mrb[0].mxu0
      %1013 = vmatprep.mubr.bf16.mxu0 0
      %1014 = vmatmul.mubr.bf16.gmra.mrb[0].mxu0 %v906
      %v1015 = vpop.f32.mrb[0].mxu0
      %v1016 = vadd.f32 0.0, %v1015
      %v1017 = vpop.f32.mrb[0].mxu0
      %v1018 = vpop.f32.mrb[0].mxu0
      %v1019 = vadd.f32 0.0, %v1018
      %v1020 = vpop.f32.mrb[0].mxu0
      %1021 = vmatprep.mubr.bf16.mxu0 0
      %1022 = vmatmul.mubr.bf16.gmra.mrb[0].mxu0 %v909
      %v1023 = vpop.f32.mrb[0].mxu0
      %v1024 = vadd.f32 0.0, %v1023
      %v1025 = vpop.f32.mrb[0].mxu0
      %v1026 = vpop.f32.mrb[0].mxu0
      %v1027 = vadd.f32 0.0, %v1026
      %v1028 = vpop.f32.mrb[0].mxu0
      %1029 = vmatprep.mubr.bf16.mxu0 0
      %1030 = vmatmul.mubr.bf16.gmra.mrb[0].mxu0 %v912
      %v1031 = vpop.f32.mrb[0].mxu0
      %v1032 = vadd.f32 0.0, %v1031
      %v1033 = vpop.f32.mrb[0].mxu0
      %v1034 = vpop.f32.mrb[0].mxu0
      %v1035 = vadd.f32 0.0, %v1034
      %v1036 = vpop.f32.mrb[0].mxu0
      %1037 = vmatprep.mubr.bf16.mxu0 0
      %1038 = vmatmul.mubr.bf16.gmra.mrb[0].mxu0 %v915
      %v1039 = vpop.f32.mrb[0].mxu0
      %v1040 = vadd.f32 0.0, %v1039
      %v1041 = vpop.f32.mrb[0].mxu0
      %v1042 = vpop.f32.mrb[0].mxu0
      %v1043 = vadd.f32 0.0, %v1042
      %v1044 = vpop.f32.mrb[0].mxu0
      %1045 = vmatprep.mubr.bf16.mxu0 0
      %1046 = vmatmul.mubr.bf16.gmra.mrb[0].mxu0 %v918
      %v1047 = vpop.f32.mrb[0].mxu0
      %v1048 = vadd.f32 0.0, %v1047
      %v1049 = vpop.f32.mrb[0].mxu0
      %v1050 = vpop.f32.mrb[0].mxu0
      %v1051 = vadd.f32 0.0, %v1050
      %v1052 = vpop.f32.mrb[0].mxu0
      %1053 = vmatprep.mubr.bf16.mxu0 0
      %1054 = vmatmul.mubr.bf16.gmra.mrb[0].mxu0 %v921
      %v1055 = vpop.f32.mrb[0].mxu0
      %v1056 = vadd.f32 0.0, %v1055
      %v1057 = vpop.f32.mrb[0].mxu0
      %v1058 = vpop.f32.mrb[0].mxu0
      %v1059 = vadd.f32 0.0, %v1058
      %v1060 = vpop.f32.mrb[0].mxu0
      %1061 = vmatprep.mubr.bf16.mxu0 0
      %1062 = vmatmul.mubr.bf16.gmra.mrb[0].mxu0 %v924
      %v1063 = vpop.f32.mrb[0].mxu0
      %v1064 = vadd.f32 0.0, %v1063
      %v1065 = vpop.f32.mrb[0].mxu0
      %v1066 = vpop.f32.mrb[0].mxu0
      %v1067 = vadd.f32 0.0, %v1066
      %v1068 = vpop.f32.mrb[0].mxu0
      %1069 = vmatprep.mubr.bf16.mxu0 0
      %1070 = vmatmul.mubr.bf16.gmra.mrb[0].mxu0 %v927
      %v1071 = vpop.f32.mrb[0].mxu0
      %v1072 = vadd.f32 0.0, %v1071
      %v1073 = vpop.f32.mrb[0].mxu0
      %v1074 = vpop.f32.mrb[0].mxu0
      %v1075 = vadd.f32 0.0, %v1074
      %v1076 = vpop.f32.mrb[0].mxu0
      %1077 = vmatprep.mubr.bf16.mxu0 0
      %1078 = vmatmul.mubr.bf16.gmra.mrb[0].mxu0 %v930
      %v1079 = vpop.f32.mrb[0].mxu0
      %v1080 = vadd.f32 0.0, %v1079
      %v1081 = vpop.f32.mrb[0].mxu0
      %v1082 = vpop.f32.mrb[0].mxu0
      %v1083 = vadd.f32 0.0, %v1082
      %v1084 = vpop.f32.mrb[0].mxu0
      %1085 = vmatprep.mubr.bf16.mxu0 0
      %1086 = vmatmul.mubr.bf16.gmra.mrb[0].mxu0 %v933
      %v1087 = vpop.f32.mrb[0].mxu0
      %v1088 = vadd.f32 0.0, %v1087
      %v1089 = vpop.f32.mrb[0].mxu0
      %v1090 = vpop.f32.mrb[0].mxu0
      %v1091 = vadd.f32 0.0, %v1090
      %v1092 = vpop.f32.mrb[0].mxu0
      %1093 = vmatprep.mubr.bf16.mxu0 0
      %1094 = vmatmul.mubr.bf16.gmra.mrb[0].mxu0 %v936
      %v1095 = vpop.f32.mrb[0].mxu0
      %v1096 = vadd.f32 0.0, %v1095
      %v1097 = vpop.f32.mrb[0].mxu0
      %v1098 = vpop.f32.mrb[0].mxu0
      %v1099 = vadd.f32 0.0, %v1098
      %v1100 = vpop.f32.mrb[0].mxu0
      %1101 = vdwg.mxu0
      %v1102 = vadd.f32 %v714, %v976
      %v1103 = vadd.f32 %v717, %v979
      %v1104 = vadd.f32 %v722, %v984
      %v1105 = vadd.f32 %v725, %v987
      %v1106 = vadd.f32 %v730, %v992
      %v1107 = vadd.f32 %v733, %v995
      %v1108 = vadd.f32 %v738, %v1000
      %v1109 = vadd.f32 %v741, %v1003
      %v1110 = vadd.f32 %v746, %v1008
      %v1111 = vadd.f32 %v749, %v1011
      %v1112 = vadd.f32 %v754, %v1016
      %v1113 = vadd.f32 %v757, %v1019
      %v1114 = vadd.f32 %v762, %v1024
      %v1115 = vadd.f32 %v765, %v1027
      %v1116 = vadd.f32 %v770, %v1032
      %v1117 = vadd.f32 %v773, %v1035
      %v1118 = vadd.f32 %v778, %v1040
      %v1119 = vadd.f32 %v781, %v1043
      %v1120 = vadd.f32 %v786, %v1048
      %v1121 = vadd.f32 %v789, %v1051
      %v1122 = vadd.f32 %v794, %v1056
      %v1123 = vadd.f32 %v797, %v1059
      %v1124 = vadd.f32 %v802, %v1064
      %v1125 = vadd.f32 %v805, %v1067
      %v1126 = vadd.f32 %v810, %v1072
      %v1127 = vadd.f32 %v813, %v1075
      %v1128 = vadd.f32 %v818, %v1080
      %v1129 = vadd.f32 %v821, %v1083
      %v1130 = vadd.f32 %v826, %v1088
      %v1131 = vadd.f32 %v829, %v1091
      %v1132 = vadd.f32 %v834, %v1096
      %v1133 = vadd.f32 %v837, %v1099
      %v1134 = vld [vmem:[%s300 + $0x12] sm:$0xff]
      %v1135 = vld [vmem:[%s300 + $0x1a] sm:$0xff]
      %v1136 = vld [vmem:[%s300 + $0x22] sm:$0xff]
      %v1137 = vld [vmem:[%s300 + $0x2a] sm:$0xff]
      %v1138 = vld [vmem:[%s300 + $0x32] sm:$0xff]
      %v1139 = vld [vmem:[%s300 + $0x3a] sm:$0xff]
      %v1140 = vld [vmem:[%s300 + $0x42] sm:$0xff]
      %v1141 = vld [vmem:[%s300 + $0x4a] sm:$0xff]
      %v1142 = vld [vmem:[%s300 + $0x52] sm:$0xff]
      %v1143 = vld [vmem:[%s300 + $0x5a] sm:$0xff]
      %v1144 = vld [vmem:[%s300 + $0x62] sm:$0xff]
      %v1145 = vld [vmem:[%s300 + $0x6a] sm:$0xff]
      %v1146 = vld [vmem:[%s300 + $0x72] sm:$0xff]
      %v1147 = vld [vmem:[%s300 + $0x7a] sm:$0xff]
      %v1148 = vld [vmem:[%s300 + $0x82] sm:$0xff]
      %v1149 = vld [vmem:[%s300 + $0x8a] sm:$0xff]
      %v1150 = vld [vmem:[%s300 + $0x92] sm:$0xff]
      %v1151 = vld [vmem:[%s300 + $0x9a] sm:$0xff]
      %v1152 = vld [vmem:[%s300 + $0xa2] sm:$0xff]
      %v1153 = vld [vmem:[%s300 + $0xaa] sm:$0xff]
      %v1154 = vld [vmem:[%s300 + $0xb2] sm:$0xff]
      %v1155 = vld [vmem:[%s300 + $0xba] sm:$0xff]
      %v1156 = vld [vmem:[%s300 + $0xc2] sm:$0xff]
      %v1157 = vld [vmem:[%s300 + $0xca] sm:$0xff]
      %v1158 = vld [vmem:[%s300 + $0xd2] sm:$0xff]
      %v1159 = vld [vmem:[%s300 + $0xda] sm:$0xff]
      %v1160 = vld [vmem:[%s300 + $0xe2] sm:$0xff]
      %v1161 = vld [vmem:[%s300 + $0xea] sm:$0xff]
      %v1162 = vld [vmem:[%s300 + $0xf2] sm:$0xff]
      %v1163 = vld [vmem:[%s300 + $0xfa] sm:$0xff]
      %v1164 = vld [vmem:[%s300 + $0x102] sm:$0xff]
      %v1165 = vld [vmem:[%s300 + $0x10a] sm:$0xff]
      %v1166 = vpack.c.bf16 %v1135, %v1134
      %v1167 = vpack.c.bf16 %v1137, %v1136
      %v1168 = vpack.c.bf16 %v1139, %v1138
      %v1169 = vpack.c.bf16 %v1141, %v1140
      %v1170 = vpack.c.bf16 %v1143, %v1142
      %v1171 = vpack.c.bf16 %v1145, %v1144
      %v1172 = vpack.c.bf16 %v1147, %v1146
      %v1173 = vpack.c.bf16 %v1149, %v1148
      %v1174 = vpack.c.bf16 %v1151, %v1150
      %v1175 = vpack.c.bf16 %v1153, %v1152
      %v1176 = vpack.c.bf16 %v1155, %v1154
      %v1177 = vpack.c.bf16 %v1157, %v1156
      %v1178 = vpack.c.bf16 %v1159, %v1158
      %v1179 = vpack.c.bf16 %v1161, %v1160
      %v1180 = vpack.c.bf16 %v1163, %v1162
      %v1181 = vpack.c.bf16 %v1165, %v1164
      %s1182 = scalar_lea.vmem %s1, 6
      %v1183 = vld [vmem:[%s1182] sm:$0x3]
      %v1185 = vsel %vm414, %v1166, 0
      %v1188 = vsel %vm414, %v1167, 0
      %v1191 = vsel %vm414, %v1168, 0
      %v1194 = vsel %vm414, %v1169, 0
      %v1197 = vsel %vm414, %v1170, 0
      %v1200 = vsel %vm414, %v1171, 0
      %v1203 = vsel %vm414, %v1172, 0
      %v1206 = vsel %vm414, %v1173, 0
      %v1209 = vsel %vm414, %v1174, 0
      %v1212 = vsel %vm414, %v1175, 0
      %v1215 = vsel %vm414, %v1176, 0
      %v1218 = vsel %vm414, %v1177, 0
      %v1221 = vsel %vm414, %v1178, 0
      %v1224 = vsel %vm414, %v1179, 0
      %v1227 = vsel %vm414, %v1180, 0
      %v1230 = vsel %vm414, %v1181, 0
      %v1233 = vsel %vm463, %v1183, 0
      %1235 = vmatprep.subr.bf16.mxu0 0
      %1236 = vmatpush1.bf16.msra.mxu0 %v1233
      %1237 = vmatprep.subr.bf16.mxu0 0
      %1238 = vmatpush1.bf16.msra.mxu0 0
      %1239 = vmatprep.subr.bf16.mxu0 0
      %1240 = vmatpush1.bf16.msra.mxu0 0
      %1241 = vmatprep.subr.bf16.mxu0 0
      %1242 = vmatpush1.bf16.msra.mxu0 0
      %1243 = vmatprep.subr.bf16.mxu0 0
      %1244 = vmatpush1.bf16.msra.mxu0 0
      %1245 = vmatprep.subr.bf16.mxu0 0
      %1246 = vmatpush1.bf16.msra.mxu0 0
      %1247 = vmatprep.subr.bf16.mxu0 0
      %1248 = vmatpush1.bf16.msra.mxu0 0
      %1249 = vmatprep.subr.bf16.mxu0 0
      %1250 = vmatpush1.bf16.msra.mxu0 0
      %1251 = vmatprep.subr.bf16.mxu0 0
      %1252 = vmatpush1.bf16.msra.mxu0 0
      %1253 = vmatprep.subr.bf16.mxu0 0
      %1254 = vmatpush1.bf16.msra.mxu0 0
      %1255 = vmatprep.subr.bf16.mxu0 0
      %1256 = vmatpush1.bf16.msra.mxu0 0
      %1257 = vmatprep.subr.bf16.mxu0 0
      %1258 = vmatpush1.bf16.msra.mxu0 0
      %1259 = vmatprep.subr.bf16.mxu0 0
      %1260 = vmatpush1.bf16.msra.mxu0 0
      %1261 = vmatprep.subr.bf16.mxu0 0
      %1262 = vmatpush1.bf16.msra.mxu0 0
      %1263 = vmatprep.subr.bf16.mxu0 0
      %1264 = vmatpush1.bf16.msra.mxu0 0
      %1265 = vmatprep.subr.bf16.mxu0 0
      %1266 = vmatpush1.bf16.msra.mxu0 0
      %1267 = vmatprep.mubr.bf16.mxu0 0
      %1268 = vmatmul.mubr.bf16.gmra.mrb[0].mxu0 %v1185
      %v1269 = vpop.f32.mrb[0].mxu0
      %v1270 = vadd.f32 0.0, %v1269
      %v1271 = vpop.f32.mrb[0].mxu0
      %v1272 = vpop.f32.mrb[0].mxu0
      %v1273 = vadd.f32 0.0, %v1272
      %v1274 = vpop.f32.mrb[0].mxu0
      %1275 = vmatprep.mubr.bf16.mxu0 0
      %1276 = vmatmul.mubr.bf16.gmra.mrb[0].mxu0 %v1188
      %v1277 = vpop.f32.mrb[0].mxu0
      %v1278 = vadd.f32 0.0, %v1277
      %v1279 = vpop.f32.mrb[0].mxu0
      %v1280 = vpop.f32.mrb[0].mxu0
      %v1281 = vadd.f32 0.0, %v1280
      %v1282 = vpop.f32.mrb[0].mxu0
      %1283 = vmatprep.mubr.bf16.mxu0 0
      %1284 = vmatmul.mubr.bf16.gmra.mrb[0].mxu0 %v1191
      %v1285 = vpop.f32.mrb[0].mxu0
      %v1286 = vadd.f32 0.0, %v1285
      %v1287 = vpop.f32.mrb[0].mxu0
      %v1288 = vpop.f32.mrb[0].mxu0
      %v1289 = vadd.f32 0.0, %v1288
      %v1290 = vpop.f32.mrb[0].mxu0
      %1291 = vmatprep.mubr.bf16.mxu0 0
      %1292 = vmatmul.mubr.bf16.gmra.mrb[0].mxu0 %v1194
      %v1293 = vpop.f32.mrb[0].mxu0
      %v1294 = vadd.f32 0.0, %v1293
      %v1295 = vpop.f32.mrb[0].mxu0
      %v1296 = vpop.f32.mrb[0].mxu0
      %v1297 = vadd.f32 0.0, %v1296
      %v1298 = vpop.f32.mrb[0].mxu0
      %1299 = vmatprep.mubr.bf16.mxu0 0
      %1300 = vmatmul.mubr.bf16.gmra.mrb[0].mxu0 %v1197
      %v1301 = vpop.f32.mrb[0].mxu0
      %v1302 = vadd.f32 0.0, %v1301
      %v1303 = vpop.f32.mrb[0].mxu0
      %v1304 = vpop.f32.mrb[0].mxu0
      %v1305 = vadd.f32 0.0, %v1304
      %v1306 = vpop.f32.mrb[0].mxu0
      %1307 = vmatprep.mubr.bf16.mxu0 0
      %1308 = vmatmul.mubr.bf16.gmra.mrb[0].mxu0 %v1200
      %v1309 = vpop.f32.mrb[0].mxu0
      %v1310 = vadd.f32 0.0, %v1309
      %v1311 = vpop.f32.mrb[0].mxu0
      %v1312 = vpop.f32.mrb[0].mxu0
      %v1313 = vadd.f32 0.0, %v1312
      %v1314 = vpop.f32.mrb[0].mxu0
      %1315 = vmatprep.mubr.bf16.mxu0 0
      %1316 = vmatmul.mubr.bf16.gmra.mrb[0].mxu0 %v1203
      %v1317 = vpop.f32.mrb[0].mxu0
      %v1318 = vadd.f32 0.0, %v1317
      %v1319 = vpop.f32.mrb[0].mxu0
      %v1320 = vpop.f32.mrb[0].mxu0
      %v1321 = vadd.f32 0.0, %v1320
      %v1322 = vpop.f32.mrb[0].mxu0
      %1323 = vmatprep.mubr.bf16.mxu0 0
      %1324 = vmatmul.mubr.bf16.gmra.mrb[0].mxu0 %v1206
      %v1325 = vpop.f32.mrb[0].mxu0
      %v1326 = vadd.f32 0.0, %v1325
      %v1327 = vpop.f32.mrb[0].mxu0
      %v1328 = vpop.f32.mrb[0].mxu0
      %v1329 = vadd.f32 0.0, %v1328
      %v1330 = vpop.f32.mrb[0].mxu0
      %1331 = vmatprep.mubr.bf16.mxu0 0
      %1332 = vmatmul.mubr.bf16.gmra.mrb[0].mxu0 %v1209
      %v1333 = vpop.f32.mrb[0].mxu0
      %v1334 = vadd.f32 0.0, %v1333
      %v1335 = vpop.f32.mrb[0].mxu0
      %v1336 = vpop.f32.mrb[0].mxu0
      %v1337 = vadd.f32 0.0, %v1336
      %v1338 = vpop.f32.mrb[0].mxu0
      %1339 = vmatprep.mubr.bf16.mxu0 0
      %1340 = vmatmul.mubr.bf16.gmra.mrb[0].mxu0 %v1212
      %v1341 = vpop.f32.mrb[0].mxu0
      %v1342 = vadd.f32 0.0, %v1341
      %v1343 = vpop.f32.mrb[0].mxu0
      %v1344 = vpop.f32.mrb[0].mxu0
      %v1345 = vadd.f32 0.0, %v1344
      %v1346 = vpop.f32.mrb[0].mxu0
      %1347 = vmatprep.mubr.bf16.mxu0 0
      %1348 = vmatmul.mubr.bf16.gmra.mrb[0].mxu0 %v1215
      %v1349 = vpop.f32.mrb[0].mxu0
      %v1350 = vadd.f32 0.0, %v1349
      %v1351 = vpop.f32.mrb[0].mxu0
      %v1352 = vpop.f32.mrb[0].mxu0
      %v1353 = vadd.f32 0.0, %v1352
      %v1354 = vpop.f32.mrb[0].mxu0
      %1355 = vmatprep.mubr.bf16.mxu0 0
      %1356 = vmatmul.mubr.bf16.gmra.mrb[0].mxu0 %v1218
      %v1357 = vpop.f32.mrb[0].mxu0
      %v1358 = vadd.f32 0.0, %v1357
      %v1359 = vpop.f32.mrb[0].mxu0
      %v1360 = vpop.f32.mrb[0].mxu0
      %v1361 = vadd.f32 0.0, %v1360
      %v1362 = vpop.f32.mrb[0].mxu0
      %1363 = vmatprep.mubr.bf16.mxu0 0
      %1364 = vmatmul.mubr.bf16.gmra.mrb[0].mxu0 %v1221
      %v1365 = vpop.f32.mrb[0].mxu0
      %v1366 = vadd.f32 0.0, %v1365
      %v1367 = vpop.f32.mrb[0].mxu0
      %v1368 = vpop.f32.mrb[0].mxu0
      %v1369 = vadd.f32 0.0, %v1368
      %v1370 = vpop.f32.mrb[0].mxu0
      %1371 = vmatprep.mubr.bf16.mxu0 0
      %1372 = vmatmul.mubr.bf16.gmra.mrb[0].mxu0 %v1224
      %v1373 = vpop.f32.mrb[0].mxu0
      %v1374 = vadd.f32 0.0, %v1373
      %v1375 = vpop.f32.mrb[0].mxu0
      %v1376 = vpop.f32.mrb[0].mxu0
      %v1377 = vadd.f32 0.0, %v1376
      %v1378 = vpop.f32.mrb[0].mxu0
      %1379 = vmatprep.mubr.bf16.mxu0 0
      %1380 = vmatmul.mubr.bf16.gmra.mrb[0].mxu0 %v1227
      %v1381 = vpop.f32.mrb[0].mxu0
      %v1382 = vadd.f32 0.0, %v1381
      %v1383 = vpop.f32.mrb[0].mxu0
      %v1384 = vpop.f32.mrb[0].mxu0
      %v1385 = vadd.f32 0.0, %v1384
      %v1386 = vpop.f32.mrb[0].mxu0
      %1387 = vmatprep.mubr.bf16.mxu0 0
      %1388 = vmatmul.mubr.bf16.gmra.mrb[0].mxu0 %v1230
      %v1389 = vpop.f32.mrb[0].mxu0
      %v1390 = vadd.f32 0.0, %v1389
      %v1391 = vpop.f32.mrb[0].mxu0
      %v1392 = vpop.f32.mrb[0].mxu0
      %v1393 = vadd.f32 0.0, %v1392
      %v1394 = vpop.f32.mrb[0].mxu0
      %1395 = vdwg.mxu0
      %v1396 = vadd.f32 %v1102, %v1270
      %v1397 = vadd.f32 %v1103, %v1273
      %v1398 = vadd.f32 %v1104, %v1278
      %v1399 = vadd.f32 %v1105, %v1281
      %v1400 = vadd.f32 %v1106, %v1286
      %v1401 = vadd.f32 %v1107, %v1289
      %v1402 = vadd.f32 %v1108, %v1294
      %v1403 = vadd.f32 %v1109, %v1297
      %v1404 = vadd.f32 %v1110, %v1302
      %v1405 = vadd.f32 %v1111, %v1305
      %v1406 = vadd.f32 %v1112, %v1310
      %v1407 = vadd.f32 %v1113, %v1313
      %v1408 = vadd.f32 %v1114, %v1318
      %v1409 = vadd.f32 %v1115, %v1321
      %v1410 = vadd.f32 %v1116, %v1326
      %v1411 = vadd.f32 %v1117, %v1329
      %v1412 = vadd.f32 %v1118, %v1334
      %v1413 = vadd.f32 %v1119, %v1337
      %v1414 = vadd.f32 %v1120, %v1342
      %v1415 = vadd.f32 %v1121, %v1345
      %v1416 = vadd.f32 %v1122, %v1350
      %v1417 = vadd.f32 %v1123, %v1353
      %v1418 = vadd.f32 %v1124, %v1358
      %v1419 = vadd.f32 %v1125, %v1361
      %v1420 = vadd.f32 %v1126, %v1366
      %v1421 = vadd.f32 %v1127, %v1369
      %v1422 = vadd.f32 %v1128, %v1374
      %v1423 = vadd.f32 %v1129, %v1377
      %v1424 = vadd.f32 %v1130, %v1382
      %v1425 = vadd.f32 %v1131, %v1385
      %v1426 = vadd.f32 %v1132, %v1390
      %v1427 = vadd.f32 %v1133, %v1393
      %v1428 = vld [vmem:[%s300 + $0x13] sm:$0xff]
      %v1429 = vld [vmem:[%s300 + $0x1b] sm:$0xff]
      %v1430 = vld [vmem:[%s300 + $0x23] sm:$0xff]
      %v1431 = vld [vmem:[%s300 + $0x2b] sm:$0xff]
      %v1432 = vld [vmem:[%s300 + $0x33] sm:$0xff]
      %v1433 = vld [vmem:[%s300 + $0x3b] sm:$0xff]
      %v1434 = vld [vmem:[%s300 + $0x43] sm:$0xff]
      %v1435 = vld [vmem:[%s300 + $0x4b] sm:$0xff]
      %v1436 = vld [vmem:[%s300 + $0x53] sm:$0xff]
      %v1437 = vld [vmem:[%s300 + $0x5b] sm:$0xff]
      %v1438 = vld [vmem:[%s300 + $0x63] sm:$0xff]
      %v1439 = vld [vmem:[%s300 + $0x6b] sm:$0xff]
      %v1440 = vld [vmem:[%s300 + $0x73] sm:$0xff]
      %v1441 = vld [vmem:[%s300 + $0x7b] sm:$0xff]
      %v1442 = vld [vmem:[%s300 + $0x83] sm:$0xff]
      %v1443 = vld [vmem:[%s300 + $0x8b] sm:$0xff]
      %v1444 = vld [vmem:[%s300 + $0x93] sm:$0xff]
      %v1445 = vld [vmem:[%s300 + $0x9b] sm:$0xff]
      %v1446 = vld [vmem:[%s300 + $0xa3] sm:$0xff]
      %v1447 = vld [vmem:[%s300 + $0xab] sm:$0xff]
      %v1448 = vld [vmem:[%s300 + $0xb3] sm:$0xff]
      %v1449 = vld [vmem:[%s300 + $0xbb] sm:$0xff]
      %v1450 = vld [vmem:[%s300 + $0xc3] sm:$0xff]
      %v1451 = vld [vmem:[%s300 + $0xcb] sm:$0xff]
      %v1452 = vld [vmem:[%s300 + $0xd3] sm:$0xff]
      %v1453 = vld [vmem:[%s300 + $0xdb] sm:$0xff]
      %v1454 = vld [vmem:[%s300 + $0xe3] sm:$0xff]
      %v1455 = vld [vmem:[%s300 + $0xeb] sm:$0xff]
      %v1456 = vld [vmem:[%s300 + $0xf3] sm:$0xff]
      %v1457 = vld [vmem:[%s300 + $0xfb] sm:$0xff]
      %v1458 = vld [vmem:[%s300 + $0x103] sm:$0xff]
      %v1459 = vld [vmem:[%s300 + $0x10b] sm:$0xff]
      %v1460 = vpack.c.bf16 %v1429, %v1428
      %v1461 = vpack.c.bf16 %v1431, %v1430
      %v1462 = vpack.c.bf16 %v1433, %v1432
      %v1463 = vpack.c.bf16 %v1435, %v1434
      %v1464 = vpack.c.bf16 %v1437, %v1436
      %v1465 = vpack.c.bf16 %v1439, %v1438
      %v1466 = vpack.c.bf16 %v1441, %v1440
      %v1467 = vpack.c.bf16 %v1443, %v1442
      %v1468 = vpack.c.bf16 %v1445, %v1444
      %v1469 = vpack.c.bf16 %v1447, %v1446
      %v1470 = vpack.c.bf16 %v1449, %v1448
      %v1471 = vpack.c.bf16 %v1451, %v1450
      %v1472 = vpack.c.bf16 %v1453, %v1452
      %v1473 = vpack.c.bf16 %v1455, %v1454
      %v1474 = vpack.c.bf16 %v1457, %v1456
      %v1475 = vpack.c.bf16 %v1459, %v1458
      %s1476 = scalar_lea.vmem %s1, 8
      %v1477 = vld [vmem:[%s1476] sm:$0x3]
      %v1479 = vsel %vm414, %v1460, 0
      %v1482 = vsel %vm414, %v1461, 0
      %v1485 = vsel %vm414, %v1462, 0
      %v1488 = vsel %vm414, %v1463, 0
      %v1491 = vsel %vm414, %v1464, 0
      %v1494 = vsel %vm414, %v1465, 0
      %v1497 = vsel %vm414, %v1466, 0
      %v1500 = vsel %vm414, %v1467, 0
      %v1503 = vsel %vm414, %v1468, 0
      %v1506 = vsel %vm414, %v1469, 0
      %v1509 = vsel %vm414, %v1470, 0
      %v1512 = vsel %vm414, %v1471, 0
      %v1515 = vsel %vm414, %v1472, 0
      %v1518 = vsel %vm414, %v1473, 0
      %v1521 = vsel %vm414, %v1474, 0
      %v1524 = vsel %vm414, %v1475, 0
      %v1527 = vsel %vm463, %v1477, 0
      %1529 = vmatprep.subr.bf16.mxu0 0
      %1530 = vmatpush1.bf16.msra.mxu0 %v1527
      %1531 = vmatprep.subr.bf16.mxu0 0
      %1532 = vmatpush1.bf16.msra.mxu0 0
      %1533 = vmatprep.subr.bf16.mxu0 0
      %1534 = vmatpush1.bf16.msra.mxu0 0
      %1535 = vmatprep.subr.bf16.mxu0 0
      %1536 = vmatpush1.bf16.msra.mxu0 0
      %1537 = vmatprep.subr.bf16.mxu0 0
      %1538 = vmatpush1.bf16.msra.mxu0 0
      %1539 = vmatprep.subr.bf16.mxu0 0
      %1540 = vmatpush1.bf16.msra.mxu0 0
      %1541 = vmatprep.subr.bf16.mxu0 0
      %1542 = vmatpush1.bf16.msra.mxu0 0
      %1543 = vmatprep.subr.bf16.mxu0 0
      %1544 = vmatpush1.bf16.msra.mxu0 0
      %1545 = vmatprep.subr.bf16.mxu0 0
      %1546 = vmatpush1.bf16.msra.mxu0 0
      %1547 = vmatprep.subr.bf16.mxu0 0
      %1548 = vmatpush1.bf16.msra.mxu0 0
      %1549 = vmatprep.subr.bf16.mxu0 0
      %1550 = vmatpush1.bf16.msra.mxu0 0
      %1551 = vmatprep.subr.bf16.mxu0 0
      %1552 = vmatpush1.bf16.msra.mxu0 0
      %1553 = vmatprep.subr.bf16.mxu0 0
      %1554 = vmatpush1.bf16.msra.mxu0 0
      %1555 = vmatprep.subr.bf16.mxu0 0
      %1556 = vmatpush1.bf16.msra.mxu0 0
      %1557 = vmatprep.subr.bf16.mxu0 0
      %1558 = vmatpush1.bf16.msra.mxu0 0
      %1559 = vmatprep.subr.bf16.mxu0 0
      %1560 = vmatpush1.bf16.msra.mxu0 0
      %1561 = vmatprep.mubr.bf16.mxu0 0
      %1562 = vmatmul.mubr.bf16.gmra.mrb[0].mxu0 %v1479
      %v1563 = vpop.f32.mrb[0].mxu0
      %v1564 = vadd.f32 0.0, %v1563
      %v1565 = vpop.f32.mrb[0].mxu0
      %v1566 = vpop.f32.mrb[0].mxu0
      %v1567 = vadd.f32 0.0, %v1566
      %v1568 = vpop.f32.mrb[0].mxu0
      %1569 = vmatprep.mubr.bf16.mxu0 0
      %1570 = vmatmul.mubr.bf16.gmra.mrb[0].mxu0 %v1482
      %v1571 = vpop.f32.mrb[0].mxu0
      %v1572 = vadd.f32 0.0, %v1571
      %v1573 = vpop.f32.mrb[0].mxu0
      %v1574 = vpop.f32.mrb[0].mxu0
      %v1575 = vadd.f32 0.0, %v1574
      %v1576 = vpop.f32.mrb[0].mxu0
      %1577 = vmatprep.mubr.bf16.mxu0 0
      %1578 = vmatmul.mubr.bf16.gmra.mrb[0].mxu0 %v1485
      %v1579 = vpop.f32.mrb[0].mxu0
      %v1580 = vadd.f32 0.0, %v1579
      %v1581 = vpop.f32.mrb[0].mxu0
      %v1582 = vpop.f32.mrb[0].mxu0
      %v1583 = vadd.f32 0.0, %v1582
      %v1584 = vpop.f32.mrb[0].mxu0
      %1585 = vmatprep.mubr.bf16.mxu0 0
      %1586 = vmatmul.mubr.bf16.gmra.mrb[0].mxu0 %v1488
      %v1587 = vpop.f32.mrb[0].mxu0
      %v1588 = vadd.f32 0.0, %v1587
      %v1589 = vpop.f32.mrb[0].mxu0
      %v1590 = vpop.f32.mrb[0].mxu0
      %v1591 = vadd.f32 0.0, %v1590
      %v1592 = vpop.f32.mrb[0].mxu0
      %1593 = vmatprep.mubr.bf16.mxu0 0
      %1594 = vmatmul.mubr.bf16.gmra.mrb[0].mxu0 %v1491
      %v1595 = vpop.f32.mrb[0].mxu0
      %v1596 = vadd.f32 0.0, %v1595
      %v1597 = vpop.f32.mrb[0].mxu0
      %v1598 = vpop.f32.mrb[0].mxu0
      %v1599 = vadd.f32 0.0, %v1598
      %v1600 = vpop.f32.mrb[0].mxu0
      %1601 = vmatprep.mubr.bf16.mxu0 0
      %1602 = vmatmul.mubr.bf16.gmra.mrb[0].mxu0 %v1494
      %v1603 = vpop.f32.mrb[0].mxu0
      %v1604 = vadd.f32 0.0, %v1603
      %v1605 = vpop.f32.mrb[0].mxu0
      %v1606 = vpop.f32.mrb[0].mxu0
      %v1607 = vadd.f32 0.0, %v1606
      %v1608 = vpop.f32.mrb[0].mxu0
      %1609 = vmatprep.mubr.bf16.mxu0 0
      %1610 = vmatmul.mubr.bf16.gmra.mrb[0].mxu0 %v1497
      %v1611 = vpop.f32.mrb[0].mxu0
      %v1612 = vadd.f32 0.0, %v1611
      %v1613 = vpop.f32.mrb[0].mxu0
      %v1614 = vpop.f32.mrb[0].mxu0
      %v1615 = vadd.f32 0.0, %v1614
      %v1616 = vpop.f32.mrb[0].mxu0
      %1617 = vmatprep.mubr.bf16.mxu0 0
      %1618 = vmatmul.mubr.bf16.gmra.mrb[0].mxu0 %v1500
      %v1619 = vpop.f32.mrb[0].mxu0
      %v1620 = vadd.f32 0.0, %v1619
      %v1621 = vpop.f32.mrb[0].mxu0
      %v1622 = vpop.f32.mrb[0].mxu0
      %v1623 = vadd.f32 0.0, %v1622
      %v1624 = vpop.f32.mrb[0].mxu0
      %1625 = vmatprep.mubr.bf16.mxu0 0
      %1626 = vmatmul.mubr.bf16.gmra.mrb[0].mxu0 %v1503
      %v1627 = vpop.f32.mrb[0].mxu0
      %v1628 = vadd.f32 0.0, %v1627
      %v1629 = vpop.f32.mrb[0].mxu0
      %v1630 = vpop.f32.mrb[0].mxu0
      %v1631 = vadd.f32 0.0, %v1630
      %v1632 = vpop.f32.mrb[0].mxu0
      %1633 = vmatprep.mubr.bf16.mxu0 0
      %1634 = vmatmul.mubr.bf16.gmra.mrb[0].mxu0 %v1506
      %v1635 = vpop.f32.mrb[0].mxu0
      %v1636 = vadd.f32 0.0, %v1635
      %v1637 = vpop.f32.mrb[0].mxu0
      %v1638 = vpop.f32.mrb[0].mxu0
      %v1639 = vadd.f32 0.0, %v1638
      %v1640 = vpop.f32.mrb[0].mxu0
      %1641 = vmatprep.mubr.bf16.mxu0 0
      %1642 = vmatmul.mubr.bf16.gmra.mrb[0].mxu0 %v1509
      %v1643 = vpop.f32.mrb[0].mxu0
      %v1644 = vadd.f32 0.0, %v1643
      %v1645 = vpop.f32.mrb[0].mxu0
      %v1646 = vpop.f32.mrb[0].mxu0
      %v1647 = vadd.f32 0.0, %v1646
      %v1648 = vpop.f32.mrb[0].mxu0
      %1649 = vmatprep.mubr.bf16.mxu0 0
      %1650 = vmatmul.mubr.bf16.gmra.mrb[0].mxu0 %v1512
      %v1651 = vpop.f32.mrb[0].mxu0
      %v1652 = vadd.f32 0.0, %v1651
      %v1653 = vpop.f32.mrb[0].mxu0
      %v1654 = vpop.f32.mrb[0].mxu0
      %v1655 = vadd.f32 0.0, %v1654
      %v1656 = vpop.f32.mrb[0].mxu0
      %1657 = vmatprep.mubr.bf16.mxu0 0
      %1658 = vmatmul.mubr.bf16.gmra.mrb[0].mxu0 %v1515
      %v1659 = vpop.f32.mrb[0].mxu0
      %v1660 = vadd.f32 0.0, %v1659
      %v1661 = vpop.f32.mrb[0].mxu0
      %v1662 = vpop.f32.mrb[0].mxu0
      %v1663 = vadd.f32 0.0, %v1662
      %v1664 = vpop.f32.mrb[0].mxu0
      %1665 = vmatprep.mubr.bf16.mxu0 0
      %1666 = vmatmul.mubr.bf16.gmra.mrb[0].mxu0 %v1518
      %v1667 = vpop.f32.mrb[0].mxu0
      %v1668 = vadd.f32 0.0, %v1667
      %v1669 = vpop.f32.mrb[0].mxu0
      %v1670 = vpop.f32.mrb[0].mxu0
      %v1671 = vadd.f32 0.0, %v1670
      %v1672 = vpop.f32.mrb[0].mxu0
      %1673 = vmatprep.mubr.bf16.mxu0 0
      %1674 = vmatmul.mubr.bf16.gmra.mrb[0].mxu0 %v1521
      %v1675 = vpop.f32.mrb[0].mxu0
      %v1676 = vadd.f32 0.0, %v1675
      %v1677 = vpop.f32.mrb[0].mxu0
      %v1678 = vpop.f32.mrb[0].mxu0
      %v1679 = vadd.f32 0.0, %v1678
      %v1680 = vpop.f32.mrb[0].mxu0
      %1681 = vmatprep.mubr.bf16.mxu0 0
      %1682 = vmatmul.mubr.bf16.gmra.mrb[0].mxu0 %v1524
      %v1683 = vpop.f32.mrb[0].mxu0
      %v1684 = vadd.f32 0.0, %v1683
      %v1685 = vpop.f32.mrb[0].mxu0
      %v1686 = vpop.f32.mrb[0].mxu0
      %v1687 = vadd.f32 0.0, %v1686
      %v1688 = vpop.f32.mrb[0].mxu0
      %1689 = vdwg.mxu0
      %v1690 = vadd.f32 %v1396, %v1564
      %v1691 = vadd.f32 %v1397, %v1567
      %v1692 = vadd.f32 %v1398, %v1572
      %v1693 = vadd.f32 %v1399, %v1575
      %v1694 = vadd.f32 %v1400, %v1580
      %v1695 = vadd.f32 %v1401, %v1583
      %v1696 = vadd.f32 %v1402, %v1588
      %v1697 = vadd.f32 %v1403, %v1591
      %v1698 = vadd.f32 %v1404, %v1596
      %v1699 = vadd.f32 %v1405, %v1599
      %v1700 = vadd.f32 %v1406, %v1604
      %v1701 = vadd.f32 %v1407, %v1607
      %v1702 = vadd.f32 %v1408, %v1612
      %v1703 = vadd.f32 %v1409, %v1615
      %v1704 = vadd.f32 %v1410, %v1620
      %v1705 = vadd.f32 %v1411, %v1623
      %v1706 = vadd.f32 %v1412, %v1628
      %v1707 = vadd.f32 %v1413, %v1631
      %v1708 = vadd.f32 %v1414, %v1636
      %v1709 = vadd.f32 %v1415, %v1639
      %v1710 = vadd.f32 %v1416, %v1644
      %v1711 = vadd.f32 %v1417, %v1647
      %v1712 = vadd.f32 %v1418, %v1652
      %v1713 = vadd.f32 %v1419, %v1655
      %v1714 = vadd.f32 %v1420, %v1660
      %v1715 = vadd.f32 %v1421, %v1663
      %v1716 = vadd.f32 %v1422, %v1668
      %v1717 = vadd.f32 %v1423, %v1671
      %v1718 = vadd.f32 %v1424, %v1676
      %v1719 = vadd.f32 %v1425, %v1679
      %v1720 = vadd.f32 %v1426, %v1684
      %v1721 = vadd.f32 %v1427, %v1687
      %v1722 = vld [vmem:[%s300 + $0x14] sm:$0xff]
      %v1723 = vld [vmem:[%s300 + $0x1c] sm:$0xff]
      %v1724 = vld [vmem:[%s300 + $0x24] sm:$0xff]
      %v1725 = vld [vmem:[%s300 + $0x2c] sm:$0xff]
      %v1726 = vld [vmem:[%s300 + $0x34] sm:$0xff]
      %v1727 = vld [vmem:[%s300 + $0x3c] sm:$0xff]
      %v1728 = vld [vmem:[%s300 + $0x44] sm:$0xff]
      %v1729 = vld [vmem:[%s300 + $0x4c] sm:$0xff]
      %v1730 = vld [vmem:[%s300 + $0x54] sm:$0xff]
      %v1731 = vld [vmem:[%s300 + $0x5c] sm:$0xff]
      %v1732 = vld [vmem:[%s300 + $0x64] sm:$0xff]
      %v1733 = vld [vmem:[%s300 + $0x6c] sm:$0xff]
      %v1734 = vld [vmem:[%s300 + $0x74] sm:$0xff]
      %v1735 = vld [vmem:[%s300 + $0x7c] sm:$0xff]
      %v1736 = vld [vmem:[%s300 + $0x84] sm:$0xff]
      %v1737 = vld [vmem:[%s300 + $0x8c] sm:$0xff]
      %v1738 = vld [vmem:[%s300 + $0x94] sm:$0xff]
      %v1739 = vld [vmem:[%s300 + $0x9c] sm:$0xff]
      %v1740 = vld [vmem:[%s300 + $0xa4] sm:$0xff]
      %v1741 = vld [vmem:[%s300 + $0xac] sm:$0xff]
      %v1742 = vld [vmem:[%s300 + $0xb4] sm:$0xff]
      %v1743 = vld [vmem:[%s300 + $0xbc] sm:$0xff]
      %v1744 = vld [vmem:[%s300 + $0xc4] sm:$0xff]
      %v1745 = vld [vmem:[%s300 + $0xcc] sm:$0xff]
      %v1746 = vld [vmem:[%s300 + $0xd4] sm:$0xff]
      %v1747 = vld [vmem:[%s300 + $0xdc] sm:$0xff]
      %v1748 = vld [vmem:[%s300 + $0xe4] sm:$0xff]
      %v1749 = vld [vmem:[%s300 + $0xec] sm:$0xff]
      %v1750 = vld [vmem:[%s300 + $0xf4] sm:$0xff]
      %v1751 = vld [vmem:[%s300 + $0xfc] sm:$0xff]
      %v1752 = vld [vmem:[%s300 + $0x104] sm:$0xff]
      %v1753 = vld [vmem:[%s300 + $0x10c] sm:$0xff]
      %v1754 = vpack.c.bf16 %v1723, %v1722
      %v1755 = vpack.c.bf16 %v1725, %v1724
      %v1756 = vpack.c.bf16 %v1727, %v1726
      %v1757 = vpack.c.bf16 %v1729, %v1728
      %v1758 = vpack.c.bf16 %v1731, %v1730
      %v1759 = vpack.c.bf16 %v1733, %v1732
      %v1760 = vpack.c.bf16 %v1735, %v1734
      %v1761 = vpack.c.bf16 %v1737, %v1736
      %v1762 = vpack.c.bf16 %v1739, %v1738
      %v1763 = vpack.c.bf16 %v1741, %v1740
      %v1764 = vpack.c.bf16 %v1743, %v1742
      %v1765 = vpack.c.bf16 %v1745, %v1744
      %v1766 = vpack.c.bf16 %v1747, %v1746
      %v1767 = vpack.c.bf16 %v1749, %v1748
      %v1768 = vpack.c.bf16 %v1751, %v1750
      %v1769 = vpack.c.bf16 %v1753, %v1752
      %s1770 = scalar_lea.vmem %s1, 10
      %v1771 = vld [vmem:[%s1770] sm:$0x3]
      %v1773 = vsel %vm414, %v1754, 0
      %v1776 = vsel %vm414, %v1755, 0
      %v1779 = vsel %vm414, %v1756, 0
      %v1782 = vsel %vm414, %v1757, 0
      %v1785 = vsel %vm414, %v1758, 0
      %v1788 = vsel %vm414, %v1759, 0
      %v1791 = vsel %vm414, %v1760, 0
      %v1794 = vsel %vm414, %v1761, 0
      %v1797 = vsel %vm414, %v1762, 0
      %v1800 = vsel %vm414, %v1763, 0
      %v1803 = vsel %vm414, %v1764, 0
      %v1806 = vsel %vm414, %v1765, 0
      %v1809 = vsel %vm414, %v1766, 0
      %v1812 = vsel %vm414, %v1767, 0
      %v1815 = vsel %vm414, %v1768, 0
      %v1818 = vsel %vm414, %v1769, 0
      %v1821 = vsel %vm463, %v1771, 0
      %1823 = vmatprep.subr.bf16.mxu0 0
      %1824 = vmatpush1.bf16.msra.mxu0 %v1821
      %1825 = vmatprep.subr.bf16.mxu0 0
      %1826 = vmatpush1.bf16.msra.mxu0 0
      %1827 = vmatprep.subr.bf16.mxu0 0
      %1828 = vmatpush1.bf16.msra.mxu0 0
      %1829 = vmatprep.subr.bf16.mxu0 0
      %1830 = vmatpush1.bf16.msra.mxu0 0
      %1831 = vmatprep.subr.bf16.mxu0 0
      %1832 = vmatpush1.bf16.msra.mxu0 0
      %1833 = vmatprep.subr.bf16.mxu0 0
      %1834 = vmatpush1.bf16.msra.mxu0 0
      %1835 = vmatprep.subr.bf16.mxu0 0
      %1836 = vmatpush1.bf16.msra.mxu0 0
      %1837 = vmatprep.subr.bf16.mxu0 0
      %1838 = vmatpush1.bf16.msra.mxu0 0
      %1839 = vmatprep.subr.bf16.mxu0 0
      %1840 = vmatpush1.bf16.msra.mxu0 0
      %1841 = vmatprep.subr.bf16.mxu0 0
      %1842 = vmatpush1.bf16.msra.mxu0 0
      %1843 = vmatprep.subr.bf16.mxu0 0
      %1844 = vmatpush1.bf16.msra.mxu0 0
      %1845 = vmatprep.subr.bf16.mxu0 0
      %1846 = vmatpush1.bf16.msra.mxu0 0
      %1847 = vmatprep.subr.bf16.mxu0 0
      %1848 = vmatpush1.bf16.msra.mxu0 0
      %1849 = vmatprep.subr.bf16.mxu0 0
      %1850 = vmatpush1.bf16.msra.mxu0 0
      %1851 = vmatprep.subr.bf16.mxu0 0
      %1852 = vmatpush1.bf16.msra.mxu0 0
      %1853 = vmatprep.subr.bf16.mxu0 0
      %1854 = vmatpush1.bf16.msra.mxu0 0
      %1855 = vmatprep.mubr.bf16.mxu0 0
      %1856 = vmatmul.mubr.bf16.gmra.mrb[0].mxu0 %v1773
      %v1857 = vpop.f32.mrb[0].mxu0
      %v1858 = vadd.f32 0.0, %v1857
      %v1859 = vpop.f32.mrb[0].mxu0
      %v1860 = vpop.f32.mrb[0].mxu0
      %v1861 = vadd.f32 0.0, %v1860
      %v1862 = vpop.f32.mrb[0].mxu0
      %1863 = vmatprep.mubr.bf16.mxu0 0
      %1864 = vmatmul.mubr.bf16.gmra.mrb[0].mxu0 %v1776
      %v1865 = vpop.f32.mrb[0].mxu0
      %v1866 = vadd.f32 0.0, %v1865
      %v1867 = vpop.f32.mrb[0].mxu0
      %v1868 = vpop.f32.mrb[0].mxu0
      %v1869 = vadd.f32 0.0, %v1868
      %v1870 = vpop.f32.mrb[0].mxu0
      %1871 = vmatprep.mubr.bf16.mxu0 0
      %1872 = vmatmul.mubr.bf16.gmra.mrb[0].mxu0 %v1779
      %v1873 = vpop.f32.mrb[0].mxu0
      %v1874 = vadd.f32 0.0, %v1873
      %v1875 = vpop.f32.mrb[0].mxu0
      %v1876 = vpop.f32.mrb[0].mxu0
      %v1877 = vadd.f32 0.0, %v1876
      %v1878 = vpop.f32.mrb[0].mxu0
      %1879 = vmatprep.mubr.bf16.mxu0 0
      %1880 = vmatmul.mubr.bf16.gmra.mrb[0].mxu0 %v1782
      %v1881 = vpop.f32.mrb[0].mxu0
      %v1882 = vadd.f32 0.0, %v1881
      %v1883 = vpop.f32.mrb[0].mxu0
      %v1884 = vpop.f32.mrb[0].mxu0
      %v1885 = vadd.f32 0.0, %v1884
      %v1886 = vpop.f32.mrb[0].mxu0
      %1887 = vmatprep.mubr.bf16.mxu0 0
      %1888 = vmatmul.mubr.bf16.gmra.mrb[0].mxu0 %v1785
      %v1889 = vpop.f32.mrb[0].mxu0
      %v1890 = vadd.f32 0.0, %v1889
      %v1891 = vpop.f32.mrb[0].mxu0
      %v1892 = vpop.f32.mrb[0].mxu0
      %v1893 = vadd.f32 0.0, %v1892
      %v1894 = vpop.f32.mrb[0].mxu0
      %1895 = vmatprep.mubr.bf16.mxu0 0
      %1896 = vmatmul.mubr.bf16.gmra.mrb[0].mxu0 %v1788
      %v1897 = vpop.f32.mrb[0].mxu0
      %v1898 = vadd.f32 0.0, %v1897
      %v1899 = vpop.f32.mrb[0].mxu0
      %v1900 = vpop.f32.mrb[0].mxu0
      %v1901 = vadd.f32 0.0, %v1900
      %v1902 = vpop.f32.mrb[0].mxu0
      %1903 = vmatprep.mubr.bf16.mxu0 0
      %1904 = vmatmul.mubr.bf16.gmra.mrb[0].mxu0 %v1791
      %v1905 = vpop.f32.mrb[0].mxu0
      %v1906 = vadd.f32 0.0, %v1905
      %v1907 = vpop.f32.mrb[0].mxu0
      %v1908 = vpop.f32.mrb[0].mxu0
      %v1909 = vadd.f32 0.0, %v1908
      %v1910 = vpop.f32.mrb[0].mxu0
      %1911 = vmatprep.mubr.bf16.mxu0 0
      %1912 = vmatmul.mubr.bf16.gmra.mrb[0].mxu0 %v1794
      %v1913 = vpop.f32.mrb[0].mxu0
      %v1914 = vadd.f32 0.0, %v1913
      %v1915 = vpop.f32.mrb[0].mxu0
      %v1916 = vpop.f32.mrb[0].mxu0
      %v1917 = vadd.f32 0.0, %v1916
      %v1918 = vpop.f32.mrb[0].mxu0
      %1919 = vmatprep.mubr.bf16.mxu0 0
      %1920 = vmatmul.mubr.bf16.gmra.mrb[0].mxu0 %v1797
      %v1921 = vpop.f32.mrb[0].mxu0
      %v1922 = vadd.f32 0.0, %v1921
      %v1923 = vpop.f32.mrb[0].mxu0
      %v1924 = vpop.f32.mrb[0].mxu0
      %v1925 = vadd.f32 0.0, %v1924
      %v1926 = vpop.f32.mrb[0].mxu0
      %1927 = vmatprep.mubr.bf16.mxu0 0
      %1928 = vmatmul.mubr.bf16.gmra.mrb[0].mxu0 %v1800
      %v1929 = vpop.f32.mrb[0].mxu0
      %v1930 = vadd.f32 0.0, %v1929
      %v1931 = vpop.f32.mrb[0].mxu0
      %v1932 = vpop.f32.mrb[0].mxu0
      %v1933 = vadd.f32 0.0, %v1932
      %v1934 = vpop.f32.mrb[0].mxu0
      %1935 = vmatprep.mubr.bf16.mxu0 0
      %1936 = vmatmul.mubr.bf16.gmra.mrb[0].mxu0 %v1803
      %v1937 = vpop.f32.mrb[0].mxu0
      %v1938 = vadd.f32 0.0, %v1937
      %v1939 = vpop.f32.mrb[0].mxu0
      %v1940 = vpop.f32.mrb[0].mxu0
      %v1941 = vadd.f32 0.0, %v1940
      %v1942 = vpop.f32.mrb[0].mxu0
      %1943 = vmatprep.mubr.bf16.mxu0 0
      %1944 = vmatmul.mubr.bf16.gmra.mrb[0].mxu0 %v1806
      %v1945 = vpop.f32.mrb[0].mxu0
      %v1946 = vadd.f32 0.0, %v1945
      %v1947 = vpop.f32.mrb[0].mxu0
      %v1948 = vpop.f32.mrb[0].mxu0
      %v1949 = vadd.f32 0.0, %v1948
      %v1950 = vpop.f32.mrb[0].mxu0
      %1951 = vmatprep.mubr.bf16.mxu0 0
      %1952 = vmatmul.mubr.bf16.gmra.mrb[0].mxu0 %v1809
      %v1953 = vpop.f32.mrb[0].mxu0
      %v1954 = vadd.f32 0.0, %v1953
      %v1955 = vpop.f32.mrb[0].mxu0
      %v1956 = vpop.f32.mrb[0].mxu0
      %v1957 = vadd.f32 0.0, %v1956
      %v1958 = vpop.f32.mrb[0].mxu0
      %1959 = vmatprep.mubr.bf16.mxu0 0
      %1960 = vmatmul.mubr.bf16.gmra.mrb[0].mxu0 %v1812
      %v1961 = vpop.f32.mrb[0].mxu0
      %v1962 = vadd.f32 0.0, %v1961
      %v1963 = vpop.f32.mrb[0].mxu0
      %v1964 = vpop.f32.mrb[0].mxu0
      %v1965 = vadd.f32 0.0, %v1964
      %v1966 = vpop.f32.mrb[0].mxu0
      %1967 = vmatprep.mubr.bf16.mxu0 0
      %1968 = vmatmul.mubr.bf16.gmra.mrb[0].mxu0 %v1815
      %v1969 = vpop.f32.mrb[0].mxu0
      %v1970 = vadd.f32 0.0, %v1969
      %v1971 = vpop.f32.mrb[0].mxu0
      %v1972 = vpop.f32.mrb[0].mxu0
      %v1973 = vadd.f32 0.0, %v1972
      %v1974 = vpop.f32.mrb[0].mxu0
      %1975 = vmatprep.mubr.bf16.mxu0 0
      %1976 = vmatmul.mubr.bf16.gmra.mrb[0].mxu0 %v1818
      %v1977 = vpop.f32.mrb[0].mxu0
      %v1978 = vadd.f32 0.0, %v1977
      %v1979 = vpop.f32.mrb[0].mxu0
      %v1980 = vpop.f32.mrb[0].mxu0
      %v1981 = vadd.f32 0.0, %v1980
      %v1982 = vpop.f32.mrb[0].mxu0
      %1983 = vdwg.mxu0
      %v1984 = vadd.f32 %v1690, %v1858
      %v1985 = vadd.f32 %v1691, %v1861
      %v1986 = vadd.f32 %v1692, %v1866
      %v1987 = vadd.f32 %v1693, %v1869
      %v1988 = vadd.f32 %v1694, %v1874
      %v1989 = vadd.f32 %v1695, %v1877
      %v1990 = vadd.f32 %v1696, %v1882
      %v1991 = vadd.f32 %v1697, %v1885
      %v1992 = vadd.f32 %v1698, %v1890
      %v1993 = vadd.f32 %v1699, %v1893
      %v1994 = vadd.f32 %v1700, %v1898
      %v1995 = vadd.f32 %v1701, %v1901
      %v1996 = vadd.f32 %v1702, %v1906
      %v1997 = vadd.f32 %v1703, %v1909
      %v1998 = vadd.f32 %v1704, %v1914
      %v1999 = vadd.f32 %v1705, %v1917
      %v2000 = vadd.f32 %v1706, %v1922
      %v2001 = vadd.f32 %v1707, %v1925
      %v2002 = vadd.f32 %v1708, %v1930
      %v2003 = vadd.f32 %v1709, %v1933
      %v2004 = vadd.f32 %v1710, %v1938
      %v2005 = vadd.f32 %v1711, %v1941
      %v2006 = vadd.f32 %v1712, %v1946
      %v2007 = vadd.f32 %v1713, %v1949
      %v2008 = vadd.f32 %v1714, %v1954
      %v2009 = vadd.f32 %v1715, %v1957
      %v2010 = vadd.f32 %v1716, %v1962
      %v2011 = vadd.f32 %v1717, %v1965
      %v2012 = vadd.f32 %v1718, %v1970
      %v2013 = vadd.f32 %v1719, %v1973
      %v2014 = vadd.f32 %v1720, %v1978
      %v2015 = vadd.f32 %v1721, %v1981
      %v2016 = vld [vmem:[%s300 + $0x24] sm:$0xff]
      %v2017 = vld [vmem:[%s300 + $0x2c] sm:$0xff]
      %v2018 = vld [vmem:[%s300 + $0x34] sm:$0xff]
      %v2019 = vld [vmem:[%s300 + $0x3c] sm:$0xff]
      %v2020 = vld [vmem:[%s300 + $0x44] sm:$0xff]
      %v2021 = vld [vmem:[%s300 + $0x4c] sm:$0xff]
      %v2022 = vld [vmem:[%s300 + $0x54] sm:$0xff]
      %v2023 = vld [vmem:[%s300 + $0x5c] sm:$0xff]
      %v2024 = vld [vmem:[%s300 + $0x64] sm:$0xff]
      %v2025 = vld [vmem:[%s300 + $0x6c] sm:$0xff]
      %v2026 = vld [vmem:[%s300 + $0x74] sm:$0xff]
      %v2027 = vld [vmem:[%s300 + $0x7c] sm:$0xff]
      %v2028 = vld [vmem:[%s300 + $0x84] sm:$0xff]
      %v2029 = vld [vmem:[%s300 + $0x8c] sm:$0xff]
      %v2030 = vld [vmem:[%s300 + $0x94] sm:$0xff]
      %v2031 = vld [vmem:[%s300 + $0x9c] sm:$0xff]
      %v2032 = vld [vmem:[%s300 + $0xa4] sm:$0xff]
      %v2033 = vld [vmem:[%s300 + $0xac] sm:$0xff]
      %v2034 = vld [vmem:[%s300 + $0xb4] sm:$0xff]
      %v2035 = vld [vmem:[%s300 + $0xbc] sm:$0xff]
      %v2036 = vld [vmem:[%s300 + $0xc4] sm:$0xff]
      %v2037 = vld [vmem:[%s300 + $0xcc] sm:$0xff]
      %v2038 = vld [vmem:[%s300 + $0xd4] sm:$0xff]
      %v2039 = vld [vmem:[%s300 + $0xdc] sm:$0xff]
      %v2040 = vld [vmem:[%s300 + $0xe4] sm:$0xff]
      %v2041 = vld [vmem:[%s300 + $0xec] sm:$0xff]
      %v2042 = vld [vmem:[%s300 + $0xf4] sm:$0xff]
      %v2043 = vld [vmem:[%s300 + $0xfc] sm:$0xff]
      %v2044 = vld [vmem:[%s300 + $0x104] sm:$0xff]
      %v2045 = vld [vmem:[%s300 + $0x10c] sm:$0xff]
      %v2046 = vld [vmem:[%s300 + $0x114] sm:$0xff]
      %v2047 = vld [vmem:[%s300 + $0x11c] sm:$0xff]
      %v2048 = vpack.c.bf16 %v2017, %v2016
      %v2049 = vpack.c.bf16 %v2019, %v2018
      %v2050 = vpack.c.bf16 %v2021, %v2020
      %v2051 = vpack.c.bf16 %v2023, %v2022
      %v2052 = vpack.c.bf16 %v2025, %v2024
      %v2053 = vpack.c.bf16 %v2027, %v2026
      %v2054 = vpack.c.bf16 %v2029, %v2028
      %v2055 = vpack.c.bf16 %v2031, %v2030
      %v2056 = vpack.c.bf16 %v2033, %v2032
      %v2057 = vpack.c.bf16 %v2035, %v2034
      %v2058 = vpack.c.bf16 %v2037, %v2036
      %v2059 = vpack.c.bf16 %v2039, %v2038
      %v2060 = vpack.c.bf16 %v2041, %v2040
      %v2061 = vpack.c.bf16 %v2043, %v2042
      %v2062 = vpack.c.bf16 %v2045, %v2044
      %v2063 = vpack.c.bf16 %v2047, %v2046
      %s2064 = scalar_lea.vmem %s1, 12
      %v2065 = vld [vmem:[%s2064] sm:$0x3]
      %v2067 = vsel %vm414, %v2048, 0
      %v2070 = vsel %vm414, %v2049, 0
      %v2073 = vsel %vm414, %v2050, 0
      %v2076 = vsel %vm414, %v2051, 0
      %v2079 = vsel %vm414, %v2052, 0
      %v2082 = vsel %vm414, %v2053, 0
      %v2085 = vsel %vm414, %v2054, 0
      %v2088 = vsel %vm414, %v2055, 0
      %v2091 = vsel %vm414, %v2056, 0
      %v2094 = vsel %vm414, %v2057, 0
      %v2097 = vsel %vm414, %v2058, 0
      %v2100 = vsel %vm414, %v2059, 0
      %v2103 = vsel %vm414, %v2060, 0
      %v2106 = vsel %vm414, %v2061, 0
      %v2109 = vsel %vm414, %v2062, 0
      %v2112 = vsel %vm414, %v2063, 0
      %v2115 = vsel %vm463, %v2065, 0
      %2117 = vmatprep.subr.bf16.mxu0 0
      %2118 = vmatpush1.bf16.msra.mxu0 %v2115
      %2119 = vmatprep.subr.bf16.mxu0 0
      %2120 = vmatpush1.bf16.msra.mxu0 0
      %2121 = vmatprep.subr.bf16.mxu0 0
      %2122 = vmatpush1.bf16.msra.mxu0 0
      %2123 = vmatprep.subr.bf16.mxu0 0
      %2124 = vmatpush1.bf16.msra.mxu0 0
      %2125 = vmatprep.subr.bf16.mxu0 0
      %2126 = vmatpush1.bf16.msra.mxu0 0
      %2127 = vmatprep.subr.bf16.mxu0 0
      %2128 = vmatpush1.bf16.msra.mxu0 0
      %2129 = vmatprep.subr.bf16.mxu0 0
      %2130 = vmatpush1.bf16.msra.mxu0 0
      %2131 = vmatprep.subr.bf16.mxu0 0
      %2132 = vmatpush1.bf16.msra.mxu0 0
      %2133 = vmatprep.subr.bf16.mxu0 0
      %2134 = vmatpush1.bf16.msra.mxu0 0
      %2135 = vmatprep.subr.bf16.mxu0 0
      %2136 = vmatpush1.bf16.msra.mxu0 0
      %2137 = vmatprep.subr.bf16.mxu0 0
      %2138 = vmatpush1.bf16.msra.mxu0 0
      %2139 = vmatprep.subr.bf16.mxu0 0
      %2140 = vmatpush1.bf16.msra.mxu0 0
      %2141 = vmatprep.subr.bf16.mxu0 0
      %2142 = vmatpush1.bf16.msra.mxu0 0
      %2143 = vmatprep.subr.bf16.mxu0 0
      %2144 = vmatpush1.bf16.msra.mxu0 0
      %2145 = vmatprep.subr.bf16.mxu0 0
      %2146 = vmatpush1.bf16.msra.mxu0 0
      %2147 = vmatprep.subr.bf16.mxu0 0
      %2148 = vmatpush1.bf16.msra.mxu0 0
      %2149 = vmatprep.mubr.bf16.mxu0 0
      %2150 = vmatmul.mubr.bf16.gmra.mrb[0].mxu0 %v2067
      %v2151 = vpop.f32.mrb[0].mxu0
      %v2152 = vadd.f32 0.0, %v2151
      %v2153 = vpop.f32.mrb[0].mxu0
      %v2154 = vpop.f32.mrb[0].mxu0
      %v2155 = vadd.f32 0.0, %v2154
      %v2156 = vpop.f32.mrb[0].mxu0
      %2157 = vmatprep.mubr.bf16.mxu0 0
      %2158 = vmatmul.mubr.bf16.gmra.mrb[0].mxu0 %v2070
      %v2159 = vpop.f32.mrb[0].mxu0
      %v2160 = vadd.f32 0.0, %v2159
      %v2161 = vpop.f32.mrb[0].mxu0
      %v2162 = vpop.f32.mrb[0].mxu0
      %v2163 = vadd.f32 0.0, %v2162
      %v2164 = vpop.f32.mrb[0].mxu0
      %2165 = vmatprep.mubr.bf16.mxu0 0
      %2166 = vmatmul.mubr.bf16.gmra.mrb[0].mxu0 %v2073
      %v2167 = vpop.f32.mrb[0].mxu0
      %v2168 = vadd.f32 0.0, %v2167
      %v2169 = vpop.f32.mrb[0].mxu0
      %v2170 = vpop.f32.mrb[0].mxu0
      %v2171 = vadd.f32 0.0, %v2170
      %v2172 = vpop.f32.mrb[0].mxu0
      %2173 = vmatprep.mubr.bf16.mxu0 0
      %2174 = vmatmul.mubr.bf16.gmra.mrb[0].mxu0 %v2076
      %v2175 = vpop.f32.mrb[0].mxu0
      %v2176 = vadd.f32 0.0, %v2175
      %v2177 = vpop.f32.mrb[0].mxu0
      %v2178 = vpop.f32.mrb[0].mxu0
      %v2179 = vadd.f32 0.0, %v2178
      %v2180 = vpop.f32.mrb[0].mxu0
      %2181 = vmatprep.mubr.bf16.mxu0 0
      %2182 = vmatmul.mubr.bf16.gmra.mrb[0].mxu0 %v2079
      %v2183 = vpop.f32.mrb[0].mxu0
      %v2184 = vadd.f32 0.0, %v2183
      %v2185 = vpop.f32.mrb[0].mxu0
      %v2186 = vpop.f32.mrb[0].mxu0
      %v2187 = vadd.f32 0.0, %v2186
      %v2188 = vpop.f32.mrb[0].mxu0
      %2189 = vmatprep.mubr.bf16.mxu0 0
      %2190 = vmatmul.mubr.bf16.gmra.mrb[0].mxu0 %v2082
      %v2191 = vpop.f32.mrb[0].mxu0
      %v2192 = vadd.f32 0.0, %v2191
      %v2193 = vpop.f32.mrb[0].mxu0
      %v2194 = vpop.f32.mrb[0].mxu0
      %v2195 = vadd.f32 0.0, %v2194
      %v2196 = vpop.f32.mrb[0].mxu0
      %2197 = vmatprep.mubr.bf16.mxu0 0
      %2198 = vmatmul.mubr.bf16.gmra.mrb[0].mxu0 %v2085
      %v2199 = vpop.f32.mrb[0].mxu0
      %v2200 = vadd.f32 0.0, %v2199
      %v2201 = vpop.f32.mrb[0].mxu0
      %v2202 = vpop.f32.mrb[0].mxu0
      %v2203 = vadd.f32 0.0, %v2202
      %v2204 = vpop.f32.mrb[0].mxu0
      %2205 = vmatprep.mubr.bf16.mxu0 0
      %2206 = vmatmul.mubr.bf16.gmra.mrb[0].mxu0 %v2088
      %v2207 = vpop.f32.mrb[0].mxu0
      %v2208 = vadd.f32 0.0, %v2207
      %v2209 = vpop.f32.mrb[0].mxu0
      %v2210 = vpop.f32.mrb[0].mxu0
      %v2211 = vadd.f32 0.0, %v2210
      %v2212 = vpop.f32.mrb[0].mxu0
      %2213 = vmatprep.mubr.bf16.mxu0 0
      %2214 = vmatmul.mubr.bf16.gmra.mrb[0].mxu0 %v2091
      %v2215 = vpop.f32.mrb[0].mxu0
      %v2216 = vadd.f32 0.0, %v2215
      %v2217 = vpop.f32.mrb[0].mxu0
      %v2218 = vpop.f32.mrb[0].mxu0
      %v2219 = vadd.f32 0.0, %v2218
      %v2220 = vpop.f32.mrb[0].mxu0
      %2221 = vmatprep.mubr.bf16.mxu0 0
      %2222 = vmatmul.mubr.bf16.gmra.mrb[0].mxu0 %v2094
      %v2223 = vpop.f32.mrb[0].mxu0
      %v2224 = vadd.f32 0.0, %v2223
      %v2225 = vpop.f32.mrb[0].mxu0
      %v2226 = vpop.f32.mrb[0].mxu0
      %v2227 = vadd.f32 0.0, %v2226
      %v2228 = vpop.f32.mrb[0].mxu0
      %2229 = vmatprep.mubr.bf16.mxu0 0
      %2230 = vmatmul.mubr.bf16.gmra.mrb[0].mxu0 %v2097
      %v2231 = vpop.f32.mrb[0].mxu0
      %v2232 = vadd.f32 0.0, %v2231
      %v2233 = vpop.f32.mrb[0].mxu0
      %v2234 = vpop.f32.mrb[0].mxu0
      %v2235 = vadd.f32 0.0, %v2234
      %v2236 = vpop.f32.mrb[0].mxu0
      %2237 = vmatprep.mubr.bf16.mxu0 0
      %2238 = vmatmul.mubr.bf16.gmra.mrb[0].mxu0 %v2100
      %v2239 = vpop.f32.mrb[0].mxu0
      %v2240 = vadd.f32 0.0, %v2239
      %v2241 = vpop.f32.mrb[0].mxu0
      %v2242 = vpop.f32.mrb[0].mxu0
      %v2243 = vadd.f32 0.0, %v2242
      %v2244 = vpop.f32.mrb[0].mxu0
      %2245 = vmatprep.mubr.bf16.mxu0 0
      %2246 = vmatmul.mubr.bf16.gmra.mrb[0].mxu0 %v2103
      %v2247 = vpop.f32.mrb[0].mxu0
      %v2248 = vadd.f32 0.0, %v2247
      %v2249 = vpop.f32.mrb[0].mxu0
      %v2250 = vpop.f32.mrb[0].mxu0
      %v2251 = vadd.f32 0.0, %v2250
      %v2252 = vpop.f32.mrb[0].mxu0
      %2253 = vmatprep.mubr.bf16.mxu0 0
      %2254 = vmatmul.mubr.bf16.gmra.mrb[0].mxu0 %v2106
      %v2255 = vpop.f32.mrb[0].mxu0
      %v2256 = vadd.f32 0.0, %v2255
      %v2257 = vpop.f32.mrb[0].mxu0
      %v2258 = vpop.f32.mrb[0].mxu0
      %v2259 = vadd.f32 0.0, %v2258
      %v2260 = vpop.f32.mrb[0].mxu0
      %2261 = vmatprep.mubr.bf16.mxu0 0
      %2262 = vmatmul.mubr.bf16.gmra.mrb[0].mxu0 %v2109
      %v2263 = vpop.f32.mrb[0].mxu0
      %v2264 = vadd.f32 0.0, %v2263
      %v2265 = vpop.f32.mrb[0].mxu0
      %v2266 = vpop.f32.mrb[0].mxu0
      %v2267 = vadd.f32 0.0, %v2266
      %v2268 = vpop.f32.mrb[0].mxu0
      %2269 = vmatprep.mubr.bf16.mxu0 0
      %2270 = vmatmul.mubr.bf16.gmra.mrb[0].mxu0 %v2112
      %v2271 = vpop.f32.mrb[0].mxu0
      %v2272 = vadd.f32 0.0, %v2271
      %v2273 = vpop.f32.mrb[0].mxu0
      %v2274 = vpop.f32.mrb[0].mxu0
      %v2275 = vadd.f32 0.0, %v2274
      %v2276 = vpop.f32.mrb[0].mxu0
      %2277 = vdwg.mxu0
      %v2278 = vadd.f32 %v1984, %v2152
      %v2279 = vadd.f32 %v1985, %v2155
      %v2280 = vadd.f32 %v1986, %v2160
      %v2281 = vadd.f32 %v1987, %v2163
      %v2282 = vadd.f32 %v1988, %v2168
      %v2283 = vadd.f32 %v1989, %v2171
      %v2284 = vadd.f32 %v1990, %v2176
      %v2285 = vadd.f32 %v1991, %v2179
      %v2286 = vadd.f32 %v1992, %v2184
      %v2287 = vadd.f32 %v1993, %v2187
      %v2288 = vadd.f32 %v1994, %v2192
      %v2289 = vadd.f32 %v1995, %v2195
      %v2290 = vadd.f32 %v1996, %v2200
      %v2291 = vadd.f32 %v1997, %v2203
      %v2292 = vadd.f32 %v1998, %v2208
      %v2293 = vadd.f32 %v1999, %v2211
      %v2294 = vadd.f32 %v2000, %v2216
      %v2295 = vadd.f32 %v2001, %v2219
      %v2296 = vadd.f32 %v2002, %v2224
      %v2297 = vadd.f32 %v2003, %v2227
      %v2298 = vadd.f32 %v2004, %v2232
      %v2299 = vadd.f32 %v2005, %v2235
      %v2300 = vadd.f32 %v2006, %v2240
      %v2301 = vadd.f32 %v2007, %v2243
      %v2302 = vadd.f32 %v2008, %v2248
      %v2303 = vadd.f32 %v2009, %v2251
      %v2304 = vadd.f32 %v2010, %v2256
      %v2305 = vadd.f32 %v2011, %v2259
      %v2306 = vadd.f32 %v2012, %v2264
      %v2307 = vadd.f32 %v2013, %v2267
      %v2308 = vadd.f32 %v2014, %v2272
      %v2309 = vadd.f32 %v2015, %v2275
      %v2310 = vld [vmem:[%s300 + $0x25] sm:$0xff]
      %v2311 = vld [vmem:[%s300 + $0x2d] sm:$0xff]
      %v2312 = vld [vmem:[%s300 + $0x35] sm:$0xff]
      %v2313 = vld [vmem:[%s300 + $0x3d] sm:$0xff]
      %v2314 = vld [vmem:[%s300 + $0x45] sm:$0xff]
      %v2315 = vld [vmem:[%s300 + $0x4d] sm:$0xff]
      %v2316 = vld [vmem:[%s300 + $0x55] sm:$0xff]
      %v2317 = vld [vmem:[%s300 + $0x5d] sm:$0xff]
      %v2318 = vld [vmem:[%s300 + $0x65] sm:$0xff]
      %v2319 = vld [vmem:[%s300 + $0x6d] sm:$0xff]
      %v2320 = vld [vmem:[%s300 + $0x75] sm:$0xff]
      %v2321 = vld [vmem:[%s300 + $0x7d] sm:$0xff]
      %v2322 = vld [vmem:[%s300 + $0x85] sm:$0xff]
      %v2323 = vld [vmem:[%s300 + $0x8d] sm:$0xff]
      %v2324 = vld [vmem:[%s300 + $0x95] sm:$0xff]
      %v2325 = vld [vmem:[%s300 + $0x9d] sm:$0xff]
      %v2326 = vld [vmem:[%s300 + $0xa5] sm:$0xff]
      %v2327 = vld [vmem:[%s300 + $0xad] sm:$0xff]
      %v2328 = vld [vmem:[%s300 + $0xb5] sm:$0xff]
      %v2329 = vld [vmem:[%s300 + $0xbd] sm:$0xff]
      %v2330 = vld [vmem:[%s300 + $0xc5] sm:$0xff]
      %v2331 = vld [vmem:[%s300 + $0xcd] sm:$0xff]
      %v2332 = vld [vmem:[%s300 + $0xd5] sm:$0xff]
      %v2333 = vld [vmem:[%s300 + $0xdd] sm:$0xff]
      %v2334 = vld [vmem:[%s300 + $0xe5] sm:$0xff]
      %v2335 = vld [vmem:[%s300 + $0xed] sm:$0xff]
      %v2336 = vld [vmem:[%s300 + $0xf5] sm:$0xff]
      %v2337 = vld [vmem:[%s300 + $0xfd] sm:$0xff]
      %v2338 = vld [vmem:[%s300 + $0x105] sm:$0xff]
      %v2339 = vld [vmem:[%s300 + $0x10d] sm:$0xff]
      %v2340 = vld [vmem:[%s300 + $0x115] sm:$0xff]
      %v2341 = vld [vmem:[%s300 + $0x11d] sm:$0xff]
      %v2342 = vpack.c.bf16 %v2311, %v2310
      %v2343 = vpack.c.bf16 %v2313, %v2312
      %v2344 = vpack.c.bf16 %v2315, %v2314
      %v2345 = vpack.c.bf16 %v2317, %v2316
      %v2346 = vpack.c.bf16 %v2319, %v2318
      %v2347 = vpack.c.bf16 %v2321, %v2320
      %v2348 = vpack.c.bf16 %v2323, %v2322
      %v2349 = vpack.c.bf16 %v2325, %v2324
      %v2350 = vpack.c.bf16 %v2327, %v2326
      %v2351 = vpack.c.bf16 %v2329, %v2328
      %v2352 = vpack.c.bf16 %v2331, %v2330
      %v2353 = vpack.c.bf16 %v2333, %v2332
      %v2354 = vpack.c.bf16 %v2335, %v2334
      %v2355 = vpack.c.bf16 %v2337, %v2336
      %v2356 = vpack.c.bf16 %v2339, %v2338
      %v2357 = vpack.c.bf16 %v2341, %v2340
      %s2358 = scalar_lea.vmem %s1, 14
      %v2359 = vld [vmem:[%s2358] sm:$0x3]
      %v2361 = vsel %vm414, %v2342, 0
      %v2364 = vsel %vm414, %v2343, 0
      %v2367 = vsel %vm414, %v2344, 0
      %v2370 = vsel %vm414, %v2345, 0
      %v2373 = vsel %vm414, %v2346, 0
      %v2376 = vsel %vm414, %v2347, 0
      %v2379 = vsel %vm414, %v2348, 0
      %v2382 = vsel %vm414, %v2349, 0
      %v2385 = vsel %vm414, %v2350, 0
      %v2388 = vsel %vm414, %v2351, 0
      %v2391 = vsel %vm414, %v2352, 0
      %v2394 = vsel %vm414, %v2353, 0
      %v2397 = vsel %vm414, %v2354, 0
      %v2400 = vsel %vm414, %v2355, 0
      %v2403 = vsel %vm414, %v2356, 0
      %v2406 = vsel %vm414, %v2357, 0
      %v2409 = vsel %vm463, %v2359, 0
      %2411 = vmatprep.subr.bf16.mxu0 0
      %2412 = vmatpush1.bf16.msra.mxu0 %v2409
      %2413 = vmatprep.subr.bf16.mxu0 0
      %2414 = vmatpush1.bf16.msra.mxu0 0
      %2415 = vmatprep.subr.bf16.mxu0 0
      %2416 = vmatpush1.bf16.msra.mxu0 0
      %2417 = vmatprep.subr.bf16.mxu0 0
      %2418 = vmatpush1.bf16.msra.mxu0 0
      %2419 = vmatprep.subr.bf16.mxu0 0
      %2420 = vmatpush1.bf16.msra.mxu0 0
      %2421 = vmatprep.subr.bf16.mxu0 0
      %2422 = vmatpush1.bf16.msra.mxu0 0
      %2423 = vmatprep.subr.bf16.mxu0 0
      %2424 = vmatpush1.bf16.msra.mxu0 0
      %2425 = vmatprep.subr.bf16.mxu0 0
      %2426 = vmatpush1.bf16.msra.mxu0 0
      %2427 = vmatprep.subr.bf16.mxu0 0
      %2428 = vmatpush1.bf16.msra.mxu0 0
      %2429 = vmatprep.subr.bf16.mxu0 0
      %2430 = vmatpush1.bf16.msra.mxu0 0
      %2431 = vmatprep.subr.bf16.mxu0 0
      %2432 = vmatpush1.bf16.msra.mxu0 0
      %2433 = vmatprep.subr.bf16.mxu0 0
      %2434 = vmatpush1.bf16.msra.mxu0 0
      %2435 = vmatprep.subr.bf16.mxu0 0
      %2436 = vmatpush1.bf16.msra.mxu0 0
      %2437 = vmatprep.subr.bf16.mxu0 0
      %2438 = vmatpush1.bf16.msra.mxu0 0
      %2439 = vmatprep.subr.bf16.mxu0 0
      %2440 = vmatpush1.bf16.msra.mxu0 0
      %2441 = vmatprep.subr.bf16.mxu0 0
      %2442 = vmatpush1.bf16.msra.mxu0 0
      %2443 = vmatprep.mubr.bf16.mxu0 0
      %2444 = vmatmul.mubr.bf16.gmra.mrb[0].mxu0 %v2361
      %v2445 = vpop.f32.mrb[0].mxu0
      %v2446 = vadd.f32 0.0, %v2445
      %v2447 = vpop.f32.mrb[0].mxu0
      %v2448 = vpop.f32.mrb[0].mxu0
      %v2449 = vadd.f32 0.0, %v2448
      %v2450 = vpop.f32.mrb[0].mxu0
      %2451 = vmatprep.mubr.bf16.mxu0 0
      %2452 = vmatmul.mubr.bf16.gmra.mrb[0].mxu0 %v2364
      %v2453 = vpop.f32.mrb[0].mxu0
      %v2454 = vadd.f32 0.0, %v2453
      %v2455 = vpop.f32.mrb[0].mxu0
      %v2456 = vpop.f32.mrb[0].mxu0
      %v2457 = vadd.f32 0.0, %v2456
      %v2458 = vpop.f32.mrb[0].mxu0
      %2459 = vmatprep.mubr.bf16.mxu0 0
      %2460 = vmatmul.mubr.bf16.gmra.mrb[0].mxu0 %v2367
      %v2461 = vpop.f32.mrb[0].mxu0
      %v2462 = vadd.f32 0.0, %v2461
      %v2463 = vpop.f32.mrb[0].mxu0
      %v2464 = vpop.f32.mrb[0].mxu0
      %v2465 = vadd.f32 0.0, %v2464
      %v2466 = vpop.f32.mrb[0].mxu0
      %2467 = vmatprep.mubr.bf16.mxu0 0
      %2468 = vmatmul.mubr.bf16.gmra.mrb[0].mxu0 %v2370
      %v2469 = vpop.f32.mrb[0].mxu0
      %v2470 = vadd.f32 0.0, %v2469
      %v2471 = vpop.f32.mrb[0].mxu0
      %v2472 = vpop.f32.mrb[0].mxu0
      %v2473 = vadd.f32 0.0, %v2472
      %v2474 = vpop.f32.mrb[0].mxu0
      %2475 = vmatprep.mubr.bf16.mxu0 0
      %2476 = vmatmul.mubr.bf16.gmra.mrb[0].mxu0 %v2373
      %v2477 = vpop.f32.mrb[0].mxu0
      %v2478 = vadd.f32 0.0, %v2477
      %v2479 = vpop.f32.mrb[0].mxu0
      %v2480 = vpop.f32.mrb[0].mxu0
      %v2481 = vadd.f32 0.0, %v2480
      %v2482 = vpop.f32.mrb[0].mxu0
      %2483 = vmatprep.mubr.bf16.mxu0 0
      %2484 = vmatmul.mubr.bf16.gmra.mrb[0].mxu0 %v2376
      %v2485 = vpop.f32.mrb[0].mxu0
      %v2486 = vadd.f32 0.0, %v2485
      %v2487 = vpop.f32.mrb[0].mxu0
      %v2488 = vpop.f32.mrb[0].mxu0
      %v2489 = vadd.f32 0.0, %v2488
      %v2490 = vpop.f32.mrb[0].mxu0
      %2491 = vmatprep.mubr.bf16.mxu0 0
      %2492 = vmatmul.mubr.bf16.gmra.mrb[0].mxu0 %v2379
      %v2493 = vpop.f32.mrb[0].mxu0
      %v2494 = vadd.f32 0.0, %v2493
      %v2495 = vpop.f32.mrb[0].mxu0
      %v2496 = vpop.f32.mrb[0].mxu0
      %v2497 = vadd.f32 0.0, %v2496
      %v2498 = vpop.f32.mrb[0].mxu0
      %2499 = vmatprep.mubr.bf16.mxu0 0
      %2500 = vmatmul.mubr.bf16.gmra.mrb[0].mxu0 %v2382
      %v2501 = vpop.f32.mrb[0].mxu0
      %v2502 = vadd.f32 0.0, %v2501
      %v2503 = vpop.f32.mrb[0].mxu0
      %v2504 = vpop.f32.mrb[0].mxu0
      %v2505 = vadd.f32 0.0, %v2504
      %v2506 = vpop.f32.mrb[0].mxu0
      %2507 = vmatprep.mubr.bf16.mxu0 0
      %2508 = vmatmul.mubr.bf16.gmra.mrb[0].mxu0 %v2385
      %v2509 = vpop.f32.mrb[0].mxu0
      %v2510 = vadd.f32 0.0, %v2509
      %v2511 = vpop.f32.mrb[0].mxu0
      %v2512 = vpop.f32.mrb[0].mxu0
      %v2513 = vadd.f32 0.0, %v2512
      %v2514 = vpop.f32.mrb[0].mxu0
      %2515 = vmatprep.mubr.bf16.mxu0 0
      %2516 = vmatmul.mubr.bf16.gmra.mrb[0].mxu0 %v2388
      %v2517 = vpop.f32.mrb[0].mxu0
      %v2518 = vadd.f32 0.0, %v2517
      %v2519 = vpop.f32.mrb[0].mxu0
      %v2520 = vpop.f32.mrb[0].mxu0
      %v2521 = vadd.f32 0.0, %v2520
      %v2522 = vpop.f32.mrb[0].mxu0
      %2523 = vmatprep.mubr.bf16.mxu0 0
      %2524 = vmatmul.mubr.bf16.gmra.mrb[0].mxu0 %v2391
      %v2525 = vpop.f32.mrb[0].mxu0
      %v2526 = vadd.f32 0.0, %v2525
      %v2527 = vpop.f32.mrb[0].mxu0
      %v2528 = vpop.f32.mrb[0].mxu0
      %v2529 = vadd.f32 0.0, %v2528
      %v2530 = vpop.f32.mrb[0].mxu0
      %2531 = vmatprep.mubr.bf16.mxu0 0
      %2532 = vmatmul.mubr.bf16.gmra.mrb[0].mxu0 %v2394
      %v2533 = vpop.f32.mrb[0].mxu0
      %v2534 = vadd.f32 0.0, %v2533
      %v2535 = vpop.f32.mrb[0].mxu0
      %v2536 = vpop.f32.mrb[0].mxu0
      %v2537 = vadd.f32 0.0, %v2536
      %v2538 = vpop.f32.mrb[0].mxu0
      %2539 = vmatprep.mubr.bf16.mxu0 0
      %2540 = vmatmul.mubr.bf16.gmra.mrb[0].mxu0 %v2397
      %v2541 = vpop.f32.mrb[0].mxu0
      %v2542 = vadd.f32 0.0, %v2541
      %v2543 = vpop.f32.mrb[0].mxu0
      %v2544 = vpop.f32.mrb[0].mxu0
      %v2545 = vadd.f32 0.0, %v2544
      %v2546 = vpop.f32.mrb[0].mxu0
      %2547 = vmatprep.mubr.bf16.mxu0 0
      %2548 = vmatmul.mubr.bf16.gmra.mrb[0].mxu0 %v2400
      %v2549 = vpop.f32.mrb[0].mxu0
      %v2550 = vadd.f32 0.0, %v2549
      %v2551 = vpop.f32.mrb[0].mxu0
      %v2552 = vpop.f32.mrb[0].mxu0
      %v2553 = vadd.f32 0.0, %v2552
      %v2554 = vpop.f32.mrb[0].mxu0
      %2555 = vmatprep.mubr.bf16.mxu0 0
      %2556 = vmatmul.mubr.bf16.gmra.mrb[0].mxu0 %v2403
      %v2557 = vpop.f32.mrb[0].mxu0
      %v2558 = vadd.f32 0.0, %v2557
      %v2559 = vpop.f32.mrb[0].mxu0
      %v2560 = vpop.f32.mrb[0].mxu0
      %v2561 = vadd.f32 0.0, %v2560
      %v2562 = vpop.f32.mrb[0].mxu0
      %2563 = vmatprep.mubr.bf16.mxu0 0
      %2564 = vmatmul.mubr.bf16.gmra.mrb[0].mxu0 %v2406
      %v2565 = vpop.f32.mrb[0].mxu0
      %v2566 = vadd.f32 0.0, %v2565
      %v2567 = vpop.f32.mrb[0].mxu0
      %v2568 = vpop.f32.mrb[0].mxu0
      %v2569 = vadd.f32 0.0, %v2568
      %v2570 = vpop.f32.mrb[0].mxu0
      %2571 = vdwg.mxu0
      %v2572 = vadd.f32 %v2278, %v2446
      %v2573 = vadd.f32 %v2279, %v2449
      %v2574 = vadd.f32 %v2280, %v2454
      %v2575 = vadd.f32 %v2281, %v2457
      %v2576 = vadd.f32 %v2282, %v2462
      %v2577 = vadd.f32 %v2283, %v2465
      %v2578 = vadd.f32 %v2284, %v2470
      %v2579 = vadd.f32 %v2285, %v2473
      %v2580 = vadd.f32 %v2286, %v2478
      %v2581 = vadd.f32 %v2287, %v2481
      %v2582 = vadd.f32 %v2288, %v2486
      %v2583 = vadd.f32 %v2289, %v2489
      %v2584 = vadd.f32 %v2290, %v2494
      %v2585 = vadd.f32 %v2291, %v2497
      %v2586 = vadd.f32 %v2292, %v2502
      %v2587 = vadd.f32 %v2293, %v2505
      %v2588 = vadd.f32 %v2294, %v2510
      %v2589 = vadd.f32 %v2295, %v2513
      %v2590 = vadd.f32 %v2296, %v2518
      %v2591 = vadd.f32 %v2297, %v2521
      %v2592 = vadd.f32 %v2298, %v2526
      %v2593 = vadd.f32 %v2299, %v2529
      %v2594 = vadd.f32 %v2300, %v2534
      %v2595 = vadd.f32 %v2301, %v2537
      %v2596 = vadd.f32 %v2302, %v2542
      %v2597 = vadd.f32 %v2303, %v2545
      %v2598 = vadd.f32 %v2304, %v2550
      %v2599 = vadd.f32 %v2305, %v2553
      %v2600 = vadd.f32 %v2306, %v2558
      %v2601 = vadd.f32 %v2307, %v2561
      %v2602 = vadd.f32 %v2308, %v2566
      %v2603 = vadd.f32 %v2309, %v2569
      %v2604 = vld [vmem:[%s300 + $0x26] sm:$0xff]
      %v2605 = vld [vmem:[%s300 + $0x2e] sm:$0xff]
      %v2606 = vld [vmem:[%s300 + $0x36] sm:$0xff]
      %v2607 = vld [vmem:[%s300 + $0x3e] sm:$0xff]
      %v2608 = vld [vmem:[%s300 + $0x46] sm:$0xff]
      %v2609 = vld [vmem:[%s300 + $0x4e] sm:$0xff]
      %v2610 = vld [vmem:[%s300 + $0x56] sm:$0xff]
      %v2611 = vld [vmem:[%s300 + $0x5e] sm:$0xff]
      %v2612 = vld [vmem:[%s300 + $0x66] sm:$0xff]
      %v2613 = vld [vmem:[%s300 + $0x6e] sm:$0xff]
      %v2614 = vld [vmem:[%s300 + $0x76] sm:$0xff]
      %v2615 = vld [vmem:[%s300 + $0x7e] sm:$0xff]
      %v2616 = vld [vmem:[%s300 + $0x86] sm:$0xff]
      %v2617 = vld [vmem:[%s300 + $0x8e] sm:$0xff]
      %v2618 = vld [vmem:[%s300 + $0x96] sm:$0xff]
      %v2619 = vld [vmem:[%s300 + $0x9e] sm:$0xff]
      %v2620 = vld [vmem:[%s300 + $0xa6] sm:$0xff]
      %v2621 = vld [vmem:[%s300 + $0xae] sm:$0xff]
      %v2622 = vld [vmem:[%s300 + $0xb6] sm:$0xff]
      %v2623 = vld [vmem:[%s300 + $0xbe] sm:$0xff]
      %v2624 = vld [vmem:[%s300 + $0xc6] sm:$0xff]
      %v2625 = vld [vmem:[%s300 + $0xce] sm:$0xff]
      %v2626 = vld [vmem:[%s300 + $0xd6] sm:$0xff]
      %v2627 = vld [vmem:[%s300 + $0xde] sm:$0xff]
      %v2628 = vld [vmem:[%s300 + $0xe6] sm:$0xff]
      %v2629 = vld [vmem:[%s300 + $0xee] sm:$0xff]
      %v2630 = vld [vmem:[%s300 + $0xf6] sm:$0xff]
      %v2631 = vld [vmem:[%s300 + $0xfe] sm:$0xff]
      %v2632 = vld [vmem:[%s300 + $0x106] sm:$0xff]
      %v2633 = vld [vmem:[%s300 + $0x10e] sm:$0xff]
      %v2634 = vld [vmem:[%s300 + $0x116] sm:$0xff]
      %v2635 = vld [vmem:[%s300 + $0x11e] sm:$0xff]
      %v2636 = vpack.c.bf16 %v2605, %v2604
      %v2637 = vpack.c.bf16 %v2607, %v2606
      %v2638 = vpack.c.bf16 %v2609, %v2608
      %v2639 = vpack.c.bf16 %v2611, %v2610
      %v2640 = vpack.c.bf16 %v2613, %v2612
      %v2641 = vpack.c.bf16 %v2615, %v2614
      %v2642 = vpack.c.bf16 %v2617, %v2616
      %v2643 = vpack.c.bf16 %v2619, %v2618
      %v2644 = vpack.c.bf16 %v2621, %v2620
      %v2645 = vpack.c.bf16 %v2623, %v2622
      %v2646 = vpack.c.bf16 %v2625, %v2624
      %v2647 = vpack.c.bf16 %v2627, %v2626
      %v2648 = vpack.c.bf16 %v2629, %v2628
      %v2649 = vpack.c.bf16 %v2631, %v2630
      %v2650 = vpack.c.bf16 %v2633, %v2632
      %v2651 = vpack.c.bf16 %v2635, %v2634
      %s2652 = scalar_lea.vmem %s1, 16
      %v2653 = vld [vmem:[%s2652] sm:$0x3]
      %v2655 = vsel %vm414, %v2636, 0
      %v2658 = vsel %vm414, %v2637, 0
      %v2661 = vsel %vm414, %v2638, 0
      %v2664 = vsel %vm414, %v2639, 0
      %v2667 = vsel %vm414, %v2640, 0
      %v2670 = vsel %vm414, %v2641, 0
      %v2673 = vsel %vm414, %v2642, 0
      %v2676 = vsel %vm414, %v2643, 0
      %v2679 = vsel %vm414, %v2644, 0
      %v2682 = vsel %vm414, %v2645, 0
      %v2685 = vsel %vm414, %v2646, 0
      %v2688 = vsel %vm414, %v2647, 0
      %v2691 = vsel %vm414, %v2648, 0
      %v2694 = vsel %vm414, %v2649, 0
      %v2697 = vsel %vm414, %v2650, 0
      %v2700 = vsel %vm414, %v2651, 0
      %v2703 = vsel %vm463, %v2653, 0
      %2705 = vmatprep.subr.bf16.mxu0 0
      %2706 = vmatpush1.bf16.msra.mxu0 %v2703
      %2707 = vmatprep.subr.bf16.mxu0 0
      %2708 = vmatpush1.bf16.msra.mxu0 0
      %2709 = vmatprep.subr.bf16.mxu0 0
      %2710 = vmatpush1.bf16.msra.mxu0 0
      %2711 = vmatprep.subr.bf16.mxu0 0
      %2712 = vmatpush1.bf16.msra.mxu0 0
      %2713 = vmatprep.subr.bf16.mxu0 0
      %2714 = vmatpush1.bf16.msra.mxu0 0
      %2715 = vmatprep.subr.bf16.mxu0 0
      %2716 = vmatpush1.bf16.msra.mxu0 0
      %2717 = vmatprep.subr.bf16.mxu0 0
      %2718 = vmatpush1.bf16.msra.mxu0 0
      %2719 = vmatprep.subr.bf16.mxu0 0
      %2720 = vmatpush1.bf16.msra.mxu0 0
      %2721 = vmatprep.subr.bf16.mxu0 0
      %2722 = vmatpush1.bf16.msra.mxu0 0
      %2723 = vmatprep.subr.bf16.mxu0 0
      %2724 = vmatpush1.bf16.msra.mxu0 0
      %2725 = vmatprep.subr.bf16.mxu0 0
      %2726 = vmatpush1.bf16.msra.mxu0 0
      %2727 = vmatprep.subr.bf16.mxu0 0
      %2728 = vmatpush1.bf16.msra.mxu0 0
      %2729 = vmatprep.subr.bf16.mxu0 0
      %2730 = vmatpush1.bf16.msra.mxu0 0
      %2731 = vmatprep.subr.bf16.mxu0 0
      %2732 = vmatpush1.bf16.msra.mxu0 0
      %2733 = vmatprep.subr.bf16.mxu0 0
      %2734 = vmatpush1.bf16.msra.mxu0 0
      %2735 = vmatprep.subr.bf16.mxu0 0
      %2736 = vmatpush1.bf16.msra.mxu0 0
      %2737 = vmatprep.mubr.bf16.mxu0 0
      %2738 = vmatmul.mubr.bf16.gmra.mrb[0].mxu0 %v2655
      %v2739 = vpop.f32.mrb[0].mxu0
      %v2740 = vadd.f32 0.0, %v2739
      %v2741 = vpop.f32.mrb[0].mxu0
      %v2742 = vpop.f32.mrb[0].mxu0
      %v2743 = vadd.f32 0.0, %v2742
      %v2744 = vpop.f32.mrb[0].mxu0
      %2745 = vmatprep.mubr.bf16.mxu0 0
      %2746 = vmatmul.mubr.bf16.gmra.mrb[0].mxu0 %v2658
      %v2747 = vpop.f32.mrb[0].mxu0
      %v2748 = vadd.f32 0.0, %v2747
      %v2749 = vpop.f32.mrb[0].mxu0
      %v2750 = vpop.f32.mrb[0].mxu0
      %v2751 = vadd.f32 0.0, %v2750
      %v2752 = vpop.f32.mrb[0].mxu0
      %2753 = vmatprep.mubr.bf16.mxu0 0
      %2754 = vmatmul.mubr.bf16.gmra.mrb[0].mxu0 %v2661
      %v2755 = vpop.f32.mrb[0].mxu0
      %v2756 = vadd.f32 0.0, %v2755
      %v2757 = vpop.f32.mrb[0].mxu0
      %v2758 = vpop.f32.mrb[0].mxu0
      %v2759 = vadd.f32 0.0, %v2758
      %v2760 = vpop.f32.mrb[0].mxu0
      %2761 = vmatprep.mubr.bf16.mxu0 0
      %2762 = vmatmul.mubr.bf16.gmra.mrb[0].mxu0 %v2664
      %v2763 = vpop.f32.mrb[0].mxu0
      %v2764 = vadd.f32 0.0, %v2763
      %v2765 = vpop.f32.mrb[0].mxu0
      %v2766 = vpop.f32.mrb[0].mxu0
      %v2767 = vadd.f32 0.0, %v2766
      %v2768 = vpop.f32.mrb[0].mxu0
      %2769 = vmatprep.mubr.bf16.mxu0 0
      %2770 = vmatmul.mubr.bf16.gmra.mrb[0].mxu0 %v2667
      %v2771 = vpop.f32.mrb[0].mxu0
      %v2772 = vadd.f32 0.0, %v2771
      %v2773 = vpop.f32.mrb[0].mxu0
      %v2774 = vpop.f32.mrb[0].mxu0
      %v2775 = vadd.f32 0.0, %v2774
      %v2776 = vpop.f32.mrb[0].mxu0
      %2777 = vmatprep.mubr.bf16.mxu0 0
      %2778 = vmatmul.mubr.bf16.gmra.mrb[0].mxu0 %v2670
      %v2779 = vpop.f32.mrb[0].mxu0
      %v2780 = vadd.f32 0.0, %v2779
      %v2781 = vpop.f32.mrb[0].mxu0
      %v2782 = vpop.f32.mrb[0].mxu0
      %v2783 = vadd.f32 0.0, %v2782
      %v2784 = vpop.f32.mrb[0].mxu0
      %2785 = vmatprep.mubr.bf16.mxu0 0
      %2786 = vmatmul.mubr.bf16.gmra.mrb[0].mxu0 %v2673
      %v2787 = vpop.f32.mrb[0].mxu0
      %v2788 = vadd.f32 0.0, %v2787
      %v2789 = vpop.f32.mrb[0].mxu0
      %v2790 = vpop.f32.mrb[0].mxu0
      %v2791 = vadd.f32 0.0, %v2790
      %v2792 = vpop.f32.mrb[0].mxu0
      %2793 = vmatprep.mubr.bf16.mxu0 0
      %2794 = vmatmul.mubr.bf16.gmra.mrb[0].mxu0 %v2676
      %v2795 = vpop.f32.mrb[0].mxu0
      %v2796 = vadd.f32 0.0, %v2795
      %v2797 = vpop.f32.mrb[0].mxu0
      %v2798 = vpop.f32.mrb[0].mxu0
      %v2799 = vadd.f32 0.0, %v2798
      %v2800 = vpop.f32.mrb[0].mxu0
      %2801 = vmatprep.mubr.bf16.mxu0 0
      %2802 = vmatmul.mubr.bf16.gmra.mrb[0].mxu0 %v2679
      %v2803 = vpop.f32.mrb[0].mxu0
      %v2804 = vadd.f32 0.0, %v2803
      %v2805 = vpop.f32.mrb[0].mxu0
      %v2806 = vpop.f32.mrb[0].mxu0
      %v2807 = vadd.f32 0.0, %v2806
      %v2808 = vpop.f32.mrb[0].mxu0
      %2809 = vmatprep.mubr.bf16.mxu0 0
      %2810 = vmatmul.mubr.bf16.gmra.mrb[0].mxu0 %v2682
      %v2811 = vpop.f32.mrb[0].mxu0
      %v2812 = vadd.f32 0.0, %v2811
      %v2813 = vpop.f32.mrb[0].mxu0
      %v2814 = vpop.f32.mrb[0].mxu0
      %v2815 = vadd.f32 0.0, %v2814
      %v2816 = vpop.f32.mrb[0].mxu0
      %2817 = vmatprep.mubr.bf16.mxu0 0
      %2818 = vmatmul.mubr.bf16.gmra.mrb[0].mxu0 %v2685
      %v2819 = vpop.f32.mrb[0].mxu0
      %v2820 = vadd.f32 0.0, %v2819
      %v2821 = vpop.f32.mrb[0].mxu0
      %v2822 = vpop.f32.mrb[0].mxu0
      %v2823 = vadd.f32 0.0, %v2822
      %v2824 = vpop.f32.mrb[0].mxu0
      %2825 = vmatprep.mubr.bf16.mxu0 0
      %2826 = vmatmul.mubr.bf16.gmra.mrb[0].mxu0 %v2688
      %v2827 = vpop.f32.mrb[0].mxu0
      %v2828 = vadd.f32 0.0, %v2827
      %v2829 = vpop.f32.mrb[0].mxu0
      %v2830 = vpop.f32.mrb[0].mxu0
      %v2831 = vadd.f32 0.0, %v2830
      %v2832 = vpop.f32.mrb[0].mxu0
      %2833 = vmatprep.mubr.bf16.mxu0 0
      %2834 = vmatmul.mubr.bf16.gmra.mrb[0].mxu0 %v2691
      %v2835 = vpop.f32.mrb[0].mxu0
      %v2836 = vadd.f32 0.0, %v2835
      %v2837 = vpop.f32.mrb[0].mxu0
      %v2838 = vpop.f32.mrb[0].mxu0
      %v2839 = vadd.f32 0.0, %v2838
      %v2840 = vpop.f32.mrb[0].mxu0
      %2841 = vmatprep.mubr.bf16.mxu0 0
      %2842 = vmatmul.mubr.bf16.gmra.mrb[0].mxu0 %v2694
      %v2843 = vpop.f32.mrb[0].mxu0
      %v2844 = vadd.f32 0.0, %v2843
      %v2845 = vpop.f32.mrb[0].mxu0
      %v2846 = vpop.f32.mrb[0].mxu0
      %v2847 = vadd.f32 0.0, %v2846
      %v2848 = vpop.f32.mrb[0].mxu0
      %2849 = vmatprep.mubr.bf16.mxu0 0
      %2850 = vmatmul.mubr.bf16.gmra.mrb[0].mxu0 %v2697
      %v2851 = vpop.f32.mrb[0].mxu0
      %v2852 = vadd.f32 0.0, %v2851
      %v2853 = vpop.f32.mrb[0].mxu0
      %v2854 = vpop.f32.mrb[0].mxu0
      %v2855 = vadd.f32 0.0, %v2854
      %v2856 = vpop.f32.mrb[0].mxu0
      %2857 = vmatprep.mubr.bf16.mxu0 0
      %2858 = vmatmul.mubr.bf16.gmra.mrb[0].mxu0 %v2700
      %v2859 = vpop.f32.mrb[0].mxu0
      %v2860 = vadd.f32 0.0, %v2859
      %v2861 = vpop.f32.mrb[0].mxu0
      %v2862 = vpop.f32.mrb[0].mxu0
      %v2863 = vadd.f32 0.0, %v2862
      %v2864 = vpop.f32.mrb[0].mxu0
      %2865 = vdwg.mxu0
      %v2866 = vadd.f32 %v2572, %v2740
      %v2867 = vadd.f32 %v2573, %v2743
      %v2868 = vadd.f32 %v2574, %v2748
      %v2869 = vadd.f32 %v2575, %v2751
      %v2870 = vadd.f32 %v2576, %v2756
      %v2871 = vadd.f32 %v2577, %v2759
      %v2872 = vadd.f32 %v2578, %v2764
      %v2873 = vadd.f32 %v2579, %v2767
      %v2874 = vadd.f32 %v2580, %v2772
      %v2875 = vadd.f32 %v2581, %v2775
      %v2876 = vadd.f32 %v2582, %v2780
      %v2877 = vadd.f32 %v2583, %v2783
      %v2878 = vadd.f32 %v2584, %v2788
      %v2879 = vadd.f32 %v2585, %v2791
      %v2880 = vadd.f32 %v2586, %v2796
      %v2881 = vadd.f32 %v2587, %v2799
      %v2882 = vadd.f32 %v2588, %v2804
      %v2883 = vadd.f32 %v2589, %v2807
      %v2884 = vadd.f32 %v2590, %v2812
      %v2885 = vadd.f32 %v2591, %v2815
      %v2886 = vadd.f32 %v2592, %v2820
      %v2887 = vadd.f32 %v2593, %v2823
      %v2888 = vadd.f32 %v2594, %v2828
      %v2889 = vadd.f32 %v2595, %v2831
      %v2890 = vadd.f32 %v2596, %v2836
      %v2891 = vadd.f32 %v2597, %v2839
      %v2892 = vadd.f32 %v2598, %v2844
      %v2893 = vadd.f32 %v2599, %v2847
      %v2894 = vadd.f32 %v2600, %v2852
      %v2895 = vadd.f32 %v2601, %v2855
      %v2896 = vadd.f32 %v2602, %v2860
      %v2897 = vadd.f32 %v2603, %v2863
      %v2898 = vld [vmem:[%s2] sm:$0x1]
      %v2900 = vlaneseq
      %v2901 = vshrl.u32 %v2900, 7
      %v2902 = vsub.s32 0, %v2901
      %v2903 = vrot.slane %v2898, %v2902
      %v2905 = vmul.f32 %v2866, %v2903
      %v2906 = vmul.f32 %v2867, %v2903
      %v2907 = vmul.f32 %v2868, %v2903
      %v2908 = vmul.f32 %v2869, %v2903
      %v2909 = vmul.f32 %v2870, %v2903
      %v2910 = vmul.f32 %v2871, %v2903
      %v2911 = vmul.f32 %v2872, %v2903
      %v2912 = vmul.f32 %v2873, %v2903
      %v2913 = vmul.f32 %v2874, %v2903
      %v2914 = vmul.f32 %v2875, %v2903
      %v2915 = vmul.f32 %v2876, %v2903
      %v2916 = vmul.f32 %v2877, %v2903
      %v2917 = vmul.f32 %v2878, %v2903
      %v2918 = vmul.f32 %v2879, %v2903
      %v2919 = vmul.f32 %v2880, %v2903
      %v2920 = vmul.f32 %v2881, %v2903
      %v2921 = vmul.f32 %v2882, %v2903
      %v2922 = vmul.f32 %v2883, %v2903
      %v2923 = vmul.f32 %v2884, %v2903
      %v2924 = vmul.f32 %v2885, %v2903
      %v2925 = vmul.f32 %v2886, %v2903
      %v2926 = vmul.f32 %v2887, %v2903
      %v2927 = vmul.f32 %v2888, %v2903
      %v2928 = vmul.f32 %v2889, %v2903
      %v2929 = vmul.f32 %v2890, %v2903
      %v2930 = vmul.f32 %v2891, %v2903
      %v2931 = vmul.f32 %v2892, %v2903
      %v2932 = vmul.f32 %v2893, %v2903
      %v2933 = vmul.f32 %v2894, %v2903
      %v2934 = vmul.f32 %v2895, %v2903
      %v2935 = vmul.f32 %v2896, %v2903
      %v2936 = vmul.f32 %v2897, %v2903
      %v2937 = vld [vmem:[%s3] sm:$0x1]
      %v2939 = vlaneseq
      %v2940 = vshrl.u32 %v2939, 7
      %v2941 = vsub.s32 0, %v2940
      %v2942 = vrot.slane %v2937, %v2941
      %v2944 = vadd.f32 %v2905, %v2942
      %v2945 = vadd.f32 %v2906, %v2942
      %v2946 = vadd.f32 %v2907, %v2942
      %v2947 = vadd.f32 %v2908, %v2942
      %v2948 = vadd.f32 %v2909, %v2942
      %v2949 = vadd.f32 %v2910, %v2942
      %v2950 = vadd.f32 %v2911, %v2942
      %v2951 = vadd.f32 %v2912, %v2942
      %v2952 = vadd.f32 %v2913, %v2942
      %v2953 = vadd.f32 %v2914, %v2942
      %v2954 = vadd.f32 %v2915, %v2942
      %v2955 = vadd.f32 %v2916, %v2942
      %v2956 = vadd.f32 %v2917, %v2942
      %v2957 = vadd.f32 %v2918, %v2942
      %v2958 = vadd.f32 %v2919, %v2942
      %v2959 = vadd.f32 %v2920, %v2942
      %v2960 = vadd.f32 %v2921, %v2942
      %v2961 = vadd.f32 %v2922, %v2942
      %v2962 = vadd.f32 %v2923, %v2942
      %v2963 = vadd.f32 %v2924, %v2942
      %v2964 = vadd.f32 %v2925, %v2942
      %v2965 = vadd.f32 %v2926, %v2942
      %v2966 = vadd.f32 %v2927, %v2942
      %v2967 = vadd.f32 %v2928, %v2942
      %v2968 = vadd.f32 %v2929, %v2942
      %v2969 = vadd.f32 %v2930, %v2942
      %v2970 = vadd.f32 %v2931, %v2942
      %v2971 = vadd.f32 %v2932, %v2942
      %v2972 = vadd.f32 %v2933, %v2942
      %v2973 = vadd.f32 %v2934, %v2942
      %v2974 = vadd.f32 %v2935, %v2942
      %v2975 = vadd.f32 %v2936, %v2942
      %v2976 = vmax.f32 %v2944, 0.0
      %v2977 = vmax.f32 %v2945, 0.0
      %v2978 = vmax.f32 %v2946, 0.0
      %v2979 = vmax.f32 %v2947, 0.0
      %v2980 = vmax.f32 %v2948, 0.0
      %v2981 = vmax.f32 %v2949, 0.0
      %v2982 = vmax.f32 %v2950, 0.0
      %v2983 = vmax.f32 %v2951, 0.0
      %v2984 = vmax.f32 %v2952, 0.0
      %v2985 = vmax.f32 %v2953, 0.0
      %v2986 = vmax.f32 %v2954, 0.0
      %v2987 = vmax.f32 %v2955, 0.0
      %v2988 = vmax.f32 %v2956, 0.0
      %v2989 = vmax.f32 %v2957, 0.0
      %v2990 = vmax.f32 %v2958, 0.0
      %v2991 = vmax.f32 %v2959, 0.0
      %v2992 = vmax.f32 %v2960, 0.0
      %v2993 = vmax.f32 %v2961, 0.0
      %v2994 = vmax.f32 %v2962, 0.0
      %v2995 = vmax.f32 %v2963, 0.0
      %v2996 = vmax.f32 %v2964, 0.0
      %v2997 = vmax.f32 %v2965, 0.0
      %v2998 = vmax.f32 %v2966, 0.0
      %v2999 = vmax.f32 %v2967, 0.0
      %v3000 = vmax.f32 %v2968, 0.0
      %v3001 = vmax.f32 %v2969, 0.0
      %v3002 = vmax.f32 %v2970, 0.0
      %v3003 = vmax.f32 %v2971, 0.0
      %v3004 = vmax.f32 %v2972, 0.0
      %v3005 = vmax.f32 %v2973, 0.0
      %v3006 = vmax.f32 %v2974, 0.0
      %v3007 = vmax.f32 %v2975, 0.0
      %v3008 = vld [vmem:[%s7] sm:$0xff]
      %v3009 = vld [vmem:[%s7 + $0x8] sm:$0xff]
      %v3010 = vld [vmem:[%s7 + $0x10] sm:$0xff]
      %v3011 = vld [vmem:[%s7 + $0x18] sm:$0xff]
      %v3012 = vld [vmem:[%s7 + $0x20] sm:$0xff]
      %v3013 = vld [vmem:[%s7 + $0x28] sm:$0xff]
      %v3014 = vld [vmem:[%s7 + $0x30] sm:$0xff]
      %v3015 = vld [vmem:[%s7 + $0x38] sm:$0xff]
      %v3016 = vld [vmem:[%s7 + $0x40] sm:$0xff]
      %v3017 = vld [vmem:[%s7 + $0x48] sm:$0xff]
      %v3018 = vld [vmem:[%s7 + $0x50] sm:$0xff]
      %v3019 = vld [vmem:[%s7 + $0x58] sm:$0xff]
      %v3020 = vld [vmem:[%s7 + $0x60] sm:$0xff]
      %v3021 = vld [vmem:[%s7 + $0x68] sm:$0xff]
      %v3022 = vld [vmem:[%s7 + $0x70] sm:$0xff]
      %v3023 = vld [vmem:[%s7 + $0x78] sm:$0xff]
      %v3024 = vld [vmem:[%s7 + $0x80] sm:$0xff]
      %v3025 = vld [vmem:[%s7 + $0x88] sm:$0xff]
      %v3026 = vld [vmem:[%s7 + $0x90] sm:$0xff]
      %v3027 = vld [vmem:[%s7 + $0x98] sm:$0xff]
      %v3028 = vld [vmem:[%s7 + $0xa0] sm:$0xff]
      %v3029 = vld [vmem:[%s7 + $0xa8] sm:$0xff]
      %v3030 = vld [vmem:[%s7 + $0xb0] sm:$0xff]
      %v3031 = vld [vmem:[%s7 + $0xb8] sm:$0xff]
      %v3032 = vld [vmem:[%s7 + $0xc0] sm:$0xff]
      %v3033 = vld [vmem:[%s7 + $0xc8] sm:$0xff]
      %v3034 = vld [vmem:[%s7 + $0xd0] sm:$0xff]
      %v3035 = vld [vmem:[%s7 + $0xd8] sm:$0xff]
      %v3036 = vld [vmem:[%s7 + $0xe0] sm:$0xff]
      %v3037 = vld [vmem:[%s7 + $0xe8] sm:$0xff]
      %v3038 = vld [vmem:[%s7 + $0xf0] sm:$0xff]
      %v3039 = vld [vmem:[%s7 + $0xf8] sm:$0xff]
      %3041 = vset.pattern.permute.xlu0 0
      %3042 = vperm.xlu0 %3041, %v3008
      %v3043 = vpop.permute.xlu0 %3042
      %3046 = vset.pattern.permute.xlu0 0
      %3047 = vperm.xlu0 %3046, %v3009
      %v3048 = vpop.permute.xlu0 %3047
      %3051 = vset.pattern.permute.xlu0 0
      %3052 = vperm.xlu0 %3051, %v3010
      %v3053 = vpop.permute.xlu0 %3052
      %3056 = vset.pattern.permute.xlu0 0
      %3057 = vperm.xlu0 %3056, %v3011
      %v3058 = vpop.permute.xlu0 %3057
      %3061 = vset.pattern.permute.xlu0 0
      %3062 = vperm.xlu0 %3061, %v3012
      %v3063 = vpop.permute.xlu0 %3062
      %3066 = vset.pattern.permute.xlu0 0
      %3067 = vperm.xlu0 %3066, %v3013
      %v3068 = vpop.permute.xlu0 %3067
      %3071 = vset.pattern.permute.xlu0 0
      %3072 = vperm.xlu0 %3071, %v3014
      %v3073 = vpop.permute.xlu0 %3072
      %3076 = vset.pattern.permute.xlu0 0
      %3077 = vperm.xlu0 %3076, %v3015
      %v3078 = vpop.permute.xlu0 %3077
      %3081 = vset.pattern.permute.xlu0 0
      %3082 = vperm.xlu0 %3081, %v3016
      %v3083 = vpop.permute.xlu0 %3082
      %3086 = vset.pattern.permute.xlu0 0
      %3087 = vperm.xlu0 %3086, %v3017
      %v3088 = vpop.permute.xlu0 %3087
      %3091 = vset.pattern.permute.xlu0 0
      %3092 = vperm.xlu0 %3091, %v3018
      %v3093 = vpop.permute.xlu0 %3092
      %3096 = vset.pattern.permute.xlu0 0
      %3097 = vperm.xlu0 %3096, %v3019
      %v3098 = vpop.permute.xlu0 %3097
      %3101 = vset.pattern.permute.xlu0 0
      %3102 = vperm.xlu0 %3101, %v3020
      %v3103 = vpop.permute.xlu0 %3102
      %3106 = vset.pattern.permute.xlu0 0
      %3107 = vperm.xlu0 %3106, %v3021
      %v3108 = vpop.permute.xlu0 %3107
      %3111 = vset.pattern.permute.xlu0 0
      %3112 = vperm.xlu0 %3111, %v3022
      %v3113 = vpop.permute.xlu0 %3112
      %3116 = vset.pattern.permute.xlu0 0
      %3117 = vperm.xlu0 %3116, %v3023
      %v3118 = vpop.permute.xlu0 %3117
      %3121 = vset.pattern.permute.xlu0 0
      %3122 = vperm.xlu0 %3121, %v3024
      %v3123 = vpop.permute.xlu0 %3122
      %3126 = vset.pattern.permute.xlu0 0
      %3127 = vperm.xlu0 %3126, %v3025
      %v3128 = vpop.permute.xlu0 %3127
      %3131 = vset.pattern.permute.xlu0 0
      %3132 = vperm.xlu0 %3131, %v3026
      %v3133 = vpop.permute.xlu0 %3132
      %3136 = vset.pattern.permute.xlu0 0
      %3137 = vperm.xlu0 %3136, %v3027
      %v3138 = vpop.permute.xlu0 %3137
      %3141 = vset.pattern.permute.xlu0 0
      %3142 = vperm.xlu0 %3141, %v3028
      %v3143 = vpop.permute.xlu0 %3142
      %3146 = vset.pattern.permute.xlu0 0
      %3147 = vperm.xlu0 %3146, %v3029
      %v3148 = vpop.permute.xlu0 %3147
      %3151 = vset.pattern.permute.xlu0 0
      %3152 = vperm.xlu0 %3151, %v3030
      %v3153 = vpop.permute.xlu0 %3152
      %3156 = vset.pattern.permute.xlu0 0
      %3157 = vperm.xlu0 %3156, %v3031
      %v3158 = vpop.permute.xlu0 %3157
      %3161 = vset.pattern.permute.xlu0 0
      %3162 = vperm.xlu0 %3161, %v3032
      %v3163 = vpop.permute.xlu0 %3162
      %3166 = vset.pattern.permute.xlu0 0
      %3167 = vperm.xlu0 %3166, %v3033
      %v3168 = vpop.permute.xlu0 %3167
      %3171 = vset.pattern.permute.xlu0 0
      %3172 = vperm.xlu0 %3171, %v3034
      %v3173 = vpop.permute.xlu0 %3172
      %3176 = vset.pattern.permute.xlu0 0
      %3177 = vperm.xlu0 %3176, %v3035
      %v3178 = vpop.permute.xlu0 %3177
      %3181 = vset.pattern.permute.xlu0 0
      %3182 = vperm.xlu0 %3181, %v3036
      %v3183 = vpop.permute.xlu0 %3182
      %3186 = vset.pattern.permute.xlu0 0
      %3187 = vperm.xlu0 %3186, %v3037
      %v3188 = vpop.permute.xlu0 %3187
      %3191 = vset.pattern.permute.xlu0 0
      %3192 = vperm.xlu0 %3191, %v3038
      %v3193 = vpop.permute.xlu0 %3192
      %3196 = vset.pattern.permute.xlu0 0
      %3197 = vperm.xlu0 %3196, %v3039
      %v3198 = vpop.permute.xlu0 %3197
      %v3200 = vmul.f32 %v2976, %v3043
      %v3201 = vmul.f32 %v2977, %v3048
      %v3202 = vmul.f32 %v2978, %v3053
      %v3203 = vmul.f32 %v2979, %v3058
      %v3204 = vmul.f32 %v2980, %v3063
      %v3205 = vmul.f32 %v2981, %v3068
      %v3206 = vmul.f32 %v2982, %v3073
      %v3207 = vmul.f32 %v2983, %v3078
      %v3208 = vmul.f32 %v2984, %v3083
      %v3209 = vmul.f32 %v2985, %v3088
      %v3210 = vmul.f32 %v2986, %v3093
      %v3211 = vmul.f32 %v2987, %v3098
      %v3212 = vmul.f32 %v2988, %v3103
      %v3213 = vmul.f32 %v2989, %v3108
      %v3214 = vmul.f32 %v2990, %v3113
      %v3215 = vmul.f32 %v2991, %v3118
      %v3216 = vmul.f32 %v2992, %v3123
      %v3217 = vmul.f32 %v2993, %v3128
      %v3218 = vmul.f32 %v2994, %v3133
      %v3219 = vmul.f32 %v2995, %v3138
      %v3220 = vmul.f32 %v2996, %v3143
      %v3221 = vmul.f32 %v2997, %v3148
      %v3222 = vmul.f32 %v2998, %v3153
      %v3223 = vmul.f32 %v2999, %v3158
      %v3224 = vmul.f32 %v3000, %v3163
      %v3225 = vmul.f32 %v3001, %v3168
      %v3226 = vmul.f32 %v3002, %v3173
      %v3227 = vmul.f32 %v3003, %v3178
      %v3228 = vmul.f32 %v3004, %v3183
      %v3229 = vmul.f32 %v3005, %v3188
      %v3230 = vmul.f32 %v3006, %v3193
      %v3231 = vmul.f32 %v3007, %v3198
      %3232 = vst.msk [vmem:[#allocation2 + $0x13] sm:$0xff] %vm307, %v3200
      %3233 = vst.msk [vmem:[#allocation2 + $0x1b] sm:$0xff] %vm307, %v3201
      %3234 = vst.msk [vmem:[#allocation2 + $0x23] sm:$0xff] %vm307, %v3202
      %3235 = vst.msk [vmem:[#allocation2 + $0x2b] sm:$0xff] %vm307, %v3203
      %3236 = vst.msk [vmem:[#allocation2 + $0x33] sm:$0xff] %vm307, %v3204
      %3237 = vst.msk [vmem:[#allocation2 + $0x3b] sm:$0xff] %vm307, %v3205
      %3238 = vst.msk [vmem:[#allocation2 + $0x43] sm:$0xff] %vm307, %v3206
      %3239 = vst.msk [vmem:[#allocation2 + $0x4b] sm:$0xff] %vm307, %v3207
      %3240 = vst.msk [vmem:[#allocation2 + $0x53] sm:$0xff] %vm307, %v3208
      %3241 = vst.msk [vmem:[#allocation2 + $0x5b] sm:$0xff] %vm307, %v3209
      %3242 = vst.msk [vmem:[#allocation2 + $0x63] sm:$0xff] %vm307, %v3210
      %3243 = vst.msk [vmem:[#allocation2 + $0x6b] sm:$0xff] %vm307, %v3211
      %3244 = vst.msk [vmem:[#allocation2 + $0x73] sm:$0xff] %vm307, %v3212
      %3245 = vst.msk [vmem:[#allocation2 + $0x7b] sm:$0xff] %vm307, %v3213
      %3246 = vst.msk [vmem:[#allocation2 + $0x83] sm:$0xff] %vm307, %v3214
      %3247 = vst.msk [vmem:[#allocation2 + $0x8b] sm:$0xff] %vm307, %v3215
      %3248 = vst.msk [vmem:[#allocation2 + $0x93] sm:$0xff] %vm307, %v3216
      %3249 = vst.msk [vmem:[#allocation2 + $0x9b] sm:$0xff] %vm307, %v3217
      %3250 = vst.msk [vmem:[#allocation2 + $0xa3] sm:$0xff] %vm307, %v3218
      %3251 = vst.msk [vmem:[#allocation2 + $0xab] sm:$0xff] %vm307, %v3219
      %3252 = vst.msk [vmem:[#allocation2 + $0xb3] sm:$0xff] %vm307, %v3220
      %3253 = vst.msk [vmem:[#allocation2 + $0xbb] sm:$0xff] %vm307, %v3221
      %3254 = vst.msk [vmem:[#allocation2 + $0xc3] sm:$0xff] %vm307, %v3222
      %3255 = vst.msk [vmem:[#allocation2 + $0xcb] sm:$0xff] %vm307, %v3223
      %3256 = vst.msk [vmem:[#allocation2 + $0xd3] sm:$0xff] %vm307, %v3224
      %3257 = vst.msk [vmem:[#allocation2 + $0xdb] sm:$0xff] %vm307, %v3225
      %3258 = vst.msk [vmem:[#allocation2 + $0xe3] sm:$0xff] %vm307, %v3226
      %3259 = vst.msk [vmem:[#allocation2 + $0xeb] sm:$0xff] %vm307, %v3227
      %3260 = vst.msk [vmem:[#allocation2 + $0xf3] sm:$0xff] %vm307, %v3228
      %3261 = vst.msk [vmem:[#allocation2 + $0xfb] sm:$0xff] %vm307, %v3229
      %3262 = vst.msk [vmem:[#allocation2 + $0x103] sm:$0xff] %vm307, %v3230
      %3263 = vst.msk [vmem:[#allocation2 + $0x10b] sm:$0xff] %vm307, %v3231
      %v3264 = vld [vmem:[%s300 + $0x100] sm:$0xff]
      %v3265 = vld [vmem:[%s300 + $0x108] sm:$0xff]
      %v3266 = vld [vmem:[%s300 + $0x110] sm:$0xff]
      %v3267 = vld [vmem:[%s300 + $0x118] sm:$0xff]
      %v3268 = vld [vmem:[%s300 + $0x120] sm:$0xff]
      %v3269 = vld [vmem:[%s300 + $0x128] sm:$0xff]
      %v3270 = vld [vmem:[%s300 + $0x130] sm:$0xff]
      %v3271 = vld [vmem:[%s300 + $0x138] sm:$0xff]
      %v3272 = vld [vmem:[%s300 + $0x140] sm:$0xf]
      %v3273 = vpack.c.bf16 %v3265, %v3264
      %v3274 = vpack.c.bf16 %v3267, %v3266
      %v3275 = vpack.c.bf16 %v3269, %v3268
      %v3276 = vpack.c.bf16 %v3271, %v3270
      %v3277 = vpack.c.bf16 %v3272, %v3272
      %v3278 = vld [vmem:[%s1] sm:$0x3]
      %v3279 = vld [vmem:[%s300 + $0x101] sm:$0xff]
      %v3280 = vld [vmem:[%s300 + $0x109] sm:$0xff]
      %v3281 = vld [vmem:[%s300 + $0x111] sm:$0xff]
      %v3282 = vld [vmem:[%s300 + $0x119] sm:$0xff]
      %v3283 = vld [vmem:[%s300 + $0x121] sm:$0xff]
      %v3284 = vld [vmem:[%s300 + $0x129] sm:$0xff]
      %v3285 = vld [vmem:[%s300 + $0x131] sm:$0xff]
      %v3286 = vld [vmem:[%s300 + $0x139] sm:$0xff]
      %v3287 = vld [vmem:[%s300 + $0x141] sm:$0xf]
      %v3288 = vpack.c.bf16 %v3280, %v3279
      %v3289 = vpack.c.bf16 %v3282, %v3281
      %v3290 = vpack.c.bf16 %v3284, %v3283
      %v3291 = vpack.c.bf16 %v3286, %v3285
      %v3292 = vpack.c.bf16 %v3287, %v3287
      %v3293 = vld [vmem:[%s412] sm:$0x3]
      %v3295 = vsel %vm414, %v3288, 0
      %v3298 = vsel %vm414, %v3289, 0
      %v3301 = vsel %vm414, %v3290, 0
      %v3304 = vsel %vm414, %v3291, 0
      %v3307 = vsel %vm414, %v3292, 0
      %v3310 = vsel %vm463, %v3293, 0
      %3312 = vmatprep.subr.bf16.mxu0 0
      %3313 = vmatpush1.bf16.msra.mxu0 %v3310
      %3314 = vmatprep.subr.bf16.mxu0 0
      %3315 = vmatpush1.bf16.msra.mxu0 0
      %3316 = vmatprep.subr.bf16.mxu0 0
      %3317 = vmatpush1.bf16.msra.mxu0 0
      %3318 = vmatprep.subr.bf16.mxu0 0
      %3319 = vmatpush1.bf16.msra.mxu0 0
      %3320 = vmatprep.subr.bf16.mxu0 0
      %3321 = vmatpush1.bf16.msra.mxu0 0
      %3322 = vmatprep.subr.bf16.mxu0 0
      %3323 = vmatpush1.bf16.msra.mxu0 0
      %3324 = vmatprep.subr.bf16.mxu0 0
      %3325 = vmatpush1.bf16.msra.mxu0 0
      %3326 = vmatprep.subr.bf16.mxu0 0
      %3327 = vmatpush1.bf16.msra.mxu0 0
      %3328 = vmatprep.subr.bf16.mxu0 0
      %3329 = vmatpush1.bf16.msra.mxu0 0
      %3330 = vmatprep.subr.bf16.mxu0 0
      %3331 = vmatpush1.bf16.msra.mxu0 0
      %3332 = vmatprep.subr.bf16.mxu0 0
      %3333 = vmatpush1.bf16.msra.mxu0 0
      %3334 = vmatprep.subr.bf16.mxu0 0
      %3335 = vmatpush1.bf16.msra.mxu0 0
      %3336 = vmatprep.subr.bf16.mxu0 0
      %3337 = vmatpush1.bf16.msra.mxu0 0
      %3338 = vmatprep.subr.bf16.mxu0 0
      %3339 = vmatpush1.bf16.msra.mxu0 0
      %3340 = vmatprep.subr.bf16.mxu0 0
      %3341 = vmatpush1.bf16.msra.mxu0 0
      %3342 = vmatprep.subr.bf16.mxu0 0
      %3343 = vmatpush1.bf16.msra.mxu0 0
      %3344 = vmatprep.mubr.bf16.mxu0 0
      %3345 = vmatmul.mubr.bf16.gmra.mrb[0].mxu0 %v3295
      %v3346 = vpop.f32.mrb[0].mxu0
      %v3347 = vadd.f32 0.0, %v3346
      %v3348 = vpop.f32.mrb[0].mxu0
      %v3349 = vpop.f32.mrb[0].mxu0
      %v3350 = vadd.f32 0.0, %v3349
      %v3351 = vpop.f32.mrb[0].mxu0
      %3352 = vmatprep.mubr.bf16.mxu0 0
      %3353 = vmatmul.mubr.bf16.gmra.mrb[0].mxu0 %v3298
      %v3354 = vpop.f32.mrb[0].mxu0
      %v3355 = vadd.f32 0.0, %v3354
      %v3356 = vpop.f32.mrb[0].mxu0
      %v3357 = vpop.f32.mrb[0].mxu0
      %v3358 = vadd.f32 0.0, %v3357
      %v3359 = vpop.f32.mrb[0].mxu0
      %3360 = vmatprep.mubr.bf16.mxu0 0
      %3361 = vmatmul.mubr.bf16.gmra.mrb[0].mxu0 %v3301
      %v3362 = vpop.f32.mrb[0].mxu0
      %v3363 = vadd.f32 0.0, %v3362
      %v3364 = vpop.f32.mrb[0].mxu0
      %v3365 = vpop.f32.mrb[0].mxu0
      %v3366 = vadd.f32 0.0, %v3365
      %v3367 = vpop.f32.mrb[0].mxu0
      %3368 = vmatprep.mubr.bf16.mxu0 0
      %3369 = vmatmul.mubr.bf16.gmra.mrb[0].mxu0 %v3304
      %v3370 = vpop.f32.mrb[0].mxu0
      %v3371 = vadd.f32 0.0, %v3370
      %v3372 = vpop.f32.mrb[0].mxu0
      %v3373 = vpop.f32.mrb[0].mxu0
      %v3374 = vadd.f32 0.0, %v3373
      %v3375 = vpop.f32.mrb[0].mxu0
      %3376 = vmatprep.mubr.bf16.mxu0 0
      %3377 = vmatmul.mubr.bf16.gmra.mrb[0].mxu0 %v3307
      %v3378 = vpop.f32.mrb[0].mxu0
      %v3379 = vadd.f32 0.0, %v3378
      %v3380 = vpop.f32.mrb[0].mxu0
      %v3381 = vpop.f32.mrb[0].mxu0
      %v3382 = vpop.f32.mrb[0].mxu0
      %3383 = vdwg.mxu0
      %v3385 = vsel %vm414, %v3273, 0
      %v3388 = vsel %vm414, %v3274, 0
      %v3391 = vsel %vm414, %v3275, 0
      %v3394 = vsel %vm414, %v3276, 0
      %v3397 = vsel %vm414, %v3277, 0
      %v3400 = vsel %vm463, %v3278, 0
      %3402 = vmatprep.subr.bf16.mxu0 0
      %3403 = vmatpush1.bf16.msra.mxu0 %v3400
      %3404 = vmatprep.subr.bf16.mxu0 0
      %3405 = vmatpush1.bf16.msra.mxu0 0
      %3406 = vmatprep.subr.bf16.mxu0 0
      %3407 = vmatpush1.bf16.msra.mxu0 0
      %3408 = vmatprep.subr.bf16.mxu0 0
      %3409 = vmatpush1.bf16.msra.mxu0 0
      %3410 = vmatprep.subr.bf16.mxu0 0
      %3411 = vmatpush1.bf16.msra.mxu0 0
      %3412 = vmatprep.subr.bf16.mxu0 0
      %3413 = vmatpush1.bf16.msra.mxu0 0
      %3414 = vmatprep.subr.bf16.mxu0 0
      %3415 = vmatpush1.bf16.msra.mxu0 0
      %3416 = vmatprep.subr.bf16.mxu0 0
      %3417 = vmatpush1.bf16.msra.mxu0 0
      %3418 = vmatprep.subr.bf16.mxu0 0
      %3419 = vmatpush1.bf16.msra.mxu0 0
      %3420 = vmatprep.subr.bf16.mxu0 0
      %3421 = vmatpush1.bf16.msra.mxu0 0
      %3422 = vmatprep.subr.bf16.mxu0 0
      %3423 = vmatpush1.bf16.msra.mxu0 0
      %3424 = vmatprep.subr.bf16.mxu0 0
      %3425 = vmatpush1.bf16.msra.mxu0 0
      %3426 = vmatprep.subr.bf16.mxu0 0
      %3427 = vmatpush1.bf16.msra.mxu0 0
      %3428 = vmatprep.subr.bf16.mxu0 0
      %3429 = vmatpush1.bf16.msra.mxu0 0
      %3430 = vmatprep.subr.bf16.mxu0 0
      %3431 = vmatpush1.bf16.msra.mxu0 0
      %3432 = vmatprep.subr.bf16.mxu0 0
      %3433 = vmatpush1.bf16.msra.mxu0 0
      %3434 = vmatprep.mubr.bf16.mxu0 0
      %3435 = vmatmul.mubr.bf16.gmra.mrb[0].mxu0 %v3385
      %v3436 = vpop.f32.mrb[0].mxu0
      %v3437 = vadd.f32 %v3347, %v3436
      %v3438 = vpop.f32.mrb[0].mxu0
      %v3439 = vpop.f32.mrb[0].mxu0
      %v3440 = vadd.f32 %v3350, %v3439
      %v3441 = vpop.f32.mrb[0].mxu0
      %3442 = vmatprep.mubr.bf16.mxu0 0
      %3443 = vmatmul.mubr.bf16.gmra.mrb[0].mxu0 %v3388
      %v3444 = vpop.f32.mrb[0].mxu0
      %v3445 = vadd.f32 %v3355, %v3444
      %v3446 = vpop.f32.mrb[0].mxu0
      %v3447 = vpop.f32.mrb[0].mxu0
      %v3448 = vadd.f32 %v3358, %v3447
      %v3449 = vpop.f32.mrb[0].mxu0
      %3450 = vmatprep.mubr.bf16.mxu0 0
      %3451 = vmatmul.mubr.bf16.gmra.mrb[0].mxu0 %v3391
      %v3452 = vpop.f32.mrb[0].mxu0
      %v3453 = vadd.f32 %v3363, %v3452
      %v3454 = vpop.f32.mrb[0].mxu0
      %v3455 = vpop.f32.mrb[0].mxu0
      %v3456 = vadd.f32 %v3366, %v3455
      %v3457 = vpop.f32.mrb[0].mxu0
      %3458 = vmatprep.mubr.bf16.mxu0 0
      %3459 = vmatmul.mubr.bf16.gmra.mrb[0].mxu0 %v3394
      %v3460 = vpop.f32.mrb[0].mxu0
      %v3461 = vadd.f32 %v3371, %v3460
      %v3462 = vpop.f32.mrb[0].mxu0
      %v3463 = vpop.f32.mrb[0].mxu0
      %v3464 = vadd.f32 %v3374, %v3463
      %v3465 = vpop.f32.mrb[0].mxu0
      %3466 = vmatprep.mubr.bf16.mxu0 0
      %3467 = vmatmul.mubr.bf16.gmra.mrb[0].mxu0 %v3397
      %v3468 = vpop.f32.mrb[0].mxu0
      %v3469 = vadd.f32 %v3379, %v3468
      %v3470 = vpop.f32.mrb[0].mxu0
      %v3471 = vpop.f32.mrb[0].mxu0
      %v3472 = vpop.f32.mrb[0].mxu0
      %3473 = vdwg.mxu0
      %v3474 = vld [vmem:[%s300 + $0x102] sm:$0xff]
      %v3475 = vld [vmem:[%s300 + $0x10a] sm:$0xff]
      %v3476 = vld [vmem:[%s300 + $0x112] sm:$0xff]
      %v3477 = vld [vmem:[%s300 + $0x11a] sm:$0xff]
      %v3478 = vld [vmem:[%s300 + $0x122] sm:$0xff]
      %v3479 = vld [vmem:[%s300 + $0x12a] sm:$0xff]
      %v3480 = vld [vmem:[%s300 + $0x132] sm:$0xff]
      %v3481 = vld [vmem:[%s300 + $0x13a] sm:$0xff]
      %v3482 = vld [vmem:[%s300 + $0x142] sm:$0xf]
      %v3483 = vpack.c.bf16 %v3475, %v3474
      %v3484 = vpack.c.bf16 %v3477, %v3476
      %v3485 = vpack.c.bf16 %v3479, %v3478
      %v3486 = vpack.c.bf16 %v3481, %v3480
      %v3487 = vpack.c.bf16 %v3482, %v3482
      %v3488 = vld [vmem:[%s888] sm:$0x3]
      %v3490 = vsel %vm414, %v3483, 0
      %v3493 = vsel %vm414, %v3484, 0
      %v3496 = vsel %vm414, %v3485, 0
      %v3499 = vsel %vm414, %v3486, 0
      %v3502 = vsel %vm414, %v3487, 0
      %v3505 = vsel %vm463, %v3488, 0
      %3507 = vmatprep.subr.bf16.mxu0 0
      %3508 = vmatpush1.bf16.msra.mxu0 %v3505
      %3509 = vmatprep.subr.bf16.mxu0 0
      %3510 = vmatpush1.bf16.msra.mxu0 0
      %3511 = vmatprep.subr.bf16.mxu0 0
      %3512 = vmatpush1.bf16.msra.mxu0 0
      %3513 = vmatprep.subr.bf16.mxu0 0
      %3514 = vmatpush1.bf16.msra.mxu0 0
      %3515 = vmatprep.subr.bf16.mxu0 0
      %3516 = vmatpush1.bf16.msra.mxu0 0
      %3517 = vmatprep.subr.bf16.mxu0 0
      %3518 = vmatpush1.bf16.msra.mxu0 0
      %3519 = vmatprep.subr.bf16.mxu0 0
      %3520 = vmatpush1.bf16.msra.mxu0 0
      %3521 = vmatprep.subr.bf16.mxu0 0
      %3522 = vmatpush1.bf16.msra.mxu0 0
      %3523 = vmatprep.subr.bf16.mxu0 0
      %3524 = vmatpush1.bf16.msra.mxu0 0
      %3525 = vmatprep.subr.bf16.mxu0 0
      %3526 = vmatpush1.bf16.msra.mxu0 0
      %3527 = vmatprep.subr.bf16.mxu0 0
      %3528 = vmatpush1.bf16.msra.mxu0 0
      %3529 = vmatprep.subr.bf16.mxu0 0
      %3530 = vmatpush1.bf16.msra.mxu0 0
      %3531 = vmatprep.subr.bf16.mxu0 0
      %3532 = vmatpush1.bf16.msra.mxu0 0
      %3533 = vmatprep.subr.bf16.mxu0 0
      %3534 = vmatpush1.bf16.msra.mxu0 0
      %3535 = vmatprep.subr.bf16.mxu0 0
      %3536 = vmatpush1.bf16.msra.mxu0 0
      %3537 = vmatprep.subr.bf16.mxu0 0
      %3538 = vmatpush1.bf16.msra.mxu0 0
      %3539 = vmatprep.mubr.bf16.mxu0 0
      %3540 = vmatmul.mubr.bf16.gmra.mrb[0].mxu0 %v3490
      %v3541 = vpop.f32.mrb[0].mxu0
      %v3542 = vadd.f32 0.0, %v3541
      %v3543 = vpop.f32.mrb[0].mxu0
      %v3544 = vpop.f32.mrb[0].mxu0
      %v3545 = vadd.f32 0.0, %v3544
      %v3546 = vpop.f32.mrb[0].mxu0
      %3547 = vmatprep.mubr.bf16.mxu0 0
      %3548 = vmatmul.mubr.bf16.gmra.mrb[0].mxu0 %v3493
      %v3549 = vpop.f32.mrb[0].mxu0
      %v3550 = vadd.f32 0.0, %v3549
      %v3551 = vpop.f32.mrb[0].mxu0
      %v3552 = vpop.f32.mrb[0].mxu0
      %v3553 = vadd.f32 0.0, %v3552
      %v3554 = vpop.f32.mrb[0].mxu0
      %3555 = vmatprep.mubr.bf16.mxu0 0
      %3556 = vmatmul.mubr.bf16.gmra.mrb[0].mxu0 %v3496
      %v3557 = vpop.f32.mrb[0].mxu0
      %v3558 = vadd.f32 0.0, %v3557
      %v3559 = vpop.f32.mrb[0].mxu0
      %v3560 = vpop.f32.mrb[0].mxu0
      %v3561 = vadd.f32 0.0, %v3560
      %v3562 = vpop.f32.mrb[0].mxu0
      %3563 = vmatprep.mubr.bf16.mxu0 0
      %3564 = vmatmul.mubr.bf16.gmra.mrb[0].mxu0 %v3499
      %v3565 = vpop.f32.mrb[0].mxu0
      %v3566 = vadd.f32 0.0, %v3565
      %v3567 = vpop.f32.mrb[0].mxu0
      %v3568 = vpop.f32.mrb[0].mxu0
      %v3569 = vadd.f32 0.0, %v3568
      %v3570 = vpop.f32.mrb[0].mxu0
      %3571 = vmatprep.mubr.bf16.mxu0 0
      %3572 = vmatmul.mubr.bf16.gmra.mrb[0].mxu0 %v3502
      %v3573 = vpop.f32.mrb[0].mxu0
      %v3574 = vadd.f32 0.0, %v3573
      %v3575 = vpop.f32.mrb[0].mxu0
      %v3576 = vpop.f32.mrb[0].mxu0
      %v3577 = vpop.f32.mrb[0].mxu0
      %3578 = vdwg.mxu0
      %v3579 = vadd.f32 %v3437, %v3542
      %v3580 = vadd.f32 %v3440, %v3545
      %v3581 = vadd.f32 %v3445, %v3550
      %v3582 = vadd.f32 %v3448, %v3553
      %v3583 = vadd.f32 %v3453, %v3558
      %v3584 = vadd.f32 %v3456, %v3561
      %v3585 = vadd.f32 %v3461, %v3566
      %v3586 = vadd.f32 %v3464, %v3569
      %v3587 = vadd.f32 %v3469, %v3574
      %v3588 = vld [vmem:[%s300 + $0x112] sm:$0xff]
      %v3589 = vld [vmem:[%s300 + $0x11a] sm:$0xff]
      %v3590 = vld [vmem:[%s300 + $0x122] sm:$0xff]
      %v3591 = vld [vmem:[%s300 + $0x12a] sm:$0xff]
      %v3592 = vld [vmem:[%s300 + $0x132] sm:$0xff]
      %v3593 = vld [vmem:[%s300 + $0x13a] sm:$0xff]
      %v3594 = vld [vmem:[%s300 + $0x142] sm:$0xff]
      %v3595 = vld [vmem:[%s300 + $0x14a] sm:$0xff]
      %v3596 = vld [vmem:[%s300 + $0x152] sm:$0xf]
      %v3597 = vpack.c.bf16 %v3589, %v3588
      %v3598 = vpack.c.bf16 %v3591, %v3590
      %v3599 = vpack.c.bf16 %v3593, %v3592
      %v3600 = vpack.c.bf16 %v3595, %v3594
      %v3601 = vpack.c.bf16 %v3596, %v3596
      %v3602 = vld [vmem:[%s1182] sm:$0x3]
      %v3604 = vsel %vm414, %v3597, 0
      %v3607 = vsel %vm414, %v3598, 0
      %v3610 = vsel %vm414, %v3599, 0
      %v3613 = vsel %vm414, %v3600, 0
      %v3616 = vsel %vm414, %v3601, 0
      %v3619 = vsel %vm463, %v3602, 0
      %3621 = vmatprep.subr.bf16.mxu0 0
      %3622 = vmatpush1.bf16.msra.mxu0 %v3619
      %3623 = vmatprep.subr.bf16.mxu0 0
      %3624 = vmatpush1.bf16.msra.mxu0 0
      %3625 = vmatprep.subr.bf16.mxu0 0
      %3626 = vmatpush1.bf16.msra.mxu0 0
      %3627 = vmatprep.subr.bf16.mxu0 0
      %3628 = vmatpush1.bf16.msra.mxu0 0
      %3629 = vmatprep.subr.bf16.mxu0 0
      %3630 = vmatpush1.bf16.msra.mxu0 0
      %3631 = vmatprep.subr.bf16.mxu0 0
      %3632 = vmatpush1.bf16.msra.mxu0 0
      %3633 = vmatprep.subr.bf16.mxu0 0
      %3634 = vmatpush1.bf16.msra.mxu0 0
      %3635 = vmatprep.subr.bf16.mxu0 0
      %3636 = vmatpush1.bf16.msra.mxu0 0
      %3637 = vmatprep.subr.bf16.mxu0 0
      %3638 = vmatpush1.bf16.msra.mxu0 0
      %3639 = vmatprep.subr.bf16.mxu0 0
      %3640 = vmatpush1.bf16.msra.mxu0 0
      %3641 = vmatprep.subr.bf16.mxu0 0
      %3642 = vmatpush1.bf16.msra.mxu0 0
      %3643 = vmatprep.subr.bf16.mxu0 0
      %3644 = vmatpush1.bf16.msra.mxu0 0
      %3645 = vmatprep.subr.bf16.mxu0 0
      %3646 = vmatpush1.bf16.msra.mxu0 0
      %3647 = vmatprep.subr.bf16.mxu0 0
      %3648 = vmatpush1.bf16.msra.mxu0 0
      %3649 = vmatprep.subr.bf16.mxu0 0
      %3650 = vmatpush1.bf16.msra.mxu0 0
      %3651 = vmatprep.subr.bf16.mxu0 0
      %3652 = vmatpush1.bf16.msra.mxu0 0
      %3653 = vmatprep.mubr.bf16.mxu0 0
      %3654 = vmatmul.mubr.bf16.gmra.mrb[0].mxu0 %v3604
      %v3655 = vpop.f32.mrb[0].mxu0
      %v3656 = vadd.f32 0.0, %v3655
      %v3657 = vpop.f32.mrb[0].mxu0
      %v3658 = vpop.f32.mrb[0].mxu0
      %v3659 = vadd.f32 0.0, %v3658
      %v3660 = vpop.f32.mrb[0].mxu0
      %3661 = vmatprep.mubr.bf16.mxu0 0
      %3662 = vmatmul.mubr.bf16.gmra.mrb[0].mxu0 %v3607
      %v3663 = vpop.f32.mrb[0].mxu0
      %v3664 = vadd.f32 0.0, %v3663
      %v3665 = vpop.f32.mrb[0].mxu0
      %v3666 = vpop.f32.mrb[0].mxu0
      %v3667 = vadd.f32 0.0, %v3666
      %v3668 = vpop.f32.mrb[0].mxu0
      %3669 = vmatprep.mubr.bf16.mxu0 0
      %3670 = vmatmul.mubr.bf16.gmra.mrb[0].mxu0 %v3610
      %v3671 = vpop.f32.mrb[0].mxu0
      %v3672 = vadd.f32 0.0, %v3671
      %v3673 = vpop.f32.mrb[0].mxu0
      %v3674 = vpop.f32.mrb[0].mxu0
      %v3675 = vadd.f32 0.0, %v3674
      %v3676 = vpop.f32.mrb[0].mxu0
      %3677 = vmatprep.mubr.bf16.mxu0 0
      %3678 = vmatmul.mubr.bf16.gmra.mrb[0].mxu0 %v3613
      %v3679 = vpop.f32.mrb[0].mxu0
      %v3680 = vadd.f32 0.0, %v3679
      %v3681 = vpop.f32.mrb[0].mxu0
      %v3682 = vpop.f32.mrb[0].mxu0
      %v3683 = vadd.f32 0.0, %v3682
      %v3684 = vpop.f32.mrb[0].mxu0
      %3685 = vmatprep.mubr.bf16.mxu0 0
      %3686 = vmatmul.mubr.bf16.gmra.mrb[0].mxu0 %v3616
      %v3687 = vpop.f32.mrb[0].mxu0
      %v3688 = vadd.f32 0.0, %v3687
      %v3689 = vpop.f32.mrb[0].mxu0
      %v3690 = vpop.f32.mrb[0].mxu0
      %v3691 = vpop.f32.mrb[0].mxu0
      %3692 = vdwg.mxu0
      %v3693 = vadd.f32 %v3579, %v3656
      %v3694 = vadd.f32 %v3580, %v3659
      %v3695 = vadd.f32 %v3581, %v3664
      %v3696 = vadd.f32 %v3582, %v3667
      %v3697 = vadd.f32 %v3583, %v3672
      %v3698 = vadd.f32 %v3584, %v3675
      %v3699 = vadd.f32 %v3585, %v3680
      %v3700 = vadd.f32 %v3586, %v3683
      %v3701 = vadd.f32 %v3587, %v3688
      %v3702 = vld [vmem:[%s300 + $0x113] sm:$0xff]
      %v3703 = vld [vmem:[%s300 + $0x11b] sm:$0xff]
      %v3704 = vld [vmem:[%s300 + $0x123] sm:$0xff]
      %v3705 = vld [vmem:[%s300 + $0x12b] sm:$0xff]
      %v3706 = vld [vmem:[%s300 + $0x133] sm:$0xff]
      %v3707 = vld [vmem:[%s300 + $0x13b] sm:$0xff]
      %v3708 = vld [vmem:[%s300 + $0x143] sm:$0xff]
      %v3709 = vld [vmem:[%s300 + $0x14b] sm:$0xff]
      %v3710 = vld [vmem:[%s300 + $0x153] sm:$0xf]
      %v3711 = vpack.c.bf16 %v3703, %v3702
      %v3712 = vpack.c.bf16 %v3705, %v3704
      %v3713 = vpack.c.bf16 %v3707, %v3706
      %v3714 = vpack.c.bf16 %v3709, %v3708
      %v3715 = vpack.c.bf16 %v3710, %v3710
      %v3716 = vld [vmem:[%s1476] sm:$0x3]
      %v3718 = vsel %vm414, %v3711, 0
      %v3721 = vsel %vm414, %v3712, 0
      %v3724 = vsel %vm414, %v3713, 0
      %v3727 = vsel %vm414, %v3714, 0
      %v3730 = vsel %vm414, %v3715, 0
      %v3733 = vsel %vm463, %v3716, 0
      %3735 = vmatprep.subr.bf16.mxu0 0
      %3736 = vmatpush1.bf16.msra.mxu0 %v3733
      %3737 = vmatprep.subr.bf16.mxu0 0
      %3738 = vmatpush1.bf16.msra.mxu0 0
      %3739 = vmatprep.subr.bf16.mxu0 0
      %3740 = vmatpush1.bf16.msra.mxu0 0
      %3741 = vmatprep.subr.bf16.mxu0 0
      %3742 = vmatpush1.bf16.msra.mxu0 0
      %3743 = vmatprep.subr.bf16.mxu0 0
      %3744 = vmatpush1.bf16.msra.mxu0 0
      %3745 = vmatprep.subr.bf16.mxu0 0
      %3746 = vmatpush1.bf16.msra.mxu0 0
      %3747 = vmatprep.subr.bf16.mxu0 0
      %3748 = vmatpush1.bf16.msra.mxu0 0
      %3749 = vmatprep.subr.bf16.mxu0 0
      %3750 = vmatpush1.bf16.msra.mxu0 0
      %3751 = vmatprep.subr.bf16.mxu0 0
      %3752 = vmatpush1.bf16.msra.mxu0 0
      %3753 = vmatprep.subr.bf16.mxu0 0
      %3754 = vmatpush1.bf16.msra.mxu0 0
      %3755 = vmatprep.subr.bf16.mxu0 0
      %3756 = vmatpush1.bf16.msra.mxu0 0
      %3757 = vmatprep.subr.bf16.mxu0 0
      %3758 = vmatpush1.bf16.msra.mxu0 0
      %3759 = vmatprep.subr.bf16.mxu0 0
      %3760 = vmatpush1.bf16.msra.mxu0 0
      %3761 = vmatprep.subr.bf16.mxu0 0
      %3762 = vmatpush1.bf16.msra.mxu0 0
      %3763 = vmatprep.subr.bf16.mxu0 0
      %3764 = vmatpush1.bf16.msra.mxu0 0
      %3765 = vmatprep.subr.bf16.mxu0 0
      %3766 = vmatpush1.bf16.msra.mxu0 0
      %3767 = vmatprep.mubr.bf16.mxu0 0
      %3768 = vmatmul.mubr.bf16.gmra.mrb[0].mxu0 %v3718
      %v3769 = vpop.f32.mrb[0].mxu0
      %v3770 = vadd.f32 0.0, %v3769
      %v3771 = vpop.f32.mrb[0].mxu0
      %v3772 = vpop.f32.mrb[0].mxu0
      %v3773 = vadd.f32 0.0, %v3772
      %v3774 = vpop.f32.mrb[0].mxu0
      %3775 = vmatprep.mubr.bf16.mxu0 0
      %3776 = vmatmul.mubr.bf16.gmra.mrb[0].mxu0 %v3721
      %v3777 = vpop.f32.mrb[0].mxu0
      %v3778 = vadd.f32 0.0, %v3777
      %v3779 = vpop.f32.mrb[0].mxu0
      %v3780 = vpop.f32.mrb[0].mxu0
      %v3781 = vadd.f32 0.0, %v3780
      %v3782 = vpop.f32.mrb[0].mxu0
      %3783 = vmatprep.mubr.bf16.mxu0 0
      %3784 = vmatmul.mubr.bf16.gmra.mrb[0].mxu0 %v3724
      %v3785 = vpop.f32.mrb[0].mxu0
      %v3786 = vadd.f32 0.0, %v3785
      %v3787 = vpop.f32.mrb[0].mxu0
      %v3788 = vpop.f32.mrb[0].mxu0
      %v3789 = vadd.f32 0.0, %v3788
      %v3790 = vpop.f32.mrb[0].mxu0
      %3791 = vmatprep.mubr.bf16.mxu0 0
      %3792 = vmatmul.mubr.bf16.gmra.mrb[0].mxu0 %v3727
      %v3793 = vpop.f32.mrb[0].mxu0
      %v3794 = vadd.f32 0.0, %v3793
      %v3795 = vpop.f32.mrb[0].mxu0
      %v3796 = vpop.f32.mrb[0].mxu0
      %v3797 = vadd.f32 0.0, %v3796
      %v3798 = vpop.f32.mrb[0].mxu0
      %3799 = vmatprep.mubr.bf16.mxu0 0
      %3800 = vmatmul.mubr.bf16.gmra.mrb[0].mxu0 %v3730
      %v3801 = vpop.f32.mrb[0].mxu0
      %v3802 = vadd.f32 0.0, %v3801
      %v3803 = vpop.f32.mrb[0].mxu0
      %v3804 = vpop.f32.mrb[0].mxu0
      %v3805 = vpop.f32.mrb[0].mxu0
      %3806 = vdwg.mxu0
      %v3807 = vadd.f32 %v3693, %v3770
      %v3808 = vadd.f32 %v3694, %v3773
      %v3809 = vadd.f32 %v3695, %v3778
      %v3810 = vadd.f32 %v3696, %v3781
      %v3811 = vadd.f32 %v3697, %v3786
      %v3812 = vadd.f32 %v3698, %v3789
      %v3813 = vadd.f32 %v3699, %v3794
      %v3814 = vadd.f32 %v3700, %v3797
      %v3815 = vadd.f32 %v3701, %v3802
      %v3816 = vld [vmem:[%s300 + $0x114] sm:$0xff]
      %v3817 = vld [vmem:[%s300 + $0x11c] sm:$0xff]
      %v3818 = vld [vmem:[%s300 + $0x124] sm:$0xff]
      %v3819 = vld [vmem:[%s300 + $0x12c] sm:$0xff]
      %v3820 = vld [vmem:[%s300 + $0x134] sm:$0xff]
      %v3821 = vld [vmem:[%s300 + $0x13c] sm:$0xff]
      %v3822 = vld [vmem:[%s300 + $0x144] sm:$0xff]
      %v3823 = vld [vmem:[%s300 + $0x14c] sm:$0xff]
      %v3824 = vld [vmem:[%s300 + $0x154] sm:$0xf]
      %v3825 = vpack.c.bf16 %v3817, %v3816
      %v3826 = vpack.c.bf16 %v3819, %v3818
      %v3827 = vpack.c.bf16 %v3821, %v3820
      %v3828 = vpack.c.bf16 %v3823, %v3822
      %v3829 = vpack.c.bf16 %v3824, %v3824
      %v3830 = vld [vmem:[%s1770] sm:$0x3]
      %v3832 = vsel %vm414, %v3825, 0
      %v3835 = vsel %vm414, %v3826, 0
      %v3838 = vsel %vm414, %v3827, 0
      %v3841 = vsel %vm414, %v3828, 0
      %v3844 = vsel %vm414, %v3829, 0
      %v3847 = vsel %vm463, %v3830, 0
      %3849 = vmatprep.subr.bf16.mxu0 0
      %3850 = vmatpush1.bf16.msra.mxu0 %v3847
      %3851 = vmatprep.subr.bf16.mxu0 0
      %3852 = vmatpush1.bf16.msra.mxu0 0
      %3853 = vmatprep.subr.bf16.mxu0 0
      %3854 = vmatpush1.bf16.msra.mxu0 0
      %3855 = vmatprep.subr.bf16.mxu0 0
      %3856 = vmatpush1.bf16.msra.mxu0 0
      %3857 = vmatprep.subr.bf16.mxu0 0
      %3858 = vmatpush1.bf16.msra.mxu0 0
      %3859 = vmatprep.subr.bf16.mxu0 0
      %3860 = vmatpush1.bf16.msra.mxu0 0
      %3861 = vmatprep.subr.bf16.mxu0 0
      %3862 = vmatpush1.bf16.msra.mxu0 0
      %3863 = vmatprep.subr.bf16.mxu0 0
      %3864 = vmatpush1.bf16.msra.mxu0 0
      %3865 = vmatprep.subr.bf16.mxu0 0
      %3866 = vmatpush1.bf16.msra.mxu0 0
      %3867 = vmatprep.subr.bf16.mxu0 0
      %3868 = vmatpush1.bf16.msra.mxu0 0
      %3869 = vmatprep.subr.bf16.mxu0 0
      %3870 = vmatpush1.bf16.msra.mxu0 0
      %3871 = vmatprep.subr.bf16.mxu0 0
      %3872 = vmatpush1.bf16.msra.mxu0 0
      %3873 = vmatprep.subr.bf16.mxu0 0
      %3874 = vmatpush1.bf16.msra.mxu0 0
      %3875 = vmatprep.subr.bf16.mxu0 0
      %3876 = vmatpush1.bf16.msra.mxu0 0
      %3877 = vmatprep.subr.bf16.mxu0 0
      %3878 = vmatpush1.bf16.msra.mxu0 0
      %3879 = vmatprep.subr.bf16.mxu0 0
      %3880 = vmatpush1.bf16.msra.mxu0 0
      %3881 = vmatprep.mubr.bf16.mxu0 0
      %3882 = vmatmul.mubr.bf16.gmra.mrb[0].mxu0 %v3832
      %v3883 = vpop.f32.mrb[0].mxu0
      %v3884 = vadd.f32 0.0, %v3883
      %v3885 = vpop.f32.mrb[0].mxu0
      %v3886 = vpop.f32.mrb[0].mxu0
      %v3887 = vadd.f32 0.0, %v3886
      %v3888 = vpop.f32.mrb[0].mxu0
      %3889 = vmatprep.mubr.bf16.mxu0 0
      %3890 = vmatmul.mubr.bf16.gmra.mrb[0].mxu0 %v3835
      %v3891 = vpop.f32.mrb[0].mxu0
      %v3892 = vadd.f32 0.0, %v3891
      %v3893 = vpop.f32.mrb[0].mxu0
      %v3894 = vpop.f32.mrb[0].mxu0
      %v3895 = vadd.f32 0.0, %v3894
      %v3896 = vpop.f32.mrb[0].mxu0
      %3897 = vmatprep.mubr.bf16.mxu0 0
      %3898 = vmatmul.mubr.bf16.gmra.mrb[0].mxu0 %v3838
      %v3899 = vpop.f32.mrb[0].mxu0
      %v3900 = vadd.f32 0.0, %v3899
      %v3901 = vpop.f32.mrb[0].mxu0
      %v3902 = vpop.f32.mrb[0].mxu0
      %v3903 = vadd.f32 0.0, %v3902
      %v3904 = vpop.f32.mrb[0].mxu0
      %3905 = vmatprep.mubr.bf16.mxu0 0
      %3906 = vmatmul.mubr.bf16.gmra.mrb[0].mxu0 %v3841
      %v3907 = vpop.f32.mrb[0].mxu0
      %v3908 = vadd.f32 0.0, %v3907
      %v3909 = vpop.f32.mrb[0].mxu0
      %v3910 = vpop.f32.mrb[0].mxu0
      %v3911 = vadd.f32 0.0, %v3910
      %v3912 = vpop.f32.mrb[0].mxu0
      %3913 = vmatprep.mubr.bf16.mxu0 0
      %3914 = vmatmul.mubr.bf16.gmra.mrb[0].mxu0 %v3844
      %v3915 = vpop.f32.mrb[0].mxu0
      %v3916 = vadd.f32 0.0, %v3915
      %v3917 = vpop.f32.mrb[0].mxu0
      %v3918 = vpop.f32.mrb[0].mxu0
      %v3919 = vpop.f32.mrb[0].mxu0
      %3920 = vdwg.mxu0
      %v3921 = vadd.f32 %v3807, %v3884
      %v3922 = vadd.f32 %v3808, %v3887
      %v3923 = vadd.f32 %v3809, %v3892
      %v3924 = vadd.f32 %v3810, %v3895
      %v3925 = vadd.f32 %v3811, %v3900
      %v3926 = vadd.f32 %v3812, %v3903
      %v3927 = vadd.f32 %v3813, %v3908
      %v3928 = vadd.f32 %v3814, %v3911
      %v3929 = vadd.f32 %v3815, %v3916
      %v3930 = vld [vmem:[%s300 + $0x124] sm:$0xff]
      %v3931 = vld [vmem:[%s300 + $0x12c] sm:$0xff]
      %v3932 = vld [vmem:[%s300 + $0x134] sm:$0xff]
      %v3933 = vld [vmem:[%s300 + $0x13c] sm:$0xff]
      %v3934 = vld [vmem:[%s300 + $0x144] sm:$0xff]
      %v3935 = vld [vmem:[%s300 + $0x14c] sm:$0xff]
      %v3936 = vld [vmem:[%s300 + $0x154] sm:$0xff]
      %v3937 = vld [vmem:[%s300 + $0x15c] sm:$0xff]
      %v3938 = vld [vmem:[%s300 + $0x164] sm:$0xf]
      %v3939 = vpack.c.bf16 %v3931, %v3930
      %v3940 = vpack.c.bf16 %v3933, %v3932
      %v3941 = vpack.c.bf16 %v3935, %v3934
      %v3942 = vpack.c.bf16 %v3937, %v3936
      %v3943 = vpack.c.bf16 %v3938, %v3938
      %v3944 = vld [vmem:[%s2064] sm:$0x3]
      %v3946 = vsel %vm414, %v3939, 0
      %v3949 = vsel %vm414, %v3940, 0
      %v3952 = vsel %vm414, %v3941, 0
      %v3955 = vsel %vm414, %v3942, 0
      %v3958 = vsel %vm414, %v3943, 0
      %v3961 = vsel %vm463, %v3944, 0
      %3963 = vmatprep.subr.bf16.mxu0 0
      %3964 = vmatpush1.bf16.msra.mxu0 %v3961
      %3965 = vmatprep.subr.bf16.mxu0 0
      %3966 = vmatpush1.bf16.msra.mxu0 0
      %3967 = vmatprep.subr.bf16.mxu0 0
      %3968 = vmatpush1.bf16.msra.mxu0 0
      %3969 = vmatprep.subr.bf16.mxu0 0
      %3970 = vmatpush1.bf16.msra.mxu0 0
      %3971 = vmatprep.subr.bf16.mxu0 0
      %3972 = vmatpush1.bf16.msra.mxu0 0
      %3973 = vmatprep.subr.bf16.mxu0 0
      %3974 = vmatpush1.bf16.msra.mxu0 0
      %3975 = vmatprep.subr.bf16.mxu0 0
      %3976 = vmatpush1.bf16.msra.mxu0 0
      %3977 = vmatprep.subr.bf16.mxu0 0
      %3978 = vmatpush1.bf16.msra.mxu0 0
      %3979 = vmatprep.subr.bf16.mxu0 0
      %3980 = vmatpush1.bf16.msra.mxu0 0
      %3981 = vmatprep.subr.bf16.mxu0 0
      %3982 = vmatpush1.bf16.msra.mxu0 0
      %3983 = vmatprep.subr.bf16.mxu0 0
      %3984 = vmatpush1.bf16.msra.mxu0 0
      %3985 = vmatprep.subr.bf16.mxu0 0
      %3986 = vmatpush1.bf16.msra.mxu0 0
      %3987 = vmatprep.subr.bf16.mxu0 0
      %3988 = vmatpush1.bf16.msra.mxu0 0
      %3989 = vmatprep.subr.bf16.mxu0 0
      %3990 = vmatpush1.bf16.msra.mxu0 0
      %3991 = vmatprep.subr.bf16.mxu0 0
      %3992 = vmatpush1.bf16.msra.mxu0 0
      %3993 = vmatprep.subr.bf16.mxu0 0
      %3994 = vmatpush1.bf16.msra.mxu0 0
      %3995 = vmatprep.mubr.bf16.mxu0 0
      %3996 = vmatmul.mubr.bf16.gmra.mrb[0].mxu0 %v3946
      %v3997 = vpop.f32.mrb[0].mxu0
      %v3998 = vadd.f32 0.0, %v3997
      %v3999 = vpop.f32.mrb[0].mxu0
      %v4000 = vpop.f32.mrb[0].mxu0
      %v4001 = vadd.f32 0.0, %v4000
      %v4002 = vpop.f32.mrb[0].mxu0
      %4003 = vmatprep.mubr.bf16.mxu0 0
      %4004 = vmatmul.mubr.bf16.gmra.mrb[0].mxu0 %v3949
      %v4005 = vpop.f32.mrb[0].mxu0
      %v4006 = vadd.f32 0.0, %v4005
      %v4007 = vpop.f32.mrb[0].mxu0
      %v4008 = vpop.f32.mrb[0].mxu0
      %v4009 = vadd.f32 0.0, %v4008
      %v4010 = vpop.f32.mrb[0].mxu0
      %4011 = vmatprep.mubr.bf16.mxu0 0
      %4012 = vmatmul.mubr.bf16.gmra.mrb[0].mxu0 %v3952
      %v4013 = vpop.f32.mrb[0].mxu0
      %v4014 = vadd.f32 0.0, %v4013
      %v4015 = vpop.f32.mrb[0].mxu0
      %v4016 = vpop.f32.mrb[0].mxu0
      %v4017 = vadd.f32 0.0, %v4016
      %v4018 = vpop.f32.mrb[0].mxu0
      %4019 = vmatprep.mubr.bf16.mxu0 0
      %4020 = vmatmul.mubr.bf16.gmra.mrb[0].mxu0 %v3955
      %v4021 = vpop.f32.mrb[0].mxu0
      %v4022 = vadd.f32 0.0, %v4021
      %v4023 = vpop.f32.mrb[0].mxu0
      %v4024 = vpop.f32.mrb[0].mxu0
      %v4025 = vadd.f32 0.0, %v4024
      %v4026 = vpop.f32.mrb[0].mxu0
      %4027 = vmatprep.mubr.bf16.mxu0 0
      %4028 = vmatmul.mubr.bf16.gmra.mrb[0].mxu0 %v3958
      %v4029 = vpop.f32.mrb[0].mxu0
      %v4030 = vadd.f32 0.0, %v4029
      %v4031 = vpop.f32.mrb[0].mxu0
      %v4032 = vpop.f32.mrb[0].mxu0
      %v4033 = vpop.f32.mrb[0].mxu0
      %4034 = vdwg.mxu0
      %v4035 = vadd.f32 %v3921, %v3998
      %v4036 = vadd.f32 %v3922, %v4001
      %v4037 = vadd.f32 %v3923, %v4006
      %v4038 = vadd.f32 %v3924, %v4009
      %v4039 = vadd.f32 %v3925, %v4014
      %v4040 = vadd.f32 %v3926, %v4017
      %v4041 = vadd.f32 %v3927, %v4022
      %v4042 = vadd.f32 %v3928, %v4025
      %v4043 = vadd.f32 %v3929, %v4030
      %v4044 = vld [vmem:[%s300 + $0x125] sm:$0xff]
      %v4045 = vld [vmem:[%s300 + $0x12d] sm:$0xff]
      %v4046 = vld [vmem:[%s300 + $0x135] sm:$0xff]
      %v4047 = vld [vmem:[%s300 + $0x13d] sm:$0xff]
      %v4048 = vld [vmem:[%s300 + $0x145] sm:$0xff]
      %v4049 = vld [vmem:[%s300 + $0x14d] sm:$0xff]
      %v4050 = vld [vmem:[%s300 + $0x155] sm:$0xff]
      %v4051 = vld [vmem:[%s300 + $0x15d] sm:$0xff]
      %v4052 = vld [vmem:[%s300 + $0x165] sm:$0xf]
      %v4053 = vpack.c.bf16 %v4045, %v4044
      %v4054 = vpack.c.bf16 %v4047, %v4046
      %v4055 = vpack.c.bf16 %v4049, %v4048
      %v4056 = vpack.c.bf16 %v4051, %v4050
      %v4057 = vpack.c.bf16 %v4052, %v4052
      %v4058 = vld [vmem:[%s2358] sm:$0x3]
      %v4060 = vsel %vm414, %v4053, 0
      %v4063 = vsel %vm414, %v4054, 0
      %v4066 = vsel %vm414, %v4055, 0
      %v4069 = vsel %vm414, %v4056, 0
      %v4072 = vsel %vm414, %v4057, 0
      %v4075 = vsel %vm463, %v4058, 0
      %4077 = vmatprep.subr.bf16.mxu0 0
      %4078 = vmatpush1.bf16.msra.mxu0 %v4075
      %4079 = vmatprep.subr.bf16.mxu0 0
      %4080 = vmatpush1.bf16.msra.mxu0 0
      %4081 = vmatprep.subr.bf16.mxu0 0
      %4082 = vmatpush1.bf16.msra.mxu0 0
      %4083 = vmatprep.subr.bf16.mxu0 0
      %4084 = vmatpush1.bf16.msra.mxu0 0
      %4085 = vmatprep.subr.bf16.mxu0 0
      %4086 = vmatpush1.bf16.msra.mxu0 0
      %4087 = vmatprep.subr.bf16.mxu0 0
      %4088 = vmatpush1.bf16.msra.mxu0 0
      %4089 = vmatprep.subr.bf16.mxu0 0
      %4090 = vmatpush1.bf16.msra.mxu0 0
      %4091 = vmatprep.subr.bf16.mxu0 0
      %4092 = vmatpush1.bf16.msra.mxu0 0
      %4093 = vmatprep.subr.bf16.mxu0 0
      %4094 = vmatpush1.bf16.msra.mxu0 0
      %4095 = vmatprep.subr.bf16.mxu0 0
      %4096 = vmatpush1.bf16.msra.mxu0 0
      %4097 = vmatprep.subr.bf16.mxu0 0
      %4098 = vmatpush1.bf16.msra.mxu0 0
      %4099 = vmatprep.subr.bf16.mxu0 0
      %4100 = vmatpush1.bf16.msra.mxu0 0
      %4101 = vmatprep.subr.bf16.mxu0 0
      %4102 = vmatpush1.bf16.msra.mxu0 0
      %4103 = vmatprep.subr.bf16.mxu0 0
      %4104 = vmatpush1.bf16.msra.mxu0 0
      %4105 = vmatprep.subr.bf16.mxu0 0
      %4106 = vmatpush1.bf16.msra.mxu0 0
      %4107 = vmatprep.subr.bf16.mxu0 0
      %4108 = vmatpush1.bf16.msra.mxu0 0
      %4109 = vmatprep.mubr.bf16.mxu0 0
      %4110 = vmatmul.mubr.bf16.gmra.mrb[0].mxu0 %v4060
      %v4111 = vpop.f32.mrb[0].mxu0
      %v4112 = vadd.f32 0.0, %v4111
      %v4113 = vpop.f32.mrb[0].mxu0
      %v4114 = vpop.f32.mrb[0].mxu0
      %v4115 = vadd.f32 0.0, %v4114
      %v4116 = vpop.f32.mrb[0].mxu0
      %4117 = vmatprep.mubr.bf16.mxu0 0
      %4118 = vmatmul.mubr.bf16.gmra.mrb[0].mxu0 %v4063
      %v4119 = vpop.f32.mrb[0].mxu0
      %v4120 = vadd.f32 0.0, %v4119
      %v4121 = vpop.f32.mrb[0].mxu0
      %v4122 = vpop.f32.mrb[0].mxu0
      %v4123 = vadd.f32 0.0, %v4122
      %v4124 = vpop.f32.mrb[0].mxu0
      %4125 = vmatprep.mubr.bf16.mxu0 0
      %4126 = vmatmul.mubr.bf16.gmra.mrb[0].mxu0 %v4066
      %v4127 = vpop.f32.mrb[0].mxu0
      %v4128 = vadd.f32 0.0, %v4127
      %v4129 = vpop.f32.mrb[0].mxu0
      %v4130 = vpop.f32.mrb[0].mxu0
      %v4131 = vadd.f32 0.0, %v4130
      %v4132 = vpop.f32.mrb[0].mxu0
      %4133 = vmatprep.mubr.bf16.mxu0 0
      %4134 = vmatmul.mubr.bf16.gmra.mrb[0].mxu0 %v4069
      %v4135 = vpop.f32.mrb[0].mxu0
      %v4136 = vadd.f32 0.0, %v4135
      %v4137 = vpop.f32.mrb[0].mxu0
      %v4138 = vpop.f32.mrb[0].mxu0
      %v4139 = vadd.f32 0.0, %v4138
      %v4140 = vpop.f32.mrb[0].mxu0
      %4141 = vmatprep.mubr.bf16.mxu0 0
      %4142 = vmatmul.mubr.bf16.gmra.mrb[0].mxu0 %v4072
      %v4143 = vpop.f32.mrb[0].mxu0
      %v4144 = vadd.f32 0.0, %v4143
      %v4145 = vpop.f32.mrb[0].mxu0
      %v4146 = vpop.f32.mrb[0].mxu0
      %v4147 = vpop.f32.mrb[0].mxu0
      %4148 = vdwg.mxu0
      %v4149 = vadd.f32 %v4035, %v4112
      %v4150 = vadd.f32 %v4036, %v4115
      %v4151 = vadd.f32 %v4037, %v4120
      %v4152 = vadd.f32 %v4038, %v4123
      %v4153 = vadd.f32 %v4039, %v4128
      %v4154 = vadd.f32 %v4040, %v4131
      %v4155 = vadd.f32 %v4041, %v4136
      %v4156 = vadd.f32 %v4042, %v4139
      %v4157 = vadd.f32 %v4043, %v4144
      %v4158 = vld [vmem:[%s300 + $0x126] sm:$0xff]
      %v4159 = vld [vmem:[%s300 + $0x12e] sm:$0xff]
      %v4160 = vld [vmem:[%s300 + $0x136] sm:$0xff]
      %v4161 = vld [vmem:[%s300 + $0x13e] sm:$0xff]
      %v4162 = vld [vmem:[%s300 + $0x146] sm:$0xff]
      %v4163 = vld [vmem:[%s300 + $0x14e] sm:$0xff]
      %v4164 = vld [vmem:[%s300 + $0x156] sm:$0xff]
      %v4165 = vld [vmem:[%s300 + $0x15e] sm:$0xff]
      %v4166 = vld [vmem:[%s300 + $0x166] sm:$0xf]
      %v4167 = vpack.c.bf16 %v4159, %v4158
      %v4168 = vpack.c.bf16 %v4161, %v4160
      %v4169 = vpack.c.bf16 %v4163, %v4162
      %v4170 = vpack.c.bf16 %v4165, %v4164
      %v4171 = vpack.c.bf16 %v4166, %v4166
      %v4172 = vld [vmem:[%s2652] sm:$0x3]
      %v4174 = vsel %vm414, %v4167, 0
      %v4177 = vsel %vm414, %v4168, 0
      %v4180 = vsel %vm414, %v4169, 0
      %v4183 = vsel %vm414, %v4170, 0
      %v4186 = vsel %vm414, %v4171, 0
      %v4189 = vsel %vm463, %v4172, 0
      %4191 = vmatprep.subr.bf16.mxu0 0
      %4192 = vmatpush1.bf16.msra.mxu0 %v4189
      %4193 = vmatprep.subr.bf16.mxu0 0
      %4194 = vmatpush1.bf16.msra.mxu0 0
      %4195 = vmatprep.subr.bf16.mxu0 0
      %4196 = vmatpush1.bf16.msra.mxu0 0
      %4197 = vmatprep.subr.bf16.mxu0 0
      %4198 = vmatpush1.bf16.msra.mxu0 0
      %4199 = vmatprep.subr.bf16.mxu0 0
      %4200 = vmatpush1.bf16.msra.mxu0 0
      %4201 = vmatprep.subr.bf16.mxu0 0
      %4202 = vmatpush1.bf16.msra.mxu0 0
      %4203 = vmatprep.subr.bf16.mxu0 0
      %4204 = vmatpush1.bf16.msra.mxu0 0
      %4205 = vmatprep.subr.bf16.mxu0 0
      %4206 = vmatpush1.bf16.msra.mxu0 0
      %4207 = vmatprep.subr.bf16.mxu0 0
      %4208 = vmatpush1.bf16.msra.mxu0 0
      %4209 = vmatprep.subr.bf16.mxu0 0
      %4210 = vmatpush1.bf16.msra.mxu0 0
      %4211 = vmatprep.subr.bf16.mxu0 0
      %4212 = vmatpush1.bf16.msra.mxu0 0
      %4213 = vmatprep.subr.bf16.mxu0 0
      %4214 = vmatpush1.bf16.msra.mxu0 0
      %4215 = vmatprep.subr.bf16.mxu0 0
      %4216 = vmatpush1.bf16.msra.mxu0 0
      %4217 = vmatprep.subr.bf16.mxu0 0
      %4218 = vmatpush1.bf16.msra.mxu0 0
      %4219 = vmatprep.subr.bf16.mxu0 0
      %4220 = vmatpush1.bf16.msra.mxu0 0
      %4221 = vmatprep.subr.bf16.mxu0 0
      %4222 = vmatpush1.bf16.msra.mxu0 0
      %4223 = vmatprep.mubr.bf16.mxu0 0
      %4224 = vmatmul.mubr.bf16.gmra.mrb[0].mxu0 %v4174
      %v4225 = vpop.f32.mrb[0].mxu0
      %v4226 = vadd.f32 0.0, %v4225
      %v4227 = vpop.f32.mrb[0].mxu0
      %v4228 = vpop.f32.mrb[0].mxu0
      %v4229 = vadd.f32 0.0, %v4228
      %v4230 = vpop.f32.mrb[0].mxu0
      %4231 = vmatprep.mubr.bf16.mxu0 0
      %4232 = vmatmul.mubr.bf16.gmra.mrb[0].mxu0 %v4177
      %v4233 = vpop.f32.mrb[0].mxu0
      %v4234 = vadd.f32 0.0, %v4233
      %v4235 = vpop.f32.mrb[0].mxu0
      %v4236 = vpop.f32.mrb[0].mxu0
      %v4237 = vadd.f32 0.0, %v4236
      %v4238 = vpop.f32.mrb[0].mxu0
      %4239 = vmatprep.mubr.bf16.mxu0 0
      %4240 = vmatmul.mubr.bf16.gmra.mrb[0].mxu0 %v4180
      %v4241 = vpop.f32.mrb[0].mxu0
      %v4242 = vadd.f32 0.0, %v4241
      %v4243 = vpop.f32.mrb[0].mxu0
      %v4244 = vpop.f32.mrb[0].mxu0
      %v4245 = vadd.f32 0.0, %v4244
      %v4246 = vpop.f32.mrb[0].mxu0
      %4247 = vmatprep.mubr.bf16.mxu0 0
      %4248 = vmatmul.mubr.bf16.gmra.mrb[0].mxu0 %v4183
      %v4249 = vpop.f32.mrb[0].mxu0
      %v4250 = vadd.f32 0.0, %v4249
      %v4251 = vpop.f32.mrb[0].mxu0
      %v4252 = vpop.f32.mrb[0].mxu0
      %v4253 = vadd.f32 0.0, %v4252
      %v4254 = vpop.f32.mrb[0].mxu0
      %4255 = vmatprep.mubr.bf16.mxu0 0
      %4256 = vmatmul.mubr.bf16.gmra.mrb[0].mxu0 %v4186
      %v4257 = vpop.f32.mrb[0].mxu0
      %v4258 = vadd.f32 0.0, %v4257
      %v4259 = vpop.f32.mrb[0].mxu0
      %v4260 = vpop.f32.mrb[0].mxu0
      %v4261 = vpop.f32.mrb[0].mxu0
      %4262 = vdwg.mxu0
      %v4263 = vadd.f32 %v4149, %v4226
      %v4264 = vadd.f32 %v4150, %v4229
      %v4265 = vadd.f32 %v4151, %v4234
      %v4266 = vadd.f32 %v4152, %v4237
      %v4267 = vadd.f32 %v4153, %v4242
      %v4268 = vadd.f32 %v4154, %v4245
      %v4269 = vadd.f32 %v4155, %v4250
      %v4270 = vadd.f32 %v4156, %v4253
      %v4271 = vadd.f32 %v4157, %v4258
      %v4272 = vld [vmem:[%s2] sm:$0x1]
      %v4274 = vlaneseq
      %v4275 = vshrl.u32 %v4274, 7
      %v4276 = vsub.s32 0, %v4275
      %v4277 = vrot.slane %v4272, %v4276
      %v4279 = vmul.f32 %v4263, %v4277
      %v4280 = vmul.f32 %v4264, %v4277
      %v4281 = vmul.f32 %v4265, %v4277
      %v4282 = vmul.f32 %v4266, %v4277
      %v4283 = vmul.f32 %v4267, %v4277
      %v4284 = vmul.f32 %v4268, %v4277
      %v4285 = vmul.f32 %v4269, %v4277
      %v4286 = vmul.f32 %v4270, %v4277
      %v4287 = vmul.f32 %v4271, %v4277
      %v4288 = vld [vmem:[%s3] sm:$0x1]
      %v4290 = vlaneseq
      %v4291 = vshrl.u32 %v4290, 7
      %v4292 = vsub.s32 0, %v4291
      %v4293 = vrot.slane %v4288, %v4292
      %v4295 = vadd.f32 %v4279, %v4293
      %v4296 = vadd.f32 %v4280, %v4293
      %v4297 = vadd.f32 %v4281, %v4293
      %v4298 = vadd.f32 %v4282, %v4293
      %v4299 = vadd.f32 %v4283, %v4293
      %v4300 = vadd.f32 %v4284, %v4293
      %v4301 = vadd.f32 %v4285, %v4293
      %v4302 = vadd.f32 %v4286, %v4293
      %v4303 = vadd.f32 %v4287, %v4293
      %v4304 = vmax.f32 %v4295, 0.0
      %v4305 = vmax.f32 %v4296, 0.0
      %v4306 = vmax.f32 %v4297, 0.0
      %v4307 = vmax.f32 %v4298, 0.0
      %v4308 = vmax.f32 %v4299, 0.0
      %v4309 = vmax.f32 %v4300, 0.0
      %v4310 = vmax.f32 %v4301, 0.0
      %v4311 = vmax.f32 %v4302, 0.0
      %v4312 = vmax.f32 %v4303, 0.0
      %v4313 = vld [vmem:[%s7 + $0x100] sm:$0xff]
      %v4314 = vld [vmem:[%s7 + $0x108] sm:$0xff]
      %v4315 = vld [vmem:[%s7 + $0x110] sm:$0xff]
      %v4316 = vld [vmem:[%s7 + $0x118] sm:$0xff]
      %v4317 = vld [vmem:[%s7 + $0x120] sm:$0xff]
      %v4318 = vld [vmem:[%s7 + $0x128] sm:$0xff]
      %v4319 = vld [vmem:[%s7 + $0x130] sm:$0xff]
      %v4320 = vld [vmem:[%s7 + $0x138] sm:$0xff]
      %v4321 = vld [vmem:[%s7 + $0x140] sm:$0xf]
      %4323 = vset.pattern.permute.xlu0 0
      %4324 = vperm.xlu0 %4323, %v4313
      %v4325 = vpop.permute.xlu0 %4324
      %4328 = vset.pattern.permute.xlu0 0
      %4329 = vperm.xlu0 %4328, %v4314
      %v4330 = vpop.permute.xlu0 %4329
      %4333 = vset.pattern.permute.xlu0 0
      %4334 = vperm.xlu0 %4333, %v4315
      %v4335 = vpop.permute.xlu0 %4334
      %4338 = vset.pattern.permute.xlu0 0
      %4339 = vperm.xlu0 %4338, %v4316
      %v4340 = vpop.permute.xlu0 %4339
      %4343 = vset.pattern.permute.xlu0 0
      %4344 = vperm.xlu0 %4343, %v4317
      %v4345 = vpop.permute.xlu0 %4344
      %4348 = vset.pattern.permute.xlu0 0
      %4349 = vperm.xlu0 %4348, %v4318
      %v4350 = vpop.permute.xlu0 %4349
      %4353 = vset.pattern.permute.xlu0 0
      %4354 = vperm.xlu0 %4353, %v4319
      %v4355 = vpop.permute.xlu0 %4354
      %4358 = vset.pattern.permute.xlu0 0
      %4359 = vperm.xlu0 %4358, %v4320
      %v4360 = vpop.permute.xlu0 %4359
      %4363 = vset.pattern.permute.xlu0 0
      %4364 = vperm.xlu0 %4363, %v4321
      %v4365 = vpop.permute.xlu0 %4364
      %v4367 = vmul.f32 %v4304, %v4325
      %v4368 = vmul.f32 %v4305, %v4330
      %v4369 = vmul.f32 %v4306, %v4335
      %v4370 = vmul.f32 %v4307, %v4340
      %v4371 = vmul.f32 %v4308, %v4345
      %v4372 = vmul.f32 %v4309, %v4350
      %v4373 = vmul.f32 %v4310, %v4355
      %v4374 = vmul.f32 %v4311, %v4360
      %v4375 = vmul.f32 %v4312, %v4365
      %4376 = vst.msk [vmem:[#allocation2 + $0x113] sm:$0xff] %vm307, %v4367
      %4377 = vst.msk [vmem:[#allocation2 + $0x11b] sm:$0xff] %vm307, %v4368
      %4378 = vst.msk [vmem:[#allocation2 + $0x123] sm:$0xff] %vm307, %v4369
      %4379 = vst.msk [vmem:[#allocation2 + $0x12b] sm:$0xff] %vm307, %v4370
      %4380 = vst.msk [vmem:[#allocation2 + $0x133] sm:$0xff] %vm307, %v4371
      %4381 = vst.msk [vmem:[#allocation2 + $0x13b] sm:$0xff] %vm307, %v4372
      %4382 = vst.msk [vmem:[#allocation2 + $0x143] sm:$0xff] %vm307, %v4373
      %4383 = vst.msk [vmem:[#allocation2 + $0x14b] sm:$0xff] %vm307, %v4374
      %vm4384 = vcmask 60416
      %4385 = vst.msk [vmem:[#allocation2 + $0x153] sm:$0xf] %vm4384, %v4375
      %v4386 = vld [vmem:[#allocation2] sm:$0xff]
      %v4387 = vld [vmem:[#allocation2 + $0x8] sm:$0xff]
      %v4388 = vld [vmem:[#allocation2 + $0x10] sm:$0xff]
      %v4389 = vld [vmem:[#allocation2 + $0x18] sm:$0xff]
      %v4390 = vld [vmem:[#allocation2 + $0x20] sm:$0xff]
      %v4391 = vld [vmem:[#allocation2 + $0x28] sm:$0xff]
      %v4392 = vld [vmem:[#allocation2 + $0x30] sm:$0xff]
      %v4393 = vld [vmem:[#allocation2 + $0x38] sm:$0xff]
      %v4394 = vld [vmem:[#allocation2 + $0x40] sm:$0xff]
      %v4395 = vld [vmem:[#allocation2 + $0x48] sm:$0xff]
      %v4396 = vld [vmem:[#allocation2 + $0x50] sm:$0xff]
      %v4397 = vld [vmem:[#allocation2 + $0x58] sm:$0xff]
      %v4398 = vld [vmem:[#allocation2 + $0x60] sm:$0xff]
      %v4399 = vld [vmem:[#allocation2 + $0x68] sm:$0xff]
      %v4400 = vld [vmem:[#allocation2 + $0x70] sm:$0xff]
      %v4401 = vld [vmem:[#allocation2 + $0x78] sm:$0xff]
      %v4402 = vld [vmem:[#allocation2 + $0x80] sm:$0xff]
      %v4403 = vld [vmem:[#allocation2 + $0x88] sm:$0xff]
      %v4404 = vld [vmem:[#allocation2 + $0x90] sm:$0xff]
      %v4405 = vld [vmem:[#allocation2 + $0x98] sm:$0xff]
      %v4406 = vld [vmem:[#allocation2 + $0xa0] sm:$0xff]
      %v4407 = vld [vmem:[#allocation2 + $0xa8] sm:$0xff]
      %v4408 = vld [vmem:[#allocation2 + $0xb0] sm:$0xff]
      %v4409 = vld [vmem:[#allocation2 + $0xb8] sm:$0xff]
      %v4410 = vld [vmem:[#allocation2 + $0xc0] sm:$0xff]
      %v4411 = vld [vmem:[#allocation2 + $0xc8] sm:$0xff]
      %v4412 = vld [vmem:[#allocation2 + $0xd0] sm:$0xff]
      %v4413 = vld [vmem:[#allocation2 + $0xd8] sm:$0xff]
      %v4414 = vld [vmem:[#allocation2 + $0xe0] sm:$0xff]
      %v4415 = vld [vmem:[#allocation2 + $0xe8] sm:$0xff]
      %v4416 = vld [vmem:[#allocation2 + $0xf0] sm:$0xff]
      %v4417 = vld [vmem:[#allocation2 + $0xf8] sm:$0xff]
      %v4418 = vpack.c.bf16 %v4387, %v4386
      %v4419 = vpack.c.bf16 %v4389, %v4388
      %v4420 = vpack.c.bf16 %v4391, %v4390
      %v4421 = vpack.c.bf16 %v4393, %v4392
      %v4422 = vpack.c.bf16 %v4395, %v4394
      %v4423 = vpack.c.bf16 %v4397, %v4396
      %v4424 = vpack.c.bf16 %v4399, %v4398
      %v4425 = vpack.c.bf16 %v4401, %v4400
      %v4426 = vpack.c.bf16 %v4403, %v4402
      %v4427 = vpack.c.bf16 %v4405, %v4404
      %v4428 = vpack.c.bf16 %v4407, %v4406
      %v4429 = vpack.c.bf16 %v4409, %v4408
      %v4430 = vpack.c.bf16 %v4411, %v4410
      %v4431 = vpack.c.bf16 %v4413, %v4412
      %v4432 = vpack.c.bf16 %v4415, %v4414
      %v4433 = vpack.c.bf16 %v4417, %v4416
      %v4434 = vld [vmem:[%s4] sm:$0xf]
      %v4435 = vld [vmem:[#allocation2 + $0x1] sm:$0xff]
      %v4436 = vld [vmem:[#allocation2 + $0x9] sm:$0xff]
      %v4437 = vld [vmem:[#allocation2 + $0x11] sm:$0xff]
      %v4438 = vld [vmem:[#allocation2 + $0x19] sm:$0xff]
      %v4439 = vld [vmem:[#allocation2 + $0x21] sm:$0xff]
      %v4440 = vld [vmem:[#allocation2 + $0x29] sm:$0xff]
      %v4441 = vld [vmem:[#allocation2 + $0x31] sm:$0xff]
      %v4442 = vld [vmem:[#allocation2 + $0x39] sm:$0xff]
      %v4443 = vld [vmem:[#allocation2 + $0x41] sm:$0xff]
      %v4444 = vld [vmem:[#allocation2 + $0x49] sm:$0xff]
      %v4445 = vld [vmem:[#allocation2 + $0x51] sm:$0xff]
      %v4446 = vld [vmem:[#allocation2 + $0x59] sm:$0xff]
      %v4447 = vld [vmem:[#allocation2 + $0x61] sm:$0xff]
      %v4448 = vld [vmem:[#allocation2 + $0x69] sm:$0xff]
      %v4449 = vld [vmem:[#allocation2 + $0x71] sm:$0xff]
      %v4450 = vld [vmem:[#allocation2 + $0x79] sm:$0xff]
      %v4451 = vld [vmem:[#allocation2 + $0x81] sm:$0xff]
      %v4452 = vld [vmem:[#allocation2 + $0x89] sm:$0xff]
      %v4453 = vld [vmem:[#allocation2 + $0x91] sm:$0xff]
      %v4454 = vld [vmem:[#allocation2 + $0x99] sm:$0xff]
      %v4455 = vld [vmem:[#allocation2 + $0xa1] sm:$0xff]
      %v4456 = vld [vmem:[#allocation2 + $0xa9] sm:$0xff]
      %v4457 = vld [vmem:[#allocation2 + $0xb1] sm:$0xff]
      %v4458 = vld [vmem:[#allocation2 + $0xb9] sm:$0xff]
      %v4459 = vld [vmem:[#allocation2 + $0xc1] sm:$0xff]
      %v4460 = vld [vmem:[#allocation2 + $0xc9] sm:$0xff]
      %v4461 = vld [vmem:[#allocation2 + $0xd1] sm:$0xff]
      %v4462 = vld [vmem:[#allocation2 + $0xd9] sm:$0xff]
      %v4463 = vld [vmem:[#allocation2 + $0xe1] sm:$0xff]
      %v4464 = vld [vmem:[#allocation2 + $0xe9] sm:$0xff]
      %v4465 = vld [vmem:[#allocation2 + $0xf1] sm:$0xff]
      %v4466 = vld [vmem:[#allocation2 + $0xf9] sm:$0xff]
      %v4467 = vpack.c.bf16 %v4436, %v4435
      %v4468 = vpack.c.bf16 %v4438, %v4437
      %v4469 = vpack.c.bf16 %v4440, %v4439
      %v4470 = vpack.c.bf16 %v4442, %v4441
      %v4471 = vpack.c.bf16 %v4444, %v4443
      %v4472 = vpack.c.bf16 %v4446, %v4445
      %v4473 = vpack.c.bf16 %v4448, %v4447
      %v4474 = vpack.c.bf16 %v4450, %v4449
      %v4475 = vpack.c.bf16 %v4452, %v4451
      %v4476 = vpack.c.bf16 %v4454, %v4453
      %v4477 = vpack.c.bf16 %v4456, %v4455
      %v4478 = vpack.c.bf16 %v4458, %v4457
      %v4479 = vpack.c.bf16 %v4460, %v4459
      %v4480 = vpack.c.bf16 %v4462, %v4461
      %v4481 = vpack.c.bf16 %v4464, %v4463
      %v4482 = vpack.c.bf16 %v4466, %v4465
      %s4483 = scalar_lea.vmem %s4, 4
      %v4484 = vld [vmem:[%s4483] sm:$0xf]
      %v4486 = vsel %vm307, %v4467, 0
      %v4489 = vsel %vm307, %v4468, 0
      %v4492 = vsel %vm307, %v4469, 0
      %v4495 = vsel %vm307, %v4470, 0
      %v4498 = vsel %vm307, %v4471, 0
      %v4501 = vsel %vm307, %v4472, 0
      %v4504 = vsel %vm307, %v4473, 0
      %v4507 = vsel %vm307, %v4474, 0
      %v4510 = vsel %vm307, %v4475, 0
      %v4513 = vsel %vm307, %v4476, 0
      %v4516 = vsel %vm307, %v4477, 0
      %v4519 = vsel %vm307, %v4478, 0
      %v4522 = vsel %vm307, %v4479, 0
      %v4525 = vsel %vm307, %v4480, 0
      %v4528 = vsel %vm307, %v4481, 0
      %v4531 = vsel %vm307, %v4482, 0
      %vm4533 = vcmask 1043456
      %v4535 = vsel %vm4533, %v4484, 0
      %4537 = vmatprep.subr.bf16.mxu0 0
      %4538 = vmatpush1.bf16.msra.mxu0 %v4535
      %4539 = vmatprep.subr.bf16.mxu0 0
      %4540 = vmatpush1.bf16.msra.mxu0 0
      %4541 = vmatprep.subr.bf16.mxu0 0
      %4542 = vmatpush1.bf16.msra.mxu0 0
      %4543 = vmatprep.subr.bf16.mxu0 0
      %4544 = vmatpush1.bf16.msra.mxu0 0
      %4545 = vmatprep.subr.bf16.mxu0 0
      %4546 = vmatpush1.bf16.msra.mxu0 0
      %4547 = vmatprep.subr.bf16.mxu0 0
      %4548 = vmatpush1.bf16.msra.mxu0 0
      %4549 = vmatprep.subr.bf16.mxu0 0
      %4550 = vmatpush1.bf16.msra.mxu0 0
      %4551 = vmatprep.subr.bf16.mxu0 0
      %4552 = vmatpush1.bf16.msra.mxu0 0
      %4553 = vmatprep.subr.bf16.mxu0 0
      %4554 = vmatpush1.bf16.msra.mxu0 0
      %4555 = vmatprep.subr.bf16.mxu0 0
      %4556 = vmatpush1.bf16.msra.mxu0 0
      %4557 = vmatprep.subr.bf16.mxu0 0
      %4558 = vmatpush1.bf16.msra.mxu0 0
      %4559 = vmatprep.subr.bf16.mxu0 0
      %4560 = vmatpush1.bf16.msra.mxu0 0
      %4561 = vmatprep.subr.bf16.mxu0 0
      %4562 = vmatpush1.bf16.msra.mxu0 0
      %4563 = vmatprep.subr.bf16.mxu0 0
      %4564 = vmatpush1.bf16.msra.mxu0 0
      %4565 = vmatprep.subr.bf16.mxu0 0
      %4566 = vmatpush1.bf16.msra.mxu0 0
      %4567 = vmatprep.subr.bf16.mxu0 0
      %4568 = vmatpush1.bf16.msra.mxu0 0
      %4569 = vmatprep.mubr.bf16.mxu0 0
      %4570 = vmatmul.mubr.bf16.gmra.mrb[0].mxu0 %v4486
      %v4571 = vpop.f32.mrb[0].mxu0
      %v4572 = vadd.f32 0.0, %v4571
      %v4573 = vpop.f32.mrb[0].mxu0
      %v4574 = vpop.f32.mrb[0].mxu0
      %v4575 = vadd.f32 0.0, %v4574
      %v4576 = vpop.f32.mrb[0].mxu0
      %4577 = vmatprep.mubr.bf16.mxu0 0
      %4578 = vmatmul.mubr.bf16.gmra.mrb[0].mxu0 %v4489
      %v4579 = vpop.f32.mrb[0].mxu0
      %v4580 = vadd.f32 0.0, %v4579
      %v4581 = vpop.f32.mrb[0].mxu0
      %v4582 = vpop.f32.mrb[0].mxu0
      %v4583 = vadd.f32 0.0, %v4582
      %v4584 = vpop.f32.mrb[0].mxu0
      %4585 = vmatprep.mubr.bf16.mxu0 0
      %4586 = vmatmul.mubr.bf16.gmra.mrb[0].mxu0 %v4492
      %v4587 = vpop.f32.mrb[0].mxu0
      %v4588 = vadd.f32 0.0, %v4587
      %v4589 = vpop.f32.mrb[0].mxu0
      %v4590 = vpop.f32.mrb[0].mxu0
      %v4591 = vadd.f32 0.0, %v4590
      %v4592 = vpop.f32.mrb[0].mxu0
      %4593 = vmatprep.mubr.bf16.mxu0 0
      %4594 = vmatmul.mubr.bf16.gmra.mrb[0].mxu0 %v4495
      %v4595 = vpop.f32.mrb[0].mxu0
      %v4596 = vadd.f32 0.0, %v4595
      %v4597 = vpop.f32.mrb[0].mxu0
      %v4598 = vpop.f32.mrb[0].mxu0
      %v4599 = vadd.f32 0.0, %v4598
      %v4600 = vpop.f32.mrb[0].mxu0
      %4601 = vmatprep.mubr.bf16.mxu0 0
      %4602 = vmatmul.mubr.bf16.gmra.mrb[0].mxu0 %v4498
      %v4603 = vpop.f32.mrb[0].mxu0
      %v4604 = vadd.f32 0.0, %v4603
      %v4605 = vpop.f32.mrb[0].mxu0
      %v4606 = vpop.f32.mrb[0].mxu0
      %v4607 = vadd.f32 0.0, %v4606
      %v4608 = vpop.f32.mrb[0].mxu0
      %4609 = vmatprep.mubr.bf16.mxu0 0
      %4610 = vmatmul.mubr.bf16.gmra.mrb[0].mxu0 %v4501
      %v4611 = vpop.f32.mrb[0].mxu0
      %v4612 = vadd.f32 0.0, %v4611
      %v4613 = vpop.f32.mrb[0].mxu0
      %v4614 = vpop.f32.mrb[0].mxu0
      %v4615 = vadd.f32 0.0, %v4614
      %v4616 = vpop.f32.mrb[0].mxu0
      %4617 = vmatprep.mubr.bf16.mxu0 0
      %4618 = vmatmul.mubr.bf16.gmra.mrb[0].mxu0 %v4504
      %v4619 = vpop.f32.mrb[0].mxu0
      %v4620 = vadd.f32 0.0, %v4619
      %v4621 = vpop.f32.mrb[0].mxu0
      %v4622 = vpop.f32.mrb[0].mxu0
      %v4623 = vadd.f32 0.0, %v4622
      %v4624 = vpop.f32.mrb[0].mxu0
      %4625 = vmatprep.mubr.bf16.mxu0 0
      %4626 = vmatmul.mubr.bf16.gmra.mrb[0].mxu0 %v4507
      %v4627 = vpop.f32.mrb[0].mxu0
      %v4628 = vadd.f32 0.0, %v4627
      %v4629 = vpop.f32.mrb[0].mxu0
      %v4630 = vpop.f32.mrb[0].mxu0
      %v4631 = vadd.f32 0.0, %v4630
      %v4632 = vpop.f32.mrb[0].mxu0
      %4633 = vmatprep.mubr.bf16.mxu0 0
      %4634 = vmatmul.mubr.bf16.gmra.mrb[0].mxu0 %v4510
      %v4635 = vpop.f32.mrb[0].mxu0
      %v4636 = vadd.f32 0.0, %v4635
      %v4637 = vpop.f32.mrb[0].mxu0
      %v4638 = vpop.f32.mrb[0].mxu0
      %v4639 = vadd.f32 0.0, %v4638
      %v4640 = vpop.f32.mrb[0].mxu0
      %4641 = vmatprep.mubr.bf16.mxu0 0
      %4642 = vmatmul.mubr.bf16.gmra.mrb[0].mxu0 %v4513
      %v4643 = vpop.f32.mrb[0].mxu0
      %v4644 = vadd.f32 0.0, %v4643
      %v4645 = vpop.f32.mrb[0].mxu0
      %v4646 = vpop.f32.mrb[0].mxu0
      %v4647 = vadd.f32 0.0, %v4646
      %v4648 = vpop.f32.mrb[0].mxu0
      %4649 = vmatprep.mubr.bf16.mxu0 0
      %4650 = vmatmul.mubr.bf16.gmra.mrb[0].mxu0 %v4516
      %v4651 = vpop.f32.mrb[0].mxu0
      %v4652 = vadd.f32 0.0, %v4651
      %v4653 = vpop.f32.mrb[0].mxu0
      %v4654 = vpop.f32.mrb[0].mxu0
      %v4655 = vadd.f32 0.0, %v4654
      %v4656 = vpop.f32.mrb[0].mxu0
      %4657 = vmatprep.mubr.bf16.mxu0 0
      %4658 = vmatmul.mubr.bf16.gmra.mrb[0].mxu0 %v4519
      %v4659 = vpop.f32.mrb[0].mxu0
      %v4660 = vadd.f32 0.0, %v4659
      %v4661 = vpop.f32.mrb[0].mxu0
      %v4662 = vpop.f32.mrb[0].mxu0
      %v4663 = vadd.f32 0.0, %v4662
      %v4664 = vpop.f32.mrb[0].mxu0
      %4665 = vmatprep.mubr.bf16.mxu0 0
      %4666 = vmatmul.mubr.bf16.gmra.mrb[0].mxu0 %v4522
      %v4667 = vpop.f32.mrb[0].mxu0
      %v4668 = vadd.f32 0.0, %v4667
      %v4669 = vpop.f32.mrb[0].mxu0
      %v4670 = vpop.f32.mrb[0].mxu0
      %v4671 = vadd.f32 0.0, %v4670
      %v4672 = vpop.f32.mrb[0].mxu0
      %4673 = vmatprep.mubr.bf16.mxu0 0
      %4674 = vmatmul.mubr.bf16.gmra.mrb[0].mxu0 %v4525
      %v4675 = vpop.f32.mrb[0].mxu0
      %v4676 = vadd.f32 0.0, %v4675
      %v4677 = vpop.f32.mrb[0].mxu0
      %v4678 = vpop.f32.mrb[0].mxu0
      %v4679 = vadd.f32 0.0, %v4678
      %v4680 = vpop.f32.mrb[0].mxu0
      %4681 = vmatprep.mubr.bf16.mxu0 0
      %4682 = vmatmul.mubr.bf16.gmra.mrb[0].mxu0 %v4528
      %v4683 = vpop.f32.mrb[0].mxu0
      %v4684 = vadd.f32 0.0, %v4683
      %v4685 = vpop.f32.mrb[0].mxu0
      %v4686 = vpop.f32.mrb[0].mxu0
      %v4687 = vadd.f32 0.0, %v4686
      %v4688 = vpop.f32.mrb[0].mxu0
      %4689 = vmatprep.mubr.bf16.mxu0 0
      %4690 = vmatmul.mubr.bf16.gmra.mrb[0].mxu0 %v4531
      %v4691 = vpop.f32.mrb[0].mxu0
      %v4692 = vadd.f32 0.0, %v4691
      %v4693 = vpop.f32.mrb[0].mxu0
      %v4694 = vpop.f32.mrb[0].mxu0
      %v4695 = vadd.f32 0.0, %v4694
      %v4696 = vpop.f32.mrb[0].mxu0
      %4697 = vdwg.mxu0
      %v4699 = vsel %vm307, %v4418, 0
      %v4702 = vsel %vm307, %v4419, 0
      %v4705 = vsel %vm307, %v4420, 0
      %v4708 = vsel %vm307, %v4421, 0
      %v4711 = vsel %vm307, %v4422, 0
      %v4714 = vsel %vm307, %v4423, 0
      %v4717 = vsel %vm307, %v4424, 0
      %v4720 = vsel %vm307, %v4425, 0
      %v4723 = vsel %vm307, %v4426, 0
      %v4726 = vsel %vm307, %v4427, 0
      %v4729 = vsel %vm307, %v4428, 0
      %v4732 = vsel %vm307, %v4429, 0
      %v4735 = vsel %vm307, %v4430, 0
      %v4738 = vsel %vm307, %v4431, 0
      %v4741 = vsel %vm307, %v4432, 0
      %v4744 = vsel %vm307, %v4433, 0
      %v4747 = vsel %vm4533, %v4434, 0
      %4749 = vmatprep.subr.bf16.mxu0 0
      %4750 = vmatpush1.bf16.msra.mxu0 %v4747
      %4751 = vmatprep.subr.bf16.mxu0 0
      %4752 = vmatpush1.bf16.msra.mxu0 0
      %4753 = vmatprep.subr.bf16.mxu0 0
      %4754 = vmatpush1.bf16.msra.mxu0 0
      %4755 = vmatprep.subr.bf16.mxu0 0
      %4756 = vmatpush1.bf16.msra.mxu0 0
      %4757 = vmatprep.subr.bf16.mxu0 0
      %4758 = vmatpush1.bf16.msra.mxu0 0
      %4759 = vmatprep.subr.bf16.mxu0 0
      %4760 = vmatpush1.bf16.msra.mxu0 0
      %4761 = vmatprep.subr.bf16.mxu0 0
      %4762 = vmatpush1.bf16.msra.mxu0 0
      %4763 = vmatprep.subr.bf16.mxu0 0
      %4764 = vmatpush1.bf16.msra.mxu0 0
      %4765 = vmatprep.subr.bf16.mxu0 0
      %4766 = vmatpush1.bf16.msra.mxu0 0
      %4767 = vmatprep.subr.bf16.mxu0 0
      %4768 = vmatpush1.bf16.msra.mxu0 0
      %4769 = vmatprep.subr.bf16.mxu0 0
      %4770 = vmatpush1.bf16.msra.mxu0 0
      %4771 = vmatprep.subr.bf16.mxu0 0
      %4772 = vmatpush1.bf16.msra.mxu0 0
      %4773 = vmatprep.subr.bf16.mxu0 0
      %4774 = vmatpush1.bf16.msra.mxu0 0
      %4775 = vmatprep.subr.bf16.mxu0 0
      %4776 = vmatpush1.bf16.msra.mxu0 0
      %4777 = vmatprep.subr.bf16.mxu0 0
      %4778 = vmatpush1.bf16.msra.mxu0 0
      %4779 = vmatprep.subr.bf16.mxu0 0
      %4780 = vmatpush1.bf16.msra.mxu0 0
      %4781 = vmatprep.mubr.bf16.mxu0 0
      %4782 = vmatmul.mubr.bf16.gmra.mrb[0].mxu0 %v4699
      %v4783 = vpop.f32.mrb[0].mxu0
      %v4784 = vadd.f32 %v4572, %v4783
      %v4785 = vpop.f32.mrb[0].mxu0
      %v4786 = vpop.f32.mrb[0].mxu0
      %v4787 = vadd.f32 %v4575, %v4786
      %v4788 = vpop.f32.mrb[0].mxu0
      %4789 = vmatprep.mubr.bf16.mxu0 0
      %4790 = vmatmul.mubr.bf16.gmra.mrb[0].mxu0 %v4702
      %v4791 = vpop.f32.mrb[0].mxu0
      %v4792 = vadd.f32 %v4580, %v4791
      %v4793 = vpop.f32.mrb[0].mxu0
      %v4794 = vpop.f32.mrb[0].mxu0
      %v4795 = vadd.f32 %v4583, %v4794
      %v4796 = vpop.f32.mrb[0].mxu0
      %4797 = vmatprep.mubr.bf16.mxu0 0
      %4798 = vmatmul.mubr.bf16.gmra.mrb[0].mxu0 %v4705
      %v4799 = vpop.f32.mrb[0].mxu0
      %v4800 = vadd.f32 %v4588, %v4799
      %v4801 = vpop.f32.mrb[0].mxu0
      %v4802 = vpop.f32.mrb[0].mxu0
      %v4803 = vadd.f32 %v4591, %v4802
      %v4804 = vpop.f32.mrb[0].mxu0
      %4805 = vmatprep.mubr.bf16.mxu0 0
      %4806 = vmatmul.mubr.bf16.gmra.mrb[0].mxu0 %v4708
      %v4807 = vpop.f32.mrb[0].mxu0
      %v4808 = vadd.f32 %v4596, %v4807
      %v4809 = vpop.f32.mrb[0].mxu0
      %v4810 = vpop.f32.mrb[0].mxu0
      %v4811 = vadd.f32 %v4599, %v4810
      %v4812 = vpop.f32.mrb[0].mxu0
      %4813 = vmatprep.mubr.bf16.mxu0 0
      %4814 = vmatmul.mubr.bf16.gmra.mrb[0].mxu0 %v4711
      %v4815 = vpop.f32.mrb[0].mxu0
      %v4816 = vadd.f32 %v4604, %v4815
      %v4817 = vpop.f32.mrb[0].mxu0
      %v4818 = vpop.f32.mrb[0].mxu0
      %v4819 = vadd.f32 %v4607, %v4818
      %v4820 = vpop.f32.mrb[0].mxu0
      %4821 = vmatprep.mubr.bf16.mxu0 0
      %4822 = vmatmul.mubr.bf16.gmra.mrb[0].mxu0 %v4714
      %v4823 = vpop.f32.mrb[0].mxu0
      %v4824 = vadd.f32 %v4612, %v4823
      %v4825 = vpop.f32.mrb[0].mxu0
      %v4826 = vpop.f32.mrb[0].mxu0
      %v4827 = vadd.f32 %v4615, %v4826
      %v4828 = vpop.f32.mrb[0].mxu0
      %4829 = vmatprep.mubr.bf16.mxu0 0
      %4830 = vmatmul.mubr.bf16.gmra.mrb[0].mxu0 %v4717
      %v4831 = vpop.f32.mrb[0].mxu0
      %v4832 = vadd.f32 %v4620, %v4831
      %v4833 = vpop.f32.mrb[0].mxu0
      %v4834 = vpop.f32.mrb[0].mxu0
      %v4835 = vadd.f32 %v4623, %v4834
      %v4836 = vpop.f32.mrb[0].mxu0
      %4837 = vmatprep.mubr.bf16.mxu0 0
      %4838 = vmatmul.mubr.bf16.gmra.mrb[0].mxu0 %v4720
      %v4839 = vpop.f32.mrb[0].mxu0
      %v4840 = vadd.f32 %v4628, %v4839
      %v4841 = vpop.f32.mrb[0].mxu0
      %v4842 = vpop.f32.mrb[0].mxu0
      %v4843 = vadd.f32 %v4631, %v4842
      %v4844 = vpop.f32.mrb[0].mxu0
      %4845 = vmatprep.mubr.bf16.mxu0 0
      %4846 = vmatmul.mubr.bf16.gmra.mrb[0].mxu0 %v4723
      %v4847 = vpop.f32.mrb[0].mxu0
      %v4848 = vadd.f32 %v4636, %v4847
      %v4849 = vpop.f32.mrb[0].mxu0
      %v4850 = vpop.f32.mrb[0].mxu0
      %v4851 = vadd.f32 %v4639, %v4850
      %v4852 = vpop.f32.mrb[0].mxu0
      %4853 = vmatprep.mubr.bf16.mxu0 0
      %4854 = vmatmul.mubr.bf16.gmra.mrb[0].mxu0 %v4726
      %v4855 = vpop.f32.mrb[0].mxu0
      %v4856 = vadd.f32 %v4644, %v4855
      %v4857 = vpop.f32.mrb[0].mxu0
      %v4858 = vpop.f32.mrb[0].mxu0
      %v4859 = vadd.f32 %v4647, %v4858
      %v4860 = vpop.f32.mrb[0].mxu0
      %4861 = vmatprep.mubr.bf16.mxu0 0
      %4862 = vmatmul.mubr.bf16.gmra.mrb[0].mxu0 %v4729
      %v4863 = vpop.f32.mrb[0].mxu0
      %v4864 = vadd.f32 %v4652, %v4863
      %v4865 = vpop.f32.mrb[0].mxu0
      %v4866 = vpop.f32.mrb[0].mxu0
      %v4867 = vadd.f32 %v4655, %v4866
      %v4868 = vpop.f32.mrb[0].mxu0
      %4869 = vmatprep.mubr.bf16.mxu0 0
      %4870 = vmatmul.mubr.bf16.gmra.mrb[0].mxu0 %v4732
      %v4871 = vpop.f32.mrb[0].mxu0
      %v4872 = vadd.f32 %v4660, %v4871
      %v4873 = vpop.f32.mrb[0].mxu0
      %v4874 = vpop.f32.mrb[0].mxu0
      %v4875 = vadd.f32 %v4663, %v4874
      %v4876 = vpop.f32.mrb[0].mxu0
      %4877 = vmatprep.mubr.bf16.mxu0 0
      %4878 = vmatmul.mubr.bf16.gmra.mrb[0].mxu0 %v4735
      %v4879 = vpop.f32.mrb[0].mxu0
      %v4880 = vadd.f32 %v4668, %v4879
      %v4881 = vpop.f32.mrb[0].mxu0
      %v4882 = vpop.f32.mrb[0].mxu0
      %v4883 = vadd.f32 %v4671, %v4882
      %v4884 = vpop.f32.mrb[0].mxu0
      %4885 = vmatprep.mubr.bf16.mxu0 0
      %4886 = vmatmul.mubr.bf16.gmra.mrb[0].mxu0 %v4738
      %v4887 = vpop.f32.mrb[0].mxu0
      %v4888 = vadd.f32 %v4676, %v4887
      %v4889 = vpop.f32.mrb[0].mxu0
      %v4890 = vpop.f32.mrb[0].mxu0
      %v4891 = vadd.f32 %v4679, %v4890
      %v4892 = vpop.f32.mrb[0].mxu0
      %4893 = vmatprep.mubr.bf16.mxu0 0
      %4894 = vmatmul.mubr.bf16.gmra.mrb[0].mxu0 %v4741
      %v4895 = vpop.f32.mrb[0].mxu0
      %v4896 = vadd.f32 %v4684, %v4895
      %v4897 = vpop.f32.mrb[0].mxu0
      %v4898 = vpop.f32.mrb[0].mxu0
      %v4899 = vadd.f32 %v4687, %v4898
      %v4900 = vpop.f32.mrb[0].mxu0
      %4901 = vmatprep.mubr.bf16.mxu0 0
      %4902 = vmatmul.mubr.bf16.gmra.mrb[0].mxu0 %v4744
      %v4903 = vpop.f32.mrb[0].mxu0
      %v4904 = vadd.f32 %v4692, %v4903
      %v4905 = vpop.f32.mrb[0].mxu0
      %v4906 = vpop.f32.mrb[0].mxu0
      %v4907 = vadd.f32 %v4695, %v4906
      %v4908 = vpop.f32.mrb[0].mxu0
      %4909 = vdwg.mxu0
      %v4910 = vld [vmem:[#allocation2 + $0x2] sm:$0xff]
      %v4911 = vld [vmem:[#allocation2 + $0xa] sm:$0xff]
      %v4912 = vld [vmem:[#allocation2 + $0x12] sm:$0xff]
      %v4913 = vld [vmem:[#allocation2 + $0x1a] sm:$0xff]
      %v4914 = vld [vmem:[#allocation2 + $0x22] sm:$0xff]
      %v4915 = vld [vmem:[#allocation2 + $0x2a] sm:$0xff]
      %v4916 = vld [vmem:[#allocation2 + $0x32] sm:$0xff]
      %v4917 = vld [vmem:[#allocation2 + $0x3a] sm:$0xff]
      %v4918 = vld [vmem:[#allocation2 + $0x42] sm:$0xff]
      %v4919 = vld [vmem:[#allocation2 + $0x4a] sm:$0xff]
      %v4920 = vld [vmem:[#allocation2 + $0x52] sm:$0xff]
      %v4921 = vld [vmem:[#allocation2 + $0x5a] sm:$0xff]
      %v4922 = vld [vmem:[#allocation2 + $0x62] sm:$0xff]
      %v4923 = vld [vmem:[#allocation2 + $0x6a] sm:$0xff]
      %v4924 = vld [vmem:[#allocation2 + $0x72] sm:$0xff]
      %v4925 = vld [vmem:[#allocation2 + $0x7a] sm:$0xff]
      %v4926 = vld [vmem:[#allocation2 + $0x82] sm:$0xff]
      %v4927 = vld [vmem:[#allocation2 + $0x8a] sm:$0xff]
      %v4928 = vld [vmem:[#allocation2 + $0x92] sm:$0xff]
      %v4929 = vld [vmem:[#allocation2 + $0x9a] sm:$0xff]
      %v4930 = vld [vmem:[#allocation2 + $0xa2] sm:$0xff]
      %v4931 = vld [vmem:[#allocation2 + $0xaa] sm:$0xff]
      %v4932 = vld [vmem:[#allocation2 + $0xb2] sm:$0xff]
      %v4933 = vld [vmem:[#allocation2 + $0xba] sm:$0xff]
      %v4934 = vld [vmem:[#allocation2 + $0xc2] sm:$0xff]
      %v4935 = vld [vmem:[#allocation2 + $0xca] sm:$0xff]
      %v4936 = vld [vmem:[#allocation2 + $0xd2] sm:$0xff]
      %v4937 = vld [vmem:[#allocation2 + $0xda] sm:$0xff]
      %v4938 = vld [vmem:[#allocation2 + $0xe2] sm:$0xff]
      %v4939 = vld [vmem:[#allocation2 + $0xea] sm:$0xff]
      %v4940 = vld [vmem:[#allocation2 + $0xf2] sm:$0xff]
      %v4941 = vld [vmem:[#allocation2 + $0xfa] sm:$0xff]
      %v4942 = vpack.c.bf16 %v4911, %v4910
      %v4943 = vpack.c.bf16 %v4913, %v4912
      %v4944 = vpack.c.bf16 %v4915, %v4914
      %v4945 = vpack.c.bf16 %v4917, %v4916
      %v4946 = vpack.c.bf16 %v4919, %v4918
      %v4947 = vpack.c.bf16 %v4921, %v4920
      %v4948 = vpack.c.bf16 %v4923, %v4922
      %v4949 = vpack.c.bf16 %v4925, %v4924
      %v4950 = vpack.c.bf16 %v4927, %v4926
      %v4951 = vpack.c.bf16 %v4929, %v4928
      %v4952 = vpack.c.bf16 %v4931, %v4930
      %v4953 = vpack.c.bf16 %v4933, %v4932
      %v4954 = vpack.c.bf16 %v4935, %v4934
      %v4955 = vpack.c.bf16 %v4937, %v4936
      %v4956 = vpack.c.bf16 %v4939, %v4938
      %v4957 = vpack.c.bf16 %v4941, %v4940
      %s4958 = scalar_lea.vmem %s4, 8
      %v4959 = vld [vmem:[%s4958] sm:$0xf]
      %v4961 = vsel %vm307, %v4942, 0
      %v4964 = vsel %vm307, %v4943, 0
      %v4967 = vsel %vm307, %v4944, 0
      %v4970 = vsel %vm307, %v4945, 0
      %v4973 = vsel %vm307, %v4946, 0
      %v4976 = vsel %vm307, %v4947, 0
      %v4979 = vsel %vm307, %v4948, 0
      %v4982 = vsel %vm307, %v4949, 0
      %v4985 = vsel %vm307, %v4950, 0
      %v4988 = vsel %vm307, %v4951, 0
      %v4991 = vsel %vm307, %v4952, 0
      %v4994 = vsel %vm307, %v4953, 0
      %v4997 = vsel %vm307, %v4954, 0
      %v5000 = vsel %vm307, %v4955, 0
      %v5003 = vsel %vm307, %v4956, 0
      %v5006 = vsel %vm307, %v4957, 0
      %v5009 = vsel %vm4533, %v4959, 0
      %5011 = vmatprep.subr.bf16.mxu0 0
      %5012 = vmatpush1.bf16.msra.mxu0 %v5009
      %5013 = vmatprep.subr.bf16.mxu0 0
      %5014 = vmatpush1.bf16.msra.mxu0 0
      %5015 = vmatprep.subr.bf16.mxu0 0
      %5016 = vmatpush1.bf16.msra.mxu0 0
      %5017 = vmatprep.subr.bf16.mxu0 0
      %5018 = vmatpush1.bf16.msra.mxu0 0
      %5019 = vmatprep.subr.bf16.mxu0 0
      %5020 = vmatpush1.bf16.msra.mxu0 0
      %5021 = vmatprep.subr.bf16.mxu0 0
      %5022 = vmatpush1.bf16.msra.mxu0 0
      %5023 = vmatprep.subr.bf16.mxu0 0
      %5024 = vmatpush1.bf16.msra.mxu0 0
      %5025 = vmatprep.subr.bf16.mxu0 0
      %5026 = vmatpush1.bf16.msra.mxu0 0
      %5027 = vmatprep.subr.bf16.mxu0 0
      %5028 = vmatpush1.bf16.msra.mxu0 0
      %5029 = vmatprep.subr.bf16.mxu0 0
      %5030 = vmatpush1.bf16.msra.mxu0 0
      %5031 = vmatprep.subr.bf16.mxu0 0
      %5032 = vmatpush1.bf16.msra.mxu0 0
      %5033 = vmatprep.subr.bf16.mxu0 0
      %5034 = vmatpush1.bf16.msra.mxu0 0
      %5035 = vmatprep.subr.bf16.mxu0 0
      %5036 = vmatpush1.bf16.msra.mxu0 0
      %5037 = vmatprep.subr.bf16.mxu0 0
      %5038 = vmatpush1.bf16.msra.mxu0 0
      %5039 = vmatprep.subr.bf16.mxu0 0
      %5040 = vmatpush1.bf16.msra.mxu0 0
      %5041 = vmatprep.subr.bf16.mxu0 0
      %5042 = vmatpush1.bf16.msra.mxu0 0
      %5043 = vmatprep.mubr.bf16.mxu0 0
      %5044 = vmatmul.mubr.bf16.gmra.mrb[0].mxu0 %v4961
      %v5045 = vpop.f32.mrb[0].mxu0
      %v5046 = vadd.f32 0.0, %v5045
      %v5047 = vpop.f32.mrb[0].mxu0
      %v5048 = vpop.f32.mrb[0].mxu0
      %v5049 = vadd.f32 0.0, %v5048
      %v5050 = vpop.f32.mrb[0].mxu0
      %5051 = vmatprep.mubr.bf16.mxu0 0
      %5052 = vmatmul.mubr.bf16.gmra.mrb[0].mxu0 %v4964
      %v5053 = vpop.f32.mrb[0].mxu0
      %v5054 = vadd.f32 0.0, %v5053
      %v5055 = vpop.f32.mrb[0].mxu0
      %v5056 = vpop.f32.mrb[0].mxu0
      %v5057 = vadd.f32 0.0, %v5056
      %v5058 = vpop.f32.mrb[0].mxu0
      %5059 = vmatprep.mubr.bf16.mxu0 0
      %5060 = vmatmul.mubr.bf16.gmra.mrb[0].mxu0 %v4967
      %v5061 = vpop.f32.mrb[0].mxu0
      %v5062 = vadd.f32 0.0, %v5061
      %v5063 = vpop.f32.mrb[0].mxu0
      %v5064 = vpop.f32.mrb[0].mxu0
      %v5065 = vadd.f32 0.0, %v5064
      %v5066 = vpop.f32.mrb[0].mxu0
      %5067 = vmatprep.mubr.bf16.mxu0 0
      %5068 = vmatmul.mubr.bf16.gmra.mrb[0].mxu0 %v4970
      %v5069 = vpop.f32.mrb[0].mxu0
      %v5070 = vadd.f32 0.0, %v5069
      %v5071 = vpop.f32.mrb[0].mxu0
      %v5072 = vpop.f32.mrb[0].mxu0
      %v5073 = vadd.f32 0.0, %v5072
      %v5074 = vpop.f32.mrb[0].mxu0
      %5075 = vmatprep.mubr.bf16.mxu0 0
      %5076 = vmatmul.mubr.bf16.gmra.mrb[0].mxu0 %v4973
      %v5077 = vpop.f32.mrb[0].mxu0
      %v5078 = vadd.f32 0.0, %v5077
      %v5079 = vpop.f32.mrb[0].mxu0
      %v5080 = vpop.f32.mrb[0].mxu0
      %v5081 = vadd.f32 0.0, %v5080
      %v5082 = vpop.f32.mrb[0].mxu0
      %5083 = vmatprep.mubr.bf16.mxu0 0
      %5084 = vmatmul.mubr.bf16.gmra.mrb[0].mxu0 %v4976
      %v5085 = vpop.f32.mrb[0].mxu0
      %v5086 = vadd.f32 0.0, %v5085
      %v5087 = vpop.f32.mrb[0].mxu0
      %v5088 = vpop.f32.mrb[0].mxu0
      %v5089 = vadd.f32 0.0, %v5088
      %v5090 = vpop.f32.mrb[0].mxu0
      %5091 = vmatprep.mubr.bf16.mxu0 0
      %5092 = vmatmul.mubr.bf16.gmra.mrb[0].mxu0 %v4979
      %v5093 = vpop.f32.mrb[0].mxu0
      %v5094 = vadd.f32 0.0, %v5093
      %v5095 = vpop.f32.mrb[0].mxu0
      %v5096 = vpop.f32.mrb[0].mxu0
      %v5097 = vadd.f32 0.0, %v5096
      %v5098 = vpop.f32.mrb[0].mxu0
      %5099 = vmatprep.mubr.bf16.mxu0 0
      %5100 = vmatmul.mubr.bf16.gmra.mrb[0].mxu0 %v4982
      %v5101 = vpop.f32.mrb[0].mxu0
      %v5102 = vadd.f32 0.0, %v5101
      %v5103 = vpop.f32.mrb[0].mxu0
      %v5104 = vpop.f32.mrb[0].mxu0
      %v5105 = vadd.f32 0.0, %v5104
      %v5106 = vpop.f32.mrb[0].mxu0
      %5107 = vmatprep.mubr.bf16.mxu0 0
      %5108 = vmatmul.mubr.bf16.gmra.mrb[0].mxu0 %v4985
      %v5109 = vpop.f32.mrb[0].mxu0
      %v5110 = vadd.f32 0.0, %v5109
      %v5111 = vpop.f32.mrb[0].mxu0
      %v5112 = vpop.f32.mrb[0].mxu0
      %v5113 = vadd.f32 0.0, %v5112
      %v5114 = vpop.f32.mrb[0].mxu0
      %5115 = vmatprep.mubr.bf16.mxu0 0
      %5116 = vmatmul.mubr.bf16.gmra.mrb[0].mxu0 %v4988
      %v5117 = vpop.f32.mrb[0].mxu0
      %v5118 = vadd.f32 0.0, %v5117
      %v5119 = vpop.f32.mrb[0].mxu0
      %v5120 = vpop.f32.mrb[0].mxu0
      %v5121 = vadd.f32 0.0, %v5120
      %v5122 = vpop.f32.mrb[0].mxu0
      %5123 = vmatprep.mubr.bf16.mxu0 0
      %5124 = vmatmul.mubr.bf16.gmra.mrb[0].mxu0 %v4991
      %v5125 = vpop.f32.mrb[0].mxu0
      %v5126 = vadd.f32 0.0, %v5125
      %v5127 = vpop.f32.mrb[0].mxu0
      %v5128 = vpop.f32.mrb[0].mxu0
      %v5129 = vadd.f32 0.0, %v5128
      %v5130 = vpop.f32.mrb[0].mxu0
      %5131 = vmatprep.mubr.bf16.mxu0 0
      %5132 = vmatmul.mubr.bf16.gmra.mrb[0].mxu0 %v4994
      %v5133 = vpop.f32.mrb[0].mxu0
      %v5134 = vadd.f32 0.0, %v5133
      %v5135 = vpop.f32.mrb[0].mxu0
      %v5136 = vpop.f32.mrb[0].mxu0
      %v5137 = vadd.f32 0.0, %v5136
      %v5138 = vpop.f32.mrb[0].mxu0
      %5139 = vmatprep.mubr.bf16.mxu0 0
      %5140 = vmatmul.mubr.bf16.gmra.mrb[0].mxu0 %v4997
      %v5141 = vpop.f32.mrb[0].mxu0
      %v5142 = vadd.f32 0.0, %v5141
      %v5143 = vpop.f32.mrb[0].mxu0
      %v5144 = vpop.f32.mrb[0].mxu0
      %v5145 = vadd.f32 0.0, %v5144
      %v5146 = vpop.f32.mrb[0].mxu0
      %5147 = vmatprep.mubr.bf16.mxu0 0
      %5148 = vmatmul.mubr.bf16.gmra.mrb[0].mxu0 %v5000
      %v5149 = vpop.f32.mrb[0].mxu0
      %v5150 = vadd.f32 0.0, %v5149
      %v5151 = vpop.f32.mrb[0].mxu0
      %v5152 = vpop.f32.mrb[0].mxu0
      %v5153 = vadd.f32 0.0, %v5152
      %v5154 = vpop.f32.mrb[0].mxu0
      %5155 = vmatprep.mubr.bf16.mxu0 0
      %5156 = vmatmul.mubr.bf16.gmra.mrb[0].mxu0 %v5003
      %v5157 = vpop.f32.mrb[0].mxu0
      %v5158 = vadd.f32 0.0, %v5157
      %v5159 = vpop.f32.mrb[0].mxu0
      %v5160 = vpop.f32.mrb[0].mxu0
      %v5161 = vadd.f32 0.0, %v5160
      %v5162 = vpop.f32.mrb[0].mxu0
      %5163 = vmatprep.mubr.bf16.mxu0 0
      %5164 = vmatmul.mubr.bf16.gmra.mrb[0].mxu0 %v5006
      %v5165 = vpop.f32.mrb[0].mxu0
      %v5166 = vadd.f32 0.0, %v5165
      %v5167 = vpop.f32.mrb[0].mxu0
      %v5168 = vpop.f32.mrb[0].mxu0
      %v5169 = vadd.f32 0.0, %v5168
      %v5170 = vpop.f32.mrb[0].mxu0
      %5171 = vdwg.mxu0
      %v5172 = vadd.f32 %v4784, %v5046
      %v5173 = vadd.f32 %v4787, %v5049
      %v5174 = vadd.f32 %v4792, %v5054
      %v5175 = vadd.f32 %v4795, %v5057
      %v5176 = vadd.f32 %v4800, %v5062
      %v5177 = vadd.f32 %v4803, %v5065
      %v5178 = vadd.f32 %v4808, %v5070
      %v5179 = vadd.f32 %v4811, %v5073
      %v5180 = vadd.f32 %v4816, %v5078
      %v5181 = vadd.f32 %v4819, %v5081
      %v5182 = vadd.f32 %v4824, %v5086
      %v5183 = vadd.f32 %v4827, %v5089
      %v5184 = vadd.f32 %v4832, %v5094
      %v5185 = vadd.f32 %v4835, %v5097
      %v5186 = vadd.f32 %v4840, %v5102
      %v5187 = vadd.f32 %v4843, %v5105
      %v5188 = vadd.f32 %v4848, %v5110
      %v5189 = vadd.f32 %v4851, %v5113
      %v5190 = vadd.f32 %v4856, %v5118
      %v5191 = vadd.f32 %v4859, %v5121
      %v5192 = vadd.f32 %v4864, %v5126
      %v5193 = vadd.f32 %v4867, %v5129
      %v5194 = vadd.f32 %v4872, %v5134
      %v5195 = vadd.f32 %v4875, %v5137
      %v5196 = vadd.f32 %v4880, %v5142
      %v5197 = vadd.f32 %v4883, %v5145
      %v5198 = vadd.f32 %v4888, %v5150
      %v5199 = vadd.f32 %v4891, %v5153
      %v5200 = vadd.f32 %v4896, %v5158
      %v5201 = vadd.f32 %v4899, %v5161
      %v5202 = vadd.f32 %v4904, %v5166
      %v5203 = vadd.f32 %v4907, %v5169
      %v5204 = vld [vmem:[#allocation2 + $0x12] sm:$0xff]
      %v5205 = vld [vmem:[#allocation2 + $0x1a] sm:$0xff]
      %v5206 = vld [vmem:[#allocation2 + $0x22] sm:$0xff]
      %v5207 = vld [vmem:[#allocation2 + $0x2a] sm:$0xff]
      %v5208 = vld [vmem:[#allocation2 + $0x32] sm:$0xff]
      %v5209 = vld [vmem:[#allocation2 + $0x3a] sm:$0xff]
      %v5210 = vld [vmem:[#allocation2 + $0x42] sm:$0xff]
      %v5211 = vld [vmem:[#allocation2 + $0x4a] sm:$0xff]
      %v5212 = vld [vmem:[#allocation2 + $0x52] sm:$0xff]
      %v5213 = vld [vmem:[#allocation2 + $0x5a] sm:$0xff]
      %v5214 = vld [vmem:[#allocation2 + $0x62] sm:$0xff]
      %v5215 = vld [vmem:[#allocation2 + $0x6a] sm:$0xff]
      %v5216 = vld [vmem:[#allocation2 + $0x72] sm:$0xff]
      %v5217 = vld [vmem:[#allocation2 + $0x7a] sm:$0xff]
      %v5218 = vld [vmem:[#allocation2 + $0x82] sm:$0xff]
      %v5219 = vld [vmem:[#allocation2 + $0x8a] sm:$0xff]
      %v5220 = vld [vmem:[#allocation2 + $0x92] sm:$0xff]
      %v5221 = vld [vmem:[#allocation2 + $0x9a] sm:$0xff]
      %v5222 = vld [vmem:[#allocation2 + $0xa2] sm:$0xff]
      %v5223 = vld [vmem:[#allocation2 + $0xaa] sm:$0xff]
      %v5224 = vld [vmem:[#allocation2 + $0xb2] sm:$0xff]
      %v5225 = vld [vmem:[#allocation2 + $0xba] sm:$0xff]
      %v5226 = vld [vmem:[#allocation2 + $0xc2] sm:$0xff]
      %v5227 = vld [vmem:[#allocation2 + $0xca] sm:$0xff]
      %v5228 = vld [vmem:[#allocation2 + $0xd2] sm:$0xff]
      %v5229 = vld [vmem:[#allocation2 + $0xda] sm:$0xff]
      %v5230 = vld [vmem:[#allocation2 + $0xe2] sm:$0xff]
      %v5231 = vld [vmem:[#allocation2 + $0xea] sm:$0xff]
      %v5232 = vld [vmem:[#allocation2 + $0xf2] sm:$0xff]
      %v5233 = vld [vmem:[#allocation2 + $0xfa] sm:$0xff]
      %v5234 = vld [vmem:[#allocation2 + $0x102] sm:$0xff]
      %v5235 = vld [vmem:[#allocation2 + $0x10a] sm:$0xff]
      %v5236 = vpack.c.bf16 %v5205, %v5204
      %v5237 = vpack.c.bf16 %v5207, %v5206
      %v5238 = vpack.c.bf16 %v5209, %v5208
      %v5239 = vpack.c.bf16 %v5211, %v5210
      %v5240 = vpack.c.bf16 %v5213, %v5212
      %v5241 = vpack.c.bf16 %v5215, %v5214
      %v5242 = vpack.c.bf16 %v5217, %v5216
      %v5243 = vpack.c.bf16 %v5219, %v5218
      %v5244 = vpack.c.bf16 %v5221, %v5220
      %v5245 = vpack.c.bf16 %v5223, %v5222
      %v5246 = vpack.c.bf16 %v5225, %v5224
      %v5247 = vpack.c.bf16 %v5227, %v5226
      %v5248 = vpack.c.bf16 %v5229, %v5228
      %v5249 = vpack.c.bf16 %v5231, %v5230
      %v5250 = vpack.c.bf16 %v5233, %v5232
      %v5251 = vpack.c.bf16 %v5235, %v5234
      %s5252 = scalar_lea.vmem %s4, 12
      %v5253 = vld [vmem:[%s5252] sm:$0xf]
      %v5255 = vsel %vm307, %v5236, 0
      %v5258 = vsel %vm307, %v5237, 0
      %v5261 = vsel %vm307, %v5238, 0
      %v5264 = vsel %vm307, %v5239, 0
      %v5267 = vsel %vm307, %v5240, 0
      %v5270 = vsel %vm307, %v5241, 0
      %v5273 = vsel %vm307, %v5242, 0
      %v5276 = vsel %vm307, %v5243, 0
      %v5279 = vsel %vm307, %v5244, 0
      %v5282 = vsel %vm307, %v5245, 0
      %v5285 = vsel %vm307, %v5246, 0
      %v5288 = vsel %vm307, %v5247, 0
      %v5291 = vsel %vm307, %v5248, 0
      %v5294 = vsel %vm307, %v5249, 0
      %v5297 = vsel %vm307, %v5250, 0
      %v5300 = vsel %vm307, %v5251, 0
      %v5303 = vsel %vm4533, %v5253, 0
      %5305 = vmatprep.subr.bf16.mxu0 0
      %5306 = vmatpush1.bf16.msra.mxu0 %v5303
      %5307 = vmatprep.subr.bf16.mxu0 0
      %5308 = vmatpush1.bf16.msra.mxu0 0
      %5309 = vmatprep.subr.bf16.mxu0 0
      %5310 = vmatpush1.bf16.msra.mxu0 0
      %5311 = vmatprep.subr.bf16.mxu0 0
      %5312 = vmatpush1.bf16.msra.mxu0 0
      %5313 = vmatprep.subr.bf16.mxu0 0
      %5314 = vmatpush1.bf16.msra.mxu0 0
      %5315 = vmatprep.subr.bf16.mxu0 0
      %5316 = vmatpush1.bf16.msra.mxu0 0
      %5317 = vmatprep.subr.bf16.mxu0 0
      %5318 = vmatpush1.bf16.msra.mxu0 0
      %5319 = vmatprep.subr.bf16.mxu0 0
      %5320 = vmatpush1.bf16.msra.mxu0 0
      %5321 = vmatprep.subr.bf16.mxu0 0
      %5322 = vmatpush1.bf16.msra.mxu0 0
      %5323 = vmatprep.subr.bf16.mxu0 0
      %5324 = vmatpush1.bf16.msra.mxu0 0
      %5325 = vmatprep.subr.bf16.mxu0 0
      %5326 = vmatpush1.bf16.msra.mxu0 0
      %5327 = vmatprep.subr.bf16.mxu0 0
      %5328 = vmatpush1.bf16.msra.mxu0 0
      %5329 = vmatprep.subr.bf16.mxu0 0
      %5330 = vmatpush1.bf16.msra.mxu0 0
      %5331 = vmatprep.subr.bf16.mxu0 0
      %5332 = vmatpush1.bf16.msra.mxu0 0
      %5333 = vmatprep.subr.bf16.mxu0 0
      %5334 = vmatpush1.bf16.msra.mxu0 0
      %5335 = vmatprep.subr.bf16.mxu0 0
      %5336 = vmatpush1.bf16.msra.mxu0 0
      %5337 = vmatprep.mubr.bf16.mxu0 0
      %5338 = vmatmul.mubr.bf16.gmra.mrb[0].mxu0 %v5255
      %v5339 = vpop.f32.mrb[0].mxu0
      %v5340 = vadd.f32 0.0, %v5339
      %v5341 = vpop.f32.mrb[0].mxu0
      %v5342 = vpop.f32.mrb[0].mxu0
      %v5343 = vadd.f32 0.0, %v5342
      %v5344 = vpop.f32.mrb[0].mxu0
      %5345 = vmatprep.mubr.bf16.mxu0 0
      %5346 = vmatmul.mubr.bf16.gmra.mrb[0].mxu0 %v5258
      %v5347 = vpop.f32.mrb[0].mxu0
      %v5348 = vadd.f32 0.0, %v5347
      %v5349 = vpop.f32.mrb[0].mxu0
      %v5350 = vpop.f32.mrb[0].mxu0
      %v5351 = vadd.f32 0.0, %v5350
      %v5352 = vpop.f32.mrb[0].mxu0
      %5353 = vmatprep.mubr.bf16.mxu0 0
      %5354 = vmatmul.mubr.bf16.gmra.mrb[0].mxu0 %v5261
      %v5355 = vpop.f32.mrb[0].mxu0
      %v5356 = vadd.f32 0.0, %v5355
      %v5357 = vpop.f32.mrb[0].mxu0
      %v5358 = vpop.f32.mrb[0].mxu0
      %v5359 = vadd.f32 0.0, %v5358
      %v5360 = vpop.f32.mrb[0].mxu0
      %5361 = vmatprep.mubr.bf16.mxu0 0
      %5362 = vmatmul.mubr.bf16.gmra.mrb[0].mxu0 %v5264
      %v5363 = vpop.f32.mrb[0].mxu0
      %v5364 = vadd.f32 0.0, %v5363
      %v5365 = vpop.f32.mrb[0].mxu0
      %v5366 = vpop.f32.mrb[0].mxu0
      %v5367 = vadd.f32 0.0, %v5366
      %v5368 = vpop.f32.mrb[0].mxu0
      %5369 = vmatprep.mubr.bf16.mxu0 0
      %5370 = vmatmul.mubr.bf16.gmra.mrb[0].mxu0 %v5267
      %v5371 = vpop.f32.mrb[0].mxu0
      %v5372 = vadd.f32 0.0, %v5371
      %v5373 = vpop.f32.mrb[0].mxu0
      %v5374 = vpop.f32.mrb[0].mxu0
      %v5375 = vadd.f32 0.0, %v5374
      %v5376 = vpop.f32.mrb[0].mxu0
      %5377 = vmatprep.mubr.bf16.mxu0 0
      %5378 = vmatmul.mubr.bf16.gmra.mrb[0].mxu0 %v5270
      %v5379 = vpop.f32.mrb[0].mxu0
      %v5380 = vadd.f32 0.0, %v5379
      %v5381 = vpop.f32.mrb[0].mxu0
      %v5382 = vpop.f32.mrb[0].mxu0
      %v5383 = vadd.f32 0.0, %v5382
      %v5384 = vpop.f32.mrb[0].mxu0
      %5385 = vmatprep.mubr.bf16.mxu0 0
      %5386 = vmatmul.mubr.bf16.gmra.mrb[0].mxu0 %v5273
      %v5387 = vpop.f32.mrb[0].mxu0
      %v5388 = vadd.f32 0.0, %v5387
      %v5389 = vpop.f32.mrb[0].mxu0
      %v5390 = vpop.f32.mrb[0].mxu0
      %v5391 = vadd.f32 0.0, %v5390
      %v5392 = vpop.f32.mrb[0].mxu0
      %5393 = vmatprep.mubr.bf16.mxu0 0
      %5394 = vmatmul.mubr.bf16.gmra.mrb[0].mxu0 %v5276
      %v5395 = vpop.f32.mrb[0].mxu0
      %v5396 = vadd.f32 0.0, %v5395
      %v5397 = vpop.f32.mrb[0].mxu0
      %v5398 = vpop.f32.mrb[0].mxu0
      %v5399 = vadd.f32 0.0, %v5398
      %v5400 = vpop.f32.mrb[0].mxu0
      %5401 = vmatprep.mubr.bf16.mxu0 0
      %5402 = vmatmul.mubr.bf16.gmra.mrb[0].mxu0 %v5279
      %v5403 = vpop.f32.mrb[0].mxu0
      %v5404 = vadd.f32 0.0, %v5403
      %v5405 = vpop.f32.mrb[0].mxu0
      %v5406 = vpop.f32.mrb[0].mxu0
      %v5407 = vadd.f32 0.0, %v5406
      %v5408 = vpop.f32.mrb[0].mxu0
      %5409 = vmatprep.mubr.bf16.mxu0 0
      %5410 = vmatmul.mubr.bf16.gmra.mrb[0].mxu0 %v5282
      %v5411 = vpop.f32.mrb[0].mxu0
      %v5412 = vadd.f32 0.0, %v5411
      %v5413 = vpop.f32.mrb[0].mxu0
      %v5414 = vpop.f32.mrb[0].mxu0
      %v5415 = vadd.f32 0.0, %v5414
      %v5416 = vpop.f32.mrb[0].mxu0
      %5417 = vmatprep.mubr.bf16.mxu0 0
      %5418 = vmatmul.mubr.bf16.gmra.mrb[0].mxu0 %v5285
      %v5419 = vpop.f32.mrb[0].mxu0
      %v5420 = vadd.f32 0.0, %v5419
      %v5421 = vpop.f32.mrb[0].mxu0
      %v5422 = vpop.f32.mrb[0].mxu0
      %v5423 = vadd.f32 0.0, %v5422
      %v5424 = vpop.f32.mrb[0].mxu0
      %5425 = vmatprep.mubr.bf16.mxu0 0
      %5426 = vmatmul.mubr.bf16.gmra.mrb[0].mxu0 %v5288
      %v5427 = vpop.f32.mrb[0].mxu0
      %v5428 = vadd.f32 0.0, %v5427
      %v5429 = vpop.f32.mrb[0].mxu0
      %v5430 = vpop.f32.mrb[0].mxu0
      %v5431 = vadd.f32 0.0, %v5430
      %v5432 = vpop.f32.mrb[0].mxu0
      %5433 = vmatprep.mubr.bf16.mxu0 0
      %5434 = vmatmul.mubr.bf16.gmra.mrb[0].mxu0 %v5291
      %v5435 = vpop.f32.mrb[0].mxu0
      %v5436 = vadd.f32 0.0, %v5435
      %v5437 = vpop.f32.mrb[0].mxu0
      %v5438 = vpop.f32.mrb[0].mxu0
      %v5439 = vadd.f32 0.0, %v5438
      %v5440 = vpop.f32.mrb[0].mxu0
      %5441 = vmatprep.mubr.bf16.mxu0 0
      %5442 = vmatmul.mubr.bf16.gmra.mrb[0].mxu0 %v5294
      %v5443 = vpop.f32.mrb[0].mxu0
      %v5444 = vadd.f32 0.0, %v5443
      %v5445 = vpop.f32.mrb[0].mxu0
      %v5446 = vpop.f32.mrb[0].mxu0
      %v5447 = vadd.f32 0.0, %v5446
      %v5448 = vpop.f32.mrb[0].mxu0
      %5449 = vmatprep.mubr.bf16.mxu0 0
      %5450 = vmatmul.mubr.bf16.gmra.mrb[0].mxu0 %v5297
      %v5451 = vpop.f32.mrb[0].mxu0
      %v5452 = vadd.f32 0.0, %v5451
      %v5453 = vpop.f32.mrb[0].mxu0
      %v5454 = vpop.f32.mrb[0].mxu0
      %v5455 = vadd.f32 0.0, %v5454
      %v5456 = vpop.f32.mrb[0].mxu0
      %5457 = vmatprep.mubr.bf16.mxu0 0
      %5458 = vmatmul.mubr.bf16.gmra.mrb[0].mxu0 %v5300
      %v5459 = vpop.f32.mrb[0].mxu0
      %v5460 = vadd.f32 0.0, %v5459
      %v5461 = vpop.f32.mrb[0].mxu0
      %v5462 = vpop.f32.mrb[0].mxu0
      %v5463 = vadd.f32 0.0, %v5462
      %v5464 = vpop.f32.mrb[0].mxu0
      %5465 = vdwg.mxu0
      %v5466 = vadd.f32 %v5172, %v5340
      %v5467 = vadd.f32 %v5173, %v5343
      %v5468 = vadd.f32 %v5174, %v5348
      %v5469 = vadd.f32 %v5175, %v5351
      %v5470 = vadd.f32 %v5176, %v5356
      %v5471 = vadd.f32 %v5177, %v5359
      %v5472 = vadd.f32 %v5178, %v5364
      %v5473 = vadd.f32 %v5179, %v5367
      %v5474 = vadd.f32 %v5180, %v5372
      %v5475 = vadd.f32 %v5181, %v5375
      %v5476 = vadd.f32 %v5182, %v5380
      %v5477 = vadd.f32 %v5183, %v5383
      %v5478 = vadd.f32 %v5184, %v5388
      %v5479 = vadd.f32 %v5185, %v5391
      %v5480 = vadd.f32 %v5186, %v5396
      %v5481 = vadd.f32 %v5187, %v5399
      %v5482 = vadd.f32 %v5188, %v5404
      %v5483 = vadd.f32 %v5189, %v5407
      %v5484 = vadd.f32 %v5190, %v5412
      %v5485 = vadd.f32 %v5191, %v5415
      %v5486 = vadd.f32 %v5192, %v5420
      %v5487 = vadd.f32 %v5193, %v5423
      %v5488 = vadd.f32 %v5194, %v5428
      %v5489 = vadd.f32 %v5195, %v5431
      %v5490 = vadd.f32 %v5196, %v5436
      %v5491 = vadd.f32 %v5197, %v5439
      %v5492 = vadd.f32 %v5198, %v5444
      %v5493 = vadd.f32 %v5199, %v5447
      %v5494 = vadd.f32 %v5200, %v5452
      %v5495 = vadd.f32 %v5201, %v5455
      %v5496 = vadd.f32 %v5202, %v5460
      %v5497 = vadd.f32 %v5203, %v5463
      %v5498 = vld [vmem:[#allocation2 + $0x13] sm:$0xff]
      %v5499 = vld [vmem:[#allocation2 + $0x1b] sm:$0xff]
      %v5500 = vld [vmem:[#allocation2 + $0x23] sm:$0xff]
      %v5501 = vld [vmem:[#allocation2 + $0x2b] sm:$0xff]
      %v5502 = vld [vmem:[#allocation2 + $0x33] sm:$0xff]
      %v5503 = vld [vmem:[#allocation2 + $0x3b] sm:$0xff]
      %v5504 = vld [vmem:[#allocation2 + $0x43] sm:$0xff]
      %v5505 = vld [vmem:[#allocation2 + $0x4b] sm:$0xff]
      %v5506 = vld [vmem:[#allocation2 + $0x53] sm:$0xff]
      %v5507 = vld [vmem:[#allocation2 + $0x5b] sm:$0xff]
      %v5508 = vld [vmem:[#allocation2 + $0x63] sm:$0xff]
      %v5509 = vld [vmem:[#allocation2 + $0x6b] sm:$0xff]
      %v5510 = vld [vmem:[#allocation2 + $0x73] sm:$0xff]
      %v5511 = vld [vmem:[#allocation2 + $0x7b] sm:$0xff]
      %v5512 = vld [vmem:[#allocation2 + $0x83] sm:$0xff]
      %v5513 = vld [vmem:[#allocation2 + $0x8b] sm:$0xff]
      %v5514 = vld [vmem:[#allocation2 + $0x93] sm:$0xff]
      %v5515 = vld [vmem:[#allocation2 + $0x9b] sm:$0xff]
      %v5516 = vld [vmem:[#allocation2 + $0xa3] sm:$0xff]
      %v5517 = vld [vmem:[#allocation2 + $0xab] sm:$0xff]
      %v5518 = vld [vmem:[#allocation2 + $0xb3] sm:$0xff]
      %v5519 = vld [vmem:[#allocation2 + $0xbb] sm:$0xff]
      %v5520 = vld [vmem:[#allocation2 + $0xc3] sm:$0xff]
      %v5521 = vld [vmem:[#allocation2 + $0xcb] sm:$0xff]
      %v5522 = vld [vmem:[#allocation2 + $0xd3] sm:$0xff]
      %v5523 = vld [vmem:[#allocation2 + $0xdb] sm:$0xff]
      %v5524 = vld [vmem:[#allocation2 + $0xe3] sm:$0xff]
      %v5525 = vld [vmem:[#allocation2 + $0xeb] sm:$0xff]
      %v5526 = vld [vmem:[#allocation2 + $0xf3] sm:$0xff]
      %v5527 = vld [vmem:[#allocation2 + $0xfb] sm:$0xff]
      %v5528 = vld [vmem:[#allocation2 + $0x103] sm:$0xff]
      %v5529 = vld [vmem:[#allocation2 + $0x10b] sm:$0xff]
      %v5530 = vpack.c.bf16 %v5499, %v5498
      %v5531 = vpack.c.bf16 %v5501, %v5500
      %v5532 = vpack.c.bf16 %v5503, %v5502
      %v5533 = vpack.c.bf16 %v5505, %v5504
      %v5534 = vpack.c.bf16 %v5507, %v5506
      %v5535 = vpack.c.bf16 %v5509, %v5508
      %v5536 = vpack.c.bf16 %v5511, %v5510
      %v5537 = vpack.c.bf16 %v5513, %v5512
      %v5538 = vpack.c.bf16 %v5515, %v5514
      %v5539 = vpack.c.bf16 %v5517, %v5516
      %v5540 = vpack.c.bf16 %v5519, %v5518
      %v5541 = vpack.c.bf16 %v5521, %v5520
      %v5542 = vpack.c.bf16 %v5523, %v5522
      %v5543 = vpack.c.bf16 %v5525, %v5524
      %v5544 = vpack.c.bf16 %v5527, %v5526
      %v5545 = vpack.c.bf16 %v5529, %v5528
      %s5546 = scalar_lea.vmem %s4, 16
      %v5547 = vld [vmem:[%s5546] sm:$0xf]
      %v5549 = vsel %vm307, %v5530, 0
      %v5552 = vsel %vm307, %v5531, 0
      %v5555 = vsel %vm307, %v5532, 0
      %v5558 = vsel %vm307, %v5533, 0
      %v5561 = vsel %vm307, %v5534, 0
      %v5564 = vsel %vm307, %v5535, 0
      %v5567 = vsel %vm307, %v5536, 0
      %v5570 = vsel %vm307, %v5537, 0
      %v5573 = vsel %vm307, %v5538, 0
      %v5576 = vsel %vm307, %v5539, 0
      %v5579 = vsel %vm307, %v5540, 0
      %v5582 = vsel %vm307, %v5541, 0
      %v5585 = vsel %vm307, %v5542, 0
      %v5588 = vsel %vm307, %v5543, 0
      %v5591 = vsel %vm307, %v5544, 0
      %v5594 = vsel %vm307, %v5545, 0
      %v5597 = vsel %vm4533, %v5547, 0
      %5599 = vmatprep.subr.bf16.mxu0 0
      %5600 = vmatpush1.bf16.msra.mxu0 %v5597
      %5601 = vmatprep.subr.bf16.mxu0 0
      %5602 = vmatpush1.bf16.msra.mxu0 0
      %5603 = vmatprep.subr.bf16.mxu0 0
      %5604 = vmatpush1.bf16.msra.mxu0 0
      %5605 = vmatprep.subr.bf16.mxu0 0
      %5606 = vmatpush1.bf16.msra.mxu0 0
      %5607 = vmatprep.subr.bf16.mxu0 0
      %5608 = vmatpush1.bf16.msra.mxu0 0
      %5609 = vmatprep.subr.bf16.mxu0 0
      %5610 = vmatpush1.bf16.msra.mxu0 0
      %5611 = vmatprep.subr.bf16.mxu0 0
      %5612 = vmatpush1.bf16.msra.mxu0 0
      %5613 = vmatprep.subr.bf16.mxu0 0
      %5614 = vmatpush1.bf16.msra.mxu0 0
      %5615 = vmatprep.subr.bf16.mxu0 0
      %5616 = vmatpush1.bf16.msra.mxu0 0
      %5617 = vmatprep.subr.bf16.mxu0 0
      %5618 = vmatpush1.bf16.msra.mxu0 0
      %5619 = vmatprep.subr.bf16.mxu0 0
      %5620 = vmatpush1.bf16.msra.mxu0 0
      %5621 = vmatprep.subr.bf16.mxu0 0
      %5622 = vmatpush1.bf16.msra.mxu0 0
      %5623 = vmatprep.subr.bf16.mxu0 0
      %5624 = vmatpush1.bf16.msra.mxu0 0
      %5625 = vmatprep.subr.bf16.mxu0 0
      %5626 = vmatpush1.bf16.msra.mxu0 0
      %5627 = vmatprep.subr.bf16.mxu0 0
      %5628 = vmatpush1.bf16.msra.mxu0 0
      %5629 = vmatprep.subr.bf16.mxu0 0
      %5630 = vmatpush1.bf16.msra.mxu0 0
      %5631 = vmatprep.mubr.bf16.mxu0 0
      %5632 = vmatmul.mubr.bf16.gmra.mrb[0].mxu0 %v5549
      %v5633 = vpop.f32.mrb[0].mxu0
      %v5634 = vadd.f32 0.0, %v5633
      %v5635 = vpop.f32.mrb[0].mxu0
      %v5636 = vpop.f32.mrb[0].mxu0
      %v5637 = vadd.f32 0.0, %v5636
      %v5638 = vpop.f32.mrb[0].mxu0
      %5639 = vmatprep.mubr.bf16.mxu0 0
      %5640 = vmatmul.mubr.bf16.gmra.mrb[0].mxu0 %v5552
      %v5641 = vpop.f32.mrb[0].mxu0
      %v5642 = vadd.f32 0.0, %v5641
      %v5643 = vpop.f32.mrb[0].mxu0
      %v5644 = vpop.f32.mrb[0].mxu0
      %v5645 = vadd.f32 0.0, %v5644
      %v5646 = vpop.f32.mrb[0].mxu0
      %5647 = vmatprep.mubr.bf16.mxu0 0
      %5648 = vmatmul.mubr.bf16.gmra.mrb[0].mxu0 %v5555
      %v5649 = vpop.f32.mrb[0].mxu0
      %v5650 = vadd.f32 0.0, %v5649
      %v5651 = vpop.f32.mrb[0].mxu0
      %v5652 = vpop.f32.mrb[0].mxu0
      %v5653 = vadd.f32 0.0, %v5652
      %v5654 = vpop.f32.mrb[0].mxu0
      %5655 = vmatprep.mubr.bf16.mxu0 0
      %5656 = vmatmul.mubr.bf16.gmra.mrb[0].mxu0 %v5558
      %v5657 = vpop.f32.mrb[0].mxu0
      %v5658 = vadd.f32 0.0, %v5657
      %v5659 = vpop.f32.mrb[0].mxu0
      %v5660 = vpop.f32.mrb[0].mxu0
      %v5661 = vadd.f32 0.0, %v5660
      %v5662 = vpop.f32.mrb[0].mxu0
      %5663 = vmatprep.mubr.bf16.mxu0 0
      %5664 = vmatmul.mubr.bf16.gmra.mrb[0].mxu0 %v5561
      %v5665 = vpop.f32.mrb[0].mxu0
      %v5666 = vadd.f32 0.0, %v5665
      %v5667 = vpop.f32.mrb[0].mxu0
      %v5668 = vpop.f32.mrb[0].mxu0
      %v5669 = vadd.f32 0.0, %v5668
      %v5670 = vpop.f32.mrb[0].mxu0
      %5671 = vmatprep.mubr.bf16.mxu0 0
      %5672 = vmatmul.mubr.bf16.gmra.mrb[0].mxu0 %v5564
      %v5673 = vpop.f32.mrb[0].mxu0
      %v5674 = vadd.f32 0.0, %v5673
      %v5675 = vpop.f32.mrb[0].mxu0
      %v5676 = vpop.f32.mrb[0].mxu0
      %v5677 = vadd.f32 0.0, %v5676
      %v5678 = vpop.f32.mrb[0].mxu0
      %5679 = vmatprep.mubr.bf16.mxu0 0
      %5680 = vmatmul.mubr.bf16.gmra.mrb[0].mxu0 %v5567
      %v5681 = vpop.f32.mrb[0].mxu0
      %v5682 = vadd.f32 0.0, %v5681
      %v5683 = vpop.f32.mrb[0].mxu0
      %v5684 = vpop.f32.mrb[0].mxu0
      %v5685 = vadd.f32 0.0, %v5684
      %v5686 = vpop.f32.mrb[0].mxu0
      %5687 = vmatprep.mubr.bf16.mxu0 0
      %5688 = vmatmul.mubr.bf16.gmra.mrb[0].mxu0 %v5570
      %v5689 = vpop.f32.mrb[0].mxu0
      %v5690 = vadd.f32 0.0, %v5689
      %v5691 = vpop.f32.mrb[0].mxu0
      %v5692 = vpop.f32.mrb[0].mxu0
      %v5693 = vadd.f32 0.0, %v5692
      %v5694 = vpop.f32.mrb[0].mxu0
      %5695 = vmatprep.mubr.bf16.mxu0 0
      %5696 = vmatmul.mubr.bf16.gmra.mrb[0].mxu0 %v5573
      %v5697 = vpop.f32.mrb[0].mxu0
      %v5698 = vadd.f32 0.0, %v5697
      %v5699 = vpop.f32.mrb[0].mxu0
      %v5700 = vpop.f32.mrb[0].mxu0
      %v5701 = vadd.f32 0.0, %v5700
      %v5702 = vpop.f32.mrb[0].mxu0
      %5703 = vmatprep.mubr.bf16.mxu0 0
      %5704 = vmatmul.mubr.bf16.gmra.mrb[0].mxu0 %v5576
      %v5705 = vpop.f32.mrb[0].mxu0
      %v5706 = vadd.f32 0.0, %v5705
      %v5707 = vpop.f32.mrb[0].mxu0
      %v5708 = vpop.f32.mrb[0].mxu0
      %v5709 = vadd.f32 0.0, %v5708
      %v5710 = vpop.f32.mrb[0].mxu0
      %5711 = vmatprep.mubr.bf16.mxu0 0
      %5712 = vmatmul.mubr.bf16.gmra.mrb[0].mxu0 %v5579
      %v5713 = vpop.f32.mrb[0].mxu0
      %v5714 = vadd.f32 0.0, %v5713
      %v5715 = vpop.f32.mrb[0].mxu0
      %v5716 = vpop.f32.mrb[0].mxu0
      %v5717 = vadd.f32 0.0, %v5716
      %v5718 = vpop.f32.mrb[0].mxu0
      %5719 = vmatprep.mubr.bf16.mxu0 0
      %5720 = vmatmul.mubr.bf16.gmra.mrb[0].mxu0 %v5582
      %v5721 = vpop.f32.mrb[0].mxu0
      %v5722 = vadd.f32 0.0, %v5721
      %v5723 = vpop.f32.mrb[0].mxu0
      %v5724 = vpop.f32.mrb[0].mxu0
      %v5725 = vadd.f32 0.0, %v5724
      %v5726 = vpop.f32.mrb[0].mxu0
      %5727 = vmatprep.mubr.bf16.mxu0 0
      %5728 = vmatmul.mubr.bf16.gmra.mrb[0].mxu0 %v5585
      %v5729 = vpop.f32.mrb[0].mxu0
      %v5730 = vadd.f32 0.0, %v5729
      %v5731 = vpop.f32.mrb[0].mxu0
      %v5732 = vpop.f32.mrb[0].mxu0
      %v5733 = vadd.f32 0.0, %v5732
      %v5734 = vpop.f32.mrb[0].mxu0
      %5735 = vmatprep.mubr.bf16.mxu0 0
      %5736 = vmatmul.mubr.bf16.gmra.mrb[0].mxu0 %v5588
      %v5737 = vpop.f32.mrb[0].mxu0
      %v5738 = vadd.f32 0.0, %v5737
      %v5739 = vpop.f32.mrb[0].mxu0
      %v5740 = vpop.f32.mrb[0].mxu0
      %v5741 = vadd.f32 0.0, %v5740
      %v5742 = vpop.f32.mrb[0].mxu0
      %5743 = vmatprep.mubr.bf16.mxu0 0
      %5744 = vmatmul.mubr.bf16.gmra.mrb[0].mxu0 %v5591
      %v5745 = vpop.f32.mrb[0].mxu0
      %v5746 = vadd.f32 0.0, %v5745
      %v5747 = vpop.f32.mrb[0].mxu0
      %v5748 = vpop.f32.mrb[0].mxu0
      %v5749 = vadd.f32 0.0, %v5748
      %v5750 = vpop.f32.mrb[0].mxu0
      %5751 = vmatprep.mubr.bf16.mxu0 0
      %5752 = vmatmul.mubr.bf16.gmra.mrb[0].mxu0 %v5594
      %v5753 = vpop.f32.mrb[0].mxu0
      %v5754 = vadd.f32 0.0, %v5753
      %v5755 = vpop.f32.mrb[0].mxu0
      %v5756 = vpop.f32.mrb[0].mxu0
      %v5757 = vadd.f32 0.0, %v5756
      %v5758 = vpop.f32.mrb[0].mxu0
      %5759 = vdwg.mxu0
      %v5760 = vadd.f32 %v5466, %v5634
      %v5761 = vadd.f32 %v5467, %v5637
      %v5762 = vadd.f32 %v5468, %v5642
      %v5763 = vadd.f32 %v5469, %v5645
      %v5764 = vadd.f32 %v5470, %v5650
      %v5765 = vadd.f32 %v5471, %v5653
      %v5766 = vadd.f32 %v5472, %v5658
      %v5767 = vadd.f32 %v5473, %v5661
      %v5768 = vadd.f32 %v5474, %v5666
      %v5769 = vadd.f32 %v5475, %v5669
      %v5770 = vadd.f32 %v5476, %v5674
      %v5771 = vadd.f32 %v5477, %v5677
      %v5772 = vadd.f32 %v5478, %v5682
      %v5773 = vadd.f32 %v5479, %v5685
      %v5774 = vadd.f32 %v5480, %v5690
      %v5775 = vadd.f32 %v5481, %v5693
      %v5776 = vadd.f32 %v5482, %v5698
      %v5777 = vadd.f32 %v5483, %v5701
      %v5778 = vadd.f32 %v5484, %v5706
      %v5779 = vadd.f32 %v5485, %v5709
      %v5780 = vadd.f32 %v5486, %v5714
      %v5781 = vadd.f32 %v5487, %v5717
      %v5782 = vadd.f32 %v5488, %v5722
      %v5783 = vadd.f32 %v5489, %v5725
      %v5784 = vadd.f32 %v5490, %v5730
      %v5785 = vadd.f32 %v5491, %v5733
      %v5786 = vadd.f32 %v5492, %v5738
      %v5787 = vadd.f32 %v5493, %v5741
      %v5788 = vadd.f32 %v5494, %v5746
      %v5789 = vadd.f32 %v5495, %v5749
      %v5790 = vadd.f32 %v5496, %v5754
      %v5791 = vadd.f32 %v5497, %v5757
      %v5792 = vld [vmem:[#allocation2 + $0x14] sm:$0xff]
      %v5793 = vld [vmem:[#allocation2 + $0x1c] sm:$0xff]
      %v5794 = vld [vmem:[#allocation2 + $0x24] sm:$0xff]
      %v5795 = vld [vmem:[#allocation2 + $0x2c] sm:$0xff]
      %v5796 = vld [vmem:[#allocation2 + $0x34] sm:$0xff]
      %v5797 = vld [vmem:[#allocation2 + $0x3c] sm:$0xff]
      %v5798 = vld [vmem:[#allocation2 + $0x44] sm:$0xff]
      %v5799 = vld [vmem:[#allocation2 + $0x4c] sm:$0xff]
      %v5800 = vld [vmem:[#allocation2 + $0x54] sm:$0xff]
      %v5801 = vld [vmem:[#allocation2 + $0x5c] sm:$0xff]
      %v5802 = vld [vmem:[#allocation2 + $0x64] sm:$0xff]
      %v5803 = vld [vmem:[#allocation2 + $0x6c] sm:$0xff]
      %v5804 = vld [vmem:[#allocation2 + $0x74] sm:$0xff]
      %v5805 = vld [vmem:[#allocation2 + $0x7c] sm:$0xff]
      %v5806 = vld [vmem:[#allocation2 + $0x84] sm:$0xff]
      %v5807 = vld [vmem:[#allocation2 + $0x8c] sm:$0xff]
      %v5808 = vld [vmem:[#allocation2 + $0x94] sm:$0xff]
      %v5809 = vld [vmem:[#allocation2 + $0x9c] sm:$0xff]
      %v5810 = vld [vmem:[#allocation2 + $0xa4] sm:$0xff]
      %v5811 = vld [vmem:[#allocation2 + $0xac] sm:$0xff]
      %v5812 = vld [vmem:[#allocation2 + $0xb4] sm:$0xff]
      %v5813 = vld [vmem:[#allocation2 + $0xbc] sm:$0xff]
      %v5814 = vld [vmem:[#allocation2 + $0xc4] sm:$0xff]
      %v5815 = vld [vmem:[#allocation2 + $0xcc] sm:$0xff]
      %v5816 = vld [vmem:[#allocation2 + $0xd4] sm:$0xff]
      %v5817 = vld [vmem:[#allocation2 + $0xdc] sm:$0xff]
      %v5818 = vld [vmem:[#allocation2 + $0xe4] sm:$0xff]
      %v5819 = vld [vmem:[#allocation2 + $0xec] sm:$0xff]
      %v5820 = vld [vmem:[#allocation2 + $0xf4] sm:$0xff]
      %v5821 = vld [vmem:[#allocation2 + $0xfc] sm:$0xff]
      %v5822 = vld [vmem:[#allocation2 + $0x104] sm:$0xff]
      %v5823 = vld [vmem:[#allocation2 + $0x10c] sm:$0xff]
      %v5824 = vpack.c.bf16 %v5793, %v5792
      %v5825 = vpack.c.bf16 %v5795, %v5794
      %v5826 = vpack.c.bf16 %v5797, %v5796
      %v5827 = vpack.c.bf16 %v5799, %v5798
      %v5828 = vpack.c.bf16 %v5801, %v5800
      %v5829 = vpack.c.bf16 %v5803, %v5802
      %v5830 = vpack.c.bf16 %v5805, %v5804
      %v5831 = vpack.c.bf16 %v5807, %v5806
      %v5832 = vpack.c.bf16 %v5809, %v5808
      %v5833 = vpack.c.bf16 %v5811, %v5810
      %v5834 = vpack.c.bf16 %v5813, %v5812
      %v5835 = vpack.c.bf16 %v5815, %v5814
      %v5836 = vpack.c.bf16 %v5817, %v5816
      %v5837 = vpack.c.bf16 %v5819, %v5818
      %v5838 = vpack.c.bf16 %v5821, %v5820
      %v5839 = vpack.c.bf16 %v5823, %v5822
      %s5840 = scalar_lea.vmem %s4, 20
      %v5841 = vld [vmem:[%s5840] sm:$0xf]
      %v5843 = vsel %vm307, %v5824, 0
      %v5846 = vsel %vm307, %v5825, 0
      %v5849 = vsel %vm307, %v5826, 0
      %v5852 = vsel %vm307, %v5827, 0
      %v5855 = vsel %vm307, %v5828, 0
      %v5858 = vsel %vm307, %v5829, 0
      %v5861 = vsel %vm307, %v5830, 0
      %v5864 = vsel %vm307, %v5831, 0
      %v5867 = vsel %vm307, %v5832, 0
      %v5870 = vsel %vm307, %v5833, 0
      %v5873 = vsel %vm307, %v5834, 0
      %v5876 = vsel %vm307, %v5835, 0
      %v5879 = vsel %vm307, %v5836, 0
      %v5882 = vsel %vm307, %v5837, 0
      %v5885 = vsel %vm307, %v5838, 0
      %v5888 = vsel %vm307, %v5839, 0
      %v5891 = vsel %vm4533, %v5841, 0
      %5893 = vmatprep.subr.bf16.mxu0 0
      %5894 = vmatpush1.bf16.msra.mxu0 %v5891
      %5895 = vmatprep.subr.bf16.mxu0 0
      %5896 = vmatpush1.bf16.msra.mxu0 0
      %5897 = vmatprep.subr.bf16.mxu0 0
      %5898 = vmatpush1.bf16.msra.mxu0 0
      %5899 = vmatprep.subr.bf16.mxu0 0
      %5900 = vmatpush1.bf16.msra.mxu0 0
      %5901 = vmatprep.subr.bf16.mxu0 0
      %5902 = vmatpush1.bf16.msra.mxu0 0
      %5903 = vmatprep.subr.bf16.mxu0 0
      %5904 = vmatpush1.bf16.msra.mxu0 0
      %5905 = vmatprep.subr.bf16.mxu0 0
      %5906 = vmatpush1.bf16.msra.mxu0 0
      %5907 = vmatprep.subr.bf16.mxu0 0
      %5908 = vmatpush1.bf16.msra.mxu0 0
      %5909 = vmatprep.subr.bf16.mxu0 0
      %5910 = vmatpush1.bf16.msra.mxu0 0
      %5911 = vmatprep.subr.bf16.mxu0 0
      %5912 = vmatpush1.bf16.msra.mxu0 0
      %5913 = vmatprep.subr.bf16.mxu0 0
      %5914 = vmatpush1.bf16.msra.mxu0 0
      %5915 = vmatprep.subr.bf16.mxu0 0
      %5916 = vmatpush1.bf16.msra.mxu0 0
      %5917 = vmatprep.subr.bf16.mxu0 0
      %5918 = vmatpush1.bf16.msra.mxu0 0
      %5919 = vmatprep.subr.bf16.mxu0 0
      %5920 = vmatpush1.bf16.msra.mxu0 0
      %5921 = vmatprep.subr.bf16.mxu0 0
      %5922 = vmatpush1.bf16.msra.mxu0 0
      %5923 = vmatprep.subr.bf16.mxu0 0
      %5924 = vmatpush1.bf16.msra.mxu0 0
      %5925 = vmatprep.mubr.bf16.mxu0 0
      %5926 = vmatmul.mubr.bf16.gmra.mrb[0].mxu0 %v5843
      %v5927 = vpop.f32.mrb[0].mxu0
      %v5928 = vadd.f32 0.0, %v5927
      %v5929 = vpop.f32.mrb[0].mxu0
      %v5930 = vpop.f32.mrb[0].mxu0
      %v5931 = vadd.f32 0.0, %v5930
      %v5932 = vpop.f32.mrb[0].mxu0
      %5933 = vmatprep.mubr.bf16.mxu0 0
      %5934 = vmatmul.mubr.bf16.gmra.mrb[0].mxu0 %v5846
      %v5935 = vpop.f32.mrb[0].mxu0
      %v5936 = vadd.f32 0.0, %v5935
      %v5937 = vpop.f32.mrb[0].mxu0
      %v5938 = vpop.f32.mrb[0].mxu0
      %v5939 = vadd.f32 0.0, %v5938
      %v5940 = vpop.f32.mrb[0].mxu0
      %5941 = vmatprep.mubr.bf16.mxu0 0
      %5942 = vmatmul.mubr.bf16.gmra.mrb[0].mxu0 %v5849
      %v5943 = vpop.f32.mrb[0].mxu0
      %v5944 = vadd.f32 0.0, %v5943
      %v5945 = vpop.f32.mrb[0].mxu0
      %v5946 = vpop.f32.mrb[0].mxu0
      %v5947 = vadd.f32 0.0, %v5946
      %v5948 = vpop.f32.mrb[0].mxu0
      %5949 = vmatprep.mubr.bf16.mxu0 0
      %5950 = vmatmul.mubr.bf16.gmra.mrb[0].mxu0 %v5852
      %v5951 = vpop.f32.mrb[0].mxu0
      %v5952 = vadd.f32 0.0, %v5951
      %v5953 = vpop.f32.mrb[0].mxu0
      %v5954 = vpop.f32.mrb[0].mxu0
      %v5955 = vadd.f32 0.0, %v5954
      %v5956 = vpop.f32.mrb[0].mxu0
      %5957 = vmatprep.mubr.bf16.mxu0 0
      %5958 = vmatmul.mubr.bf16.gmra.mrb[0].mxu0 %v5855
      %v5959 = vpop.f32.mrb[0].mxu0
      %v5960 = vadd.f32 0.0, %v5959
      %v5961 = vpop.f32.mrb[0].mxu0
      %v5962 = vpop.f32.mrb[0].mxu0
      %v5963 = vadd.f32 0.0, %v5962
      %v5964 = vpop.f32.mrb[0].mxu0
      %5965 = vmatprep.mubr.bf16.mxu0 0
      %5966 = vmatmul.mubr.bf16.gmra.mrb[0].mxu0 %v5858
      %v5967 = vpop.f32.mrb[0].mxu0
      %v5968 = vadd.f32 0.0, %v5967
      %v5969 = vpop.f32.mrb[0].mxu0
      %v5970 = vpop.f32.mrb[0].mxu0
      %v5971 = vadd.f32 0.0, %v5970
      %v5972 = vpop.f32.mrb[0].mxu0
      %5973 = vmatprep.mubr.bf16.mxu0 0
      %5974 = vmatmul.mubr.bf16.gmra.mrb[0].mxu0 %v5861
      %v5975 = vpop.f32.mrb[0].mxu0
      %v5976 = vadd.f32 0.0, %v5975
      %v5977 = vpop.f32.mrb[0].mxu0
      %v5978 = vpop.f32.mrb[0].mxu0
      %v5979 = vadd.f32 0.0, %v5978
      %v5980 = vpop.f32.mrb[0].mxu0
      %5981 = vmatprep.mubr.bf16.mxu0 0
      %5982 = vmatmul.mubr.bf16.gmra.mrb[0].mxu0 %v5864
      %v5983 = vpop.f32.mrb[0].mxu0
      %v5984 = vadd.f32 0.0, %v5983
      %v5985 = vpop.f32.mrb[0].mxu0
      %v5986 = vpop.f32.mrb[0].mxu0
      %v5987 = vadd.f32 0.0, %v5986
      %v5988 = vpop.f32.mrb[0].mxu0
      %5989 = vmatprep.mubr.bf16.mxu0 0
      %5990 = vmatmul.mubr.bf16.gmra.mrb[0].mxu0 %v5867
      %v5991 = vpop.f32.mrb[0].mxu0
      %v5992 = vadd.f32 0.0, %v5991
      %v5993 = vpop.f32.mrb[0].mxu0
      %v5994 = vpop.f32.mrb[0].mxu0
      %v5995 = vadd.f32 0.0, %v5994
      %v5996 = vpop.f32.mrb[0].mxu0
      %5997 = vmatprep.mubr.bf16.mxu0 0
      %5998 = vmatmul.mubr.bf16.gmra.mrb[0].mxu0 %v5870
      %v5999 = vpop.f32.mrb[0].mxu0
      %v6000 = vadd.f32 0.0, %v5999
      %v6001 = vpop.f32.mrb[0].mxu0
      %v6002 = vpop.f32.mrb[0].mxu0
      %v6003 = vadd.f32 0.0, %v6002
      %v6004 = vpop.f32.mrb[0].mxu0
      %6005 = vmatprep.mubr.bf16.mxu0 0
      %6006 = vmatmul.mubr.bf16.gmra.mrb[0].mxu0 %v5873
      %v6007 = vpop.f32.mrb[0].mxu0
      %v6008 = vadd.f32 0.0, %v6007
      %v6009 = vpop.f32.mrb[0].mxu0
      %v6010 = vpop.f32.mrb[0].mxu0
      %v6011 = vadd.f32 0.0, %v6010
      %v6012 = vpop.f32.mrb[0].mxu0
      %6013 = vmatprep.mubr.bf16.mxu0 0
      %6014 = vmatmul.mubr.bf16.gmra.mrb[0].mxu0 %v5876
      %v6015 = vpop.f32.mrb[0].mxu0
      %v6016 = vadd.f32 0.0, %v6015
      %v6017 = vpop.f32.mrb[0].mxu0
      %v6018 = vpop.f32.mrb[0].mxu0
      %v6019 = vadd.f32 0.0, %v6018
      %v6020 = vpop.f32.mrb[0].mxu0
      %6021 = vmatprep.mubr.bf16.mxu0 0
      %6022 = vmatmul.mubr.bf16.gmra.mrb[0].mxu0 %v5879
      %v6023 = vpop.f32.mrb[0].mxu0
      %v6024 = vadd.f32 0.0, %v6023
      %v6025 = vpop.f32.mrb[0].mxu0
      %v6026 = vpop.f32.mrb[0].mxu0
      %v6027 = vadd.f32 0.0, %v6026
      %v6028 = vpop.f32.mrb[0].mxu0
      %6029 = vmatprep.mubr.bf16.mxu0 0
      %6030 = vmatmul.mubr.bf16.gmra.mrb[0].mxu0 %v5882
      %v6031 = vpop.f32.mrb[0].mxu0
      %v6032 = vadd.f32 0.0, %v6031
      %v6033 = vpop.f32.mrb[0].mxu0
      %v6034 = vpop.f32.mrb[0].mxu0
      %v6035 = vadd.f32 0.0, %v6034
      %v6036 = vpop.f32.mrb[0].mxu0
      %6037 = vmatprep.mubr.bf16.mxu0 0
      %6038 = vmatmul.mubr.bf16.gmra.mrb[0].mxu0 %v5885
      %v6039 = vpop.f32.mrb[0].mxu0
      %v6040 = vadd.f32 0.0, %v6039
      %v6041 = vpop.f32.mrb[0].mxu0
      %v6042 = vpop.f32.mrb[0].mxu0
      %v6043 = vadd.f32 0.0, %v6042
      %v6044 = vpop.f32.mrb[0].mxu0
      %6045 = vmatprep.mubr.bf16.mxu0 0
      %6046 = vmatmul.mubr.bf16.gmra.mrb[0].mxu0 %v5888
      %v6047 = vpop.f32.mrb[0].mxu0
      %v6048 = vadd.f32 0.0, %v6047
      %v6049 = vpop.f32.mrb[0].mxu0
      %v6050 = vpop.f32.mrb[0].mxu0
      %v6051 = vadd.f32 0.0, %v6050
      %v6052 = vpop.f32.mrb[0].mxu0
      %6053 = vdwg.mxu0
      %v6054 = vadd.f32 %v5760, %v5928
      %v6055 = vadd.f32 %v5761, %v5931
      %v6056 = vadd.f32 %v5762, %v5936
      %v6057 = vadd.f32 %v5763, %v5939
      %v6058 = vadd.f32 %v5764, %v5944
      %v6059 = vadd.f32 %v5765, %v5947
      %v6060 = vadd.f32 %v5766, %v5952
      %v6061 = vadd.f32 %v5767, %v5955
      %v6062 = vadd.f32 %v5768, %v5960
      %v6063 = vadd.f32 %v5769, %v5963
      %v6064 = vadd.f32 %v5770, %v5968
      %v6065 = vadd.f32 %v5771, %v5971
      %v6066 = vadd.f32 %v5772, %v5976
      %v6067 = vadd.f32 %v5773, %v5979
      %v6068 = vadd.f32 %v5774, %v5984
      %v6069 = vadd.f32 %v5775, %v5987
      %v6070 = vadd.f32 %v5776, %v5992
      %v6071 = vadd.f32 %v5777, %v5995
      %v6072 = vadd.f32 %v5778, %v6000
      %v6073 = vadd.f32 %v5779, %v6003
      %v6074 = vadd.f32 %v5780, %v6008
      %v6075 = vadd.f32 %v5781, %v6011
      %v6076 = vadd.f32 %v5782, %v6016
      %v6077 = vadd.f32 %v5783, %v6019
      %v6078 = vadd.f32 %v5784, %v6024
      %v6079 = vadd.f32 %v5785, %v6027
      %v6080 = vadd.f32 %v5786, %v6032
      %v6081 = vadd.f32 %v5787, %v6035
      %v6082 = vadd.f32 %v5788, %v6040
      %v6083 = vadd.f32 %v5789, %v6043
      %v6084 = vadd.f32 %v5790, %v6048
      %v6085 = vadd.f32 %v5791, %v6051
      %v6086 = vld [vmem:[#allocation2 + $0x24] sm:$0xff]
      %v6087 = vld [vmem:[#allocation2 + $0x2c] sm:$0xff]
      %v6088 = vld [vmem:[#allocation2 + $0x34] sm:$0xff]
      %v6089 = vld [vmem:[#allocation2 + $0x3c] sm:$0xff]
      %v6090 = vld [vmem:[#allocation2 + $0x44] sm:$0xff]
      %v6091 = vld [vmem:[#allocation2 + $0x4c] sm:$0xff]
      %v6092 = vld [vmem:[#allocation2 + $0x54] sm:$0xff]
      %v6093 = vld [vmem:[#allocation2 + $0x5c] sm:$0xff]
      %v6094 = vld [vmem:[#allocation2 + $0x64] sm:$0xff]
      %v6095 = vld [vmem:[#allocation2 + $0x6c] sm:$0xff]
      %v6096 = vld [vmem:[#allocation2 + $0x74] sm:$0xff]
      %v6097 = vld [vmem:[#allocation2 + $0x7c] sm:$0xff]
      %v6098 = vld [vmem:[#allocation2 + $0x84] sm:$0xff]
      %v6099 = vld [vmem:[#allocation2 + $0x8c] sm:$0xff]
      %v6100 = vld [vmem:[#allocation2 + $0x94] sm:$0xff]
      %v6101 = vld [vmem:[#allocation2 + $0x9c] sm:$0xff]
      %v6102 = vld [vmem:[#allocation2 + $0xa4] sm:$0xff]
      %v6103 = vld [vmem:[#allocation2 + $0xac] sm:$0xff]
      %v6104 = vld [vmem:[#allocation2 + $0xb4] sm:$0xff]
      %v6105 = vld [vmem:[#allocation2 + $0xbc] sm:$0xff]
      %v6106 = vld [vmem:[#allocation2 + $0xc4] sm:$0xff]
      %v6107 = vld [vmem:[#allocation2 + $0xcc] sm:$0xff]
      %v6108 = vld [vmem:[#allocation2 + $0xd4] sm:$0xff]
      %v6109 = vld [vmem:[#allocation2 + $0xdc] sm:$0xff]
      %v6110 = vld [vmem:[#allocation2 + $0xe4] sm:$0xff]
      %v6111 = vld [vmem:[#allocation2 + $0xec] sm:$0xff]
      %v6112 = vld [vmem:[#allocation2 + $0xf4] sm:$0xff]
      %v6113 = vld [vmem:[#allocation2 + $0xfc] sm:$0xff]
      %v6114 = vld [vmem:[#allocation2 + $0x104] sm:$0xff]
      %v6115 = vld [vmem:[#allocation2 + $0x10c] sm:$0xff]
      %v6116 = vld [vmem:[#allocation2 + $0x114] sm:$0xff]
      %v6117 = vld [vmem:[#allocation2 + $0x11c] sm:$0xff]
      %v6118 = vpack.c.bf16 %v6087, %v6086
      %v6119 = vpack.c.bf16 %v6089, %v6088
      %v6120 = vpack.c.bf16 %v6091, %v6090
      %v6121 = vpack.c.bf16 %v6093, %v6092
      %v6122 = vpack.c.bf16 %v6095, %v6094
      %v6123 = vpack.c.bf16 %v6097, %v6096
      %v6124 = vpack.c.bf16 %v6099, %v6098
      %v6125 = vpack.c.bf16 %v6101, %v6100
      %v6126 = vpack.c.bf16 %v6103, %v6102
      %v6127 = vpack.c.bf16 %v6105, %v6104
      %v6128 = vpack.c.bf16 %v6107, %v6106
      %v6129 = vpack.c.bf16 %v6109, %v6108
      %v6130 = vpack.c.bf16 %v6111, %v6110
      %v6131 = vpack.c.bf16 %v6113, %v6112
      %v6132 = vpack.c.bf16 %v6115, %v6114
      %v6133 = vpack.c.bf16 %v6117, %v6116
      %s6134 = scalar_lea.vmem %s4, 24
      %v6135 = vld [vmem:[%s6134] sm:$0xf]
      %v6137 = vsel %vm307, %v6118, 0
      %v6140 = vsel %vm307, %v6119, 0
      %v6143 = vsel %vm307, %v6120, 0
      %v6146 = vsel %vm307, %v6121, 0
      %v6149 = vsel %vm307, %v6122, 0
      %v6152 = vsel %vm307, %v6123, 0
      %v6155 = vsel %vm307, %v6124, 0
      %v6158 = vsel %vm307, %v6125, 0
      %v6161 = vsel %vm307, %v6126, 0
      %v6164 = vsel %vm307, %v6127, 0
      %v6167 = vsel %vm307, %v6128, 0
      %v6170 = vsel %vm307, %v6129, 0
      %v6173 = vsel %vm307, %v6130, 0
      %v6176 = vsel %vm307, %v6131, 0
      %v6179 = vsel %vm307, %v6132, 0
      %v6182 = vsel %vm307, %v6133, 0
      %v6185 = vsel %vm4533, %v6135, 0
      %6187 = vmatprep.subr.bf16.mxu0 0
      %6188 = vmatpush1.bf16.msra.mxu0 %v6185
      %6189 = vmatprep.subr.bf16.mxu0 0
      %6190 = vmatpush1.bf16.msra.mxu0 0
      %6191 = vmatprep.subr.bf16.mxu0 0
      %6192 = vmatpush1.bf16.msra.mxu0 0
      %6193 = vmatprep.subr.bf16.mxu0 0
      %6194 = vmatpush1.bf16.msra.mxu0 0
      %6195 = vmatprep.subr.bf16.mxu0 0
      %6196 = vmatpush1.bf16.msra.mxu0 0
      %6197 = vmatprep.subr.bf16.mxu0 0
      %6198 = vmatpush1.bf16.msra.mxu0 0
      %6199 = vmatprep.subr.bf16.mxu0 0
      %6200 = vmatpush1.bf16.msra.mxu0 0
      %6201 = vmatprep.subr.bf16.mxu0 0
      %6202 = vmatpush1.bf16.msra.mxu0 0
      %6203 = vmatprep.subr.bf16.mxu0 0
      %6204 = vmatpush1.bf16.msra.mxu0 0
      %6205 = vmatprep.subr.bf16.mxu0 0
      %6206 = vmatpush1.bf16.msra.mxu0 0
      %6207 = vmatprep.subr.bf16.mxu0 0
      %6208 = vmatpush1.bf16.msra.mxu0 0
      %6209 = vmatprep.subr.bf16.mxu0 0
      %6210 = vmatpush1.bf16.msra.mxu0 0
      %6211 = vmatprep.subr.bf16.mxu0 0
      %6212 = vmatpush1.bf16.msra.mxu0 0
      %6213 = vmatprep.subr.bf16.mxu0 0
      %6214 = vmatpush1.bf16.msra.mxu0 0
      %6215 = vmatprep.subr.bf16.mxu0 0
      %6216 = vmatpush1.bf16.msra.mxu0 0
      %6217 = vmatprep.subr.bf16.mxu0 0
      %6218 = vmatpush1.bf16.msra.mxu0 0
      %6219 = vmatprep.mubr.bf16.mxu0 0
      %6220 = vmatmul.mubr.bf16.gmra.mrb[0].mxu0 %v6137
      %v6221 = vpop.f32.mrb[0].mxu0
      %v6222 = vadd.f32 0.0, %v6221
      %v6223 = vpop.f32.mrb[0].mxu0
      %v6224 = vpop.f32.mrb[0].mxu0
      %v6225 = vadd.f32 0.0, %v6224
      %v6226 = vpop.f32.mrb[0].mxu0
      %6227 = vmatprep.mubr.bf16.mxu0 0
      %6228 = vmatmul.mubr.bf16.gmra.mrb[0].mxu0 %v6140
      %v6229 = vpop.f32.mrb[0].mxu0
      %v6230 = vadd.f32 0.0, %v6229
      %v6231 = vpop.f32.mrb[0].mxu0
      %v6232 = vpop.f32.mrb[0].mxu0
      %v6233 = vadd.f32 0.0, %v6232
      %v6234 = vpop.f32.mrb[0].mxu0
      %6235 = vmatprep.mubr.bf16.mxu0 0
      %6236 = vmatmul.mubr.bf16.gmra.mrb[0].mxu0 %v6143
      %v6237 = vpop.f32.mrb[0].mxu0
      %v6238 = vadd.f32 0.0, %v6237
      %v6239 = vpop.f32.mrb[0].mxu0
      %v6240 = vpop.f32.mrb[0].mxu0
      %v6241 = vadd.f32 0.0, %v6240
      %v6242 = vpop.f32.mrb[0].mxu0
      %6243 = vmatprep.mubr.bf16.mxu0 0
      %6244 = vmatmul.mubr.bf16.gmra.mrb[0].mxu0 %v6146
      %v6245 = vpop.f32.mrb[0].mxu0
      %v6246 = vadd.f32 0.0, %v6245
      %v6247 = vpop.f32.mrb[0].mxu0
      %v6248 = vpop.f32.mrb[0].mxu0
      %v6249 = vadd.f32 0.0, %v6248
      %v6250 = vpop.f32.mrb[0].mxu0
      %6251 = vmatprep.mubr.bf16.mxu0 0
      %6252 = vmatmul.mubr.bf16.gmra.mrb[0].mxu0 %v6149
      %v6253 = vpop.f32.mrb[0].mxu0
      %v6254 = vadd.f32 0.0, %v6253
      %v6255 = vpop.f32.mrb[0].mxu0
      %v6256 = vpop.f32.mrb[0].mxu0
      %v6257 = vadd.f32 0.0, %v6256
      %v6258 = vpop.f32.mrb[0].mxu0
      %6259 = vmatprep.mubr.bf16.mxu0 0
      %6260 = vmatmul.mubr.bf16.gmra.mrb[0].mxu0 %v6152
      %v6261 = vpop.f32.mrb[0].mxu0
      %v6262 = vadd.f32 0.0, %v6261
      %v6263 = vpop.f32.mrb[0].mxu0
      %v6264 = vpop.f32.mrb[0].mxu0
      %v6265 = vadd.f32 0.0, %v6264
      %v6266 = vpop.f32.mrb[0].mxu0
      %6267 = vmatprep.mubr.bf16.mxu0 0
      %6268 = vmatmul.mubr.bf16.gmra.mrb[0].mxu0 %v6155
      %v6269 = vpop.f32.mrb[0].mxu0
      %v6270 = vadd.f32 0.0, %v6269
      %v6271 = vpop.f32.mrb[0].mxu0
      %v6272 = vpop.f32.mrb[0].mxu0
      %v6273 = vadd.f32 0.0, %v6272
      %v6274 = vpop.f32.mrb[0].mxu0
      %6275 = vmatprep.mubr.bf16.mxu0 0
      %6276 = vmatmul.mubr.bf16.gmra.mrb[0].mxu0 %v6158
      %v6277 = vpop.f32.mrb[0].mxu0
      %v6278 = vadd.f32 0.0, %v6277
      %v6279 = vpop.f32.mrb[0].mxu0
      %v6280 = vpop.f32.mrb[0].mxu0
      %v6281 = vadd.f32 0.0, %v6280
      %v6282 = vpop.f32.mrb[0].mxu0
      %6283 = vmatprep.mubr.bf16.mxu0 0
      %6284 = vmatmul.mubr.bf16.gmra.mrb[0].mxu0 %v6161
      %v6285 = vpop.f32.mrb[0].mxu0
      %v6286 = vadd.f32 0.0, %v6285
      %v6287 = vpop.f32.mrb[0].mxu0
      %v6288 = vpop.f32.mrb[0].mxu0
      %v6289 = vadd.f32 0.0, %v6288
      %v6290 = vpop.f32.mrb[0].mxu0
      %6291 = vmatprep.mubr.bf16.mxu0 0
      %6292 = vmatmul.mubr.bf16.gmra.mrb[0].mxu0 %v6164
      %v6293 = vpop.f32.mrb[0].mxu0
      %v6294 = vadd.f32 0.0, %v6293
      %v6295 = vpop.f32.mrb[0].mxu0
      %v6296 = vpop.f32.mrb[0].mxu0
      %v6297 = vadd.f32 0.0, %v6296
      %v6298 = vpop.f32.mrb[0].mxu0
      %6299 = vmatprep.mubr.bf16.mxu0 0
      %6300 = vmatmul.mubr.bf16.gmra.mrb[0].mxu0 %v6167
      %v6301 = vpop.f32.mrb[0].mxu0
      %v6302 = vadd.f32 0.0, %v6301
      %v6303 = vpop.f32.mrb[0].mxu0
      %v6304 = vpop.f32.mrb[0].mxu0
      %v6305 = vadd.f32 0.0, %v6304
      %v6306 = vpop.f32.mrb[0].mxu0
      %6307 = vmatprep.mubr.bf16.mxu0 0
      %6308 = vmatmul.mubr.bf16.gmra.mrb[0].mxu0 %v6170
      %v6309 = vpop.f32.mrb[0].mxu0
      %v6310 = vadd.f32 0.0, %v6309
      %v6311 = vpop.f32.mrb[0].mxu0
      %v6312 = vpop.f32.mrb[0].mxu0
      %v6313 = vadd.f32 0.0, %v6312
      %v6314 = vpop.f32.mrb[0].mxu0
      %6315 = vmatprep.mubr.bf16.mxu0 0
      %6316 = vmatmul.mubr.bf16.gmra.mrb[0].mxu0 %v6173
      %v6317 = vpop.f32.mrb[0].mxu0
      %v6318 = vadd.f32 0.0, %v6317
      %v6319 = vpop.f32.mrb[0].mxu0
      %v6320 = vpop.f32.mrb[0].mxu0
      %v6321 = vadd.f32 0.0, %v6320
      %v6322 = vpop.f32.mrb[0].mxu0
      %6323 = vmatprep.mubr.bf16.mxu0 0
      %6324 = vmatmul.mubr.bf16.gmra.mrb[0].mxu0 %v6176
      %v6325 = vpop.f32.mrb[0].mxu0
      %v6326 = vadd.f32 0.0, %v6325
      %v6327 = vpop.f32.mrb[0].mxu0
      %v6328 = vpop.f32.mrb[0].mxu0
      %v6329 = vadd.f32 0.0, %v6328
      %v6330 = vpop.f32.mrb[0].mxu0
      %6331 = vmatprep.mubr.bf16.mxu0 0
      %6332 = vmatmul.mubr.bf16.gmra.mrb[0].mxu0 %v6179
      %v6333 = vpop.f32.mrb[0].mxu0
      %v6334 = vadd.f32 0.0, %v6333
      %v6335 = vpop.f32.mrb[0].mxu0
      %v6336 = vpop.f32.mrb[0].mxu0
      %v6337 = vadd.f32 0.0, %v6336
      %v6338 = vpop.f32.mrb[0].mxu0
      %6339 = vmatprep.mubr.bf16.mxu0 0
      %6340 = vmatmul.mubr.bf16.gmra.mrb[0].mxu0 %v6182
      %v6341 = vpop.f32.mrb[0].mxu0
      %v6342 = vadd.f32 0.0, %v6341
      %v6343 = vpop.f32.mrb[0].mxu0
      %v6344 = vpop.f32.mrb[0].mxu0
      %v6345 = vadd.f32 0.0, %v6344
      %v6346 = vpop.f32.mrb[0].mxu0
      %6347 = vdwg.mxu0
      %v6348 = vadd.f32 %v6054, %v6222
      %v6349 = vadd.f32 %v6055, %v6225
      %v6350 = vadd.f32 %v6056, %v6230
      %v6351 = vadd.f32 %v6057, %v6233
      %v6352 = vadd.f32 %v6058, %v6238
      %v6353 = vadd.f32 %v6059, %v6241
      %v6354 = vadd.f32 %v6060, %v6246
      %v6355 = vadd.f32 %v6061, %v6249
      %v6356 = vadd.f32 %v6062, %v6254
      %v6357 = vadd.f32 %v6063, %v6257
      %v6358 = vadd.f32 %v6064, %v6262
      %v6359 = vadd.f32 %v6065, %v6265
      %v6360 = vadd.f32 %v6066, %v6270
      %v6361 = vadd.f32 %v6067, %v6273
      %v6362 = vadd.f32 %v6068, %v6278
      %v6363 = vadd.f32 %v6069, %v6281
      %v6364 = vadd.f32 %v6070, %v6286
      %v6365 = vadd.f32 %v6071, %v6289
      %v6366 = vadd.f32 %v6072, %v6294
      %v6367 = vadd.f32 %v6073, %v6297
      %v6368 = vadd.f32 %v6074, %v6302
      %v6369 = vadd.f32 %v6075, %v6305
      %v6370 = vadd.f32 %v6076, %v6310
      %v6371 = vadd.f32 %v6077, %v6313
      %v6372 = vadd.f32 %v6078, %v6318
      %v6373 = vadd.f32 %v6079, %v6321
      %v6374 = vadd.f32 %v6080, %v6326
      %v6375 = vadd.f32 %v6081, %v6329
      %v6376 = vadd.f32 %v6082, %v6334
      %v6377 = vadd.f32 %v6083, %v6337
      %v6378 = vadd.f32 %v6084, %v6342
      %v6379 = vadd.f32 %v6085, %v6345
      %v6380 = vld [vmem:[#allocation2 + $0x25] sm:$0xff]
      %v6381 = vld [vmem:[#allocation2 + $0x2d] sm:$0xff]
      %v6382 = vld [vmem:[#allocation2 + $0x35] sm:$0xff]
      %v6383 = vld [vmem:[#allocation2 + $0x3d] sm:$0xff]
      %v6384 = vld [vmem:[#allocation2 + $0x45] sm:$0xff]
      %v6385 = vld [vmem:[#allocation2 + $0x4d] sm:$0xff]
      %v6386 = vld [vmem:[#allocation2 + $0x55] sm:$0xff]
      %v6387 = vld [vmem:[#allocation2 + $0x5d] sm:$0xff]
      %v6388 = vld [vmem:[#allocation2 + $0x65] sm:$0xff]
      %v6389 = vld [vmem:[#allocation2 + $0x6d] sm:$0xff]
      %v6390 = vld [vmem:[#allocation2 + $0x75] sm:$0xff]
      %v6391 = vld [vmem:[#allocation2 + $0x7d] sm:$0xff]
      %v6392 = vld [vmem:[#allocation2 + $0x85] sm:$0xff]
      %v6393 = vld [vmem:[#allocation2 + $0x8d] sm:$0xff]
      %v6394 = vld [vmem:[#allocation2 + $0x95] sm:$0xff]
      %v6395 = vld [vmem:[#allocation2 + $0x9d] sm:$0xff]
      %v6396 = vld [vmem:[#allocation2 + $0xa5] sm:$0xff]
      %v6397 = vld [vmem:[#allocation2 + $0xad] sm:$0xff]
      %v6398 = vld [vmem:[#allocation2 + $0xb5] sm:$0xff]
      %v6399 = vld [vmem:[#allocation2 + $0xbd] sm:$0xff]
      %v6400 = vld [vmem:[#allocation2 + $0xc5] sm:$0xff]
      %v6401 = vld [vmem:[#allocation2 + $0xcd] sm:$0xff]
      %v6402 = vld [vmem:[#allocation2 + $0xd5] sm:$0xff]
      %v6403 = vld [vmem:[#allocation2 + $0xdd] sm:$0xff]
      %v6404 = vld [vmem:[#allocation2 + $0xe5] sm:$0xff]
      %v6405 = vld [vmem:[#allocation2 + $0xed] sm:$0xff]
      %v6406 = vld [vmem:[#allocation2 + $0xf5] sm:$0xff]
      %v6407 = vld [vmem:[#allocation2 + $0xfd] sm:$0xff]
      %v6408 = vld [vmem:[#allocation2 + $0x105] sm:$0xff]
      %v6409 = vld [vmem:[#allocation2 + $0x10d] sm:$0xff]
      %v6410 = vld [vmem:[#allocation2 + $0x115] sm:$0xff]
      %v6411 = vld [vmem:[#allocation2 + $0x11d] sm:$0xff]
      %v6412 = vpack.c.bf16 %v6381, %v6380
      %v6413 = vpack.c.bf16 %v6383, %v6382
      %v6414 = vpack.c.bf16 %v6385, %v6384
      %v6415 = vpack.c.bf16 %v6387, %v6386
      %v6416 = vpack.c.bf16 %v6389, %v6388
      %v6417 = vpack.c.bf16 %v6391, %v6390
      %v6418 = vpack.c.bf16 %v6393, %v6392
      %v6419 = vpack.c.bf16 %v6395, %v6394
      %v6420 = vpack.c.bf16 %v6397, %v6396
      %v6421 = vpack.c.bf16 %v6399, %v6398
      %v6422 = vpack.c.bf16 %v6401, %v6400
      %v6423 = vpack.c.bf16 %v6403, %v6402
      %v6424 = vpack.c.bf16 %v6405, %v6404
      %v6425 = vpack.c.bf16 %v6407, %v6406
      %v6426 = vpack.c.bf16 %v6409, %v6408
      %v6427 = vpack.c.bf16 %v6411, %v6410
      %s6428 = scalar_lea.vmem %s4, 28
      %v6429 = vld [vmem:[%s6428] sm:$0xf]
      %v6431 = vsel %vm307, %v6412, 0
      %v6434 = vsel %vm307, %v6413, 0
      %v6437 = vsel %vm307, %v6414, 0
      %v6440 = vsel %vm307, %v6415, 0
      %v6443 = vsel %vm307, %v6416, 0
      %v6446 = vsel %vm307, %v6417, 0
      %v6449 = vsel %vm307, %v6418, 0
      %v6452 = vsel %vm307, %v6419, 0
      %v6455 = vsel %vm307, %v6420, 0
      %v6458 = vsel %vm307, %v6421, 0
      %v6461 = vsel %vm307, %v6422, 0
      %v6464 = vsel %vm307, %v6423, 0
      %v6467 = vsel %vm307, %v6424, 0
      %v6470 = vsel %vm307, %v6425, 0
      %v6473 = vsel %vm307, %v6426, 0
      %v6476 = vsel %vm307, %v6427, 0
      %v6479 = vsel %vm4533, %v6429, 0
      %6481 = vmatprep.subr.bf16.mxu0 0
      %6482 = vmatpush1.bf16.msra.mxu0 %v6479
      %6483 = vmatprep.subr.bf16.mxu0 0
      %6484 = vmatpush1.bf16.msra.mxu0 0
      %6485 = vmatprep.subr.bf16.mxu0 0
      %6486 = vmatpush1.bf16.msra.mxu0 0
      %6487 = vmatprep.subr.bf16.mxu0 0
      %6488 = vmatpush1.bf16.msra.mxu0 0
      %6489 = vmatprep.subr.bf16.mxu0 0
      %6490 = vmatpush1.bf16.msra.mxu0 0
      %6491 = vmatprep.subr.bf16.mxu0 0
      %6492 = vmatpush1.bf16.msra.mxu0 0
      %6493 = vmatprep.subr.bf16.mxu0 0
      %6494 = vmatpush1.bf16.msra.mxu0 0
      %6495 = vmatprep.subr.bf16.mxu0 0
      %6496 = vmatpush1.bf16.msra.mxu0 0
      %6497 = vmatprep.subr.bf16.mxu0 0
      %6498 = vmatpush1.bf16.msra.mxu0 0
      %6499 = vmatprep.subr.bf16.mxu0 0
      %6500 = vmatpush1.bf16.msra.mxu0 0
      %6501 = vmatprep.subr.bf16.mxu0 0
      %6502 = vmatpush1.bf16.msra.mxu0 0
      %6503 = vmatprep.subr.bf16.mxu0 0
      %6504 = vmatpush1.bf16.msra.mxu0 0
      %6505 = vmatprep.subr.bf16.mxu0 0
      %6506 = vmatpush1.bf16.msra.mxu0 0
      %6507 = vmatprep.subr.bf16.mxu0 0
      %6508 = vmatpush1.bf16.msra.mxu0 0
      %6509 = vmatprep.subr.bf16.mxu0 0
      %6510 = vmatpush1.bf16.msra.mxu0 0
      %6511 = vmatprep.subr.bf16.mxu0 0
      %6512 = vmatpush1.bf16.msra.mxu0 0
      %6513 = vmatprep.mubr.bf16.mxu0 0
      %6514 = vmatmul.mubr.bf16.gmra.mrb[0].mxu0 %v6431
      %v6515 = vpop.f32.mrb[0].mxu0
      %v6516 = vadd.f32 0.0, %v6515
      %v6517 = vpop.f32.mrb[0].mxu0
      %v6518 = vpop.f32.mrb[0].mxu0
      %v6519 = vadd.f32 0.0, %v6518
      %v6520 = vpop.f32.mrb[0].mxu0
      %6521 = vmatprep.mubr.bf16.mxu0 0
      %6522 = vmatmul.mubr.bf16.gmra.mrb[0].mxu0 %v6434
      %v6523 = vpop.f32.mrb[0].mxu0
      %v6524 = vadd.f32 0.0, %v6523
      %v6525 = vpop.f32.mrb[0].mxu0
      %v6526 = vpop.f32.mrb[0].mxu0
      %v6527 = vadd.f32 0.0, %v6526
      %v6528 = vpop.f32.mrb[0].mxu0
      %6529 = vmatprep.mubr.bf16.mxu0 0
      %6530 = vmatmul.mubr.bf16.gmra.mrb[0].mxu0 %v6437
      %v6531 = vpop.f32.mrb[0].mxu0
      %v6532 = vadd.f32 0.0, %v6531
      %v6533 = vpop.f32.mrb[0].mxu0
      %v6534 = vpop.f32.mrb[0].mxu0
      %v6535 = vadd.f32 0.0, %v6534
      %v6536 = vpop.f32.mrb[0].mxu0
      %6537 = vmatprep.mubr.bf16.mxu0 0
      %6538 = vmatmul.mubr.bf16.gmra.mrb[0].mxu0 %v6440
      %v6539 = vpop.f32.mrb[0].mxu0
      %v6540 = vadd.f32 0.0, %v6539
      %v6541 = vpop.f32.mrb[0].mxu0
      %v6542 = vpop.f32.mrb[0].mxu0
      %v6543 = vadd.f32 0.0, %v6542
      %v6544 = vpop.f32.mrb[0].mxu0
      %6545 = vmatprep.mubr.bf16.mxu0 0
      %6546 = vmatmul.mubr.bf16.gmra.mrb[0].mxu0 %v6443
      %v6547 = vpop.f32.mrb[0].mxu0
      %v6548 = vadd.f32 0.0, %v6547
      %v6549 = vpop.f32.mrb[0].mxu0
      %v6550 = vpop.f32.mrb[0].mxu0
      %v6551 = vadd.f32 0.0, %v6550
      %v6552 = vpop.f32.mrb[0].mxu0
      %6553 = vmatprep.mubr.bf16.mxu0 0
      %6554 = vmatmul.mubr.bf16.gmra.mrb[0].mxu0 %v6446
      %v6555 = vpop.f32.mrb[0].mxu0
      %v6556 = vadd.f32 0.0, %v6555
      %v6557 = vpop.f32.mrb[0].mxu0
      %v6558 = vpop.f32.mrb[0].mxu0
      %v6559 = vadd.f32 0.0, %v6558
      %v6560 = vpop.f32.mrb[0].mxu0
      %6561 = vmatprep.mubr.bf16.mxu0 0
      %6562 = vmatmul.mubr.bf16.gmra.mrb[0].mxu0 %v6449
      %v6563 = vpop.f32.mrb[0].mxu0
      %v6564 = vadd.f32 0.0, %v6563
      %v6565 = vpop.f32.mrb[0].mxu0
      %v6566 = vpop.f32.mrb[0].mxu0
      %v6567 = vadd.f32 0.0, %v6566
      %v6568 = vpop.f32.mrb[0].mxu0
      %6569 = vmatprep.mubr.bf16.mxu0 0
      %6570 = vmatmul.mubr.bf16.gmra.mrb[0].mxu0 %v6452
      %v6571 = vpop.f32.mrb[0].mxu0
      %v6572 = vadd.f32 0.0, %v6571
      %v6573 = vpop.f32.mrb[0].mxu0
      %v6574 = vpop.f32.mrb[0].mxu0
      %v6575 = vadd.f32 0.0, %v6574
      %v6576 = vpop.f32.mrb[0].mxu0
      %6577 = vmatprep.mubr.bf16.mxu0 0
      %6578 = vmatmul.mubr.bf16.gmra.mrb[0].mxu0 %v6455
      %v6579 = vpop.f32.mrb[0].mxu0
      %v6580 = vadd.f32 0.0, %v6579
      %v6581 = vpop.f32.mrb[0].mxu0
      %v6582 = vpop.f32.mrb[0].mxu0
      %v6583 = vadd.f32 0.0, %v6582
      %v6584 = vpop.f32.mrb[0].mxu0
      %6585 = vmatprep.mubr.bf16.mxu0 0
      %6586 = vmatmul.mubr.bf16.gmra.mrb[0].mxu0 %v6458
      %v6587 = vpop.f32.mrb[0].mxu0
      %v6588 = vadd.f32 0.0, %v6587
      %v6589 = vpop.f32.mrb[0].mxu0
      %v6590 = vpop.f32.mrb[0].mxu0
      %v6591 = vadd.f32 0.0, %v6590
      %v6592 = vpop.f32.mrb[0].mxu0
      %6593 = vmatprep.mubr.bf16.mxu0 0
      %6594 = vmatmul.mubr.bf16.gmra.mrb[0].mxu0 %v6461
      %v6595 = vpop.f32.mrb[0].mxu0
      %v6596 = vadd.f32 0.0, %v6595
      %v6597 = vpop.f32.mrb[0].mxu0
      %v6598 = vpop.f32.mrb[0].mxu0
      %v6599 = vadd.f32 0.0, %v6598
      %v6600 = vpop.f32.mrb[0].mxu0
      %6601 = vmatprep.mubr.bf16.mxu0 0
      %6602 = vmatmul.mubr.bf16.gmra.mrb[0].mxu0 %v6464
      %v6603 = vpop.f32.mrb[0].mxu0
      %v6604 = vadd.f32 0.0, %v6603
      %v6605 = vpop.f32.mrb[0].mxu0
      %v6606 = vpop.f32.mrb[0].mxu0
      %v6607 = vadd.f32 0.0, %v6606
      %v6608 = vpop.f32.mrb[0].mxu0
      %6609 = vmatprep.mubr.bf16.mxu0 0
      %6610 = vmatmul.mubr.bf16.gmra.mrb[0].mxu0 %v6467
      %v6611 = vpop.f32.mrb[0].mxu0
      %v6612 = vadd.f32 0.0, %v6611
      %v6613 = vpop.f32.mrb[0].mxu0
      %v6614 = vpop.f32.mrb[0].mxu0
      %v6615 = vadd.f32 0.0, %v6614
      %v6616 = vpop.f32.mrb[0].mxu0
      %6617 = vmatprep.mubr.bf16.mxu0 0
      %6618 = vmatmul.mubr.bf16.gmra.mrb[0].mxu0 %v6470
      %v6619 = vpop.f32.mrb[0].mxu0
      %v6620 = vadd.f32 0.0, %v6619
      %v6621 = vpop.f32.mrb[0].mxu0
      %v6622 = vpop.f32.mrb[0].mxu0
      %v6623 = vadd.f32 0.0, %v6622
      %v6624 = vpop.f32.mrb[0].mxu0
      %6625 = vmatprep.mubr.bf16.mxu0 0
      %6626 = vmatmul.mubr.bf16.gmra.mrb[0].mxu0 %v6473
      %v6627 = vpop.f32.mrb[0].mxu0
      %v6628 = vadd.f32 0.0, %v6627
      %v6629 = vpop.f32.mrb[0].mxu0
      %v6630 = vpop.f32.mrb[0].mxu0
      %v6631 = vadd.f32 0.0, %v6630
      %v6632 = vpop.f32.mrb[0].mxu0
      %6633 = vmatprep.mubr.bf16.mxu0 0
      %6634 = vmatmul.mubr.bf16.gmra.mrb[0].mxu0 %v6476
      %v6635 = vpop.f32.mrb[0].mxu0
      %v6636 = vadd.f32 0.0, %v6635
      %v6637 = vpop.f32.mrb[0].mxu0
      %v6638 = vpop.f32.mrb[0].mxu0
      %v6639 = vadd.f32 0.0, %v6638
      %v6640 = vpop.f32.mrb[0].mxu0
      %6641 = vdwg.mxu0
      %v6642 = vadd.f32 %v6348, %v6516
      %v6643 = vadd.f32 %v6349, %v6519
      %v6644 = vadd.f32 %v6350, %v6524
      %v6645 = vadd.f32 %v6351, %v6527
      %v6646 = vadd.f32 %v6352, %v6532
      %v6647 = vadd.f32 %v6353, %v6535
      %v6648 = vadd.f32 %v6354, %v6540
      %v6649 = vadd.f32 %v6355, %v6543
      %v6650 = vadd.f32 %v6356, %v6548
      %v6651 = vadd.f32 %v6357, %v6551
      %v6652 = vadd.f32 %v6358, %v6556
      %v6653 = vadd.f32 %v6359, %v6559
      %v6654 = vadd.f32 %v6360, %v6564
      %v6655 = vadd.f32 %v6361, %v6567
      %v6656 = vadd.f32 %v6362, %v6572
      %v6657 = vadd.f32 %v6363, %v6575
      %v6658 = vadd.f32 %v6364, %v6580
      %v6659 = vadd.f32 %v6365, %v6583
      %v6660 = vadd.f32 %v6366, %v6588
      %v6661 = vadd.f32 %v6367, %v6591
      %v6662 = vadd.f32 %v6368, %v6596
      %v6663 = vadd.f32 %v6369, %v6599
      %v6664 = vadd.f32 %v6370, %v6604
      %v6665 = vadd.f32 %v6371, %v6607
      %v6666 = vadd.f32 %v6372, %v6612
      %v6667 = vadd.f32 %v6373, %v6615
      %v6668 = vadd.f32 %v6374, %v6620
      %v6669 = vadd.f32 %v6375, %v6623
      %v6670 = vadd.f32 %v6376, %v6628
      %v6671 = vadd.f32 %v6377, %v6631
      %v6672 = vadd.f32 %v6378, %v6636
      %v6673 = vadd.f32 %v6379, %v6639
      %v6674 = vld [vmem:[#allocation2 + $0x26] sm:$0xff]
      %v6675 = vld [vmem:[#allocation2 + $0x2e] sm:$0xff]
      %v6676 = vld [vmem:[#allocation2 + $0x36] sm:$0xff]
      %v6677 = vld [vmem:[#allocation2 + $0x3e] sm:$0xff]
      %v6678 = vld [vmem:[#allocation2 + $0x46] sm:$0xff]
      %v6679 = vld [vmem:[#allocation2 + $0x4e] sm:$0xff]
      %v6680 = vld [vmem:[#allocation2 + $0x56] sm:$0xff]
      %v6681 = vld [vmem:[#allocation2 + $0x5e] sm:$0xff]
      %v6682 = vld [vmem:[#allocation2 + $0x66] sm:$0xff]
      %v6683 = vld [vmem:[#allocation2 + $0x6e] sm:$0xff]
      %v6684 = vld [vmem:[#allocation2 + $0x76] sm:$0xff]
      %v6685 = vld [vmem:[#allocation2 + $0x7e] sm:$0xff]
      %v6686 = vld [vmem:[#allocation2 + $0x86] sm:$0xff]
      %v6687 = vld [vmem:[#allocation2 + $0x8e] sm:$0xff]
      %v6688 = vld [vmem:[#allocation2 + $0x96] sm:$0xff]
      %v6689 = vld [vmem:[#allocation2 + $0x9e] sm:$0xff]
      %v6690 = vld [vmem:[#allocation2 + $0xa6] sm:$0xff]
      %v6691 = vld [vmem:[#allocation2 + $0xae] sm:$0xff]
      %v6692 = vld [vmem:[#allocation2 + $0xb6] sm:$0xff]
      %v6693 = vld [vmem:[#allocation2 + $0xbe] sm:$0xff]
      %v6694 = vld [vmem:[#allocation2 + $0xc6] sm:$0xff]
      %v6695 = vld [vmem:[#allocation2 + $0xce] sm:$0xff]
      %v6696 = vld [vmem:[#allocation2 + $0xd6] sm:$0xff]
      %v6697 = vld [vmem:[#allocation2 + $0xde] sm:$0xff]
      %v6698 = vld [vmem:[#allocation2 + $0xe6] sm:$0xff]
      %v6699 = vld [vmem:[#allocation2 + $0xee] sm:$0xff]
      %v6700 = vld [vmem:[#allocation2 + $0xf6] sm:$0xff]
      %v6701 = vld [vmem:[#allocation2 + $0xfe] sm:$0xff]
      %v6702 = vld [vmem:[#allocation2 + $0x106] sm:$0xff]
      %v6703 = vld [vmem:[#allocation2 + $0x10e] sm:$0xff]
      %v6704 = vld [vmem:[#allocation2 + $0x116] sm:$0xff]
      %v6705 = vld [vmem:[#allocation2 + $0x11e] sm:$0xff]
      %v6706 = vpack.c.bf16 %v6675, %v6674
      %v6707 = vpack.c.bf16 %v6677, %v6676
      %v6708 = vpack.c.bf16 %v6679, %v6678
      %v6709 = vpack.c.bf16 %v6681, %v6680
      %v6710 = vpack.c.bf16 %v6683, %v6682
      %v6711 = vpack.c.bf16 %v6685, %v6684
      %v6712 = vpack.c.bf16 %v6687, %v6686
      %v6713 = vpack.c.bf16 %v6689, %v6688
      %v6714 = vpack.c.bf16 %v6691, %v6690
      %v6715 = vpack.c.bf16 %v6693, %v6692
      %v6716 = vpack.c.bf16 %v6695, %v6694
      %v6717 = vpack.c.bf16 %v6697, %v6696
      %v6718 = vpack.c.bf16 %v6699, %v6698
      %v6719 = vpack.c.bf16 %v6701, %v6700
      %v6720 = vpack.c.bf16 %v6703, %v6702
      %v6721 = vpack.c.bf16 %v6705, %v6704
      %s6722 = scalar_lea.vmem %s4, 32
      %v6723 = vld [vmem:[%s6722] sm:$0xf]
      %v6725 = vsel %vm307, %v6706, 0
      %v6728 = vsel %vm307, %v6707, 0
      %v6731 = vsel %vm307, %v6708, 0
      %v6734 = vsel %vm307, %v6709, 0
      %v6737 = vsel %vm307, %v6710, 0
      %v6740 = vsel %vm307, %v6711, 0
      %v6743 = vsel %vm307, %v6712, 0
      %v6746 = vsel %vm307, %v6713, 0
      %v6749 = vsel %vm307, %v6714, 0
      %v6752 = vsel %vm307, %v6715, 0
      %v6755 = vsel %vm307, %v6716, 0
      %v6758 = vsel %vm307, %v6717, 0
      %v6761 = vsel %vm307, %v6718, 0
      %v6764 = vsel %vm307, %v6719, 0
      %v6767 = vsel %vm307, %v6720, 0
      %v6770 = vsel %vm307, %v6721, 0
      %v6773 = vsel %vm4533, %v6723, 0
      %6775 = vmatprep.subr.bf16.mxu0 0
      %6776 = vmatpush1.bf16.msra.mxu0 %v6773
      %6777 = vmatprep.subr.bf16.mxu0 0
      %6778 = vmatpush1.bf16.msra.mxu0 0
      %6779 = vmatprep.subr.bf16.mxu0 0
      %6780 = vmatpush1.bf16.msra.mxu0 0
      %6781 = vmatprep.subr.bf16.mxu0 0
      %6782 = vmatpush1.bf16.msra.mxu0 0
      %6783 = vmatprep.subr.bf16.mxu0 0
      %6784 = vmatpush1.bf16.msra.mxu0 0
      %6785 = vmatprep.subr.bf16.mxu0 0
      %6786 = vmatpush1.bf16.msra.mxu0 0
      %6787 = vmatprep.subr.bf16.mxu0 0
      %6788 = vmatpush1.bf16.msra.mxu0 0
      %6789 = vmatprep.subr.bf16.mxu0 0
      %6790 = vmatpush1.bf16.msra.mxu0 0
      %6791 = vmatprep.subr.bf16.mxu0 0
      %6792 = vmatpush1.bf16.msra.mxu0 0
      %6793 = vmatprep.subr.bf16.mxu0 0
      %6794 = vmatpush1.bf16.msra.mxu0 0
      %6795 = vmatprep.subr.bf16.mxu0 0
      %6796 = vmatpush1.bf16.msra.mxu0 0
      %6797 = vmatprep.subr.bf16.mxu0 0
      %6798 = vmatpush1.bf16.msra.mxu0 0
      %6799 = vmatprep.subr.bf16.mxu0 0
      %6800 = vmatpush1.bf16.msra.mxu0 0
      %6801 = vmatprep.subr.bf16.mxu0 0
      %6802 = vmatpush1.bf16.msra.mxu0 0
      %6803 = vmatprep.subr.bf16.mxu0 0
      %6804 = vmatpush1.bf16.msra.mxu0 0
      %6805 = vmatprep.subr.bf16.mxu0 0
      %6806 = vmatpush1.bf16.msra.mxu0 0
      %6807 = vmatprep.mubr.bf16.mxu0 0
      %6808 = vmatmul.mubr.bf16.gmra.mrb[0].mxu0 %v6725
      %v6809 = vpop.f32.mrb[0].mxu0
      %v6810 = vadd.f32 0.0, %v6809
      %v6811 = vpop.f32.mrb[0].mxu0
      %v6812 = vpop.f32.mrb[0].mxu0
      %v6813 = vadd.f32 0.0, %v6812
      %v6814 = vpop.f32.mrb[0].mxu0
      %6815 = vmatprep.mubr.bf16.mxu0 0
      %6816 = vmatmul.mubr.bf16.gmra.mrb[0].mxu0 %v6728
      %v6817 = vpop.f32.mrb[0].mxu0
      %v6818 = vadd.f32 0.0, %v6817
      %v6819 = vpop.f32.mrb[0].mxu0
      %v6820 = vpop.f32.mrb[0].mxu0
      %v6821 = vadd.f32 0.0, %v6820
      %v6822 = vpop.f32.mrb[0].mxu0
      %6823 = vmatprep.mubr.bf16.mxu0 0
      %6824 = vmatmul.mubr.bf16.gmra.mrb[0].mxu0 %v6731
      %v6825 = vpop.f32.mrb[0].mxu0
      %v6826 = vadd.f32 0.0, %v6825
      %v6827 = vpop.f32.mrb[0].mxu0
      %v6828 = vpop.f32.mrb[0].mxu0
      %v6829 = vadd.f32 0.0, %v6828
      %v6830 = vpop.f32.mrb[0].mxu0
      %6831 = vmatprep.mubr.bf16.mxu0 0
      %6832 = vmatmul.mubr.bf16.gmra.mrb[0].mxu0 %v6734
      %v6833 = vpop.f32.mrb[0].mxu0
      %v6834 = vadd.f32 0.0, %v6833
      %v6835 = vpop.f32.mrb[0].mxu0
      %v6836 = vpop.f32.mrb[0].mxu0
      %v6837 = vadd.f32 0.0, %v6836
      %v6838 = vpop.f32.mrb[0].mxu0
      %6839 = vmatprep.mubr.bf16.mxu0 0
      %6840 = vmatmul.mubr.bf16.gmra.mrb[0].mxu0 %v6737
      %v6841 = vpop.f32.mrb[0].mxu0
      %v6842 = vadd.f32 0.0, %v6841
      %v6843 = vpop.f32.mrb[0].mxu0
      %v6844 = vpop.f32.mrb[0].mxu0
      %v6845 = vadd.f32 0.0, %v6844
      %v6846 = vpop.f32.mrb[0].mxu0
      %6847 = vmatprep.mubr.bf16.mxu0 0
      %6848 = vmatmul.mubr.bf16.gmra.mrb[0].mxu0 %v6740
      %v6849 = vpop.f32.mrb[0].mxu0
      %v6850 = vadd.f32 0.0, %v6849
      %v6851 = vpop.f32.mrb[0].mxu0
      %v6852 = vpop.f32.mrb[0].mxu0
      %v6853 = vadd.f32 0.0, %v6852
      %v6854 = vpop.f32.mrb[0].mxu0
      %6855 = vmatprep.mubr.bf16.mxu0 0
      %6856 = vmatmul.mubr.bf16.gmra.mrb[0].mxu0 %v6743
      %v6857 = vpop.f32.mrb[0].mxu0
      %v6858 = vadd.f32 0.0, %v6857
      %v6859 = vpop.f32.mrb[0].mxu0
      %v6860 = vpop.f32.mrb[0].mxu0
      %v6861 = vadd.f32 0.0, %v6860
      %v6862 = vpop.f32.mrb[0].mxu0
      %6863 = vmatprep.mubr.bf16.mxu0 0
      %6864 = vmatmul.mubr.bf16.gmra.mrb[0].mxu0 %v6746
      %v6865 = vpop.f32.mrb[0].mxu0
      %v6866 = vadd.f32 0.0, %v6865
      %v6867 = vpop.f32.mrb[0].mxu0
      %v6868 = vpop.f32.mrb[0].mxu0
      %v6869 = vadd.f32 0.0, %v6868
      %v6870 = vpop.f32.mrb[0].mxu0
      %6871 = vmatprep.mubr.bf16.mxu0 0
      %6872 = vmatmul.mubr.bf16.gmra.mrb[0].mxu0 %v6749
      %v6873 = vpop.f32.mrb[0].mxu0
      %v6874 = vadd.f32 0.0, %v6873
      %v6875 = vpop.f32.mrb[0].mxu0
      %v6876 = vpop.f32.mrb[0].mxu0
      %v6877 = vadd.f32 0.0, %v6876
      %v6878 = vpop.f32.mrb[0].mxu0
      %6879 = vmatprep.mubr.bf16.mxu0 0
      %6880 = vmatmul.mubr.bf16.gmra.mrb[0].mxu0 %v6752
      %v6881 = vpop.f32.mrb[0].mxu0
      %v6882 = vadd.f32 0.0, %v6881
      %v6883 = vpop.f32.mrb[0].mxu0
      %v6884 = vpop.f32.mrb[0].mxu0
      %v6885 = vadd.f32 0.0, %v6884
      %v6886 = vpop.f32.mrb[0].mxu0
      %6887 = vmatprep.mubr.bf16.mxu0 0
      %6888 = vmatmul.mubr.bf16.gmra.mrb[0].mxu0 %v6755
      %v6889 = vpop.f32.mrb[0].mxu0
      %v6890 = vadd.f32 0.0, %v6889
      %v6891 = vpop.f32.mrb[0].mxu0
      %v6892 = vpop.f32.mrb[0].mxu0
      %v6893 = vadd.f32 0.0, %v6892
      %v6894 = vpop.f32.mrb[0].mxu0
      %6895 = vmatprep.mubr.bf16.mxu0 0
      %6896 = vmatmul.mubr.bf16.gmra.mrb[0].mxu0 %v6758
      %v6897 = vpop.f32.mrb[0].mxu0
      %v6898 = vadd.f32 0.0, %v6897
      %v6899 = vpop.f32.mrb[0].mxu0
      %v6900 = vpop.f32.mrb[0].mxu0
      %v6901 = vadd.f32 0.0, %v6900
      %v6902 = vpop.f32.mrb[0].mxu0
      %6903 = vmatprep.mubr.bf16.mxu0 0
      %6904 = vmatmul.mubr.bf16.gmra.mrb[0].mxu0 %v6761
      %v6905 = vpop.f32.mrb[0].mxu0
      %v6906 = vadd.f32 0.0, %v6905
      %v6907 = vpop.f32.mrb[0].mxu0
      %v6908 = vpop.f32.mrb[0].mxu0
      %v6909 = vadd.f32 0.0, %v6908
      %v6910 = vpop.f32.mrb[0].mxu0
      %6911 = vmatprep.mubr.bf16.mxu0 0
      %6912 = vmatmul.mubr.bf16.gmra.mrb[0].mxu0 %v6764
      %v6913 = vpop.f32.mrb[0].mxu0
      %v6914 = vadd.f32 0.0, %v6913
      %v6915 = vpop.f32.mrb[0].mxu0
      %v6916 = vpop.f32.mrb[0].mxu0
      %v6917 = vadd.f32 0.0, %v6916
      %v6918 = vpop.f32.mrb[0].mxu0
      %6919 = vmatprep.mubr.bf16.mxu0 0
      %6920 = vmatmul.mubr.bf16.gmra.mrb[0].mxu0 %v6767
      %v6921 = vpop.f32.mrb[0].mxu0
      %v6922 = vadd.f32 0.0, %v6921
      %v6923 = vpop.f32.mrb[0].mxu0
      %v6924 = vpop.f32.mrb[0].mxu0
      %v6925 = vadd.f32 0.0, %v6924
      %v6926 = vpop.f32.mrb[0].mxu0
      %6927 = vmatprep.mubr.bf16.mxu0 0
      %6928 = vmatmul.mubr.bf16.gmra.mrb[0].mxu0 %v6770
      %v6929 = vpop.f32.mrb[0].mxu0
      %v6930 = vadd.f32 0.0, %v6929
      %v6931 = vpop.f32.mrb[0].mxu0
      %v6932 = vpop.f32.mrb[0].mxu0
      %v6933 = vadd.f32 0.0, %v6932
      %v6934 = vpop.f32.mrb[0].mxu0
      %6935 = vdwg.mxu0
      %v6936 = vadd.f32 %v6642, %v6810
      %v6937 = vadd.f32 %v6643, %v6813
      %v6938 = vadd.f32 %v6644, %v6818
      %v6939 = vadd.f32 %v6645, %v6821
      %v6940 = vadd.f32 %v6646, %v6826
      %v6941 = vadd.f32 %v6647, %v6829
      %v6942 = vadd.f32 %v6648, %v6834
      %v6943 = vadd.f32 %v6649, %v6837
      %v6944 = vadd.f32 %v6650, %v6842
      %v6945 = vadd.f32 %v6651, %v6845
      %v6946 = vadd.f32 %v6652, %v6850
      %v6947 = vadd.f32 %v6653, %v6853
      %v6948 = vadd.f32 %v6654, %v6858
      %v6949 = vadd.f32 %v6655, %v6861
      %v6950 = vadd.f32 %v6656, %v6866
      %v6951 = vadd.f32 %v6657, %v6869
      %v6952 = vadd.f32 %v6658, %v6874
      %v6953 = vadd.f32 %v6659, %v6877
      %v6954 = vadd.f32 %v6660, %v6882
      %v6955 = vadd.f32 %v6661, %v6885
      %v6956 = vadd.f32 %v6662, %v6890
      %v6957 = vadd.f32 %v6663, %v6893
      %v6958 = vadd.f32 %v6664, %v6898
      %v6959 = vadd.f32 %v6665, %v6901
      %v6960 = vadd.f32 %v6666, %v6906
      %v6961 = vadd.f32 %v6667, %v6909
      %v6962 = vadd.f32 %v6668, %v6914
      %v6963 = vadd.f32 %v6669, %v6917
      %v6964 = vadd.f32 %v6670, %v6922
      %v6965 = vadd.f32 %v6671, %v6925
      %v6966 = vadd.f32 %v6672, %v6930
      %v6967 = vadd.f32 %v6673, %v6933
      %v6968 = vld [vmem:[%s5] sm:$0x1]
      %v6970 = vlaneseq
      %v6971 = vshrl.u32 %v6970, 7
      %v6972 = vsub.s32 0, %v6971
      %v6973 = vrot.slane %v6968, %v6972
      %v6975 = vmul.f32 %v6936, %v6973
      %v6976 = vmul.f32 %v6937, %v6973
      %v6977 = vmul.f32 %v6938, %v6973
      %v6978 = vmul.f32 %v6939, %v6973
      %v6979 = vmul.f32 %v6940, %v6973
      %v6980 = vmul.f32 %v6941, %v6973
      %v6981 = vmul.f32 %v6942, %v6973
      %v6982 = vmul.f32 %v6943, %v6973
      %v6983 = vmul.f32 %v6944, %v6973
      %v6984 = vmul.f32 %v6945, %v6973
      %v6985 = vmul.f32 %v6946, %v6973
      %v6986 = vmul.f32 %v6947, %v6973
      %v6987 = vmul.f32 %v6948, %v6973
      %v6988 = vmul.f32 %v6949, %v6973
      %v6989 = vmul.f32 %v6950, %v6973
      %v6990 = vmul.f32 %v6951, %v6973
      %v6991 = vmul.f32 %v6952, %v6973
      %v6992 = vmul.f32 %v6953, %v6973
      %v6993 = vmul.f32 %v6954, %v6973
      %v6994 = vmul.f32 %v6955, %v6973
      %v6995 = vmul.f32 %v6956, %v6973
      %v6996 = vmul.f32 %v6957, %v6973
      %v6997 = vmul.f32 %v6958, %v6973
      %v6998 = vmul.f32 %v6959, %v6973
      %v6999 = vmul.f32 %v6960, %v6973
      %v7000 = vmul.f32 %v6961, %v6973
      %v7001 = vmul.f32 %v6962, %v6973
      %v7002 = vmul.f32 %v6963, %v6973
      %v7003 = vmul.f32 %v6964, %v6973
      %v7004 = vmul.f32 %v6965, %v6973
      %v7005 = vmul.f32 %v6966, %v6973
      %v7006 = vmul.f32 %v6967, %v6973
      %v7007 = vld [vmem:[%s6] sm:$0x1]
      %v7009 = vlaneseq
      %v7010 = vshrl.u32 %v7009, 7
      %v7011 = vsub.s32 0, %v7010
      %v7012 = vrot.slane %v7007, %v7011
      %v7014 = vadd.f32 %v6975, %v7012
      %v7015 = vadd.f32 %v6976, %v7012
      %v7016 = vadd.f32 %v6977, %v7012
      %v7017 = vadd.f32 %v6978, %v7012
      %v7018 = vadd.f32 %v6979, %v7012
      %v7019 = vadd.f32 %v6980, %v7012
      %v7020 = vadd.f32 %v6981, %v7012
      %v7021 = vadd.f32 %v6982, %v7012
      %v7022 = vadd.f32 %v6983, %v7012
      %v7023 = vadd.f32 %v6984, %v7012
      %v7024 = vadd.f32 %v6985, %v7012
      %v7025 = vadd.f32 %v6986, %v7012
      %v7026 = vadd.f32 %v6987, %v7012
      %v7027 = vadd.f32 %v6988, %v7012
      %v7028 = vadd.f32 %v6989, %v7012
      %v7029 = vadd.f32 %v6990, %v7012
      %v7030 = vadd.f32 %v6991, %v7012
      %v7031 = vadd.f32 %v6992, %v7012
      %v7032 = vadd.f32 %v6993, %v7012
      %v7033 = vadd.f32 %v6994, %v7012
      %v7034 = vadd.f32 %v6995, %v7012
      %v7035 = vadd.f32 %v6996, %v7012
      %v7036 = vadd.f32 %v6997, %v7012
      %v7037 = vadd.f32 %v6998, %v7012
      %v7038 = vadd.f32 %v6999, %v7012
      %v7039 = vadd.f32 %v7000, %v7012
      %v7040 = vadd.f32 %v7001, %v7012
      %v7041 = vadd.f32 %v7002, %v7012
      %v7042 = vadd.f32 %v7003, %v7012
      %v7043 = vadd.f32 %v7004, %v7012
      %v7044 = vadd.f32 %v7005, %v7012
      %v7045 = vadd.f32 %v7006, %v7012
      %v7046 = vmax.f32 %v7014, 0.0
      %v7047 = vmax.f32 %v7015, 0.0
      %v7048 = vmax.f32 %v7016, 0.0
      %v7049 = vmax.f32 %v7017, 0.0
      %v7050 = vmax.f32 %v7018, 0.0
      %v7051 = vmax.f32 %v7019, 0.0
      %v7052 = vmax.f32 %v7020, 0.0
      %v7053 = vmax.f32 %v7021, 0.0
      %v7054 = vmax.f32 %v7022, 0.0
      %v7055 = vmax.f32 %v7023, 0.0
      %v7056 = vmax.f32 %v7024, 0.0
      %v7057 = vmax.f32 %v7025, 0.0
      %v7058 = vmax.f32 %v7026, 0.0
      %v7059 = vmax.f32 %v7027, 0.0
      %v7060 = vmax.f32 %v7028, 0.0
      %v7061 = vmax.f32 %v7029, 0.0
      %v7062 = vmax.f32 %v7030, 0.0
      %v7063 = vmax.f32 %v7031, 0.0
      %v7064 = vmax.f32 %v7032, 0.0
      %v7065 = vmax.f32 %v7033, 0.0
      %v7066 = vmax.f32 %v7034, 0.0
      %v7067 = vmax.f32 %v7035, 0.0
      %v7068 = vmax.f32 %v7036, 0.0
      %v7069 = vmax.f32 %v7037, 0.0
      %v7070 = vmax.f32 %v7038, 0.0
      %v7071 = vmax.f32 %v7039, 0.0
      %v7072 = vmax.f32 %v7040, 0.0
      %v7073 = vmax.f32 %v7041, 0.0
      %v7074 = vmax.f32 %v7042, 0.0
      %v7075 = vmax.f32 %v7043, 0.0
      %v7076 = vmax.f32 %v7044, 0.0
      %v7077 = vmax.f32 %v7045, 0.0
      %7078 = vst.msk [vmem:[#allocation3] sm:$0xff] %vm307, %v7046
      %7079 = vst.msk [vmem:[#allocation3 + $0x8] sm:$0xff] %vm307, %v7047
      %7080 = vst.msk [vmem:[#allocation3 + $0x10] sm:$0xff] %vm307, %v7048
      %7081 = vst.msk [vmem:[#allocation3 + $0x18] sm:$0xff] %vm307, %v7049
      %7082 = vst.msk [vmem:[#allocation3 + $0x20] sm:$0xff] %vm307, %v7050
      %7083 = vst.msk [vmem:[#allocation3 + $0x28] sm:$0xff] %vm307, %v7051
      %7084 = vst.msk [vmem:[#allocation3 + $0x30] sm:$0xff] %vm307, %v7052
      %7085 = vst.msk [vmem:[#allocation3 + $0x38] sm:$0xff] %vm307, %v7053
      %7086 = vst.msk [vmem:[#allocation3 + $0x40] sm:$0xff] %vm307, %v7054
      %7087 = vst.msk [vmem:[#allocation3 + $0x48] sm:$0xff] %vm307, %v7055
      %7088 = vst.msk [vmem:[#allocation3 + $0x50] sm:$0xff] %vm307, %v7056
      %7089 = vst.msk [vmem:[#allocation3 + $0x58] sm:$0xff] %vm307, %v7057
      %7090 = vst.msk [vmem:[#allocation3 + $0x60] sm:$0xff] %vm307, %v7058
      %7091 = vst.msk [vmem:[#allocation3 + $0x68] sm:$0xff] %vm307, %v7059
      %7092 = vst.msk [vmem:[#allocation3 + $0x70] sm:$0xff] %vm307, %v7060
      %7093 = vst.msk [vmem:[#allocation3 + $0x78] sm:$0xff] %vm307, %v7061
      %7094 = vst.msk [vmem:[#allocation3 + $0x80] sm:$0xff] %vm307, %v7062
      %7095 = vst.msk [vmem:[#allocation3 + $0x88] sm:$0xff] %vm307, %v7063
      %7096 = vst.msk [vmem:[#allocation3 + $0x90] sm:$0xff] %vm307, %v7064
      %7097 = vst.msk [vmem:[#allocation3 + $0x98] sm:$0xff] %vm307, %v7065
      %7098 = vst.msk [vmem:[#allocation3 + $0xa0] sm:$0xff] %vm307, %v7066
      %7099 = vst.msk [vmem:[#allocation3 + $0xa8] sm:$0xff] %vm307, %v7067
      %7100 = vst.msk [vmem:[#allocation3 + $0xb0] sm:$0xff] %vm307, %v7068
      %7101 = vst.msk [vmem:[#allocation3 + $0xb8] sm:$0xff] %vm307, %v7069
      %7102 = vst.msk [vmem:[#allocation3 + $0xc0] sm:$0xff] %vm307, %v7070
      %7103 = vst.msk [vmem:[#allocation3 + $0xc8] sm:$0xff] %vm307, %v7071
      %7104 = vst.msk [vmem:[#allocation3 + $0xd0] sm:$0xff] %vm307, %v7072
      %7105 = vst.msk [vmem:[#allocation3 + $0xd8] sm:$0xff] %vm307, %v7073
      %7106 = vst.msk [vmem:[#allocation3 + $0xe0] sm:$0xff] %vm307, %v7074
      %7107 = vst.msk [vmem:[#allocation3 + $0xe8] sm:$0xff] %vm307, %v7075
      %7108 = vst.msk [vmem:[#allocation3 + $0xf0] sm:$0xff] %vm307, %v7076
      %7109 = vst.msk [vmem:[#allocation3 + $0xf8] sm:$0xff] %vm307, %v7077
      %v7110 = vld [vmem:[#allocation2 + $0x100] sm:$0xff]
      %v7111 = vld [vmem:[#allocation2 + $0x108] sm:$0xff]
      %v7112 = vld [vmem:[#allocation2 + $0x110] sm:$0xff]
      %v7113 = vld [vmem:[#allocation2 + $0x118] sm:$0xff]
      %v7114 = vld [vmem:[#allocation2 + $0x120] sm:$0xff]
      %v7115 = vld [vmem:[#allocation2 + $0x128] sm:$0xff]
      %v7116 = vld [vmem:[#allocation2 + $0x130] sm:$0xff]
      %v7117 = vld [vmem:[#allocation2 + $0x138] sm:$0xff]
      %v7118 = vld [vmem:[#allocation2 + $0x140] sm:$0xf]
      %v7119 = vpack.c.bf16 %v7111, %v7110
      %v7120 = vpack.c.bf16 %v7113, %v7112
      %v7121 = vpack.c.bf16 %v7115, %v7114
      %v7122 = vpack.c.bf16 %v7117, %v7116
      %v7123 = vpack.c.bf16 %v7118, %v7118
      %v7124 = vld [vmem:[%s4] sm:$0xf]
      %v7125 = vld [vmem:[#allocation2 + $0x101] sm:$0xff]
      %v7126 = vld [vmem:[#allocation2 + $0x109] sm:$0xff]
      %v7127 = vld [vmem:[#allocation2 + $0x111] sm:$0xff]
      %v7128 = vld [vmem:[#allocation2 + $0x119] sm:$0xff]
      %v7129 = vld [vmem:[#allocation2 + $0x121] sm:$0xff]
      %v7130 = vld [vmem:[#allocation2 + $0x129] sm:$0xff]
      %v7131 = vld [vmem:[#allocation2 + $0x131] sm:$0xff]
      %v7132 = vld [vmem:[#allocation2 + $0x139] sm:$0xff]
      %v7133 = vld [vmem:[#allocation2 + $0x141] sm:$0xf]
      %v7134 = vpack.c.bf16 %v7126, %v7125
      %v7135 = vpack.c.bf16 %v7128, %v7127
      %v7136 = vpack.c.bf16 %v7130, %v7129
      %v7137 = vpack.c.bf16 %v7132, %v7131
      %v7138 = vpack.c.bf16 %v7133, %v7133
      %v7139 = vld [vmem:[%s4483] sm:$0xf]
      %v7141 = vsel %vm307, %v7134, 0
      %v7144 = vsel %vm307, %v7135, 0
      %v7147 = vsel %vm307, %v7136, 0
      %v7150 = vsel %vm307, %v7137, 0
      %v7153 = vsel %vm307, %v7138, 0
      %v7156 = vsel %vm4533, %v7139, 0
      %7158 = vmatprep.subr.bf16.mxu0 0
      %7159 = vmatpush1.bf16.msra.mxu0 %v7156
      %7160 = vmatprep.subr.bf16.mxu0 0
      %7161 = vmatpush1.bf16.msra.mxu0 0
      %7162 = vmatprep.subr.bf16.mxu0 0
      %7163 = vmatpush1.bf16.msra.mxu0 0
      %7164 = vmatprep.subr.bf16.mxu0 0
      %7165 = vmatpush1.bf16.msra.mxu0 0
      %7166 = vmatprep.subr.bf16.mxu0 0
      %7167 = vmatpush1.bf16.msra.mxu0 0
      %7168 = vmatprep.subr.bf16.mxu0 0
      %7169 = vmatpush1.bf16.msra.mxu0 0
      %7170 = vmatprep.subr.bf16.mxu0 0
      %7171 = vmatpush1.bf16.msra.mxu0 0
      %7172 = vmatprep.subr.bf16.mxu0 0
      %7173 = vmatpush1.bf16.msra.mxu0 0
      %7174 = vmatprep.subr.bf16.mxu0 0
      %7175 = vmatpush1.bf16.msra.mxu0 0
      %7176 = vmatprep.subr.bf16.mxu0 0
      %7177 = vmatpush1.bf16.msra.mxu0 0
      %7178 = vmatprep.subr.bf16.mxu0 0
      %7179 = vmatpush1.bf16.msra.mxu0 0
      %7180 = vmatprep.subr.bf16.mxu0 0
      %7181 = vmatpush1.bf16.msra.mxu0 0
      %7182 = vmatprep.subr.bf16.mxu0 0
      %7183 = vmatpush1.bf16.msra.mxu0 0
      %7184 = vmatprep.subr.bf16.mxu0 0
      %7185 = vmatpush1.bf16.msra.mxu0 0
      %7186 = vmatprep.subr.bf16.mxu0 0
      %7187 = vmatpush1.bf16.msra.mxu0 0
      %7188 = vmatprep.subr.bf16.mxu0 0
      %7189 = vmatpush1.bf16.msra.mxu0 0
      %7190 = vmatprep.mubr.bf16.mxu0 0
      %7191 = vmatmul.mubr.bf16.gmra.mrb[0].mxu0 %v7141
      %v7192 = vpop.f32.mrb[0].mxu0
      %v7193 = vadd.f32 0.0, %v7192
      %v7194 = vpop.f32.mrb[0].mxu0
      %v7195 = vpop.f32.mrb[0].mxu0
      %v7196 = vadd.f32 0.0, %v7195
      %v7197 = vpop.f32.mrb[0].mxu0
      %7198 = vmatprep.mubr.bf16.mxu0 0
      %7199 = vmatmul.mubr.bf16.gmra.mrb[0].mxu0 %v7144
      %v7200 = vpop.f32.mrb[0].mxu0
      %v7201 = vadd.f32 0.0, %v7200
      %v7202 = vpop.f32.mrb[0].mxu0
      %v7203 = vpop.f32.mrb[0].mxu0
      %v7204 = vadd.f32 0.0, %v7203
      %v7205 = vpop.f32.mrb[0].mxu0
      %7206 = vmatprep.mubr.bf16.mxu0 0
      %7207 = vmatmul.mubr.bf16.gmra.mrb[0].mxu0 %v7147
      %v7208 = vpop.f32.mrb[0].mxu0
      %v7209 = vadd.f32 0.0, %v7208
      %v7210 = vpop.f32.mrb[0].mxu0
      %v7211 = vpop.f32.mrb[0].mxu0
      %v7212 = vadd.f32 0.0, %v7211
      %v7213 = vpop.f32.mrb[0].mxu0
      %7214 = vmatprep.mubr.bf16.mxu0 0
      %7215 = vmatmul.mubr.bf16.gmra.mrb[0].mxu0 %v7150
      %v7216 = vpop.f32.mrb[0].mxu0
      %v7217 = vadd.f32 0.0, %v7216
      %v7218 = vpop.f32.mrb[0].mxu0
      %v7219 = vpop.f32.mrb[0].mxu0
      %v7220 = vadd.f32 0.0, %v7219
      %v7221 = vpop.f32.mrb[0].mxu0
      %7222 = vmatprep.mubr.bf16.mxu0 0
      %7223 = vmatmul.mubr.bf16.gmra.mrb[0].mxu0 %v7153
      %v7224 = vpop.f32.mrb[0].mxu0
      %v7225 = vadd.f32 0.0, %v7224
      %v7226 = vpop.f32.mrb[0].mxu0
      %v7227 = vpop.f32.mrb[0].mxu0
      %v7228 = vpop.f32.mrb[0].mxu0
      %7229 = vdwg.mxu0
      %v7231 = vsel %vm307, %v7119, 0
      %v7234 = vsel %vm307, %v7120, 0
      %v7237 = vsel %vm307, %v7121, 0
      %v7240 = vsel %vm307, %v7122, 0
      %v7243 = vsel %vm307, %v7123, 0
      %v7246 = vsel %vm4533, %v7124, 0
      %7248 = vmatprep.subr.bf16.mxu0 0
      %7249 = vmatpush1.bf16.msra.mxu0 %v7246
      %7250 = vmatprep.subr.bf16.mxu0 0
      %7251 = vmatpush1.bf16.msra.mxu0 0
      %7252 = vmatprep.subr.bf16.mxu0 0
      %7253 = vmatpush1.bf16.msra.mxu0 0
      %7254 = vmatprep.subr.bf16.mxu0 0
      %7255 = vmatpush1.bf16.msra.mxu0 0
      %7256 = vmatprep.subr.bf16.mxu0 0
      %7257 = vmatpush1.bf16.msra.mxu0 0
      %7258 = vmatprep.subr.bf16.mxu0 0
      %7259 = vmatpush1.bf16.msra.mxu0 0
      %7260 = vmatprep.subr.bf16.mxu0 0
      %7261 = vmatpush1.bf16.msra.mxu0 0
      %7262 = vmatprep.subr.bf16.mxu0 0
      %7263 = vmatpush1.bf16.msra.mxu0 0
      %7264 = vmatprep.subr.bf16.mxu0 0
      %7265 = vmatpush1.bf16.msra.mxu0 0
      %7266 = vmatprep.subr.bf16.mxu0 0
      %7267 = vmatpush1.bf16.msra.mxu0 0
      %7268 = vmatprep.subr.bf16.mxu0 0
      %7269 = vmatpush1.bf16.msra.mxu0 0
      %7270 = vmatprep.subr.bf16.mxu0 0
      %7271 = vmatpush1.bf16.msra.mxu0 0
      %7272 = vmatprep.subr.bf16.mxu0 0
      %7273 = vmatpush1.bf16.msra.mxu0 0
      %7274 = vmatprep.subr.bf16.mxu0 0
      %7275 = vmatpush1.bf16.msra.mxu0 0
      %7276 = vmatprep.subr.bf16.mxu0 0
      %7277 = vmatpush1.bf16.msra.mxu0 0
      %7278 = vmatprep.subr.bf16.mxu0 0
      %7279 = vmatpush1.bf16.msra.mxu0 0
      %7280 = vmatprep.mubr.bf16.mxu0 0
      %7281 = vmatmul.mubr.bf16.gmra.mrb[0].mxu0 %v7231
      %v7282 = vpop.f32.mrb[0].mxu0
      %v7283 = vadd.f32 %v7193, %v7282
      %v7284 = vpop.f32.mrb[0].mxu0
      %v7285 = vpop.f32.mrb[0].mxu0
      %v7286 = vadd.f32 %v7196, %v7285
      %v7287 = vpop.f32.mrb[0].mxu0
      %7288 = vmatprep.mubr.bf16.mxu0 0
      %7289 = vmatmul.mubr.bf16.gmra.mrb[0].mxu0 %v7234
      %v7290 = vpop.f32.mrb[0].mxu0
      %v7291 = vadd.f32 %v7201, %v7290
      %v7292 = vpop.f32.mrb[0].mxu0
      %v7293 = vpop.f32.mrb[0].mxu0
      %v7294 = vadd.f32 %v7204, %v7293
      %v7295 = vpop.f32.mrb[0].mxu0
      %7296 = vmatprep.mubr.bf16.mxu0 0
      %7297 = vmatmul.mubr.bf16.gmra.mrb[0].mxu0 %v7237
      %v7298 = vpop.f32.mrb[0].mxu0
      %v7299 = vadd.f32 %v7209, %v7298
      %v7300 = vpop.f32.mrb[0].mxu0
      %v7301 = vpop.f32.mrb[0].mxu0
      %v7302 = vadd.f32 %v7212, %v7301
      %v7303 = vpop.f32.mrb[0].mxu0
      %7304 = vmatprep.mubr.bf16.mxu0 0
      %7305 = vmatmul.mubr.bf16.gmra.mrb[0].mxu0 %v7240
      %v7306 = vpop.f32.mrb[0].mxu0
      %v7307 = vadd.f32 %v7217, %v7306
      %v7308 = vpop.f32.mrb[0].mxu0
      %v7309 = vpop.f32.mrb[0].mxu0
      %v7310 = vadd.f32 %v7220, %v7309
      %v7311 = vpop.f32.mrb[0].mxu0
      %7312 = vmatprep.mubr.bf16.mxu0 0
      %7313 = vmatmul.mubr.bf16.gmra.mrb[0].mxu0 %v7243
      %v7314 = vpop.f32.mrb[0].mxu0
      %v7315 = vadd.f32 %v7225, %v7314
      %v7316 = vpop.f32.mrb[0].mxu0
      %v7317 = vpop.f32.mrb[0].mxu0
      %v7318 = vpop.f32.mrb[0].mxu0
      %7319 = vdwg.mxu0
      %v7320 = vld [vmem:[#allocation2 + $0x102] sm:$0xff]
      %v7321 = vld [vmem:[#allocation2 + $0x10a] sm:$0xff]
      %v7322 = vld [vmem:[#allocation2 + $0x112] sm:$0xff]
      %v7323 = vld [vmem:[#allocation2 + $0x11a] sm:$0xff]
      %v7324 = vld [vmem:[#allocation2 + $0x122] sm:$0xff]
      %v7325 = vld [vmem:[#allocation2 + $0x12a] sm:$0xff]
      %v7326 = vld [vmem:[#allocation2 + $0x132] sm:$0xff]
      %v7327 = vld [vmem:[#allocation2 + $0x13a] sm:$0xff]
      %v7328 = vld [vmem:[#allocation2 + $0x142] sm:$0xf]
      %v7329 = vpack.c.bf16 %v7321, %v7320
      %v7330 = vpack.c.bf16 %v7323, %v7322
      %v7331 = vpack.c.bf16 %v7325, %v7324
      %v7332 = vpack.c.bf16 %v7327, %v7326
      %v7333 = vpack.c.bf16 %v7328, %v7328
      %v7334 = vld [vmem:[%s4958] sm:$0xf]
      %v7336 = vsel %vm307, %v7329, 0
      %v7339 = vsel %vm307, %v7330, 0
      %v7342 = vsel %vm307, %v7331, 0
      %v7345 = vsel %vm307, %v7332, 0
      %v7348 = vsel %vm307, %v7333, 0
      %v7351 = vsel %vm4533, %v7334, 0
      %7353 = vmatprep.subr.bf16.mxu0 0
      %7354 = vmatpush1.bf16.msra.mxu0 %v7351
      %7355 = vmatprep.subr.bf16.mxu0 0
      %7356 = vmatpush1.bf16.msra.mxu0 0
      %7357 = vmatprep.subr.bf16.mxu0 0
      %7358 = vmatpush1.bf16.msra.mxu0 0
      %7359 = vmatprep.subr.bf16.mxu0 0
      %7360 = vmatpush1.bf16.msra.mxu0 0
      %7361 = vmatprep.subr.bf16.mxu0 0
      %7362 = vmatpush1.bf16.msra.mxu0 0
      %7363 = vmatprep.subr.bf16.mxu0 0
      %7364 = vmatpush1.bf16.msra.mxu0 0
      %7365 = vmatprep.subr.bf16.mxu0 0
      %7366 = vmatpush1.bf16.msra.mxu0 0
      %7367 = vmatprep.subr.bf16.mxu0 0
      %7368 = vmatpush1.bf16.msra.mxu0 0
      %7369 = vmatprep.subr.bf16.mxu0 0
      %7370 = vmatpush1.bf16.msra.mxu0 0
      %7371 = vmatprep.subr.bf16.mxu0 0
      %7372 = vmatpush1.bf16.msra.mxu0 0
      %7373 = vmatprep.subr.bf16.mxu0 0
      %7374 = vmatpush1.bf16.msra.mxu0 0
      %7375 = vmatprep.subr.bf16.mxu0 0
      %7376 = vmatpush1.bf16.msra.mxu0 0
      %7377 = vmatprep.subr.bf16.mxu0 0
      %7378 = vmatpush1.bf16.msra.mxu0 0
      %7379 = vmatprep.subr.bf16.mxu0 0
      %7380 = vmatpush1.bf16.msra.mxu0 0
      %7381 = vmatprep.subr.bf16.mxu0 0
      %7382 = vmatpush1.bf16.msra.mxu0 0
      %7383 = vmatprep.subr.bf16.mxu0 0
      %7384 = vmatpush1.bf16.msra.mxu0 0
      %7385 = vmatprep.mubr.bf16.mxu0 0
      %7386 = vmatmul.mubr.bf16.gmra.mrb[0].mxu0 %v7336
      %v7387 = vpop.f32.mrb[0].mxu0
      %v7388 = vadd.f32 0.0, %v7387
      %v7389 = vpop.f32.mrb[0].mxu0
      %v7390 = vpop.f32.mrb[0].mxu0
      %v7391 = vadd.f32 0.0, %v7390
      %v7392 = vpop.f32.mrb[0].mxu0
      %7393 = vmatprep.mubr.bf16.mxu0 0
      %7394 = vmatmul.mubr.bf16.gmra.mrb[0].mxu0 %v7339
      %v7395 = vpop.f32.mrb[0].mxu0
      %v7396 = vadd.f32 0.0, %v7395
      %v7397 = vpop.f32.mrb[0].mxu0
      %v7398 = vpop.f32.mrb[0].mxu0
      %v7399 = vadd.f32 0.0, %v7398
      %v7400 = vpop.f32.mrb[0].mxu0
      %7401 = vmatprep.mubr.bf16.mxu0 0
      %7402 = vmatmul.mubr.bf16.gmra.mrb[0].mxu0 %v7342
      %v7403 = vpop.f32.mrb[0].mxu0
      %v7404 = vadd.f32 0.0, %v7403
      %v7405 = vpop.f32.mrb[0].mxu0
      %v7406 = vpop.f32.mrb[0].mxu0
      %v7407 = vadd.f32 0.0, %v7406
      %v7408 = vpop.f32.mrb[0].mxu0
      %7409 = vmatprep.mubr.bf16.mxu0 0
      %7410 = vmatmul.mubr.bf16.gmra.mrb[0].mxu0 %v7345
      %v7411 = vpop.f32.mrb[0].mxu0
      %v7412 = vadd.f32 0.0, %v7411
      %v7413 = vpop.f32.mrb[0].mxu0
      %v7414 = vpop.f32.mrb[0].mxu0
      %v7415 = vadd.f32 0.0, %v7414
      %v7416 = vpop.f32.mrb[0].mxu0
      %7417 = vmatprep.mubr.bf16.mxu0 0
      %7418 = vmatmul.mubr.bf16.gmra.mrb[0].mxu0 %v7348
      %v7419 = vpop.f32.mrb[0].mxu0
      %v7420 = vadd.f32 0.0, %v7419
      %v7421 = vpop.f32.mrb[0].mxu0
      %v7422 = vpop.f32.mrb[0].mxu0
      %v7423 = vpop.f32.mrb[0].mxu0
      %7424 = vdwg.mxu0
      %v7425 = vadd.f32 %v7283, %v7388
      %v7426 = vadd.f32 %v7286, %v7391
      %v7427 = vadd.f32 %v7291, %v7396
      %v7428 = vadd.f32 %v7294, %v7399
      %v7429 = vadd.f32 %v7299, %v7404
      %v7430 = vadd.f32 %v7302, %v7407
      %v7431 = vadd.f32 %v7307, %v7412
      %v7432 = vadd.f32 %v7310, %v7415
      %v7433 = vadd.f32 %v7315, %v7420
      %v7434 = vld [vmem:[#allocation2 + $0x112] sm:$0xff]
      %v7435 = vld [vmem:[#allocation2 + $0x11a] sm:$0xff]
      %v7436 = vld [vmem:[#allocation2 + $0x122] sm:$0xff]
      %v7437 = vld [vmem:[#allocation2 + $0x12a] sm:$0xff]
      %v7438 = vld [vmem:[#allocation2 + $0x132] sm:$0xff]
      %v7439 = vld [vmem:[#allocation2 + $0x13a] sm:$0xff]
      %v7440 = vld [vmem:[#allocation2 + $0x142] sm:$0xff]
      %v7441 = vld [vmem:[#allocation2 + $0x14a] sm:$0xff]
      %v7442 = vld [vmem:[#allocation2 + $0x152] sm:$0xf]
      %v7443 = vpack.c.bf16 %v7435, %v7434
      %v7444 = vpack.c.bf16 %v7437, %v7436
      %v7445 = vpack.c.bf16 %v7439, %v7438
      %v7446 = vpack.c.bf16 %v7441, %v7440
      %v7447 = vpack.c.bf16 %v7442, %v7442
      %v7448 = vld [vmem:[%s5252] sm:$0xf]
      %v7450 = vsel %vm307, %v7443, 0
      %v7453 = vsel %vm307, %v7444, 0
      %v7456 = vsel %vm307, %v7445, 0
      %v7459 = vsel %vm307, %v7446, 0
      %v7462 = vsel %vm307, %v7447, 0
      %v7465 = vsel %vm4533, %v7448, 0
      %7467 = vmatprep.subr.bf16.mxu0 0
      %7468 = vmatpush1.bf16.msra.mxu0 %v7465
      %7469 = vmatprep.subr.bf16.mxu0 0
      %7470 = vmatpush1.bf16.msra.mxu0 0
      %7471 = vmatprep.subr.bf16.mxu0 0
      %7472 = vmatpush1.bf16.msra.mxu0 0
      %7473 = vmatprep.subr.bf16.mxu0 0
      %7474 = vmatpush1.bf16.msra.mxu0 0
      %7475 = vmatprep.subr.bf16.mxu0 0
      %7476 = vmatpush1.bf16.msra.mxu0 0
      %7477 = vmatprep.subr.bf16.mxu0 0
      %7478 = vmatpush1.bf16.msra.mxu0 0
      %7479 = vmatprep.subr.bf16.mxu0 0
      %7480 = vmatpush1.bf16.msra.mxu0 0
      %7481 = vmatprep.subr.bf16.mxu0 0
      %7482 = vmatpush1.bf16.msra.mxu0 0
      %7483 = vmatprep.subr.bf16.mxu0 0
      %7484 = vmatpush1.bf16.msra.mxu0 0
      %7485 = vmatprep.subr.bf16.mxu0 0
      %7486 = vmatpush1.bf16.msra.mxu0 0
      %7487 = vmatprep.subr.bf16.mxu0 0
      %7488 = vmatpush1.bf16.msra.mxu0 0
      %7489 = vmatprep.subr.bf16.mxu0 0
      %7490 = vmatpush1.bf16.msra.mxu0 0
      %7491 = vmatprep.subr.bf16.mxu0 0
      %7492 = vmatpush1.bf16.msra.mxu0 0
      %7493 = vmatprep.subr.bf16.mxu0 0
      %7494 = vmatpush1.bf16.msra.mxu0 0
      %7495 = vmatprep.subr.bf16.mxu0 0
      %7496 = vmatpush1.bf16.msra.mxu0 0
      %7497 = vmatprep.subr.bf16.mxu0 0
      %7498 = vmatpush1.bf16.msra.mxu0 0
      %7499 = vmatprep.mubr.bf16.mxu0 0
      %7500 = vmatmul.mubr.bf16.gmra.mrb[0].mxu0 %v7450
      %v7501 = vpop.f32.mrb[0].mxu0
      %v7502 = vadd.f32 0.0, %v7501
      %v7503 = vpop.f32.mrb[0].mxu0
      %v7504 = vpop.f32.mrb[0].mxu0
      %v7505 = vadd.f32 0.0, %v7504
      %v7506 = vpop.f32.mrb[0].mxu0
      %7507 = vmatprep.mubr.bf16.mxu0 0
      %7508 = vmatmul.mubr.bf16.gmra.mrb[0].mxu0 %v7453
      %v7509 = vpop.f32.mrb[0].mxu0
      %v7510 = vadd.f32 0.0, %v7509
      %v7511 = vpop.f32.mrb[0].mxu0
      %v7512 = vpop.f32.mrb[0].mxu0
      %v7513 = vadd.f32 0.0, %v7512
      %v7514 = vpop.f32.mrb[0].mxu0
      %7515 = vmatprep.mubr.bf16.mxu0 0
      %7516 = vmatmul.mubr.bf16.gmra.mrb[0].mxu0 %v7456
      %v7517 = vpop.f32.mrb[0].mxu0
      %v7518 = vadd.f32 0.0, %v7517
      %v7519 = vpop.f32.mrb[0].mxu0
      %v7520 = vpop.f32.mrb[0].mxu0
      %v7521 = vadd.f32 0.0, %v7520
      %v7522 = vpop.f32.mrb[0].mxu0
      %7523 = vmatprep.mubr.bf16.mxu0 0
      %7524 = vmatmul.mubr.bf16.gmra.mrb[0].mxu0 %v7459
      %v7525 = vpop.f32.mrb[0].mxu0
      %v7526 = vadd.f32 0.0, %v7525
      %v7527 = vpop.f32.mrb[0].mxu0
      %v7528 = vpop.f32.mrb[0].mxu0
      %v7529 = vadd.f32 0.0, %v7528
      %v7530 = vpop.f32.mrb[0].mxu0
      %7531 = vmatprep.mubr.bf16.mxu0 0
      %7532 = vmatmul.mubr.bf16.gmra.mrb[0].mxu0 %v7462
      %v7533 = vpop.f32.mrb[0].mxu0
      %v7534 = vadd.f32 0.0, %v7533
      %v7535 = vpop.f32.mrb[0].mxu0
      %v7536 = vpop.f32.mrb[0].mxu0
      %v7537 = vpop.f32.mrb[0].mxu0
      %7538 = vdwg.mxu0
      %v7539 = vadd.f32 %v7425, %v7502
      %v7540 = vadd.f32 %v7426, %v7505
      %v7541 = vadd.f32 %v7427, %v7510
      %v7542 = vadd.f32 %v7428, %v7513
      %v7543 = vadd.f32 %v7429, %v7518
      %v7544 = vadd.f32 %v7430, %v7521
      %v7545 = vadd.f32 %v7431, %v7526
      %v7546 = vadd.f32 %v7432, %v7529
      %v7547 = vadd.f32 %v7433, %v7534
      %v7548 = vld [vmem:[#allocation2 + $0x113] sm:$0xff]
      %v7549 = vld [vmem:[#allocation2 + $0x11b] sm:$0xff]
      %v7550 = vld [vmem:[#allocation2 + $0x123] sm:$0xff]
      %v7551 = vld [vmem:[#allocation2 + $0x12b] sm:$0xff]
      %v7552 = vld [vmem:[#allocation2 + $0x133] sm:$0xff]
      %v7553 = vld [vmem:[#allocation2 + $0x13b] sm:$0xff]
      %v7554 = vld [vmem:[#allocation2 + $0x143] sm:$0xff]
      %v7555 = vld [vmem:[#allocation2 + $0x14b] sm:$0xff]
      %v7556 = vld [vmem:[#allocation2 + $0x153] sm:$0xf]
      %v7557 = vpack.c.bf16 %v7549, %v7548
      %v7558 = vpack.c.bf16 %v7551, %v7550
      %v7559 = vpack.c.bf16 %v7553, %v7552
      %v7560 = vpack.c.bf16 %v7555, %v7554
      %v7561 = vpack.c.bf16 %v7556, %v7556
      %v7562 = vld [vmem:[%s5546] sm:$0xf]
      %v7564 = vsel %vm307, %v7557, 0
      %v7567 = vsel %vm307, %v7558, 0
      %v7570 = vsel %vm307, %v7559, 0
      %v7573 = vsel %vm307, %v7560, 0
      %v7576 = vsel %vm307, %v7561, 0
      %v7579 = vsel %vm4533, %v7562, 0
      %7581 = vmatprep.subr.bf16.mxu0 0
      %7582 = vmatpush1.bf16.msra.mxu0 %v7579
      %7583 = vmatprep.subr.bf16.mxu0 0
      %7584 = vmatpush1.bf16.msra.mxu0 0
      %7585 = vmatprep.subr.bf16.mxu0 0
      %7586 = vmatpush1.bf16.msra.mxu0 0
      %7587 = vmatprep.subr.bf16.mxu0 0
      %7588 = vmatpush1.bf16.msra.mxu0 0
      %7589 = vmatprep.subr.bf16.mxu0 0
      %7590 = vmatpush1.bf16.msra.mxu0 0
      %7591 = vmatprep.subr.bf16.mxu0 0
      %7592 = vmatpush1.bf16.msra.mxu0 0
      %7593 = vmatprep.subr.bf16.mxu0 0
      %7594 = vmatpush1.bf16.msra.mxu0 0
      %7595 = vmatprep.subr.bf16.mxu0 0
      %7596 = vmatpush1.bf16.msra.mxu0 0
      %7597 = vmatprep.subr.bf16.mxu0 0
      %7598 = vmatpush1.bf16.msra.mxu0 0
      %7599 = vmatprep.subr.bf16.mxu0 0
      %7600 = vmatpush1.bf16.msra.mxu0 0
      %7601 = vmatprep.subr.bf16.mxu0 0
      %7602 = vmatpush1.bf16.msra.mxu0 0
      %7603 = vmatprep.subr.bf16.mxu0 0
      %7604 = vmatpush1.bf16.msra.mxu0 0
      %7605 = vmatprep.subr.bf16.mxu0 0
      %7606 = vmatpush1.bf16.msra.mxu0 0
      %7607 = vmatprep.subr.bf16.mxu0 0
      %7608 = vmatpush1.bf16.msra.mxu0 0
      %7609 = vmatprep.subr.bf16.mxu0 0
      %7610 = vmatpush1.bf16.msra.mxu0 0
      %7611 = vmatprep.subr.bf16.mxu0 0
      %7612 = vmatpush1.bf16.msra.mxu0 0
      %7613 = vmatprep.mubr.bf16.mxu0 0
      %7614 = vmatmul.mubr.bf16.gmra.mrb[0].mxu0 %v7564
      %v7615 = vpop.f32.mrb[0].mxu0
      %v7616 = vadd.f32 0.0, %v7615
      %v7617 = vpop.f32.mrb[0].mxu0
      %v7618 = vpop.f32.mrb[0].mxu0
      %v7619 = vadd.f32 0.0, %v7618
      %v7620 = vpop.f32.mrb[0].mxu0
      %7621 = vmatprep.mubr.bf16.mxu0 0
      %7622 = vmatmul.mubr.bf16.gmra.mrb[0].mxu0 %v7567
      %v7623 = vpop.f32.mrb[0].mxu0
      %v7624 = vadd.f32 0.0, %v7623
      %v7625 = vpop.f32.mrb[0].mxu0
      %v7626 = vpop.f32.mrb[0].mxu0
      %v7627 = vadd.f32 0.0, %v7626
      %v7628 = vpop.f32.mrb[0].mxu0
      %7629 = vmatprep.mubr.bf16.mxu0 0
      %7630 = vmatmul.mubr.bf16.gmra.mrb[0].mxu0 %v7570
      %v7631 = vpop.f32.mrb[0].mxu0
      %v7632 = vadd.f32 0.0, %v7631
      %v7633 = vpop.f32.mrb[0].mxu0
      %v7634 = vpop.f32.mrb[0].mxu0
      %v7635 = vadd.f32 0.0, %v7634
      %v7636 = vpop.f32.mrb[0].mxu0
      %7637 = vmatprep.mubr.bf16.mxu0 0
      %7638 = vmatmul.mubr.bf16.gmra.mrb[0].mxu0 %v7573
      %v7639 = vpop.f32.mrb[0].mxu0
      %v7640 = vadd.f32 0.0, %v7639
      %v7641 = vpop.f32.mrb[0].mxu0
      %v7642 = vpop.f32.mrb[0].mxu0
      %v7643 = vadd.f32 0.0, %v7642
      %v7644 = vpop.f32.mrb[0].mxu0
      %7645 = vmatprep.mubr.bf16.mxu0 0
      %7646 = vmatmul.mubr.bf16.gmra.mrb[0].mxu0 %v7576
      %v7647 = vpop.f32.mrb[0].mxu0
      %v7648 = vadd.f32 0.0, %v7647
      %v7649 = vpop.f32.mrb[0].mxu0
      %v7650 = vpop.f32.mrb[0].mxu0
      %v7651 = vpop.f32.mrb[0].mxu0
      %7652 = vdwg.mxu0
      %v7653 = vadd.f32 %v7539, %v7616
      %v7654 = vadd.f32 %v7540, %v7619
      %v7655 = vadd.f32 %v7541, %v7624
      %v7656 = vadd.f32 %v7542, %v7627
      %v7657 = vadd.f32 %v7543, %v7632
      %v7658 = vadd.f32 %v7544, %v7635
      %v7659 = vadd.f32 %v7545, %v7640
      %v7660 = vadd.f32 %v7546, %v7643
      %v7661 = vadd.f32 %v7547, %v7648
      %v7662 = vld [vmem:[#allocation2 + $0x114] sm:$0xff]
      %v7663 = vld [vmem:[#allocation2 + $0x11c] sm:$0xff]
      %v7664 = vld [vmem:[#allocation2 + $0x124] sm:$0xff]
      %v7665 = vld [vmem:[#allocation2 + $0x12c] sm:$0xff]
      %v7666 = vld [vmem:[#allocation2 + $0x134] sm:$0xff]
      %v7667 = vld [vmem:[#allocation2 + $0x13c] sm:$0xff]
      %v7668 = vld [vmem:[#allocation2 + $0x144] sm:$0xff]
      %v7669 = vld [vmem:[#allocation2 + $0x14c] sm:$0xff]
      %v7670 = vld [vmem:[#allocation2 + $0x154] sm:$0xf]
      %v7671 = vpack.c.bf16 %v7663, %v7662
      %v7672 = vpack.c.bf16 %v7665, %v7664
      %v7673 = vpack.c.bf16 %v7667, %v7666
      %v7674 = vpack.c.bf16 %v7669, %v7668
      %v7675 = vpack.c.bf16 %v7670, %v7670
      %v7676 = vld [vmem:[%s5840] sm:$0xf]
      %v7678 = vsel %vm307, %v7671, 0
      %v7681 = vsel %vm307, %v7672, 0
      %v7684 = vsel %vm307, %v7673, 0
      %v7687 = vsel %vm307, %v7674, 0
      %v7690 = vsel %vm307, %v7675, 0
      %v7693 = vsel %vm4533, %v7676, 0
      %7695 = vmatprep.subr.bf16.mxu0 0
      %7696 = vmatpush1.bf16.msra.mxu0 %v7693
      %7697 = vmatprep.subr.bf16.mxu0 0
      %7698 = vmatpush1.bf16.msra.mxu0 0
      %7699 = vmatprep.subr.bf16.mxu0 0
      %7700 = vmatpush1.bf16.msra.mxu0 0
      %7701 = vmatprep.subr.bf16.mxu0 0
      %7702 = vmatpush1.bf16.msra.mxu0 0
      %7703 = vmatprep.subr.bf16.mxu0 0
      %7704 = vmatpush1.bf16.msra.mxu0 0
      %7705 = vmatprep.subr.bf16.mxu0 0
      %7706 = vmatpush1.bf16.msra.mxu0 0
      %7707 = vmatprep.subr.bf16.mxu0 0
      %7708 = vmatpush1.bf16.msra.mxu0 0
      %7709 = vmatprep.subr.bf16.mxu0 0
      %7710 = vmatpush1.bf16.msra.mxu0 0
      %7711 = vmatprep.subr.bf16.mxu0 0
      %7712 = vmatpush1.bf16.msra.mxu0 0
      %7713 = vmatprep.subr.bf16.mxu0 0
      %7714 = vmatpush1.bf16.msra.mxu0 0
      %7715 = vmatprep.subr.bf16.mxu0 0
      %7716 = vmatpush1.bf16.msra.mxu0 0
      %7717 = vmatprep.subr.bf16.mxu0 0
      %7718 = vmatpush1.bf16.msra.mxu0 0
      %7719 = vmatprep.subr.bf16.mxu0 0
      %7720 = vmatpush1.bf16.msra.mxu0 0
      %7721 = vmatprep.subr.bf16.mxu0 0
      %7722 = vmatpush1.bf16.msra.mxu0 0
      %7723 = vmatprep.subr.bf16.mxu0 0
      %7724 = vmatpush1.bf16.msra.mxu0 0
      %7725 = vmatprep.subr.bf16.mxu0 0
      %7726 = vmatpush1.bf16.msra.mxu0 0
      %7727 = vmatprep.mubr.bf16.mxu0 0
      %7728 = vmatmul.mubr.bf16.gmra.mrb[0].mxu0 %v7678
      %v7729 = vpop.f32.mrb[0].mxu0
      %v7730 = vadd.f32 0.0, %v7729
      %v7731 = vpop.f32.mrb[0].mxu0
      %v7732 = vpop.f32.mrb[0].mxu0
      %v7733 = vadd.f32 0.0, %v7732
      %v7734 = vpop.f32.mrb[0].mxu0
      %7735 = vmatprep.mubr.bf16.mxu0 0
      %7736 = vmatmul.mubr.bf16.gmra.mrb[0].mxu0 %v7681
      %v7737 = vpop.f32.mrb[0].mxu0
      %v7738 = vadd.f32 0.0, %v7737
      %v7739 = vpop.f32.mrb[0].mxu0
      %v7740 = vpop.f32.mrb[0].mxu0
      %v7741 = vadd.f32 0.0, %v7740
      %v7742 = vpop.f32.mrb[0].mxu0
      %7743 = vmatprep.mubr.bf16.mxu0 0
      %7744 = vmatmul.mubr.bf16.gmra.mrb[0].mxu0 %v7684
      %v7745 = vpop.f32.mrb[0].mxu0
      %v7746 = vadd.f32 0.0, %v7745
      %v7747 = vpop.f32.mrb[0].mxu0
      %v7748 = vpop.f32.mrb[0].mxu0
      %v7749 = vadd.f32 0.0, %v7748
      %v7750 = vpop.f32.mrb[0].mxu0
      %7751 = vmatprep.mubr.bf16.mxu0 0
      %7752 = vmatmul.mubr.bf16.gmra.mrb[0].mxu0 %v7687
      %v7753 = vpop.f32.mrb[0].mxu0
      %v7754 = vadd.f32 0.0, %v7753
      %v7755 = vpop.f32.mrb[0].mxu0
      %v7756 = vpop.f32.mrb[0].mxu0
      %v7757 = vadd.f32 0.0, %v7756
      %v7758 = vpop.f32.mrb[0].mxu0
      %7759 = vmatprep.mubr.bf16.mxu0 0
      %7760 = vmatmul.mubr.bf16.gmra.mrb[0].mxu0 %v7690
      %v7761 = vpop.f32.mrb[0].mxu0
      %v7762 = vadd.f32 0.0, %v7761
      %v7763 = vpop.f32.mrb[0].mxu0
      %v7764 = vpop.f32.mrb[0].mxu0
      %v7765 = vpop.f32.mrb[0].mxu0
      %7766 = vdwg.mxu0
      %v7767 = vadd.f32 %v7653, %v7730
      %v7768 = vadd.f32 %v7654, %v7733
      %v7769 = vadd.f32 %v7655, %v7738
      %v7770 = vadd.f32 %v7656, %v7741
      %v7771 = vadd.f32 %v7657, %v7746
      %v7772 = vadd.f32 %v7658, %v7749
      %v7773 = vadd.f32 %v7659, %v7754
      %v7774 = vadd.f32 %v7660, %v7757
      %v7775 = vadd.f32 %v7661, %v7762
      %v7776 = vld [vmem:[#allocation2 + $0x124] sm:$0xff]
      %v7777 = vld [vmem:[#allocation2 + $0x12c] sm:$0xff]
      %v7778 = vld [vmem:[#allocation2 + $0x134] sm:$0xff]
      %v7779 = vld [vmem:[#allocation2 + $0x13c] sm:$0xff]
      %v7780 = vld [vmem:[#allocation2 + $0x144] sm:$0xff]
      %v7781 = vld [vmem:[#allocation2 + $0x14c] sm:$0xff]
      %v7782 = vld [vmem:[#allocation2 + $0x154] sm:$0xff]
      %v7783 = vld [vmem:[#allocation2 + $0x15c] sm:$0xff]
      %v7784 = vld [vmem:[#allocation2 + $0x164] sm:$0xf]
      %v7785 = vpack.c.bf16 %v7777, %v7776
      %v7786 = vpack.c.bf16 %v7779, %v7778
      %v7787 = vpack.c.bf16 %v7781, %v7780
      %v7788 = vpack.c.bf16 %v7783, %v7782
      %v7789 = vpack.c.bf16 %v7784, %v7784
      %v7790 = vld [vmem:[%s6134] sm:$0xf]
      %v7792 = vsel %vm307, %v7785, 0
      %v7795 = vsel %vm307, %v7786, 0
      %v7798 = vsel %vm307, %v7787, 0
      %v7801 = vsel %vm307, %v7788, 0
      %v7804 = vsel %vm307, %v7789, 0
      %v7807 = vsel %vm4533, %v7790, 0
      %7809 = vmatprep.subr.bf16.mxu0 0
      %7810 = vmatpush1.bf16.msra.mxu0 %v7807
      %7811 = vmatprep.subr.bf16.mxu0 0
      %7812 = vmatpush1.bf16.msra.mxu0 0
      %7813 = vmatprep.subr.bf16.mxu0 0
      %7814 = vmatpush1.bf16.msra.mxu0 0
      %7815 = vmatprep.subr.bf16.mxu0 0
      %7816 = vmatpush1.bf16.msra.mxu0 0
      %7817 = vmatprep.subr.bf16.mxu0 0
      %7818 = vmatpush1.bf16.msra.mxu0 0
      %7819 = vmatprep.subr.bf16.mxu0 0
      %7820 = vmatpush1.bf16.msra.mxu0 0
      %7821 = vmatprep.subr.bf16.mxu0 0
      %7822 = vmatpush1.bf16.msra.mxu0 0
      %7823 = vmatprep.subr.bf16.mxu0 0
      %7824 = vmatpush1.bf16.msra.mxu0 0
      %7825 = vmatprep.subr.bf16.mxu0 0
      %7826 = vmatpush1.bf16.msra.mxu0 0
      %7827 = vmatprep.subr.bf16.mxu0 0
      %7828 = vmatpush1.bf16.msra.mxu0 0
      %7829 = vmatprep.subr.bf16.mxu0 0
      %7830 = vmatpush1.bf16.msra.mxu0 0
      %7831 = vmatprep.subr.bf16.mxu0 0
      %7832 = vmatpush1.bf16.msra.mxu0 0
      %7833 = vmatprep.subr.bf16.mxu0 0
      %7834 = vmatpush1.bf16.msra.mxu0 0
      %7835 = vmatprep.subr.bf16.mxu0 0
      %7836 = vmatpush1.bf16.msra.mxu0 0
      %7837 = vmatprep.subr.bf16.mxu0 0
      %7838 = vmatpush1.bf16.msra.mxu0 0
      %7839 = vmatprep.subr.bf16.mxu0 0
      %7840 = vmatpush1.bf16.msra.mxu0 0
      %7841 = vmatprep.mubr.bf16.mxu0 0
      %7842 = vmatmul.mubr.bf16.gmra.mrb[0].mxu0 %v7792
      %v7843 = vpop.f32.mrb[0].mxu0
      %v7844 = vadd.f32 0.0, %v7843
      %v7845 = vpop.f32.mrb[0].mxu0
      %v7846 = vpop.f32.mrb[0].mxu0
      %v7847 = vadd.f32 0.0, %v7846
      %v7848 = vpop.f32.mrb[0].mxu0
      %7849 = vmatprep.mubr.bf16.mxu0 0
      %7850 = vmatmul.mubr.bf16.gmra.mrb[0].mxu0 %v7795
      %v7851 = vpop.f32.mrb[0].mxu0
      %v7852 = vadd.f32 0.0, %v7851
      %v7853 = vpop.f32.mrb[0].mxu0
      %v7854 = vpop.f32.mrb[0].mxu0
      %v7855 = vadd.f32 0.0, %v7854
      %v7856 = vpop.f32.mrb[0].mxu0
      %7857 = vmatprep.mubr.bf16.mxu0 0
      %7858 = vmatmul.mubr.bf16.gmra.mrb[0].mxu0 %v7798
      %v7859 = vpop.f32.mrb[0].mxu0
      %v7860 = vadd.f32 0.0, %v7859
      %v7861 = vpop.f32.mrb[0].mxu0
      %v7862 = vpop.f32.mrb[0].mxu0
      %v7863 = vadd.f32 0.0, %v7862
      %v7864 = vpop.f32.mrb[0].mxu0
      %7865 = vmatprep.mubr.bf16.mxu0 0
      %7866 = vmatmul.mubr.bf16.gmra.mrb[0].mxu0 %v7801
      %v7867 = vpop.f32.mrb[0].mxu0
      %v7868 = vadd.f32 0.0, %v7867
      %v7869 = vpop.f32.mrb[0].mxu0
      %v7870 = vpop.f32.mrb[0].mxu0
      %v7871 = vadd.f32 0.0, %v7870
      %v7872 = vpop.f32.mrb[0].mxu0
      %7873 = vmatprep.mubr.bf16.mxu0 0
      %7874 = vmatmul.mubr.bf16.gmra.mrb[0].mxu0 %v7804
      %v7875 = vpop.f32.mrb[0].mxu0
      %v7876 = vadd.f32 0.0, %v7875
      %v7877 = vpop.f32.mrb[0].mxu0
      %v7878 = vpop.f32.mrb[0].mxu0
      %v7879 = vpop.f32.mrb[0].mxu0
      %7880 = vdwg.mxu0
      %v7881 = vadd.f32 %v7767, %v7844
      %v7882 = vadd.f32 %v7768, %v7847
      %v7883 = vadd.f32 %v7769, %v7852
      %v7884 = vadd.f32 %v7770, %v7855
      %v7885 = vadd.f32 %v7771, %v7860
      %v7886 = vadd.f32 %v7772, %v7863
      %v7887 = vadd.f32 %v7773, %v7868
      %v7888 = vadd.f32 %v7774, %v7871
      %v7889 = vadd.f32 %v7775, %v7876
      %v7890 = vld [vmem:[#allocation2 + $0x125] sm:$0xff]
      %v7891 = vld [vmem:[#allocation2 + $0x12d] sm:$0xff]
      %v7892 = vld [vmem:[#allocation2 + $0x135] sm:$0xff]
      %v7893 = vld [vmem:[#allocation2 + $0x13d] sm:$0xff]
      %v7894 = vld [vmem:[#allocation2 + $0x145] sm:$0xff]
      %v7895 = vld [vmem:[#allocation2 + $0x14d] sm:$0xff]
      %v7896 = vld [vmem:[#allocation2 + $0x155] sm:$0xff]
      %v7897 = vld [vmem:[#allocation2 + $0x15d] sm:$0xff]
      %v7898 = vld [vmem:[#allocation2 + $0x165] sm:$0xf]
      %v7899 = vpack.c.bf16 %v7891, %v7890
      %v7900 = vpack.c.bf16 %v7893, %v7892
      %v7901 = vpack.c.bf16 %v7895, %v7894
      %v7902 = vpack.c.bf16 %v7897, %v7896
      %v7903 = vpack.c.bf16 %v7898, %v7898
      %v7904 = vld [vmem:[%s6428] sm:$0xf]
      %v7906 = vsel %vm307, %v7899, 0
      %v7909 = vsel %vm307, %v7900, 0
      %v7912 = vsel %vm307, %v7901, 0
      %v7915 = vsel %vm307, %v7902, 0
      %v7918 = vsel %vm307, %v7903, 0
      %v7921 = vsel %vm4533, %v7904, 0
      %7923 = vmatprep.subr.bf16.mxu0 0
      %7924 = vmatpush1.bf16.msra.mxu0 %v7921
      %7925 = vmatprep.subr.bf16.mxu0 0
      %7926 = vmatpush1.bf16.msra.mxu0 0
      %7927 = vmatprep.subr.bf16.mxu0 0
      %7928 = vmatpush1.bf16.msra.mxu0 0
      %7929 = vmatprep.subr.bf16.mxu0 0
      %7930 = vmatpush1.bf16.msra.mxu0 0
      %7931 = vmatprep.subr.bf16.mxu0 0
      %7932 = vmatpush1.bf16.msra.mxu0 0
      %7933 = vmatprep.subr.bf16.mxu0 0
      %7934 = vmatpush1.bf16.msra.mxu0 0
      %7935 = vmatprep.subr.bf16.mxu0 0
      %7936 = vmatpush1.bf16.msra.mxu0 0
      %7937 = vmatprep.subr.bf16.mxu0 0
      %7938 = vmatpush1.bf16.msra.mxu0 0
      %7939 = vmatprep.subr.bf16.mxu0 0
      %7940 = vmatpush1.bf16.msra.mxu0 0
      %7941 = vmatprep.subr.bf16.mxu0 0
      %7942 = vmatpush1.bf16.msra.mxu0 0
      %7943 = vmatprep.subr.bf16.mxu0 0
      %7944 = vmatpush1.bf16.msra.mxu0 0
      %7945 = vmatprep.subr.bf16.mxu0 0
      %7946 = vmatpush1.bf16.msra.mxu0 0
      %7947 = vmatprep.subr.bf16.mxu0 0
      %7948 = vmatpush1.bf16.msra.mxu0 0
      %7949 = vmatprep.subr.bf16.mxu0 0
      %7950 = vmatpush1.bf16.msra.mxu0 0
      %7951 = vmatprep.subr.bf16.mxu0 0
      %7952 = vmatpush1.bf16.msra.mxu0 0
      %7953 = vmatprep.subr.bf16.mxu0 0
      %7954 = vmatpush1.bf16.msra.mxu0 0
      %7955 = vmatprep.mubr.bf16.mxu0 0
      %7956 = vmatmul.mubr.bf16.gmra.mrb[0].mxu0 %v7906
      %v7957 = vpop.f32.mrb[0].mxu0
      %v7958 = vadd.f32 0.0, %v7957
      %v7959 = vpop.f32.mrb[0].mxu0
      %v7960 = vpop.f32.mrb[0].mxu0
      %v7961 = vadd.f32 0.0, %v7960
      %v7962 = vpop.f32.mrb[0].mxu0
      %7963 = vmatprep.mubr.bf16.mxu0 0
      %7964 = vmatmul.mubr.bf16.gmra.mrb[0].mxu0 %v7909
      %v7965 = vpop.f32.mrb[0].mxu0
      %v7966 = vadd.f32 0.0, %v7965
      %v7967 = vpop.f32.mrb[0].mxu0
      %v7968 = vpop.f32.mrb[0].mxu0
      %v7969 = vadd.f32 0.0, %v7968
      %v7970 = vpop.f32.mrb[0].mxu0
      %7971 = vmatprep.mubr.bf16.mxu0 0
      %7972 = vmatmul.mubr.bf16.gmra.mrb[0].mxu0 %v7912
      %v7973 = vpop.f32.mrb[0].mxu0
      %v7974 = vadd.f32 0.0, %v7973
      %v7975 = vpop.f32.mrb[0].mxu0
      %v7976 = vpop.f32.mrb[0].mxu0
      %v7977 = vadd.f32 0.0, %v7976
      %v7978 = vpop.f32.mrb[0].mxu0
      %7979 = vmatprep.mubr.bf16.mxu0 0
      %7980 = vmatmul.mubr.bf16.gmra.mrb[0].mxu0 %v7915
      %v7981 = vpop.f32.mrb[0].mxu0
      %v7982 = vadd.f32 0.0, %v7981
      %v7983 = vpop.f32.mrb[0].mxu0
      %v7984 = vpop.f32.mrb[0].mxu0
      %v7985 = vadd.f32 0.0, %v7984
      %v7986 = vpop.f32.mrb[0].mxu0
      %7987 = vmatprep.mubr.bf16.mxu0 0
      %7988 = vmatmul.mubr.bf16.gmra.mrb[0].mxu0 %v7918
      %v7989 = vpop.f32.mrb[0].mxu0
      %v7990 = vadd.f32 0.0, %v7989
      %v7991 = vpop.f32.mrb[0].mxu0
      %v7992 = vpop.f32.mrb[0].mxu0
      %v7993 = vpop.f32.mrb[0].mxu0
      %7994 = vdwg.mxu0
      %v7995 = vadd.f32 %v7881, %v7958
      %v7996 = vadd.f32 %v7882, %v7961
      %v7997 = vadd.f32 %v7883, %v7966
      %v7998 = vadd.f32 %v7884, %v7969
      %v7999 = vadd.f32 %v7885, %v7974
      %v8000 = vadd.f32 %v7886, %v7977
      %v8001 = vadd.f32 %v7887, %v7982
      %v8002 = vadd.f32 %v7888, %v7985
      %v8003 = vadd.f32 %v7889, %v7990
      %v8004 = vld [vmem:[#allocation2 + $0x126] sm:$0xff]
      %v8005 = vld [vmem:[#allocation2 + $0x12e] sm:$0xff]
      %v8006 = vld [vmem:[#allocation2 + $0x136] sm:$0xff]
      %v8007 = vld [vmem:[#allocation2 + $0x13e] sm:$0xff]
      %v8008 = vld [vmem:[#allocation2 + $0x146] sm:$0xff]
      %v8009 = vld [vmem:[#allocation2 + $0x14e] sm:$0xff]
      %v8010 = vld [vmem:[#allocation2 + $0x156] sm:$0xff]
      %v8011 = vld [vmem:[#allocation2 + $0x15e] sm:$0xff]
      %v8012 = vld [vmem:[#allocation2 + $0x166] sm:$0xf]
      %v8013 = vpack.c.bf16 %v8005, %v8004
      %v8014 = vpack.c.bf16 %v8007, %v8006
      %v8015 = vpack.c.bf16 %v8009, %v8008
      %v8016 = vpack.c.bf16 %v8011, %v8010
      %v8017 = vpack.c.bf16 %v8012, %v8012
      %v8018 = vld [vmem:[%s6722] sm:$0xf]
      %v8020 = vsel %vm307, %v8013, 0
      %v8023 = vsel %vm307, %v8014, 0
      %v8026 = vsel %vm307, %v8015, 0
      %v8029 = vsel %vm307, %v8016, 0
      %v8032 = vsel %vm307, %v8017, 0
      %v8035 = vsel %vm4533, %v8018, 0
      %8037 = vmatprep.subr.bf16.mxu0 0
      %8038 = vmatpush1.bf16.msra.mxu0 %v8035
      %8039 = vmatprep.subr.bf16.mxu0 0
      %8040 = vmatpush1.bf16.msra.mxu0 0
      %8041 = vmatprep.subr.bf16.mxu0 0
      %8042 = vmatpush1.bf16.msra.mxu0 0
      %8043 = vmatprep.subr.bf16.mxu0 0
      %8044 = vmatpush1.bf16.msra.mxu0 0
      %8045 = vmatprep.subr.bf16.mxu0 0
      %8046 = vmatpush1.bf16.msra.mxu0 0
      %8047 = vmatprep.subr.bf16.mxu0 0
      %8048 = vmatpush1.bf16.msra.mxu0 0
      %8049 = vmatprep.subr.bf16.mxu0 0
      %8050 = vmatpush1.bf16.msra.mxu0 0
      %8051 = vmatprep.subr.bf16.mxu0 0
      %8052 = vmatpush1.bf16.msra.mxu0 0
      %8053 = vmatprep.subr.bf16.mxu0 0
      %8054 = vmatpush1.bf16.msra.mxu0 0
      %8055 = vmatprep.subr.bf16.mxu0 0
      %8056 = vmatpush1.bf16.msra.mxu0 0
      %8057 = vmatprep.subr.bf16.mxu0 0
      %8058 = vmatpush1.bf16.msra.mxu0 0
      %8059 = vmatprep.subr.bf16.mxu0 0
      %8060 = vmatpush1.bf16.msra.mxu0 0
      %8061 = vmatprep.subr.bf16.mxu0 0
      %8062 = vmatpush1.bf16.msra.mxu0 0
      %8063 = vmatprep.subr.bf16.mxu0 0
      %8064 = vmatpush1.bf16.msra.mxu0 0
      %8065 = vmatprep.subr.bf16.mxu0 0
      %8066 = vmatpush1.bf16.msra.mxu0 0
      %8067 = vmatprep.subr.bf16.mxu0 0
      %8068 = vmatpush1.bf16.msra.mxu0 0
      %8069 = vmatprep.mubr.bf16.mxu0 0
      %8070 = vmatmul.mubr.bf16.gmra.mrb[0].mxu0 %v8020
      %v8071 = vpop.f32.mrb[0].mxu0
      %v8072 = vadd.f32 0.0, %v8071
      %v8073 = vpop.f32.mrb[0].mxu0
      %v8074 = vpop.f32.mrb[0].mxu0
      %v8075 = vadd.f32 0.0, %v8074
      %v8076 = vpop.f32.mrb[0].mxu0
      %8077 = vmatprep.mubr.bf16.mxu0 0
      %8078 = vmatmul.mubr.bf16.gmra.mrb[0].mxu0 %v8023
      %v8079 = vpop.f32.mrb[0].mxu0
      %v8080 = vadd.f32 0.0, %v8079
      %v8081 = vpop.f32.mrb[0].mxu0
      %v8082 = vpop.f32.mrb[0].mxu0
      %v8083 = vadd.f32 0.0, %v8082
      %v8084 = vpop.f32.mrb[0].mxu0
      %8085 = vmatprep.mubr.bf16.mxu0 0
      %8086 = vmatmul.mubr.bf16.gmra.mrb[0].mxu0 %v8026
      %v8087 = vpop.f32.mrb[0].mxu0
      %v8088 = vadd.f32 0.0, %v8087
      %v8089 = vpop.f32.mrb[0].mxu0
      %v8090 = vpop.f32.mrb[0].mxu0
      %v8091 = vadd.f32 0.0, %v8090
      %v8092 = vpop.f32.mrb[0].mxu0
      %8093 = vmatprep.mubr.bf16.mxu0 0
      %8094 = vmatmul.mubr.bf16.gmra.mrb[0].mxu0 %v8029
      %v8095 = vpop.f32.mrb[0].mxu0
      %v8096 = vadd.f32 0.0, %v8095
      %v8097 = vpop.f32.mrb[0].mxu0
      %v8098 = vpop.f32.mrb[0].mxu0
      %v8099 = vadd.f32 0.0, %v8098
      %v8100 = vpop.f32.mrb[0].mxu0
      %8101 = vmatprep.mubr.bf16.mxu0 0
      %8102 = vmatmul.mubr.bf16.gmra.mrb[0].mxu0 %v8032
      %v8103 = vpop.f32.mrb[0].mxu0
      %v8104 = vadd.f32 0.0, %v8103
      %v8105 = vpop.f32.mrb[0].mxu0
      %v8106 = vpop.f32.mrb[0].mxu0
      %v8107 = vpop.f32.mrb[0].mxu0
      %8108 = vdwg.mxu0
      %v8109 = vadd.f32 %v7995, %v8072
      %v8110 = vadd.f32 %v7996, %v8075
      %v8111 = vadd.f32 %v7997, %v8080
      %v8112 = vadd.f32 %v7998, %v8083
      %v8113 = vadd.f32 %v7999, %v8088
      %v8114 = vadd.f32 %v8000, %v8091
      %v8115 = vadd.f32 %v8001, %v8096
      %v8116 = vadd.f32 %v8002, %v8099
      %v8117 = vadd.f32 %v8003, %v8104
      %v8118 = vld [vmem:[%s5] sm:$0x1]
      %v8120 = vlaneseq
      %v8121 = vshrl.u32 %v8120, 7
      %v8122 = vsub.s32 0, %v8121
      %v8123 = vrot.slane %v8118, %v8122
      %v8125 = vmul.f32 %v8109, %v8123
      %v8126 = vmul.f32 %v8110, %v8123
      %v8127 = vmul.f32 %v8111, %v8123
      %v8128 = vmul.f32 %v8112, %v8123
      %v8129 = vmul.f32 %v8113, %v8123
      %v8130 = vmul.f32 %v8114, %v8123
      %v8131 = vmul.f32 %v8115, %v8123
      %v8132 = vmul.f32 %v8116, %v8123
      %v8133 = vmul.f32 %v8117, %v8123
      %v8134 = vld [vmem:[%s6] sm:$0x1]
      %v8136 = vlaneseq
      %v8137 = vshrl.u32 %v8136, 7
      %v8138 = vsub.s32 0, %v8137
      %v8139 = vrot.slane %v8134, %v8138
      %v8141 = vadd.f32 %v8125, %v8139
      %v8142 = vadd.f32 %v8126, %v8139
      %v8143 = vadd.f32 %v8127, %v8139
      %v8144 = vadd.f32 %v8128, %v8139
      %v8145 = vadd.f32 %v8129, %v8139
      %v8146 = vadd.f32 %v8130, %v8139
      %v8147 = vadd.f32 %v8131, %v8139
      %v8148 = vadd.f32 %v8132, %v8139
      %v8149 = vadd.f32 %v8133, %v8139
      %v8150 = vmax.f32 %v8141, 0.0
      %v8151 = vmax.f32 %v8142, 0.0
      %v8152 = vmax.f32 %v8143, 0.0
      %v8153 = vmax.f32 %v8144, 0.0
      %v8154 = vmax.f32 %v8145, 0.0
      %v8155 = vmax.f32 %v8146, 0.0
      %v8156 = vmax.f32 %v8147, 0.0
      %v8157 = vmax.f32 %v8148, 0.0
      %v8158 = vmax.f32 %v8149, 0.0
      %8159 = vst.msk [vmem:[#allocation3 + $0x100] sm:$0xff] %vm307, %v8150
      %8160 = vst.msk [vmem:[#allocation3 + $0x108] sm:$0xff] %vm307, %v8151
      %8161 = vst.msk [vmem:[#allocation3 + $0x110] sm:$0xff] %vm307, %v8152
      %8162 = vst.msk [vmem:[#allocation3 + $0x118] sm:$0xff] %vm307, %v8153
      %8163 = vst.msk [vmem:[#allocation3 + $0x120] sm:$0xff] %vm307, %v8154
      %8164 = vst.msk [vmem:[#allocation3 + $0x128] sm:$0xff] %vm307, %v8155
      %8165 = vst.msk [vmem:[#allocation3 + $0x130] sm:$0xff] %vm307, %v8156
      %8166 = vst.msk [vmem:[#allocation3 + $0x138] sm:$0xff] %vm307, %v8157
      %8167 = vst.msk [vmem:[#allocation3 + $0x140] sm:$0xf] %vm4384, %v8158
      %s8168 = scalar_lea.vmem [#allocation3], 19
      %v8169 = vld [vmem:[%s8168] ss:$2 sm:$0xff]
      %s8170 = scalar_lea.vmem [#allocation3], 20
      %v8171 = vld [vmem:[%s8170] ss:$2 sm:$0xff]
      %v8172 = vadd.f32 %v8169, %v8171
      %s8173 = scalar_lea.vmem [#allocation3], 37
      %v8174 = vld [vmem:[%s8173] ss:$2 sm:$0xff]
      %v8175 = vadd.f32 %v8172, %v8174
      %s8176 = scalar_lea.vmem [#allocation3], 38
      %v8177 = vld [vmem:[%s8176] ss:$2 sm:$0xff]
      %v8178 = vadd.f32 %v8175, %v8177
      %s8179 = scalar_lea.vmem [#allocation3], 55
      %v8180 = vld [vmem:[%s8179] ss:$2 sm:$0xff]
      %s8181 = scalar_lea.vmem [#allocation3], 56
      %v8182 = vld [vmem:[%s8181] ss:$2 sm:$0xff]
      %v8183 = vadd.f32 %v8180, %v8182
      %s8184 = scalar_lea.vmem [#allocation3], 73
      %v8185 = vld [vmem:[%s8184] ss:$2 sm:$0xff]
      %v8186 = vadd.f32 %v8183, %v8185
      %s8187 = scalar_lea.vmem [#allocation3], 74
      %v8188 = vld [vmem:[%s8187] ss:$2 sm:$0xff]
      %v8189 = vadd.f32 %v8186, %v8188
      %s8190 = scalar_lea.vmem [#allocation3], 91
      %v8191 = vld [vmem:[%s8190] ss:$2 sm:$0xff]
      %s8192 = scalar_lea.vmem [#allocation3], 92
      %v8193 = vld [vmem:[%s8192] ss:$2 sm:$0xff]
      %v8194 = vadd.f32 %v8191, %v8193
      %s8195 = scalar_lea.vmem [#allocation3], 109
      %v8196 = vld [vmem:[%s8195] ss:$2 sm:$0xff]
      %v8197 = vadd.f32 %v8194, %v8196
      %s8198 = scalar_lea.vmem [#allocation3], 110
      %v8199 = vld [vmem:[%s8198] ss:$2 sm:$0xff]
      %v8200 = vadd.f32 %v8197, %v8199
      %s8201 = scalar_lea.vmem [#allocation3], 127
      %v8202 = vld [vmem:[%s8201] ss:$2 sm:$0xff]
      %s8203 = scalar_lea.vmem [#allocation3], 128
      %v8204 = vld [vmem:[%s8203] ss:$2 sm:$0xff]
      %v8205 = vadd.f32 %v8202, %v8204
      %s8206 = scalar_lea.vmem [#allocation3], 145
      %v8207 = vld [vmem:[%s8206] ss:$2 sm:$0xff]
      %v8208 = vadd.f32 %v8205, %v8207
      %s8209 = scalar_lea.vmem [#allocation3], 146
      %v8210 = vld [vmem:[%s8209] ss:$2 sm:$0xff]
      %v8211 = vadd.f32 %v8208, %v8210
      %s8212 = scalar_lea.vmem [#allocation3], 163
      %v8213 = vld [vmem:[%s8212] ss:$2 sm:$0xff]
      %s8214 = scalar_lea.vmem [#allocation3], 164
      %v8215 = vld [vmem:[%s8214] ss:$2 sm:$0xff]
      %v8216 = vadd.f32 %v8213, %v8215
      %s8217 = scalar_lea.vmem [#allocation3], 181
      %v8218 = vld [vmem:[%s8217] ss:$2 sm:$0xff]
      %v8219 = vadd.f32 %v8216, %v8218
      %s8220 = scalar_lea.vmem [#allocation3], 182
      %v8221 = vld [vmem:[%s8220] ss:$2 sm:$0xff]
      %v8222 = vadd.f32 %v8219, %v8221
      %s8223 = scalar_lea.vmem [#allocation3], 199
      %v8224 = vld [vmem:[%s8223] ss:$2 sm:$0xff]
      %s8225 = scalar_lea.vmem [#allocation3], 200
      %v8226 = vld [vmem:[%s8225] ss:$2 sm:$0xff]
      %v8227 = vadd.f32 %v8224, %v8226
      %s8228 = scalar_lea.vmem [#allocation3], 217
      %v8229 = vld [vmem:[%s8228] ss:$2 sm:$0xff]
      %v8230 = vadd.f32 %v8227, %v8229
      %s8231 = scalar_lea.vmem [#allocation3], 218
      %v8232 = vld [vmem:[%s8231] ss:$2 sm:$0xff]
      %v8233 = vadd.f32 %v8230, %v8232
      %s8234 = scalar_lea.vmem [#allocation3], 235
      %v8235 = vld [vmem:[%s8234] ss:$2 sm:$0xff]
      %s8236 = scalar_lea.vmem [#allocation3], 236
      %v8237 = vld [vmem:[%s8236] ss:$2 sm:$0xff]
      %v8238 = vadd.f32 %v8235, %v8237
      %s8239 = scalar_lea.vmem [#allocation3], 253
      %v8240 = vld [vmem:[%s8239] ss:$2 sm:$0xff]
      %v8241 = vadd.f32 %v8238, %v8240
      %s8242 = scalar_lea.vmem [#allocation3], 254
      %v8243 = vld [vmem:[%s8242] ss:$2 sm:$0xff]
      %v8244 = vadd.f32 %v8241, %v8243
      %s8245 = scalar_lea.vmem [#allocation3], 271
      %v8246 = vld [vmem:[%s8245] ss:$2 sm:$0xff]
      %s8247 = scalar_lea.vmem [#allocation3], 272
      %v8248 = vld [vmem:[%s8247] ss:$2 sm:$0xff]
      %v8249 = vadd.f32 %v8246, %v8248
      %s8250 = scalar_lea.vmem [#allocation3], 289
      %v8251 = vld [vmem:[%s8250] ss:$2 sm:$0xff]
      %v8252 = vadd.f32 %v8249, %v8251
      %s8253 = scalar_lea.vmem [#allocation3], 290
      %v8254 = vld [vmem:[%s8253] ss:$2 sm:$0xff]
      %v8255 = vadd.f32 %v8252, %v8254
      %v8256 = vmul.f32 %v8178, 0.25
      %v8257 = vmul.f32 %v8189, 0.25
      %v8258 = vmul.f32 %v8200, 0.25
      %v8259 = vmul.f32 %v8211, 0.25
      %v8260 = vmul.f32 %v8222, 0.25
      %v8261 = vmul.f32 %v8233, 0.25
      %v8262 = vmul.f32 %v8244, 0.25
      %v8263 = vmul.f32 %v8255, 0.25
      %8264 = vst.msk [vmem:[%s305] sm:$0xff] %vm307, %v8256
      %8265 = vst.msk [vmem:[%s305 + $0x8] sm:$0xff] %vm307, %v8257
      %8266 = vst.msk [vmem:[%s305 + $0x10] sm:$0xff] %vm307, %v8258
      %8267 = vst.msk [vmem:[%s305 + $0x18] sm:$0xff] %vm307, %v8259
      %8268 = vst.msk [vmem:[%s305 + $0x20] sm:$0xff] %vm307, %v8260
      %8269 = vst.msk [vmem:[%s305 + $0x28] sm:$0xff] %vm307, %v8261
      %8270 = vst.msk [vmem:[%s305 + $0x30] sm:$0xff] %vm307, %v8262
      %8271 = vst.msk [vmem:[%s305 + $0x38] sm:$0xff] %vm307, %v8263
      %p8272 = scmp.lt.s32.totalorder %s19, 1
      %s8273 = scalar_select %p8272, %s19, 1
      %s8274 = smul.addr %s8273, 8
      %s8275 = smul.addr %s8274, 8
      %s8276 = scalar_lea.vmem %s8, %s8275
      // Predicated region
      $region53: #{tpu_custom_call.1} parent=51 // pred_check
        %p8277 = pneg %p210
      $region54: #{tpu_custom_call.1} parent=51 // pred_check_branch
        %8279 = sbr.rel (%p8277) target = $region56
      $region55: #{tpu_custom_call.1} parent=51 // pred_region
        _
      $region56: #{tpu_custom_call.1} parent=51 // pred_fallthru
        _
    $region52: #{tpu_custom_call.1} parent=5 // pred_fallthru
      _
    %p8280 = scmp.le.s32.totalorder 2, %s14
    // Predicated region
    $region57: #{tpu_custom_call.1} parent=5 // pred_check
      %p8281 = pneg %p8280
    $region58: #{tpu_custom_call.1} parent=5 // pred_check_branch
      %8283 = sbr.rel (%p8281) target = $region60
    $region59: #{tpu_custom_call.1} parent=5 // pred_region
      %s8284 = ssub.s32 %s14, 2
      // Predicated region
      $region61: #{tpu_custom_call.1} parent=59 // pred_check
        %p8285 = pneg %p216
      $region62: #{tpu_custom_call.1} parent=59 // pred_check_branch
        %8287 = sbr.rel (%p8285) target = $region64
      $region63: #{tpu_custom_call.1} parent=59 // pred_region
        %p8288 = scmp.lt.s32.totalorder %s20, 1
        %s8289 = scalar_select %p8288, %s20, 1
        %s8290 = smul.addr %s8289, 8
        %s8291 = smul.addr %s8290, 8
        %s8292 = scalar_lea.vmem %s8, %s8291
      $region64: #{tpu_custom_call.1} parent=59 // pred_fallthru
        _
    $region60: #{tpu_custom_call.1} parent=5 // pred_fallthru
      _
  $region6: #{tpu_custom_call.1} parent=0 // loop_footer
    %s18 = sadd.s32 1, %s14
  $region7: #{tpu_custom_call.1} parent=0 // loop_footer_branch
    %13 = sbr.rel target = $region3
  $region8: #{tpu_custom_call.1} parent=0 // loop_exit
    _

</llo_original>
